<compile_context>
chip_gen: v7x
topology: tpu7x:2x2x1
jax: 0.10.0
libtpu: 0.0.40
codegen_flags: <defaults>
</compile_context>

<pallas_src>
import functools

import jax
import jax.numpy as jnp
from jax.experimental import pallas as pl
from jax.experimental.pallas import tpu as pltpu

IN_FEATURES = 1984
OUT_FEATURES = 1000


def linear_kernel(x_ref, w_ref, b_ref, o_ref):
    # x_ref: [M, K] fp32, w_ref: [K, tn] bf16, b_ref: [1, tn] fp32,
    # o_ref: [M, tn] fp32.  Compute is negligible; fp32 accumulate on MXU.
    acc = jnp.dot(
        x_ref[...].astype(jnp.bfloat16),
        w_ref[...],
        preferred_element_type=jnp.float32,
    )
    o_ref[...] = (acc + b_ref[...]).astype(o_ref.dtype)


def _num_n_blocks():
    # Split N across TensorCores only on dual-TC chips (v7x); on single-TC
    # chips extra grid steps are pure overhead for this tiny problem.
    try:
        kind = jax.devices()[0].device_kind.lower()
    except Exception as e:  # perf-only fallback, but log it (review item).
        print(f"WARNING: device query failed ({e!r}); assuming single TensorCore.")
        return 1
    return 2 if "v7" in kind else 1


def prepare_params(w_torch_layout, b):
    """One-time ("model load") weight prep -- keep OUT of the per-call path.

    w_torch_layout: [out, in] fp32 (PyTorch Linear.weight), b: [out] fp32.
    Returns (w_bf16 [K, N_pad], b_f32 [1, N_pad], N_valid) with N_pad a
    multiple of 128 (lane-dense) and zero padding in the extra columns
    (zero bias padding keeps the padded output columns garbage-free).
    """
    out_f, in_f = w_torch_layout.shape
    n_pad = ((out_f + 127) // 128) * 128
    w = jnp.zeros((in_f, n_pad), dtype=jnp.bfloat16)
    w = w.at[:, :out_f].set(w_torch_layout.T.astype(jnp.bfloat16))
    b_p = jnp.zeros((1, n_pad), dtype=jnp.float32)
    b_p = b_p.at[:, :out_f].set(b.astype(jnp.float32).reshape(1, -1))
    return w, b_p, out_f


@functools.lru_cache(maxsize=None)
def _build_linear_call(m, k, n_pad, n_blocks, buffered):
    """Build (and cache) the pallas_call for a given shape configuration."""
    tn = n_pad // n_blocks
    # Single grid step per core -> no double-buffering needed; Buffered(1)
    # frees the dead second weight buffer in VMEM.
    pm = pl.Buffered(1) if buffered else None

    in_specs = [
        pl.BlockSpec((m, k), lambda j: (0, 0), pipeline_mode=pm),
        pl.BlockSpec((k, tn), lambda j: (0, j), pipeline_mode=pm),
        pl.BlockSpec((1, tn), lambda j: (0, j), pipeline_mode=pm),
    ]
    out_spec = pl.BlockSpec((m, tn), lambda j: (0, j))

    cost = pl.CostEstimate(
        flops=2 * m * k * n_pad,
        transcendentals=0,
        bytes_accessed=k * n_pad * 2 + m * k * 4 + m * n_pad * 4 + n_pad * 4,
    )

    dim_sem = ("parallel",) if n_blocks > 1 else ("arbitrary",)

    return pl.pallas_call(
        linear_kernel,
        out_shape=jax.ShapeDtypeStruct((m, n_pad), jnp.float32),
        grid_spec=pltpu.PrefetchScalarGridSpec(
            num_scalar_prefetch=0,
            grid=(n_blocks,),
            in_specs=in_specs,
            out_specs=out_spec,
        ),
        compiler_params=pltpu.CompilerParams(
            dimension_semantics=dim_sem,
            vmem_limit_bytes=32 << 20,
        ),
        cost_estimate=cost,
    )


def linear_pallas(x, w_padded, b_padded, n_valid):
    # Per-call path: only the GEMV kernel + output slice.
    # x: [M, K] fp32, w_padded: [K, N_pad] bf16, b_padded: [1, N_pad] fp32.
    M, K = x.shape
    K2, N_pad = w_padded.shape
    assert K == K2 and b_padded.shape == (1, N_pad)
    assert N_pad % 128 == 0

    n_blocks = _num_n_blocks()
    if N_pad % (128 * n_blocks) != 0:
        n_blocks = 1

    try:
        fn = _build_linear_call(M, K, N_pad, n_blocks, True)
        out_padded = fn(x, w_padded, b_padded)
    except Exception:
        # Safe fallback if Buffered(1) is rejected by this JAX/Mosaic build.
        fn = _build_linear_call(M, K, N_pad, n_blocks, False)
        out_padded = fn(x, w_padded, b_padded)

    # Module semantics require [M, 1000].  If a downstream consumer can take
    # N_pad=1024 directly, return out_padded instead and drop this copy.
    return out_padded[:, :n_valid]


def linear_forward(x, w_torch_layout, b):
    # Convenience wrapper (prep + call).  For repeated use, call
    # prepare_params() ONCE and reuse (w_p, b_p, n_valid) -- see __main__.
    w_p, b_p, n_valid = prepare_params(w_torch_layout, b)
    return linear_pallas(x, w_p, b_p, n_valid)


if __name__ == "__main__":
    key = jax.random.PRNGKey(0)
    kx, kw, kb = jax.random.split(key, 3)

    # Input matches the module's x212: [1, 1984]
    x = jax.random.normal(kx, (1, IN_FEATURES), dtype=jnp.float32)

    # Deterministic parameter init (mimic nn.Linear uniform(-1/sqrt(K), 1/sqrt(K)))
    bound = 1.0 / (IN_FEATURES ** 0.5)
    # PyTorch weight layout: [out_features, in_features]
    w_torch = jax.random.uniform(
        kw, (OUT_FEATURES, IN_FEATURES), minval=-bound, maxval=bound,
        dtype=jnp.float32,
    )
    b = jax.random.uniform(
        kb, (OUT_FEATURES,), minval=-bound, maxval=bound, dtype=jnp.float32
    )

    # ---- model-load time: one-time weight prep (hoisted per review) ----
    w_p, b_p, n_valid = prepare_params(w_torch, b)
    w_p, b_p = jax.block_until_ready((w_p, b_p))

    # ---- per-call path: just the GEMV kernel (run twice; 2nd call reuses
    #      the cached pallas_call and the already-padded weight) ----
    out = linear_pallas(x, w_p, b_p, n_valid)
    out = linear_pallas(x, w_p, b_p, n_valid)
    out = jax.block_until_ready(out)

    # Reference (fp32) check; bf16 weights -> relaxed tolerance.
    ref = x @ w_torch.T + b[None, :]
    assert out.shape == (1, OUT_FEATURES)
    assert jnp.allclose(out, ref, atol=2e-2, rtol=2e-2), float(
        jnp.max(jnp.abs(out - ref))
    )

    print("KERNEL_OK")
</pallas_src>

<mosaic_0001>
module attributes {stable_mosaic.version = 11 : i64} {
  func.func @linear_kernel(%arg0: i32, %arg1: memref<1x1984xf32, #tpu.memory_space<vmem>>, %arg2: memref<1984x1024xbf16, #tpu.memory_space<vmem>>, %arg3: memref<1x1024xf32, #tpu.memory_space<vmem>>, %arg4: memref<1x1024xf32, #tpu.memory_space<vmem>>) attributes {dimension_semantics = [#tpu.dimension_semantics<arbitrary>], iteration_bounds = array<i64: 1>, scalar_prefetch = 0 : i64, scratch_operands = 0 : i64, tpu.core_type = #tpu.core_type<tc>, window_params = [{pipeline_mode = #tpu.pipeline_mode<synchronous>, transform_indices = @transform_0, window_bounds = array<i64: 1, 1984>}, {pipeline_mode = #tpu.pipeline_mode<synchronous>, transform_indices = @transform_1, window_bounds = array<i64: 1984, 1024>}, {pipeline_mode = #tpu.pipeline_mode<synchronous>, transform_indices = @transform_2, window_bounds = array<i64: 1, 1024>}, {transform_indices = @transform_3, window_bounds = array<i64: 1, 1024>}]} {
    %c0 = arith.constant 0 : index
    %c0_0 = arith.constant 0 : index
    %0 = vector.load %arg1[%c0, %c0_0] : memref<1x1984xf32, #tpu.memory_space<vmem>>, vector<1x1984xf32>
    %1 = arith.truncf %0 : vector<1x1984xf32> to vector<1x1984xbf16>
    %c0_1 = arith.constant 0 : index
    %c0_2 = arith.constant 0 : index
    %2 = vector.load %arg2[%c0_1, %c0_2] : memref<1984x1024xbf16, #tpu.memory_space<vmem>>, vector<1984x1024xbf16>
    %cst = arith.constant dense<0.000000e+00> : vector<1x1024xf32>
    %3 = tpu.matmul %1, %2, %cst {dimension_numbers = #tpu.dot_dimension_numbers<[1], [0], [0], [1], [0, 0, 1, 1], [], []>} : vector<1x1984xbf16>, vector<1984x1024xbf16>, vector<1x1024xf32> -> vector<1x1024xf32>
    %c0_3 = arith.constant 0 : index
    %c0_4 = arith.constant 0 : index
    %4 = vector.load %arg3[%c0_3, %c0_4] : memref<1x1024xf32, #tpu.memory_space<vmem>>, vector<1x1024xf32>
    %5 = arith.addf %3, %4 : vector<1x1024xf32>
    %c0_5 = arith.constant 0 : index
    %c0_6 = arith.constant 0 : index
    %6 = vector.load %arg4[%c0_5, %c0_6] : memref<1x1024xf32, #tpu.memory_space<vmem>>, vector<1x1024xf32>
    tpu.vector_store %arg4[%c0_5, %c0_6], %5 {strides = array<i32>} : memref<1x1024xf32, #tpu.memory_space<vmem>>, vector<1x1024xf32>,
    return
  }
  func.func @transform_0(%arg0: i32) -> (i32, i32) {
    %c0_i32 = arith.constant 0 : i32
    %c0_i32_0 = arith.constant 0 : i32
    %c0_i32_1 = arith.constant 0 : i32
    return %c0_i32, %c0_i32_0 : i32, i32
  }
  func.func @transform_1(%arg0: i32) -> (i32, i32) {
    %c0_i32 = arith.constant 0 : i32
    %c0_i32_0 = arith.constant 0 : i32
    return %c0_i32, %arg0 : i32, i32
  }
  func.func @transform_2(%arg0: i32) -> (i32, i32) {
    %c0_i32 = arith.constant 0 : i32
    %c0_i32_0 = arith.constant 0 : i32
    return %c0_i32, %arg0 : i32, i32
  }
  func.func @transform_3(%arg0: i32) -> (i32, i32) {
    %c0_i32 = arith.constant 0 : i32
    %c0_i32_0 = arith.constant 0 : i32
    return %c0_i32, %arg0 : i32, i32
  }
}

module attributes {stable_mosaic.version = 11 : i64} {
  func.func @linear_kernel(%arg0: i32, %arg1: memref<1x1984xf32, #tpu.memory_space<vmem>>, %arg2: memref<1984x1024xbf16, #tpu.memory_space<vmem>>, %arg3: memref<1x1024xf32, #tpu.memory_space<vmem>>, %arg4: memref<1x1024xf32, #tpu.memory_space<vmem>>) attributes {dimension_semantics = [#tpu.dimension_semantics<arbitrary>], iteration_bounds = array<i64: 1>, scalar_prefetch = 0 : i64, scratch_operands = 0 : i64, tpu.core_type = #tpu.core_type<tc>, window_params = [{pipeline_mode = #tpu.pipeline_mode<synchronous>, transform_indices = @transform_0, window_bounds = array<i64: 1, 1984>}, {transform_indices = @transform_1, window_bounds = array<i64: 1984, 1024>}, {transform_indices = @transform_2, window_bounds = array<i64: 1, 1024>}, {transform_indices = @transform_3, window_bounds = array<i64: 1, 1024>}]} {
    %c0 = arith.constant 0 : index
    %c0_0 = arith.constant 0 : index
    %0 = vector.load %arg1[%c0, %c0_0] : memref<1x1984xf32, #tpu.memory_space<vmem>>, vector<1x1984xf32>
    %1 = arith.truncf %0 : vector<1x1984xf32> to vector<1x1984xbf16>
    %c0_1 = arith.constant 0 : index
    %c0_2 = arith.constant 0 : index
    %2 = vector.load %arg2[%c0_1, %c0_2] : memref<1984x1024xbf16, #tpu.memory_space<vmem>>, vector<1984x1024xbf16>
    %cst = arith.constant dense<0.000000e+00> : vector<1x1024xf32>
    %3 = tpu.matmul %1, %2, %cst {dimension_numbers = #tpu.dot_dimension_numbers<[1], [0], [0], [1], [0, 0, 1, 1], [], []>} : vector<1x1984xbf16>, vector<1984x1024xbf16>, vector<1x1024xf32> -> vector<1x1024xf32>
    %c0_3 = arith.constant 0 : index
    %c0_4 = arith.constant 0 : index
    %4 = vector.load %arg3[%c0_3, %c0_4] : memref<1x1024xf32, #tpu.memory_space<vmem>>, vector<1x1024xf32>
    %5 = arith.addf %3, %4 : vector<1x1024xf32>
    %c0_5 = arith.constant 0 : index
    %c0_6 = arith.constant 0 : index
    %6 = vector.load %arg4[%c0_5, %c0_6] : memref<1x1024xf32, #tpu.memory_space<vmem>>, vector<1x1024xf32>
    tpu.vector_store %arg4[%c0_5, %c0_6], %5 {strides = array<i32>} : memref<1x1024xf32, #tpu.memory_space<vmem>>, vector<1x1024xf32>,
    return
  }
  func.func @transform_0(%arg0: i32) -> (i32, i32) {
    %c0_i32 = arith.constant 0 : i32
    %c0_i32_0 = arith.constant 0 : i32
    %c0_i32_1 = arith.constant 0 : i32
    return %c0_i32, %c0_i32_0 : i32, i32
  }
  func.func @transform_1(%arg0: i32) -> (i32, i32) {
    %c0_i32 = arith.constant 0 : i32
    %c0_i32_0 = arith.constant 0 : i32
    return %c0_i32, %arg0 : i32, i32
  }
  func.func @transform_2(%arg0: i32) -> (i32, i32) {
    %c0_i32 = arith.constant 0 : i32
    %c0_i32_0 = arith.constant 0 : i32
    return %c0_i32, %arg0 : i32, i32
  }
  func.func @transform_3(%arg0: i32) -> (i32, i32) {
    %c0_i32 = arith.constant 0 : i32
    %c0_i32_0 = arith.constant 0 : i32
    return %c0_i32, %arg0 : i32, i32
  }
}

</mosaic_0001>

<llo_original>
// kernel: tpu_custom_call.1
$region0: #{tpu_custom_call.1}
  #allocation0 [shape = 'u32[]', space=smem, size = 0x4, offset = 0x4, fixed_abs, tag = 'smem constant byte address 0x4 - core index']
  #allocation1 [shape = 'u32[144,128]{1,0:T(1,128)}', space=vmem, size = 0x12000, scoped, tag = 'internal scratch']
  %s0 = inlined_call_operand.hbm [shape: f32[1,1984], index: 0, kind: input, shape index: {}]
  %s1 = inlined_call_operand.hbm [shape: bf16[1984,1024], index: 1, kind: input, shape index: {}]
  %s2 = inlined_call_operand.hbm [shape: f32[1,1024], index: 2, kind: input, shape index: {}]
  %s3 = inlined_call_operand.hbm [shape: f32[1,1024], index: 3, kind: output, shape index: {}]
  %s4 = sld [smem:[#allocation0]]
  $region34: #{tpu_custom_call.1} parent=0
    _
  %s6 = ssub.s32 1, %s4
  %s7 = scalar_select 0, %s6, %s4
  $region1: #{tpu_custom_call.1} parent=0
    #allocation2 [shape = 'u8[8192]{0}', space=vmem, size = 0x2000, scoped, tag = 'input window, operand 0, single buffered']
    #allocation3 [shape = 's32[1]{0}', space=sflag, size = 0x4, scoped, tag = 'scoped memory for tpu_custom_call.1']
    #allocation4 [shape = 's32[1]{0}', space=sflag, size = 0x4, scoped, tag = 'scoped memory for tpu_custom_call.1']
    #allocation5 [shape = 'u8[4063232]{0}', space=vmem, size = 0x3e0000, scoped, tag = 'input window, operand 1, single buffered']
    #allocation6 [shape = 's32[1]{0}', space=sflag, size = 0x4, scoped, tag = 'scoped memory for tpu_custom_call.1']
    #allocation7 [shape = 'u8[4096]{0}', space=vmem, size = 0x1000, scoped, tag = 'input window, operand 2, single buffered']
    #allocation8 [shape = 'u8[4096]{0}', space=vmem, size = 0x1000, scoped, tag = 'output window, operand 0, single buffered']
    %8 = vsyncpa [#allocation3], 0
    %9 = vsyncpa [#allocation6], 0
    %10 = vsyncpa [#allocation4], 0
    // Predicated region
    $region2: #{tpu_custom_call.1} parent=1 // pred_check
      _
    $region3: #{tpu_custom_call.1} parent=1 // pred_check_branch
      %12 = sbr.rel (0) target = $region5
    $region4: #{tpu_custom_call.1} parent=1 // pred_region
      %s14 = ssub.s32 256, 256
      %15 = vsyncadd [#allocation3], %s14
      %s17 = sshll.u32 [#allocation2], 4
      %s18 = int_to_ptr.vmem [resolvable:$true] %s17
      %20 = dma.hbm_to_vmem [thread:$0]  %s0, 256, %s18, [#allocation3]
    $region5: #{tpu_custom_call.1} parent=1 // pred_fallthru
      _
    // Predicated region
    $region6: #{tpu_custom_call.1} parent=1 // pred_check
      _
    $region7: #{tpu_custom_call.1} parent=1 // pred_check_branch
      %22 = sbr.rel (0) target = $region9
    $region8: #{tpu_custom_call.1} parent=1 // pred_region
      %s24 = ssub.s32 126976, 126976
      %25 = vsyncadd [#allocation6], %s24
      %s26 = sshll.u32 [#allocation5], 4
      %s27 = int_to_ptr.vmem [resolvable:$true] %s26
      %32 = dma.hbm_to_vmem [thread:$0]  %s1, 126976, %s27, [#allocation6], 512, 512, 32
    $region9: #{tpu_custom_call.1} parent=1 // pred_fallthru
      _
    // Predicated region
    $region10: #{tpu_custom_call.1} parent=1 // pred_check
      _
    $region11: #{tpu_custom_call.1} parent=1 // pred_check_branch
      %34 = sbr.rel (0) target = $region13
    $region12: #{tpu_custom_call.1} parent=1 // pred_region
      %s36 = ssub.s32 128, 128
      %37 = vsyncadd [#allocation6], %s36
      %s39 = sshll.u32 [#allocation7], 4
      %s40 = int_to_ptr.vmem [resolvable:$true] %s39
      %42 = dma.hbm_to_vmem [thread:$0]  %s2, 128, %s40, [#allocation6]
    $region13: #{tpu_custom_call.1} parent=1 // pred_fallthru
      _
    // Predicated region
    $region14: #{tpu_custom_call.1} parent=1 // pred_check
      _
    $region15: #{tpu_custom_call.1} parent=1 // pred_check_branch
      %44 = sbr.rel (0) target = $region17
    $region16: #{tpu_custom_call.1} parent=1 // pred_region
      %45 = dma.done [#allocation3], 256
    $region17: #{tpu_custom_call.1} parent=1 // pred_fallthru
      _
    // Predicated region
    $region18: #{tpu_custom_call.1} parent=1 // pred_check
      _
    $region19: #{tpu_custom_call.1} parent=1 // pred_check_branch
      %47 = sbr.rel (0) target = $region21
    $region20: #{tpu_custom_call.1} parent=1 // pred_region
      %48 = dma.done [#allocation6], 126976
    $region21: #{tpu_custom_call.1} parent=1 // pred_fallthru
      _
    // Predicated region
    $region22: #{tpu_custom_call.1} parent=1 // pred_check
      _
    $region23: #{tpu_custom_call.1} parent=1 // pred_check_branch
      %50 = sbr.rel (0) target = $region25
    $region24: #{tpu_custom_call.1} parent=1 // pred_region
      %51 = dma.done [#allocation6], 128
    $region25: #{tpu_custom_call.1} parent=1 // pred_fallthru
      _
    %v53 = vld [vmem:[#allocation2] sm:$0xff]
    %v54 = vld [vmem:[#allocation2 + $0x8] sm:$0xff]
    %v57 = vlaneseq
    %v58 = vshrl.u32 %v57, 7
    %v59 = vsub.s32 0, %v58
    %v60 = vrot.slane %v53, %v59
    %v61 = vlaneseq
    %v62 = vshrl.u32 %v61, 7
    %v63 = vsub.s32 1, %v62
    %v64 = vrot.slane %v53, %v63
    %v65 = vlaneseq
    %v66 = vshrl.u32 %v65, 7
    %v67 = vsub.s32 2, %v66
    %v68 = vrot.slane %v53, %v67
    %v69 = vlaneseq
    %v70 = vshrl.u32 %v69, 7
    %v71 = vsub.s32 3, %v70
    %v72 = vrot.slane %v53, %v71
    %v73 = vlaneseq
    %v74 = vshrl.u32 %v73, 7
    %v75 = vsub.s32 4, %v74
    %v76 = vrot.slane %v53, %v75
    %v77 = vlaneseq
    %v78 = vshrl.u32 %v77, 7
    %v79 = vsub.s32 5, %v78
    %v80 = vrot.slane %v53, %v79
    %v81 = vlaneseq
    %v82 = vshrl.u32 %v81, 7
    %v83 = vsub.s32 6, %v82
    %v84 = vrot.slane %v53, %v83
    %v85 = vlaneseq
    %v86 = vshrl.u32 %v85, 7
    %v87 = vsub.s32 7, %v86
    %v88 = vrot.slane %v53, %v87
    %v89 = vlaneseq
    %v90 = vshrl.u32 %v89, 7
    %v91 = vsub.s32 0, %v90
    %v92 = vrot.slane %v54, %v91
    %v93 = vlaneseq
    %v94 = vshrl.u32 %v93, 7
    %v95 = vsub.s32 1, %v94
    %v96 = vrot.slane %v54, %v95
    %v97 = vlaneseq
    %v98 = vshrl.u32 %v97, 7
    %v99 = vsub.s32 2, %v98
    %v100 = vrot.slane %v54, %v99
    %v101 = vlaneseq
    %v102 = vshrl.u32 %v101, 7
    %v103 = vsub.s32 3, %v102
    %v104 = vrot.slane %v54, %v103
    %v105 = vlaneseq
    %v106 = vshrl.u32 %v105, 7
    %v107 = vsub.s32 4, %v106
    %v108 = vrot.slane %v54, %v107
    %v109 = vlaneseq
    %v110 = vshrl.u32 %v109, 7
    %v111 = vsub.s32 5, %v110
    %v112 = vrot.slane %v54, %v111
    %v113 = vlaneseq
    %v114 = vshrl.u32 %v113, 7
    %v115 = vsub.s32 6, %v114
    %v116 = vrot.slane %v54, %v115
    %v117 = vlaneseq
    %v118 = vshrl.u32 %v117, 7
    %v119 = vsub.s32 7, %v118
    %v120 = vrot.slane %v54, %v119
    %v137 = vpack.c.bf16 %v60, %v60
    %v138 = vpack.c.bf16 %v64, %v64
    %v139 = vpack.c.bf16 %v68, %v68
    %v140 = vpack.c.bf16 %v72, %v72
    %v141 = vpack.c.bf16 %v76, %v76
    %v142 = vpack.c.bf16 %v80, %v80
    %v143 = vpack.c.bf16 %v84, %v84
    %v144 = vpack.c.bf16 %v88, %v88
    %v145 = vpack.c.bf16 %v92, %v92
    %v146 = vpack.c.bf16 %v96, %v96
    %v147 = vpack.c.bf16 %v100, %v100
    %v148 = vpack.c.bf16 %v104, %v104
    %v149 = vpack.c.bf16 %v108, %v108
    %v150 = vpack.c.bf16 %v112, %v112
    %v151 = vpack.c.bf16 %v116, %v116
    %v152 = vpack.c.bf16 %v120, %v120
    %v153 = vld [vmem:[#allocation5] sm:$0xff]
    %v154 = vld [vmem:[#allocation5 + $0x8] sm:$0xff]
    %v155 = vld [vmem:[#allocation5 + $0x10] sm:$0xff]
    %v156 = vld [vmem:[#allocation5 + $0x18] sm:$0xff]
    %v157 = vld [vmem:[#allocation5 + $0x20] sm:$0xff]
    %v158 = vld [vmem:[#allocation5 + $0x28] sm:$0xff]
    %v159 = vld [vmem:[#allocation5 + $0x30] sm:$0xff]
    %v160 = vld [vmem:[#allocation5 + $0x38] sm:$0xff]
    %v161 = vld [vmem:[#allocation5 + $0x40] sm:$0xff]
    %v162 = vld [vmem:[#allocation5 + $0x48] sm:$0xff]
    %v163 = vld [vmem:[#allocation5 + $0x50] sm:$0xff]
    %v164 = vld [vmem:[#allocation5 + $0x58] sm:$0xff]
    %v165 = vld [vmem:[#allocation5 + $0x60] sm:$0xff]
    %v166 = vld [vmem:[#allocation5 + $0x68] sm:$0xff]
    %v167 = vld [vmem:[#allocation5 + $0x70] sm:$0xff]
    %v168 = vld [vmem:[#allocation5 + $0x78] sm:$0xff]
    %v169 = vld [vmem:[#allocation5 + $0x80] sm:$0xff]
    %v170 = vld [vmem:[#allocation5 + $0x88] sm:$0xff]
    %v171 = vld [vmem:[#allocation5 + $0x90] sm:$0xff]
    %v172 = vld [vmem:[#allocation5 + $0x98] sm:$0xff]
    %v173 = vld [vmem:[#allocation5 + $0xa0] sm:$0xff]
    %v174 = vld [vmem:[#allocation5 + $0xa8] sm:$0xff]
    %v175 = vld [vmem:[#allocation5 + $0xb0] sm:$0xff]
    %v176 = vld [vmem:[#allocation5 + $0xb8] sm:$0xff]
    %v177 = vld [vmem:[#allocation5 + $0xc0] sm:$0xff]
    %v178 = vld [vmem:[#allocation5 + $0xc8] sm:$0xff]
    %v179 = vld [vmem:[#allocation5 + $0xd0] sm:$0xff]
    %v180 = vld [vmem:[#allocation5 + $0xd8] sm:$0xff]
    %v181 = vld [vmem:[#allocation5 + $0xe0] sm:$0xff]
    %v182 = vld [vmem:[#allocation5 + $0xe8] sm:$0xff]
    %v183 = vld [vmem:[#allocation5 + $0xf0] sm:$0xff]
    %v184 = vld [vmem:[#allocation5 + $0xf8] sm:$0xff]
    %v185 = vld [vmem:[#allocation5 + $0x100] sm:$0xff]
    %v186 = vld [vmem:[#allocation5 + $0x108] sm:$0xff]
    %v187 = vld [vmem:[#allocation5 + $0x110] sm:$0xff]
    %v188 = vld [vmem:[#allocation5 + $0x118] sm:$0xff]
    %v189 = vld [vmem:[#allocation5 + $0x120] sm:$0xff]
    %v190 = vld [vmem:[#allocation5 + $0x128] sm:$0xff]
    %v191 = vld [vmem:[#allocation5 + $0x130] sm:$0xff]
    %v192 = vld [vmem:[#allocation5 + $0x138] sm:$0xff]
    %v193 = vld [vmem:[#allocation5 + $0x140] sm:$0xff]
    %v194 = vld [vmem:[#allocation5 + $0x148] sm:$0xff]
    %v195 = vld [vmem:[#allocation5 + $0x150] sm:$0xff]
    %v196 = vld [vmem:[#allocation5 + $0x158] sm:$0xff]
    %v197 = vld [vmem:[#allocation5 + $0x160] sm:$0xff]
    %v198 = vld [vmem:[#allocation5 + $0x168] sm:$0xff]
    %v199 = vld [vmem:[#allocation5 + $0x170] sm:$0xff]
    %v200 = vld [vmem:[#allocation5 + $0x178] sm:$0xff]
    %v201 = vld [vmem:[#allocation5 + $0x180] sm:$0xff]
    %v202 = vld [vmem:[#allocation5 + $0x188] sm:$0xff]
    %v203 = vld [vmem:[#allocation5 + $0x190] sm:$0xff]
    %v204 = vld [vmem:[#allocation5 + $0x198] sm:$0xff]
    %v205 = vld [vmem:[#allocation5 + $0x1a0] sm:$0xff]
    %v206 = vld [vmem:[#allocation5 + $0x1a8] sm:$0xff]
    %v207 = vld [vmem:[#allocation5 + $0x1b0] sm:$0xff]
    %v208 = vld [vmem:[#allocation5 + $0x1b8] sm:$0xff]
    %v209 = vld [vmem:[#allocation5 + $0x1c0] sm:$0xff]
    %v210 = vld [vmem:[#allocation5 + $0x1c8] sm:$0xff]
    %v211 = vld [vmem:[#allocation5 + $0x1d0] sm:$0xff]
    %v212 = vld [vmem:[#allocation5 + $0x1d8] sm:$0xff]
    %v213 = vld [vmem:[#allocation5 + $0x1e0] sm:$0xff]
    %v214 = vld [vmem:[#allocation5 + $0x1e8] sm:$0xff]
    %v215 = vld [vmem:[#allocation5 + $0x1f0] sm:$0xff]
    %v216 = vld [vmem:[#allocation5 + $0x1f8] sm:$0xff]
    %v217 = vld [vmem:[#allocation5 + $0x200] sm:$0xff]
    %v218 = vld [vmem:[#allocation5 + $0x208] sm:$0xff]
    %v219 = vld [vmem:[#allocation5 + $0x210] sm:$0xff]
    %v220 = vld [vmem:[#allocation5 + $0x218] sm:$0xff]
    %v221 = vld [vmem:[#allocation5 + $0x220] sm:$0xff]
    %v222 = vld [vmem:[#allocation5 + $0x228] sm:$0xff]
    %v223 = vld [vmem:[#allocation5 + $0x230] sm:$0xff]
    %v224 = vld [vmem:[#allocation5 + $0x238] sm:$0xff]
    %v225 = vld [vmem:[#allocation5 + $0x240] sm:$0xff]
    %v226 = vld [vmem:[#allocation5 + $0x248] sm:$0xff]
    %v227 = vld [vmem:[#allocation5 + $0x250] sm:$0xff]
    %v228 = vld [vmem:[#allocation5 + $0x258] sm:$0xff]
    %v229 = vld [vmem:[#allocation5 + $0x260] sm:$0xff]
    %v230 = vld [vmem:[#allocation5 + $0x268] sm:$0xff]
    %v231 = vld [vmem:[#allocation5 + $0x270] sm:$0xff]
    %v232 = vld [vmem:[#allocation5 + $0x278] sm:$0xff]
    %v233 = vld [vmem:[#allocation5 + $0x280] sm:$0xff]
    %v234 = vld [vmem:[#allocation5 + $0x288] sm:$0xff]
    %v235 = vld [vmem:[#allocation5 + $0x290] sm:$0xff]
    %v236 = vld [vmem:[#allocation5 + $0x298] sm:$0xff]
    %v237 = vld [vmem:[#allocation5 + $0x2a0] sm:$0xff]
    %v238 = vld [vmem:[#allocation5 + $0x2a8] sm:$0xff]
    %v239 = vld [vmem:[#allocation5 + $0x2b0] sm:$0xff]
    %v240 = vld [vmem:[#allocation5 + $0x2b8] sm:$0xff]
    %v241 = vld [vmem:[#allocation5 + $0x2c0] sm:$0xff]
    %v242 = vld [vmem:[#allocation5 + $0x2c8] sm:$0xff]
    %v243 = vld [vmem:[#allocation5 + $0x2d0] sm:$0xff]
    %v244 = vld [vmem:[#allocation5 + $0x2d8] sm:$0xff]
    %v245 = vld [vmem:[#allocation5 + $0x2e0] sm:$0xff]
    %v246 = vld [vmem:[#allocation5 + $0x2e8] sm:$0xff]
    %v247 = vld [vmem:[#allocation5 + $0x2f0] sm:$0xff]
    %v248 = vld [vmem:[#allocation5 + $0x2f8] sm:$0xff]
    %v249 = vld [vmem:[#allocation5 + $0x300] sm:$0xff]
    %v250 = vld [vmem:[#allocation5 + $0x308] sm:$0xff]
    %v251 = vld [vmem:[#allocation5 + $0x310] sm:$0xff]
    %v252 = vld [vmem:[#allocation5 + $0x318] sm:$0xff]
    %v253 = vld [vmem:[#allocation5 + $0x320] sm:$0xff]
    %v254 = vld [vmem:[#allocation5 + $0x328] sm:$0xff]
    %v255 = vld [vmem:[#allocation5 + $0x330] sm:$0xff]
    %v256 = vld [vmem:[#allocation5 + $0x338] sm:$0xff]
    %v257 = vld [vmem:[#allocation5 + $0x340] sm:$0xff]
    %v258 = vld [vmem:[#allocation5 + $0x348] sm:$0xff]
    %v259 = vld [vmem:[#allocation5 + $0x350] sm:$0xff]
    %v260 = vld [vmem:[#allocation5 + $0x358] sm:$0xff]
    %v261 = vld [vmem:[#allocation5 + $0x360] sm:$0xff]
    %v262 = vld [vmem:[#allocation5 + $0x368] sm:$0xff]
    %v263 = vld [vmem:[#allocation5 + $0x370] sm:$0xff]
    %v264 = vld [vmem:[#allocation5 + $0x378] sm:$0xff]
    %v265 = vld [vmem:[#allocation5 + $0x380] sm:$0xff]
    %v266 = vld [vmem:[#allocation5 + $0x388] sm:$0xff]
    %v267 = vld [vmem:[#allocation5 + $0x390] sm:$0xff]
    %v268 = vld [vmem:[#allocation5 + $0x398] sm:$0xff]
    %v269 = vld [vmem:[#allocation5 + $0x3a0] sm:$0xff]
    %v270 = vld [vmem:[#allocation5 + $0x3a8] sm:$0xff]
    %v271 = vld [vmem:[#allocation5 + $0x3b0] sm:$0xff]
    %v272 = vld [vmem:[#allocation5 + $0x3b8] sm:$0xff]
    %v273 = vld [vmem:[#allocation5 + $0x3c0] sm:$0xff]
    %v274 = vld [vmem:[#allocation5 + $0x3c8] sm:$0xff]
    %v275 = vld [vmem:[#allocation5 + $0x3d0] sm:$0xff]
    %v276 = vld [vmem:[#allocation5 + $0x3d8] sm:$0xff]
    %v277 = vld [vmem:[#allocation5 + $0x3e0] sm:$0xff]
    %v278 = vld [vmem:[#allocation5 + $0x3e8] sm:$0xff]
    %v279 = vld [vmem:[#allocation5 + $0x3f0] sm:$0xff]
    %v280 = vld [vmem:[#allocation5 + $0x3f8] sm:$0xff]
    %v281 = vld [vmem:[#allocation5 + $0x400] sm:$0xff]
    %v282 = vld [vmem:[#allocation5 + $0x408] sm:$0xff]
    %v283 = vld [vmem:[#allocation5 + $0x410] sm:$0xff]
    %v284 = vld [vmem:[#allocation5 + $0x418] sm:$0xff]
    %v285 = vld [vmem:[#allocation5 + $0x420] sm:$0xff]
    %v286 = vld [vmem:[#allocation5 + $0x428] sm:$0xff]
    %v287 = vld [vmem:[#allocation5 + $0x430] sm:$0xff]
    %v288 = vld [vmem:[#allocation5 + $0x438] sm:$0xff]
    %v289 = vld [vmem:[#allocation5 + $0x440] sm:$0xff]
    %v290 = vld [vmem:[#allocation5 + $0x448] sm:$0xff]
    %v291 = vld [vmem:[#allocation5 + $0x450] sm:$0xff]
    %v292 = vld [vmem:[#allocation5 + $0x458] sm:$0xff]
    %v293 = vld [vmem:[#allocation5 + $0x460] sm:$0xff]
    %v294 = vld [vmem:[#allocation5 + $0x468] sm:$0xff]
    %v295 = vld [vmem:[#allocation5 + $0x470] sm:$0xff]
    %v296 = vld [vmem:[#allocation5 + $0x478] sm:$0xff]
    %v297 = vld [vmem:[#allocation5 + $0x480] sm:$0xff]
    %v298 = vld [vmem:[#allocation5 + $0x488] sm:$0xff]
    %v299 = vld [vmem:[#allocation5 + $0x490] sm:$0xff]
    %v300 = vld [vmem:[#allocation5 + $0x498] sm:$0xff]
    %v301 = vld [vmem:[#allocation5 + $0x4a0] sm:$0xff]
    %v302 = vld [vmem:[#allocation5 + $0x4a8] sm:$0xff]
    %v303 = vld [vmem:[#allocation5 + $0x4b0] sm:$0xff]
    %v304 = vld [vmem:[#allocation5 + $0x4b8] sm:$0xff]
    %v305 = vld [vmem:[#allocation5 + $0x4c0] sm:$0xff]
    %v306 = vld [vmem:[#allocation5 + $0x4c8] sm:$0xff]
    %v307 = vld [vmem:[#allocation5 + $0x4d0] sm:$0xff]
    %v308 = vld [vmem:[#allocation5 + $0x4d8] sm:$0xff]
    %v309 = vld [vmem:[#allocation5 + $0x4e0] sm:$0xff]
    %v310 = vld [vmem:[#allocation5 + $0x4e8] sm:$0xff]
    %v311 = vld [vmem:[#allocation5 + $0x4f0] sm:$0xff]
    %v312 = vld [vmem:[#allocation5 + $0x4f8] sm:$0xff]
    %v313 = vld [vmem:[#allocation5 + $0x500] sm:$0xff]
    %v314 = vld [vmem:[#allocation5 + $0x508] sm:$0xff]
    %v315 = vld [vmem:[#allocation5 + $0x510] sm:$0xff]
    %v316 = vld [vmem:[#allocation5 + $0x518] sm:$0xff]
    %v317 = vld [vmem:[#allocation5 + $0x520] sm:$0xff]
    %v318 = vld [vmem:[#allocation5 + $0x528] sm:$0xff]
    %v319 = vld [vmem:[#allocation5 + $0x530] sm:$0xff]
    %v320 = vld [vmem:[#allocation5 + $0x538] sm:$0xff]
    %v321 = vld [vmem:[#allocation5 + $0x540] sm:$0xff]
    %v322 = vld [vmem:[#allocation5 + $0x548] sm:$0xff]
    %v323 = vld [vmem:[#allocation5 + $0x550] sm:$0xff]
    %v324 = vld [vmem:[#allocation5 + $0x558] sm:$0xff]
    %v325 = vld [vmem:[#allocation5 + $0x560] sm:$0xff]
    %v326 = vld [vmem:[#allocation5 + $0x568] sm:$0xff]
    %v327 = vld [vmem:[#allocation5 + $0x570] sm:$0xff]
    %v328 = vld [vmem:[#allocation5 + $0x578] sm:$0xff]
    %v329 = vld [vmem:[#allocation5 + $0x580] sm:$0xff]
    %v330 = vld [vmem:[#allocation5 + $0x588] sm:$0xff]
    %v331 = vld [vmem:[#allocation5 + $0x590] sm:$0xff]
    %v332 = vld [vmem:[#allocation5 + $0x598] sm:$0xff]
    %v333 = vld [vmem:[#allocation5 + $0x5a0] sm:$0xff]
    %v334 = vld [vmem:[#allocation5 + $0x5a8] sm:$0xff]
    %v335 = vld [vmem:[#allocation5 + $0x5b0] sm:$0xff]
    %v336 = vld [vmem:[#allocation5 + $0x5b8] sm:$0xff]
    %v337 = vld [vmem:[#allocation5 + $0x5c0] sm:$0xff]
    %v338 = vld [vmem:[#allocation5 + $0x5c8] sm:$0xff]
    %v339 = vld [vmem:[#allocation5 + $0x5d0] sm:$0xff]
    %v340 = vld [vmem:[#allocation5 + $0x5d8] sm:$0xff]
    %v341 = vld [vmem:[#allocation5 + $0x5e0] sm:$0xff]
    %v342 = vld [vmem:[#allocation5 + $0x5e8] sm:$0xff]
    %v343 = vld [vmem:[#allocation5 + $0x5f0] sm:$0xff]
    %v344 = vld [vmem:[#allocation5 + $0x5f8] sm:$0xff]
    %v345 = vld [vmem:[#allocation5 + $0x600] sm:$0xff]
    %v346 = vld [vmem:[#allocation5 + $0x608] sm:$0xff]
    %v347 = vld [vmem:[#allocation5 + $0x610] sm:$0xff]
    %v348 = vld [vmem:[#allocation5 + $0x618] sm:$0xff]
    %v349 = vld [vmem:[#allocation5 + $0x620] sm:$0xff]
    %v350 = vld [vmem:[#allocation5 + $0x628] sm:$0xff]
    %v351 = vld [vmem:[#allocation5 + $0x630] sm:$0xff]
    %v352 = vld [vmem:[#allocation5 + $0x638] sm:$0xff]
    %v353 = vld [vmem:[#allocation5 + $0x640] sm:$0xff]
    %v354 = vld [vmem:[#allocation5 + $0x648] sm:$0xff]
    %v355 = vld [vmem:[#allocation5 + $0x650] sm:$0xff]
    %v356 = vld [vmem:[#allocation5 + $0x658] sm:$0xff]
    %v357 = vld [vmem:[#allocation5 + $0x660] sm:$0xff]
    %v358 = vld [vmem:[#allocation5 + $0x668] sm:$0xff]
    %v359 = vld [vmem:[#allocation5 + $0x670] sm:$0xff]
    %v360 = vld [vmem:[#allocation5 + $0x678] sm:$0xff]
    %v361 = vld [vmem:[#allocation5 + $0x680] sm:$0xff]
    %v362 = vld [vmem:[#allocation5 + $0x688] sm:$0xff]
    %v363 = vld [vmem:[#allocation5 + $0x690] sm:$0xff]
    %v364 = vld [vmem:[#allocation5 + $0x698] sm:$0xff]
    %v365 = vld [vmem:[#allocation5 + $0x6a0] sm:$0xff]
    %v366 = vld [vmem:[#allocation5 + $0x6a8] sm:$0xff]
    %v367 = vld [vmem:[#allocation5 + $0x6b0] sm:$0xff]
    %v368 = vld [vmem:[#allocation5 + $0x6b8] sm:$0xff]
    %v369 = vld [vmem:[#allocation5 + $0x6c0] sm:$0xff]
    %v370 = vld [vmem:[#allocation5 + $0x6c8] sm:$0xff]
    %v371 = vld [vmem:[#allocation5 + $0x6d0] sm:$0xff]
    %v372 = vld [vmem:[#allocation5 + $0x6d8] sm:$0xff]
    %v373 = vld [vmem:[#allocation5 + $0x6e0] sm:$0xff]
    %v374 = vld [vmem:[#allocation5 + $0x6e8] sm:$0xff]
    %v375 = vld [vmem:[#allocation5 + $0x6f0] sm:$0xff]
    %v376 = vld [vmem:[#allocation5 + $0x6f8] sm:$0xff]
    %v377 = vld [vmem:[#allocation5 + $0x700] sm:$0xff]
    %v378 = vld [vmem:[#allocation5 + $0x708] sm:$0xff]
    %v379 = vld [vmem:[#allocation5 + $0x710] sm:$0xff]
    %v380 = vld [vmem:[#allocation5 + $0x718] sm:$0xff]
    %v381 = vld [vmem:[#allocation5 + $0x720] sm:$0xff]
    %v382 = vld [vmem:[#allocation5 + $0x728] sm:$0xff]
    %v383 = vld [vmem:[#allocation5 + $0x730] sm:$0xff]
    %v384 = vld [vmem:[#allocation5 + $0x738] sm:$0xff]
    %v385 = vld [vmem:[#allocation5 + $0x740] sm:$0xff]
    %v386 = vld [vmem:[#allocation5 + $0x748] sm:$0xff]
    %v387 = vld [vmem:[#allocation5 + $0x750] sm:$0xff]
    %v388 = vld [vmem:[#allocation5 + $0x758] sm:$0xff]
    %v389 = vld [vmem:[#allocation5 + $0x760] sm:$0xff]
    %v390 = vld [vmem:[#allocation5 + $0x768] sm:$0xff]
    %v391 = vld [vmem:[#allocation5 + $0x770] sm:$0xff]
    %v392 = vld [vmem:[#allocation5 + $0x778] sm:$0xff]
    %v393 = vld [vmem:[#allocation5 + $0x780] sm:$0xff]
    %v394 = vld [vmem:[#allocation5 + $0x788] sm:$0xff]
    %v395 = vld [vmem:[#allocation5 + $0x790] sm:$0xff]
    %v396 = vld [vmem:[#allocation5 + $0x798] sm:$0xff]
    %v397 = vld [vmem:[#allocation5 + $0x7a0] sm:$0xff]
    %v398 = vld [vmem:[#allocation5 + $0x7a8] sm:$0xff]
    %v399 = vld [vmem:[#allocation5 + $0x7b0] sm:$0xff]
    %v400 = vld [vmem:[#allocation5 + $0x7b8] sm:$0xff]
    %v401 = vld [vmem:[#allocation5 + $0x7c0] sm:$0xff]
    %v402 = vld [vmem:[#allocation5 + $0x7c8] sm:$0xff]
    %v403 = vld [vmem:[#allocation5 + $0x7d0] sm:$0xff]
    %v404 = vld [vmem:[#allocation5 + $0x7d8] sm:$0xff]
    %v405 = vld [vmem:[#allocation5 + $0x7e0] sm:$0xff]
    %v406 = vld [vmem:[#allocation5 + $0x7e8] sm:$0xff]
    %v407 = vld [vmem:[#allocation5 + $0x7f0] sm:$0xff]
    %v408 = vld [vmem:[#allocation5 + $0x7f8] sm:$0xff]
    %v409 = vld [vmem:[#allocation5 + $0x800] sm:$0xff]
    %v410 = vld [vmem:[#allocation5 + $0x808] sm:$0xff]
    %v411 = vld [vmem:[#allocation5 + $0x810] sm:$0xff]
    %v412 = vld [vmem:[#allocation5 + $0x818] sm:$0xff]
    %v413 = vld [vmem:[#allocation5 + $0x820] sm:$0xff]
    %v414 = vld [vmem:[#allocation5 + $0x828] sm:$0xff]
    %v415 = vld [vmem:[#allocation5 + $0x830] sm:$0xff]
    %v416 = vld [vmem:[#allocation5 + $0x838] sm:$0xff]
    %v417 = vld [vmem:[#allocation5 + $0x840] sm:$0xff]
    %v418 = vld [vmem:[#allocation5 + $0x848] sm:$0xff]
    %v419 = vld [vmem:[#allocation5 + $0x850] sm:$0xff]
    %v420 = vld [vmem:[#allocation5 + $0x858] sm:$0xff]
    %v421 = vld [vmem:[#allocation5 + $0x860] sm:$0xff]
    %v422 = vld [vmem:[#allocation5 + $0x868] sm:$0xff]
    %v423 = vld [vmem:[#allocation5 + $0x870] sm:$0xff]
    %v424 = vld [vmem:[#allocation5 + $0x878] sm:$0xff]
    %v425 = vld [vmem:[#allocation5 + $0x880] sm:$0xff]
    %v426 = vld [vmem:[#allocation5 + $0x888] sm:$0xff]
    %v427 = vld [vmem:[#allocation5 + $0x890] sm:$0xff]
    %v428 = vld [vmem:[#allocation5 + $0x898] sm:$0xff]
    %v429 = vld [vmem:[#allocation5 + $0x8a0] sm:$0xff]
    %v430 = vld [vmem:[#allocation5 + $0x8a8] sm:$0xff]
    %v431 = vld [vmem:[#allocation5 + $0x8b0] sm:$0xff]
    %v432 = vld [vmem:[#allocation5 + $0x8b8] sm:$0xff]
    %v433 = vld [vmem:[#allocation5 + $0x8c0] sm:$0xff]
    %v434 = vld [vmem:[#allocation5 + $0x8c8] sm:$0xff]
    %v435 = vld [vmem:[#allocation5 + $0x8d0] sm:$0xff]
    %v436 = vld [vmem:[#allocation5 + $0x8d8] sm:$0xff]
    %v437 = vld [vmem:[#allocation5 + $0x8e0] sm:$0xff]
    %v438 = vld [vmem:[#allocation5 + $0x8e8] sm:$0xff]
    %v439 = vld [vmem:[#allocation5 + $0x8f0] sm:$0xff]
    %v440 = vld [vmem:[#allocation5 + $0x8f8] sm:$0xff]
    %v441 = vld [vmem:[#allocation5 + $0x900] sm:$0xff]
    %v442 = vld [vmem:[#allocation5 + $0x908] sm:$0xff]
    %v443 = vld [vmem:[#allocation5 + $0x910] sm:$0xff]
    %v444 = vld [vmem:[#allocation5 + $0x918] sm:$0xff]
    %v445 = vld [vmem:[#allocation5 + $0x920] sm:$0xff]
    %v446 = vld [vmem:[#allocation5 + $0x928] sm:$0xff]
    %v447 = vld [vmem:[#allocation5 + $0x930] sm:$0xff]
    %v448 = vld [vmem:[#allocation5 + $0x938] sm:$0xff]
    %v449 = vld [vmem:[#allocation5 + $0x940] sm:$0xff]
    %v450 = vld [vmem:[#allocation5 + $0x948] sm:$0xff]
    %v451 = vld [vmem:[#allocation5 + $0x950] sm:$0xff]
    %v452 = vld [vmem:[#allocation5 + $0x958] sm:$0xff]
    %v453 = vld [vmem:[#allocation5 + $0x960] sm:$0xff]
    %v454 = vld [vmem:[#allocation5 + $0x968] sm:$0xff]
    %v455 = vld [vmem:[#allocation5 + $0x970] sm:$0xff]
    %v456 = vld [vmem:[#allocation5 + $0x978] sm:$0xff]
    %v457 = vld [vmem:[#allocation5 + $0x980] sm:$0xff]
    %v458 = vld [vmem:[#allocation5 + $0x988] sm:$0xff]
    %v459 = vld [vmem:[#allocation5 + $0x990] sm:$0xff]
    %v460 = vld [vmem:[#allocation5 + $0x998] sm:$0xff]
    %v461 = vld [vmem:[#allocation5 + $0x9a0] sm:$0xff]
    %v462 = vld [vmem:[#allocation5 + $0x9a8] sm:$0xff]
    %v463 = vld [vmem:[#allocation5 + $0x9b0] sm:$0xff]
    %v464 = vld [vmem:[#allocation5 + $0x9b8] sm:$0xff]
    %v465 = vld [vmem:[#allocation5 + $0x9c0] sm:$0xff]
    %v466 = vld [vmem:[#allocation5 + $0x9c8] sm:$0xff]
    %v467 = vld [vmem:[#allocation5 + $0x9d0] sm:$0xff]
    %v468 = vld [vmem:[#allocation5 + $0x9d8] sm:$0xff]
    %v469 = vld [vmem:[#allocation5 + $0x9e0] sm:$0xff]
    %v470 = vld [vmem:[#allocation5 + $0x9e8] sm:$0xff]
    %v471 = vld [vmem:[#allocation5 + $0x9f0] sm:$0xff]
    %v472 = vld [vmem:[#allocation5 + $0x9f8] sm:$0xff]
    %v473 = vld [vmem:[#allocation5 + $0xa00] sm:$0xff]
    %v474 = vld [vmem:[#allocation5 + $0xa08] sm:$0xff]
    %v475 = vld [vmem:[#allocation5 + $0xa10] sm:$0xff]
    %v476 = vld [vmem:[#allocation5 + $0xa18] sm:$0xff]
    %v477 = vld [vmem:[#allocation5 + $0xa20] sm:$0xff]
    %v478 = vld [vmem:[#allocation5 + $0xa28] sm:$0xff]
    %v479 = vld [vmem:[#allocation5 + $0xa30] sm:$0xff]
    %v480 = vld [vmem:[#allocation5 + $0xa38] sm:$0xff]
    %v481 = vld [vmem:[#allocation5 + $0xa40] sm:$0xff]
    %v482 = vld [vmem:[#allocation5 + $0xa48] sm:$0xff]
    %v483 = vld [vmem:[#allocation5 + $0xa50] sm:$0xff]
    %v484 = vld [vmem:[#allocation5 + $0xa58] sm:$0xff]
    %v485 = vld [vmem:[#allocation5 + $0xa60] sm:$0xff]
    %v486 = vld [vmem:[#allocation5 + $0xa68] sm:$0xff]
    %v487 = vld [vmem:[#allocation5 + $0xa70] sm:$0xff]
    %v488 = vld [vmem:[#allocation5 + $0xa78] sm:$0xff]
    %v489 = vld [vmem:[#allocation5 + $0xa80] sm:$0xff]
    %v490 = vld [vmem:[#allocation5 + $0xa88] sm:$0xff]
    %v491 = vld [vmem:[#allocation5 + $0xa90] sm:$0xff]
    %v492 = vld [vmem:[#allocation5 + $0xa98] sm:$0xff]
    %v493 = vld [vmem:[#allocation5 + $0xaa0] sm:$0xff]
    %v494 = vld [vmem:[#allocation5 + $0xaa8] sm:$0xff]
    %v495 = vld [vmem:[#allocation5 + $0xab0] sm:$0xff]
    %v496 = vld [vmem:[#allocation5 + $0xab8] sm:$0xff]
    %v497 = vld [vmem:[#allocation5 + $0xac0] sm:$0xff]
    %v498 = vld [vmem:[#allocation5 + $0xac8] sm:$0xff]
    %v499 = vld [vmem:[#allocation5 + $0xad0] sm:$0xff]
    %v500 = vld [vmem:[#allocation5 + $0xad8] sm:$0xff]
    %v501 = vld [vmem:[#allocation5 + $0xae0] sm:$0xff]
    %v502 = vld [vmem:[#allocation5 + $0xae8] sm:$0xff]
    %v503 = vld [vmem:[#allocation5 + $0xaf0] sm:$0xff]
    %v504 = vld [vmem:[#allocation5 + $0xaf8] sm:$0xff]
    %v505 = vld [vmem:[#allocation5 + $0xb00] sm:$0xff]
    %v506 = vld [vmem:[#allocation5 + $0xb08] sm:$0xff]
    %v507 = vld [vmem:[#allocation5 + $0xb10] sm:$0xff]
    %v508 = vld [vmem:[#allocation5 + $0xb18] sm:$0xff]
    %v509 = vld [vmem:[#allocation5 + $0xb20] sm:$0xff]
    %v510 = vld [vmem:[#allocation5 + $0xb28] sm:$0xff]
    %v511 = vld [vmem:[#allocation5 + $0xb30] sm:$0xff]
    %v512 = vld [vmem:[#allocation5 + $0xb38] sm:$0xff]
    %v513 = vld [vmem:[#allocation5 + $0xb40] sm:$0xff]
    %v514 = vld [vmem:[#allocation5 + $0xb48] sm:$0xff]
    %v515 = vld [vmem:[#allocation5 + $0xb50] sm:$0xff]
    %v516 = vld [vmem:[#allocation5 + $0xb58] sm:$0xff]
    %v517 = vld [vmem:[#allocation5 + $0xb60] sm:$0xff]
    %v518 = vld [vmem:[#allocation5 + $0xb68] sm:$0xff]
    %v519 = vld [vmem:[#allocation5 + $0xb70] sm:$0xff]
    %v520 = vld [vmem:[#allocation5 + $0xb78] sm:$0xff]
    %v521 = vld [vmem:[#allocation5 + $0xb80] sm:$0xff]
    %v522 = vld [vmem:[#allocation5 + $0xb88] sm:$0xff]
    %v523 = vld [vmem:[#allocation5 + $0xb90] sm:$0xff]
    %v524 = vld [vmem:[#allocation5 + $0xb98] sm:$0xff]
    %v525 = vld [vmem:[#allocation5 + $0xba0] sm:$0xff]
    %v526 = vld [vmem:[#allocation5 + $0xba8] sm:$0xff]
    %v527 = vld [vmem:[#allocation5 + $0xbb0] sm:$0xff]
    %v528 = vld [vmem:[#allocation5 + $0xbb8] sm:$0xff]
    %v529 = vld [vmem:[#allocation5 + $0xbc0] sm:$0xff]
    %v530 = vld [vmem:[#allocation5 + $0xbc8] sm:$0xff]
    %v531 = vld [vmem:[#allocation5 + $0xbd0] sm:$0xff]
    %v532 = vld [vmem:[#allocation5 + $0xbd8] sm:$0xff]
    %v533 = vld [vmem:[#allocation5 + $0xbe0] sm:$0xff]
    %v534 = vld [vmem:[#allocation5 + $0xbe8] sm:$0xff]
    %v535 = vld [vmem:[#allocation5 + $0xbf0] sm:$0xff]
    %v536 = vld [vmem:[#allocation5 + $0xbf8] sm:$0xff]
    %v537 = vld [vmem:[#allocation5 + $0xc00] sm:$0xff]
    %v538 = vld [vmem:[#allocation5 + $0xc08] sm:$0xff]
    %v539 = vld [vmem:[#allocation5 + $0xc10] sm:$0xff]
    %v540 = vld [vmem:[#allocation5 + $0xc18] sm:$0xff]
    %v541 = vld [vmem:[#allocation5 + $0xc20] sm:$0xff]
    %v542 = vld [vmem:[#allocation5 + $0xc28] sm:$0xff]
    %v543 = vld [vmem:[#allocation5 + $0xc30] sm:$0xff]
    %v544 = vld [vmem:[#allocation5 + $0xc38] sm:$0xff]
    %v545 = vld [vmem:[#allocation5 + $0xc40] sm:$0xff]
    %v546 = vld [vmem:[#allocation5 + $0xc48] sm:$0xff]
    %v547 = vld [vmem:[#allocation5 + $0xc50] sm:$0xff]
    %v548 = vld [vmem:[#allocation5 + $0xc58] sm:$0xff]
    %v549 = vld [vmem:[#allocation5 + $0xc60] sm:$0xff]
    %v550 = vld [vmem:[#allocation5 + $0xc68] sm:$0xff]
    %v551 = vld [vmem:[#allocation5 + $0xc70] sm:$0xff]
    %v552 = vld [vmem:[#allocation5 + $0xc78] sm:$0xff]
    %v553 = vld [vmem:[#allocation5 + $0xc80] sm:$0xff]
    %v554 = vld [vmem:[#allocation5 + $0xc88] sm:$0xff]
    %v555 = vld [vmem:[#allocation5 + $0xc90] sm:$0xff]
    %v556 = vld [vmem:[#allocation5 + $0xc98] sm:$0xff]
    %v557 = vld [vmem:[#allocation5 + $0xca0] sm:$0xff]
    %v558 = vld [vmem:[#allocation5 + $0xca8] sm:$0xff]
    %v559 = vld [vmem:[#allocation5 + $0xcb0] sm:$0xff]
    %v560 = vld [vmem:[#allocation5 + $0xcb8] sm:$0xff]
    %v561 = vld [vmem:[#allocation5 + $0xcc0] sm:$0xff]
    %v562 = vld [vmem:[#allocation5 + $0xcc8] sm:$0xff]
    %v563 = vld [vmem:[#allocation5 + $0xcd0] sm:$0xff]
    %v564 = vld [vmem:[#allocation5 + $0xcd8] sm:$0xff]
    %v565 = vld [vmem:[#allocation5 + $0xce0] sm:$0xff]
    %v566 = vld [vmem:[#allocation5 + $0xce8] sm:$0xff]
    %v567 = vld [vmem:[#allocation5 + $0xcf0] sm:$0xff]
    %v568 = vld [vmem:[#allocation5 + $0xcf8] sm:$0xff]
    %v569 = vld [vmem:[#allocation5 + $0xd00] sm:$0xff]
    %v570 = vld [vmem:[#allocation5 + $0xd08] sm:$0xff]
    %v571 = vld [vmem:[#allocation5 + $0xd10] sm:$0xff]
    %v572 = vld [vmem:[#allocation5 + $0xd18] sm:$0xff]
    %v573 = vld [vmem:[#allocation5 + $0xd20] sm:$0xff]
    %v574 = vld [vmem:[#allocation5 + $0xd28] sm:$0xff]
    %v575 = vld [vmem:[#allocation5 + $0xd30] sm:$0xff]
    %v576 = vld [vmem:[#allocation5 + $0xd38] sm:$0xff]
    %v577 = vld [vmem:[#allocation5 + $0xd40] sm:$0xff]
    %v578 = vld [vmem:[#allocation5 + $0xd48] sm:$0xff]
    %v579 = vld [vmem:[#allocation5 + $0xd50] sm:$0xff]
    %v580 = vld [vmem:[#allocation5 + $0xd58] sm:$0xff]
    %v581 = vld [vmem:[#allocation5 + $0xd60] sm:$0xff]
    %v582 = vld [vmem:[#allocation5 + $0xd68] sm:$0xff]
    %v583 = vld [vmem:[#allocation5 + $0xd70] sm:$0xff]
    %v584 = vld [vmem:[#allocation5 + $0xd78] sm:$0xff]
    %v585 = vld [vmem:[#allocation5 + $0xd80] sm:$0xff]
    %v586 = vld [vmem:[#allocation5 + $0xd88] sm:$0xff]
    %v587 = vld [vmem:[#allocation5 + $0xd90] sm:$0xff]
    %v588 = vld [vmem:[#allocation5 + $0xd98] sm:$0xff]
    %v589 = vld [vmem:[#allocation5 + $0xda0] sm:$0xff]
    %v590 = vld [vmem:[#allocation5 + $0xda8] sm:$0xff]
    %v591 = vld [vmem:[#allocation5 + $0xdb0] sm:$0xff]
    %v592 = vld [vmem:[#allocation5 + $0xdb8] sm:$0xff]
    %v593 = vld [vmem:[#allocation5 + $0xdc0] sm:$0xff]
    %v594 = vld [vmem:[#allocation5 + $0xdc8] sm:$0xff]
    %v595 = vld [vmem:[#allocation5 + $0xdd0] sm:$0xff]
    %v596 = vld [vmem:[#allocation5 + $0xdd8] sm:$0xff]
    %v597 = vld [vmem:[#allocation5 + $0xde0] sm:$0xff]
    %v598 = vld [vmem:[#allocation5 + $0xde8] sm:$0xff]
    %v599 = vld [vmem:[#allocation5 + $0xdf0] sm:$0xff]
    %v600 = vld [vmem:[#allocation5 + $0xdf8] sm:$0xff]
    %v601 = vld [vmem:[#allocation5 + $0xe00] sm:$0xff]
    %v602 = vld [vmem:[#allocation5 + $0xe08] sm:$0xff]
    %v603 = vld [vmem:[#allocation5 + $0xe10] sm:$0xff]
    %v604 = vld [vmem:[#allocation5 + $0xe18] sm:$0xff]
    %v605 = vld [vmem:[#allocation5 + $0xe20] sm:$0xff]
    %v606 = vld [vmem:[#allocation5 + $0xe28] sm:$0xff]
    %v607 = vld [vmem:[#allocation5 + $0xe30] sm:$0xff]
    %v608 = vld [vmem:[#allocation5 + $0xe38] sm:$0xff]
    %v609 = vld [vmem:[#allocation5 + $0xe40] sm:$0xff]
    %v610 = vld [vmem:[#allocation5 + $0xe48] sm:$0xff]
    %v611 = vld [vmem:[#allocation5 + $0xe50] sm:$0xff]
    %v612 = vld [vmem:[#allocation5 + $0xe58] sm:$0xff]
    %v613 = vld [vmem:[#allocation5 + $0xe60] sm:$0xff]
    %v614 = vld [vmem:[#allocation5 + $0xe68] sm:$0xff]
    %v615 = vld [vmem:[#allocation5 + $0xe70] sm:$0xff]
    %v616 = vld [vmem:[#allocation5 + $0xe78] sm:$0xff]
    %v617 = vld [vmem:[#allocation5 + $0xe80] sm:$0xff]
    %v618 = vld [vmem:[#allocation5 + $0xe88] sm:$0xff]
    %v619 = vld [vmem:[#allocation5 + $0xe90] sm:$0xff]
    %v620 = vld [vmem:[#allocation5 + $0xe98] sm:$0xff]
    %v621 = vld [vmem:[#allocation5 + $0xea0] sm:$0xff]
    %v622 = vld [vmem:[#allocation5 + $0xea8] sm:$0xff]
    %v623 = vld [vmem:[#allocation5 + $0xeb0] sm:$0xff]
    %v624 = vld [vmem:[#allocation5 + $0xeb8] sm:$0xff]
    %v625 = vld [vmem:[#allocation5 + $0xec0] sm:$0xff]
    %v626 = vld [vmem:[#allocation5 + $0xec8] sm:$0xff]
    %v627 = vld [vmem:[#allocation5 + $0xed0] sm:$0xff]
    %v628 = vld [vmem:[#allocation5 + $0xed8] sm:$0xff]
    %v629 = vld [vmem:[#allocation5 + $0xee0] sm:$0xff]
    %v630 = vld [vmem:[#allocation5 + $0xee8] sm:$0xff]
    %v631 = vld [vmem:[#allocation5 + $0xef0] sm:$0xff]
    %v632 = vld [vmem:[#allocation5 + $0xef8] sm:$0xff]
    %v633 = vld [vmem:[#allocation5 + $0xf00] sm:$0xff]
    %v634 = vld [vmem:[#allocation5 + $0xf08] sm:$0xff]
    %v635 = vld [vmem:[#allocation5 + $0xf10] sm:$0xff]
    %v636 = vld [vmem:[#allocation5 + $0xf18] sm:$0xff]
    %v637 = vld [vmem:[#allocation5 + $0xf20] sm:$0xff]
    %v638 = vld [vmem:[#allocation5 + $0xf28] sm:$0xff]
    %v639 = vld [vmem:[#allocation5 + $0xf30] sm:$0xff]
    %v640 = vld [vmem:[#allocation5 + $0xf38] sm:$0xff]
    %v641 = vld [vmem:[#allocation5 + $0xf40] sm:$0xff]
    %v642 = vld [vmem:[#allocation5 + $0xf48] sm:$0xff]
    %v643 = vld [vmem:[#allocation5 + $0xf50] sm:$0xff]
    %v644 = vld [vmem:[#allocation5 + $0xf58] sm:$0xff]
    %v645 = vld [vmem:[#allocation5 + $0xf60] sm:$0xff]
    %v646 = vld [vmem:[#allocation5 + $0xf68] sm:$0xff]
    %v647 = vld [vmem:[#allocation5 + $0xf70] sm:$0xff]
    %v648 = vld [vmem:[#allocation5 + $0xf78] sm:$0xff]
    %v649 = vld [vmem:[#allocation5 + $0xf80] sm:$0xff]
    %v650 = vld [vmem:[#allocation5 + $0xf88] sm:$0xff]
    %v651 = vld [vmem:[#allocation5 + $0xf90] sm:$0xff]
    %v652 = vld [vmem:[#allocation5 + $0xf98] sm:$0xff]
    %v653 = vld [vmem:[#allocation5 + $0xfa0] sm:$0xff]
    %v654 = vld [vmem:[#allocation5 + $0xfa8] sm:$0xff]
    %v655 = vld [vmem:[#allocation5 + $0xfb0] sm:$0xff]
    %v656 = vld [vmem:[#allocation5 + $0xfb8] sm:$0xff]
    %v657 = vld [vmem:[#allocation5 + $0xfc0] sm:$0xff]
    %v658 = vld [vmem:[#allocation5 + $0xfc8] sm:$0xff]
    %v659 = vld [vmem:[#allocation5 + $0xfd0] sm:$0xff]
    %v660 = vld [vmem:[#allocation5 + $0xfd8] sm:$0xff]
    %v661 = vld [vmem:[#allocation5 + $0xfe0] sm:$0xff]
    %v662 = vld [vmem:[#allocation5 + $0xfe8] sm:$0xff]
    %v663 = vld [vmem:[#allocation5 + $0xff0] sm:$0xff]
    %v664 = vld [vmem:[#allocation5 + $0xff8] sm:$0xff]
    %v665 = vld [vmem:[#allocation5 + $0x1000] sm:$0xff]
    %v666 = vld [vmem:[#allocation5 + $0x1008] sm:$0xff]
    %v667 = vld [vmem:[#allocation5 + $0x1010] sm:$0xff]
    %v668 = vld [vmem:[#allocation5 + $0x1018] sm:$0xff]
    %v669 = vld [vmem:[#allocation5 + $0x1020] sm:$0xff]
    %v670 = vld [vmem:[#allocation5 + $0x1028] sm:$0xff]
    %v671 = vld [vmem:[#allocation5 + $0x1030] sm:$0xff]
    %v672 = vld [vmem:[#allocation5 + $0x1038] sm:$0xff]
    %v673 = vld [vmem:[#allocation5 + $0x1040] sm:$0xff]
    %v674 = vld [vmem:[#allocation5 + $0x1048] sm:$0xff]
    %v675 = vld [vmem:[#allocation5 + $0x1050] sm:$0xff]
    %v676 = vld [vmem:[#allocation5 + $0x1058] sm:$0xff]
    %v677 = vld [vmem:[#allocation5 + $0x1060] sm:$0xff]
    %v678 = vld [vmem:[#allocation5 + $0x1068] sm:$0xff]
    %v679 = vld [vmem:[#allocation5 + $0x1070] sm:$0xff]
    %v680 = vld [vmem:[#allocation5 + $0x1078] sm:$0xff]
    %v681 = vld [vmem:[#allocation5 + $0x1080] sm:$0xff]
    %v682 = vld [vmem:[#allocation5 + $0x1088] sm:$0xff]
    %v683 = vld [vmem:[#allocation5 + $0x1090] sm:$0xff]
    %v684 = vld [vmem:[#allocation5 + $0x1098] sm:$0xff]
    %v685 = vld [vmem:[#allocation5 + $0x10a0] sm:$0xff]
    %v686 = vld [vmem:[#allocation5 + $0x10a8] sm:$0xff]
    %v687 = vld [vmem:[#allocation5 + $0x10b0] sm:$0xff]
    %v688 = vld [vmem:[#allocation5 + $0x10b8] sm:$0xff]
    %v689 = vld [vmem:[#allocation5 + $0x10c0] sm:$0xff]
    %v690 = vld [vmem:[#allocation5 + $0x10c8] sm:$0xff]
    %v691 = vld [vmem:[#allocation5 + $0x10d0] sm:$0xff]
    %v692 = vld [vmem:[#allocation5 + $0x10d8] sm:$0xff]
    %v693 = vld [vmem:[#allocation5 + $0x10e0] sm:$0xff]
    %v694 = vld [vmem:[#allocation5 + $0x10e8] sm:$0xff]
    %v695 = vld [vmem:[#allocation5 + $0x10f0] sm:$0xff]
    %v696 = vld [vmem:[#allocation5 + $0x10f8] sm:$0xff]
    %v697 = vld [vmem:[#allocation5 + $0x1100] sm:$0xff]
    %v698 = vld [vmem:[#allocation5 + $0x1108] sm:$0xff]
    %v699 = vld [vmem:[#allocation5 + $0x1110] sm:$0xff]
    %v700 = vld [vmem:[#allocation5 + $0x1118] sm:$0xff]
    %v701 = vld [vmem:[#allocation5 + $0x1120] sm:$0xff]
    %v702 = vld [vmem:[#allocation5 + $0x1128] sm:$0xff]
    %v703 = vld [vmem:[#allocation5 + $0x1130] sm:$0xff]
    %v704 = vld [vmem:[#allocation5 + $0x1138] sm:$0xff]
    %v705 = vld [vmem:[#allocation5 + $0x1140] sm:$0xff]
    %v706 = vld [vmem:[#allocation5 + $0x1148] sm:$0xff]
    %v707 = vld [vmem:[#allocation5 + $0x1150] sm:$0xff]
    %v708 = vld [vmem:[#allocation5 + $0x1158] sm:$0xff]
    %v709 = vld [vmem:[#allocation5 + $0x1160] sm:$0xff]
    %v710 = vld [vmem:[#allocation5 + $0x1168] sm:$0xff]
    %v711 = vld [vmem:[#allocation5 + $0x1170] sm:$0xff]
    %v712 = vld [vmem:[#allocation5 + $0x1178] sm:$0xff]
    %v713 = vld [vmem:[#allocation5 + $0x1180] sm:$0xff]
    %v714 = vld [vmem:[#allocation5 + $0x1188] sm:$0xff]
    %v715 = vld [vmem:[#allocation5 + $0x1190] sm:$0xff]
    %v716 = vld [vmem:[#allocation5 + $0x1198] sm:$0xff]
    %v717 = vld [vmem:[#allocation5 + $0x11a0] sm:$0xff]
    %v718 = vld [vmem:[#allocation5 + $0x11a8] sm:$0xff]
    %v719 = vld [vmem:[#allocation5 + $0x11b0] sm:$0xff]
    %v720 = vld [vmem:[#allocation5 + $0x11b8] sm:$0xff]
    %v721 = vld [vmem:[#allocation5 + $0x11c0] sm:$0xff]
    %v722 = vld [vmem:[#allocation5 + $0x11c8] sm:$0xff]
    %v723 = vld [vmem:[#allocation5 + $0x11d0] sm:$0xff]
    %v724 = vld [vmem:[#allocation5 + $0x11d8] sm:$0xff]
    %v725 = vld [vmem:[#allocation5 + $0x11e0] sm:$0xff]
    %v726 = vld [vmem:[#allocation5 + $0x11e8] sm:$0xff]
    %v727 = vld [vmem:[#allocation5 + $0x11f0] sm:$0xff]
    %v728 = vld [vmem:[#allocation5 + $0x11f8] sm:$0xff]
    %v729 = vld [vmem:[#allocation5 + $0x1200] sm:$0xff]
    %v730 = vld [vmem:[#allocation5 + $0x1208] sm:$0xff]
    %v731 = vld [vmem:[#allocation5 + $0x1210] sm:$0xff]
    %v732 = vld [vmem:[#allocation5 + $0x1218] sm:$0xff]
    %v733 = vld [vmem:[#allocation5 + $0x1220] sm:$0xff]
    %v734 = vld [vmem:[#allocation5 + $0x1228] sm:$0xff]
    %v735 = vld [vmem:[#allocation5 + $0x1230] sm:$0xff]
    %v736 = vld [vmem:[#allocation5 + $0x1238] sm:$0xff]
    %v737 = vld [vmem:[#allocation5 + $0x1240] sm:$0xff]
    %v738 = vld [vmem:[#allocation5 + $0x1248] sm:$0xff]
    %v739 = vld [vmem:[#allocation5 + $0x1250] sm:$0xff]
    %v740 = vld [vmem:[#allocation5 + $0x1258] sm:$0xff]
    %v741 = vld [vmem:[#allocation5 + $0x1260] sm:$0xff]
    %v742 = vld [vmem:[#allocation5 + $0x1268] sm:$0xff]
    %v743 = vld [vmem:[#allocation5 + $0x1270] sm:$0xff]
    %v744 = vld [vmem:[#allocation5 + $0x1278] sm:$0xff]
    %v745 = vld [vmem:[#allocation5 + $0x1280] sm:$0xff]
    %v746 = vld [vmem:[#allocation5 + $0x1288] sm:$0xff]
    %v747 = vld [vmem:[#allocation5 + $0x1290] sm:$0xff]
    %v748 = vld [vmem:[#allocation5 + $0x1298] sm:$0xff]
    %v749 = vld [vmem:[#allocation5 + $0x12a0] sm:$0xff]
    %v750 = vld [vmem:[#allocation5 + $0x12a8] sm:$0xff]
    %v751 = vld [vmem:[#allocation5 + $0x12b0] sm:$0xff]
    %v752 = vld [vmem:[#allocation5 + $0x12b8] sm:$0xff]
    %v753 = vld [vmem:[#allocation5 + $0x12c0] sm:$0xff]
    %v754 = vld [vmem:[#allocation5 + $0x12c8] sm:$0xff]
    %v755 = vld [vmem:[#allocation5 + $0x12d0] sm:$0xff]
    %v756 = vld [vmem:[#allocation5 + $0x12d8] sm:$0xff]
    %v757 = vld [vmem:[#allocation5 + $0x12e0] sm:$0xff]
    %v758 = vld [vmem:[#allocation5 + $0x12e8] sm:$0xff]
    %v759 = vld [vmem:[#allocation5 + $0x12f0] sm:$0xff]
    %v760 = vld [vmem:[#allocation5 + $0x12f8] sm:$0xff]
    %v761 = vld [vmem:[#allocation5 + $0x1300] sm:$0xff]
    %v762 = vld [vmem:[#allocation5 + $0x1308] sm:$0xff]
    %v763 = vld [vmem:[#allocation5 + $0x1310] sm:$0xff]
    %v764 = vld [vmem:[#allocation5 + $0x1318] sm:$0xff]
    %v765 = vld [vmem:[#allocation5 + $0x1320] sm:$0xff]
    %v766 = vld [vmem:[#allocation5 + $0x1328] sm:$0xff]
    %v767 = vld [vmem:[#allocation5 + $0x1330] sm:$0xff]
    %v768 = vld [vmem:[#allocation5 + $0x1338] sm:$0xff]
    %v769 = vld [vmem:[#allocation5 + $0x1340] sm:$0xff]
    %v770 = vld [vmem:[#allocation5 + $0x1348] sm:$0xff]
    %v771 = vld [vmem:[#allocation5 + $0x1350] sm:$0xff]
    %v772 = vld [vmem:[#allocation5 + $0x1358] sm:$0xff]
    %v773 = vld [vmem:[#allocation5 + $0x1360] sm:$0xff]
    %v774 = vld [vmem:[#allocation5 + $0x1368] sm:$0xff]
    %v775 = vld [vmem:[#allocation5 + $0x1370] sm:$0xff]
    %v776 = vld [vmem:[#allocation5 + $0x1378] sm:$0xff]
    %v777 = vld [vmem:[#allocation5 + $0x1380] sm:$0xff]
    %v778 = vld [vmem:[#allocation5 + $0x1388] sm:$0xff]
    %v779 = vld [vmem:[#allocation5 + $0x1390] sm:$0xff]
    %v780 = vld [vmem:[#allocation5 + $0x1398] sm:$0xff]
    %v781 = vld [vmem:[#allocation5 + $0x13a0] sm:$0xff]
    %v782 = vld [vmem:[#allocation5 + $0x13a8] sm:$0xff]
    %v783 = vld [vmem:[#allocation5 + $0x13b0] sm:$0xff]
    %v784 = vld [vmem:[#allocation5 + $0x13b8] sm:$0xff]
    %v785 = vld [vmem:[#allocation5 + $0x13c0] sm:$0xff]
    %v786 = vld [vmem:[#allocation5 + $0x13c8] sm:$0xff]
    %v787 = vld [vmem:[#allocation5 + $0x13d0] sm:$0xff]
    %v788 = vld [vmem:[#allocation5 + $0x13d8] sm:$0xff]
    %v789 = vld [vmem:[#allocation5 + $0x13e0] sm:$0xff]
    %v790 = vld [vmem:[#allocation5 + $0x13e8] sm:$0xff]
    %v791 = vld [vmem:[#allocation5 + $0x13f0] sm:$0xff]
    %v792 = vld [vmem:[#allocation5 + $0x13f8] sm:$0xff]
    %v793 = vld [vmem:[#allocation5 + $0x1400] sm:$0xff]
    %v794 = vld [vmem:[#allocation5 + $0x1408] sm:$0xff]
    %v795 = vld [vmem:[#allocation5 + $0x1410] sm:$0xff]
    %v796 = vld [vmem:[#allocation5 + $0x1418] sm:$0xff]
    %v797 = vld [vmem:[#allocation5 + $0x1420] sm:$0xff]
    %v798 = vld [vmem:[#allocation5 + $0x1428] sm:$0xff]
    %v799 = vld [vmem:[#allocation5 + $0x1430] sm:$0xff]
    %v800 = vld [vmem:[#allocation5 + $0x1438] sm:$0xff]
    %v801 = vld [vmem:[#allocation5 + $0x1440] sm:$0xff]
    %v802 = vld [vmem:[#allocation5 + $0x1448] sm:$0xff]
    %v803 = vld [vmem:[#allocation5 + $0x1450] sm:$0xff]
    %v804 = vld [vmem:[#allocation5 + $0x1458] sm:$0xff]
    %v805 = vld [vmem:[#allocation5 + $0x1460] sm:$0xff]
    %v806 = vld [vmem:[#allocation5 + $0x1468] sm:$0xff]
    %v807 = vld [vmem:[#allocation5 + $0x1470] sm:$0xff]
    %v808 = vld [vmem:[#allocation5 + $0x1478] sm:$0xff]
    %v809 = vld [vmem:[#allocation5 + $0x1480] sm:$0xff]
    %v810 = vld [vmem:[#allocation5 + $0x1488] sm:$0xff]
    %v811 = vld [vmem:[#allocation5 + $0x1490] sm:$0xff]
    %v812 = vld [vmem:[#allocation5 + $0x1498] sm:$0xff]
    %v813 = vld [vmem:[#allocation5 + $0x14a0] sm:$0xff]
    %v814 = vld [vmem:[#allocation5 + $0x14a8] sm:$0xff]
    %v815 = vld [vmem:[#allocation5 + $0x14b0] sm:$0xff]
    %v816 = vld [vmem:[#allocation5 + $0x14b8] sm:$0xff]
    %v817 = vld [vmem:[#allocation5 + $0x14c0] sm:$0xff]
    %v818 = vld [vmem:[#allocation5 + $0x14c8] sm:$0xff]
    %v819 = vld [vmem:[#allocation5 + $0x14d0] sm:$0xff]
    %v820 = vld [vmem:[#allocation5 + $0x14d8] sm:$0xff]
    %v821 = vld [vmem:[#allocation5 + $0x14e0] sm:$0xff]
    %v822 = vld [vmem:[#allocation5 + $0x14e8] sm:$0xff]
    %v823 = vld [vmem:[#allocation5 + $0x14f0] sm:$0xff]
    %v824 = vld [vmem:[#allocation5 + $0x14f8] sm:$0xff]
    %v825 = vld [vmem:[#allocation5 + $0x1500] sm:$0xff]
    %v826 = vld [vmem:[#allocation5 + $0x1508] sm:$0xff]
    %v827 = vld [vmem:[#allocation5 + $0x1510] sm:$0xff]
    %v828 = vld [vmem:[#allocation5 + $0x1518] sm:$0xff]
    %v829 = vld [vmem:[#allocation5 + $0x1520] sm:$0xff]
    %v830 = vld [vmem:[#allocation5 + $0x1528] sm:$0xff]
    %v831 = vld [vmem:[#allocation5 + $0x1530] sm:$0xff]
    %v832 = vld [vmem:[#allocation5 + $0x1538] sm:$0xff]
    %v833 = vld [vmem:[#allocation5 + $0x1540] sm:$0xff]
    %v834 = vld [vmem:[#allocation5 + $0x1548] sm:$0xff]
    %v835 = vld [vmem:[#allocation5 + $0x1550] sm:$0xff]
    %v836 = vld [vmem:[#allocation5 + $0x1558] sm:$0xff]
    %v837 = vld [vmem:[#allocation5 + $0x1560] sm:$0xff]
    %v838 = vld [vmem:[#allocation5 + $0x1568] sm:$0xff]
    %v839 = vld [vmem:[#allocation5 + $0x1570] sm:$0xff]
    %v840 = vld [vmem:[#allocation5 + $0x1578] sm:$0xff]
    %v841 = vld [vmem:[#allocation5 + $0x1580] sm:$0xff]
    %v842 = vld [vmem:[#allocation5 + $0x1588] sm:$0xff]
    %v843 = vld [vmem:[#allocation5 + $0x1590] sm:$0xff]
    %v844 = vld [vmem:[#allocation5 + $0x1598] sm:$0xff]
    %v845 = vld [vmem:[#allocation5 + $0x15a0] sm:$0xff]
    %v846 = vld [vmem:[#allocation5 + $0x15a8] sm:$0xff]
    %v847 = vld [vmem:[#allocation5 + $0x15b0] sm:$0xff]
    %v848 = vld [vmem:[#allocation5 + $0x15b8] sm:$0xff]
    %v849 = vld [vmem:[#allocation5 + $0x15c0] sm:$0xff]
    %v850 = vld [vmem:[#allocation5 + $0x15c8] sm:$0xff]
    %v851 = vld [vmem:[#allocation5 + $0x15d0] sm:$0xff]
    %v852 = vld [vmem:[#allocation5 + $0x15d8] sm:$0xff]
    %v853 = vld [vmem:[#allocation5 + $0x15e0] sm:$0xff]
    %v854 = vld [vmem:[#allocation5 + $0x15e8] sm:$0xff]
    %v855 = vld [vmem:[#allocation5 + $0x15f0] sm:$0xff]
    %v856 = vld [vmem:[#allocation5 + $0x15f8] sm:$0xff]
    %v857 = vld [vmem:[#allocation5 + $0x1600] sm:$0xff]
    %v858 = vld [vmem:[#allocation5 + $0x1608] sm:$0xff]
    %v859 = vld [vmem:[#allocation5 + $0x1610] sm:$0xff]
    %v860 = vld [vmem:[#allocation5 + $0x1618] sm:$0xff]
    %v861 = vld [vmem:[#allocation5 + $0x1620] sm:$0xff]
    %v862 = vld [vmem:[#allocation5 + $0x1628] sm:$0xff]
    %v863 = vld [vmem:[#allocation5 + $0x1630] sm:$0xff]
    %v864 = vld [vmem:[#allocation5 + $0x1638] sm:$0xff]
    %v865 = vld [vmem:[#allocation5 + $0x1640] sm:$0xff]
    %v866 = vld [vmem:[#allocation5 + $0x1648] sm:$0xff]
    %v867 = vld [vmem:[#allocation5 + $0x1650] sm:$0xff]
    %v868 = vld [vmem:[#allocation5 + $0x1658] sm:$0xff]
    %v869 = vld [vmem:[#allocation5 + $0x1660] sm:$0xff]
    %v870 = vld [vmem:[#allocation5 + $0x1668] sm:$0xff]
    %v871 = vld [vmem:[#allocation5 + $0x1670] sm:$0xff]
    %v872 = vld [vmem:[#allocation5 + $0x1678] sm:$0xff]
    %v873 = vld [vmem:[#allocation5 + $0x1680] sm:$0xff]
    %v874 = vld [vmem:[#allocation5 + $0x1688] sm:$0xff]
    %v875 = vld [vmem:[#allocation5 + $0x1690] sm:$0xff]
    %v876 = vld [vmem:[#allocation5 + $0x1698] sm:$0xff]
    %v877 = vld [vmem:[#allocation5 + $0x16a0] sm:$0xff]
    %v878 = vld [vmem:[#allocation5 + $0x16a8] sm:$0xff]
    %v879 = vld [vmem:[#allocation5 + $0x16b0] sm:$0xff]
    %v880 = vld [vmem:[#allocation5 + $0x16b8] sm:$0xff]
    %v881 = vld [vmem:[#allocation5 + $0x16c0] sm:$0xff]
    %v882 = vld [vmem:[#allocation5 + $0x16c8] sm:$0xff]
    %v883 = vld [vmem:[#allocation5 + $0x16d0] sm:$0xff]
    %v884 = vld [vmem:[#allocation5 + $0x16d8] sm:$0xff]
    %v885 = vld [vmem:[#allocation5 + $0x16e0] sm:$0xff]
    %v886 = vld [vmem:[#allocation5 + $0x16e8] sm:$0xff]
    %v887 = vld [vmem:[#allocation5 + $0x16f0] sm:$0xff]
    %v888 = vld [vmem:[#allocation5 + $0x16f8] sm:$0xff]
    %v889 = vld [vmem:[#allocation5 + $0x1700] sm:$0xff]
    %v890 = vld [vmem:[#allocation5 + $0x1708] sm:$0xff]
    %v891 = vld [vmem:[#allocation5 + $0x1710] sm:$0xff]
    %v892 = vld [vmem:[#allocation5 + $0x1718] sm:$0xff]
    %v893 = vld [vmem:[#allocation5 + $0x1720] sm:$0xff]
    %v894 = vld [vmem:[#allocation5 + $0x1728] sm:$0xff]
    %v895 = vld [vmem:[#allocation5 + $0x1730] sm:$0xff]
    %v896 = vld [vmem:[#allocation5 + $0x1738] sm:$0xff]
    %v897 = vld [vmem:[#allocation5 + $0x1740] sm:$0xff]
    %v898 = vld [vmem:[#allocation5 + $0x1748] sm:$0xff]
    %v899 = vld [vmem:[#allocation5 + $0x1750] sm:$0xff]
    %v900 = vld [vmem:[#allocation5 + $0x1758] sm:$0xff]
    %v901 = vld [vmem:[#allocation5 + $0x1760] sm:$0xff]
    %v902 = vld [vmem:[#allocation5 + $0x1768] sm:$0xff]
    %v903 = vld [vmem:[#allocation5 + $0x1770] sm:$0xff]
    %v904 = vld [vmem:[#allocation5 + $0x1778] sm:$0xff]
    %v905 = vld [vmem:[#allocation5 + $0x1780] sm:$0xff]
    %v906 = vld [vmem:[#allocation5 + $0x1788] sm:$0xff]
    %v907 = vld [vmem:[#allocation5 + $0x1790] sm:$0xff]
    %v908 = vld [vmem:[#allocation5 + $0x1798] sm:$0xff]
    %v909 = vld [vmem:[#allocation5 + $0x17a0] sm:$0xff]
    %v910 = vld [vmem:[#allocation5 + $0x17a8] sm:$0xff]
    %v911 = vld [vmem:[#allocation5 + $0x17b0] sm:$0xff]
    %v912 = vld [vmem:[#allocation5 + $0x17b8] sm:$0xff]
    %v913 = vld [vmem:[#allocation5 + $0x17c0] sm:$0xff]
    %v914 = vld [vmem:[#allocation5 + $0x17c8] sm:$0xff]
    %v915 = vld [vmem:[#allocation5 + $0x17d0] sm:$0xff]
    %v916 = vld [vmem:[#allocation5 + $0x17d8] sm:$0xff]
    %v917 = vld [vmem:[#allocation5 + $0x17e0] sm:$0xff]
    %v918 = vld [vmem:[#allocation5 + $0x17e8] sm:$0xff]
    %v919 = vld [vmem:[#allocation5 + $0x17f0] sm:$0xff]
    %v920 = vld [vmem:[#allocation5 + $0x17f8] sm:$0xff]
    %v921 = vld [vmem:[#allocation5 + $0x1800] sm:$0xff]
    %v922 = vld [vmem:[#allocation5 + $0x1808] sm:$0xff]
    %v923 = vld [vmem:[#allocation5 + $0x1810] sm:$0xff]
    %v924 = vld [vmem:[#allocation5 + $0x1818] sm:$0xff]
    %v925 = vld [vmem:[#allocation5 + $0x1820] sm:$0xff]
    %v926 = vld [vmem:[#allocation5 + $0x1828] sm:$0xff]
    %v927 = vld [vmem:[#allocation5 + $0x1830] sm:$0xff]
    %v928 = vld [vmem:[#allocation5 + $0x1838] sm:$0xff]
    %v929 = vld [vmem:[#allocation5 + $0x1840] sm:$0xff]
    %v930 = vld [vmem:[#allocation5 + $0x1848] sm:$0xff]
    %v931 = vld [vmem:[#allocation5 + $0x1850] sm:$0xff]
    %v932 = vld [vmem:[#allocation5 + $0x1858] sm:$0xff]
    %v933 = vld [vmem:[#allocation5 + $0x1860] sm:$0xff]
    %v934 = vld [vmem:[#allocation5 + $0x1868] sm:$0xff]
    %v935 = vld [vmem:[#allocation5 + $0x1870] sm:$0xff]
    %v936 = vld [vmem:[#allocation5 + $0x1878] sm:$0xff]
    %v937 = vld [vmem:[#allocation5 + $0x1880] sm:$0xff]
    %v938 = vld [vmem:[#allocation5 + $0x1888] sm:$0xff]
    %v939 = vld [vmem:[#allocation5 + $0x1890] sm:$0xff]
    %v940 = vld [vmem:[#allocation5 + $0x1898] sm:$0xff]
    %v941 = vld [vmem:[#allocation5 + $0x18a0] sm:$0xff]
    %v942 = vld [vmem:[#allocation5 + $0x18a8] sm:$0xff]
    %v943 = vld [vmem:[#allocation5 + $0x18b0] sm:$0xff]
    %v944 = vld [vmem:[#allocation5 + $0x18b8] sm:$0xff]
    %v945 = vld [vmem:[#allocation5 + $0x18c0] sm:$0xff]
    %v946 = vld [vmem:[#allocation5 + $0x18c8] sm:$0xff]
    %v947 = vld [vmem:[#allocation5 + $0x18d0] sm:$0xff]
    %v948 = vld [vmem:[#allocation5 + $0x18d8] sm:$0xff]
    %v949 = vld [vmem:[#allocation5 + $0x18e0] sm:$0xff]
    %v950 = vld [vmem:[#allocation5 + $0x18e8] sm:$0xff]
    %v951 = vld [vmem:[#allocation5 + $0x18f0] sm:$0xff]
    %v952 = vld [vmem:[#allocation5 + $0x18f8] sm:$0xff]
    %v953 = vld [vmem:[#allocation5 + $0x1900] sm:$0xff]
    %v954 = vld [vmem:[#allocation5 + $0x1908] sm:$0xff]
    %v955 = vld [vmem:[#allocation5 + $0x1910] sm:$0xff]
    %v956 = vld [vmem:[#allocation5 + $0x1918] sm:$0xff]
    %v957 = vld [vmem:[#allocation5 + $0x1920] sm:$0xff]
    %v958 = vld [vmem:[#allocation5 + $0x1928] sm:$0xff]
    %v959 = vld [vmem:[#allocation5 + $0x1930] sm:$0xff]
    %v960 = vld [vmem:[#allocation5 + $0x1938] sm:$0xff]
    %v961 = vld [vmem:[#allocation5 + $0x1940] sm:$0xff]
    %v962 = vld [vmem:[#allocation5 + $0x1948] sm:$0xff]
    %v963 = vld [vmem:[#allocation5 + $0x1950] sm:$0xff]
    %v964 = vld [vmem:[#allocation5 + $0x1958] sm:$0xff]
    %v965 = vld [vmem:[#allocation5 + $0x1960] sm:$0xff]
    %v966 = vld [vmem:[#allocation5 + $0x1968] sm:$0xff]
    %v967 = vld [vmem:[#allocation5 + $0x1970] sm:$0xff]
    %v968 = vld [vmem:[#allocation5 + $0x1978] sm:$0xff]
    %v969 = vld [vmem:[#allocation5 + $0x1980] sm:$0xff]
    %v970 = vld [vmem:[#allocation5 + $0x1988] sm:$0xff]
    %v971 = vld [vmem:[#allocation5 + $0x1990] sm:$0xff]
    %v972 = vld [vmem:[#allocation5 + $0x1998] sm:$0xff]
    %v973 = vld [vmem:[#allocation5 + $0x19a0] sm:$0xff]
    %v974 = vld [vmem:[#allocation5 + $0x19a8] sm:$0xff]
    %v975 = vld [vmem:[#allocation5 + $0x19b0] sm:$0xff]
    %v976 = vld [vmem:[#allocation5 + $0x19b8] sm:$0xff]
    %v977 = vld [vmem:[#allocation5 + $0x19c0] sm:$0xff]
    %v978 = vld [vmem:[#allocation5 + $0x19c8] sm:$0xff]
    %v979 = vld [vmem:[#allocation5 + $0x19d0] sm:$0xff]
    %v980 = vld [vmem:[#allocation5 + $0x19d8] sm:$0xff]
    %v981 = vld [vmem:[#allocation5 + $0x19e0] sm:$0xff]
    %v982 = vld [vmem:[#allocation5 + $0x19e8] sm:$0xff]
    %v983 = vld [vmem:[#allocation5 + $0x19f0] sm:$0xff]
    %v984 = vld [vmem:[#allocation5 + $0x19f8] sm:$0xff]
    %v985 = vld [vmem:[#allocation5 + $0x1a00] sm:$0xff]
    %v986 = vld [vmem:[#allocation5 + $0x1a08] sm:$0xff]
    %v987 = vld [vmem:[#allocation5 + $0x1a10] sm:$0xff]
    %v988 = vld [vmem:[#allocation5 + $0x1a18] sm:$0xff]
    %v989 = vld [vmem:[#allocation5 + $0x1a20] sm:$0xff]
    %v990 = vld [vmem:[#allocation5 + $0x1a28] sm:$0xff]
    %v991 = vld [vmem:[#allocation5 + $0x1a30] sm:$0xff]
    %v992 = vld [vmem:[#allocation5 + $0x1a38] sm:$0xff]
    %v993 = vld [vmem:[#allocation5 + $0x1a40] sm:$0xff]
    %v994 = vld [vmem:[#allocation5 + $0x1a48] sm:$0xff]
    %v995 = vld [vmem:[#allocation5 + $0x1a50] sm:$0xff]
    %v996 = vld [vmem:[#allocation5 + $0x1a58] sm:$0xff]
    %v997 = vld [vmem:[#allocation5 + $0x1a60] sm:$0xff]
    %v998 = vld [vmem:[#allocation5 + $0x1a68] sm:$0xff]
    %v999 = vld [vmem:[#allocation5 + $0x1a70] sm:$0xff]
    %v1000 = vld [vmem:[#allocation5 + $0x1a78] sm:$0xff]
    %v1001 = vld [vmem:[#allocation5 + $0x1a80] sm:$0xff]
    %v1002 = vld [vmem:[#allocation5 + $0x1a88] sm:$0xff]
    %v1003 = vld [vmem:[#allocation5 + $0x1a90] sm:$0xff]
    %v1004 = vld [vmem:[#allocation5 + $0x1a98] sm:$0xff]
    %v1005 = vld [vmem:[#allocation5 + $0x1aa0] sm:$0xff]
    %v1006 = vld [vmem:[#allocation5 + $0x1aa8] sm:$0xff]
    %v1007 = vld [vmem:[#allocation5 + $0x1ab0] sm:$0xff]
    %v1008 = vld [vmem:[#allocation5 + $0x1ab8] sm:$0xff]
    %v1009 = vld [vmem:[#allocation5 + $0x1ac0] sm:$0xff]
    %v1010 = vld [vmem:[#allocation5 + $0x1ac8] sm:$0xff]
    %v1011 = vld [vmem:[#allocation5 + $0x1ad0] sm:$0xff]
    %v1012 = vld [vmem:[#allocation5 + $0x1ad8] sm:$0xff]
    %v1013 = vld [vmem:[#allocation5 + $0x1ae0] sm:$0xff]
    %v1014 = vld [vmem:[#allocation5 + $0x1ae8] sm:$0xff]
    %v1015 = vld [vmem:[#allocation5 + $0x1af0] sm:$0xff]
    %v1016 = vld [vmem:[#allocation5 + $0x1af8] sm:$0xff]
    %v1017 = vld [vmem:[#allocation5 + $0x1b00] sm:$0xff]
    %v1018 = vld [vmem:[#allocation5 + $0x1b08] sm:$0xff]
    %v1019 = vld [vmem:[#allocation5 + $0x1b10] sm:$0xff]
    %v1020 = vld [vmem:[#allocation5 + $0x1b18] sm:$0xff]
    %v1021 = vld [vmem:[#allocation5 + $0x1b20] sm:$0xff]
    %v1022 = vld [vmem:[#allocation5 + $0x1b28] sm:$0xff]
    %v1023 = vld [vmem:[#allocation5 + $0x1b30] sm:$0xff]
    %v1024 = vld [vmem:[#allocation5 + $0x1b38] sm:$0xff]
    %v1025 = vld [vmem:[#allocation5 + $0x1b40] sm:$0xff]
    %v1026 = vld [vmem:[#allocation5 + $0x1b48] sm:$0xff]
    %v1027 = vld [vmem:[#allocation5 + $0x1b50] sm:$0xff]
    %v1028 = vld [vmem:[#allocation5 + $0x1b58] sm:$0xff]
    %v1029 = vld [vmem:[#allocation5 + $0x1b60] sm:$0xff]
    %v1030 = vld [vmem:[#allocation5 + $0x1b68] sm:$0xff]
    %v1031 = vld [vmem:[#allocation5 + $0x1b70] sm:$0xff]
    %v1032 = vld [vmem:[#allocation5 + $0x1b78] sm:$0xff]
    %v1033 = vld [vmem:[#allocation5 + $0x1b80] sm:$0xff]
    %v1034 = vld [vmem:[#allocation5 + $0x1b88] sm:$0xff]
    %v1035 = vld [vmem:[#allocation5 + $0x1b90] sm:$0xff]
    %v1036 = vld [vmem:[#allocation5 + $0x1b98] sm:$0xff]
    %v1037 = vld [vmem:[#allocation5 + $0x1ba0] sm:$0xff]
    %v1038 = vld [vmem:[#allocation5 + $0x1ba8] sm:$0xff]
    %v1039 = vld [vmem:[#allocation5 + $0x1bb0] sm:$0xff]
    %v1040 = vld [vmem:[#allocation5 + $0x1bb8] sm:$0xff]
    %v1041 = vld [vmem:[#allocation5 + $0x1bc0] sm:$0xff]
    %v1042 = vld [vmem:[#allocation5 + $0x1bc8] sm:$0xff]
    %v1043 = vld [vmem:[#allocation5 + $0x1bd0] sm:$0xff]
    %v1044 = vld [vmem:[#allocation5 + $0x1bd8] sm:$0xff]
    %v1045 = vld [vmem:[#allocation5 + $0x1be0] sm:$0xff]
    %v1046 = vld [vmem:[#allocation5 + $0x1be8] sm:$0xff]
    %v1047 = vld [vmem:[#allocation5 + $0x1bf0] sm:$0xff]
    %v1048 = vld [vmem:[#allocation5 + $0x1bf8] sm:$0xff]
    %v1049 = vld [vmem:[#allocation5 + $0x1c00] sm:$0xff]
    %v1050 = vld [vmem:[#allocation5 + $0x1c08] sm:$0xff]
    %v1051 = vld [vmem:[#allocation5 + $0x1c10] sm:$0xff]
    %v1052 = vld [vmem:[#allocation5 + $0x1c18] sm:$0xff]
    %v1053 = vld [vmem:[#allocation5 + $0x1c20] sm:$0xff]
    %v1054 = vld [vmem:[#allocation5 + $0x1c28] sm:$0xff]
    %v1055 = vld [vmem:[#allocation5 + $0x1c30] sm:$0xff]
    %v1056 = vld [vmem:[#allocation5 + $0x1c38] sm:$0xff]
    %v1057 = vld [vmem:[#allocation5 + $0x1c40] sm:$0xff]
    %v1058 = vld [vmem:[#allocation5 + $0x1c48] sm:$0xff]
    %v1059 = vld [vmem:[#allocation5 + $0x1c50] sm:$0xff]
    %v1060 = vld [vmem:[#allocation5 + $0x1c58] sm:$0xff]
    %v1061 = vld [vmem:[#allocation5 + $0x1c60] sm:$0xff]
    %v1062 = vld [vmem:[#allocation5 + $0x1c68] sm:$0xff]
    %v1063 = vld [vmem:[#allocation5 + $0x1c70] sm:$0xff]
    %v1064 = vld [vmem:[#allocation5 + $0x1c78] sm:$0xff]
    %v1065 = vld [vmem:[#allocation5 + $0x1c80] sm:$0xff]
    %v1066 = vld [vmem:[#allocation5 + $0x1c88] sm:$0xff]
    %v1067 = vld [vmem:[#allocation5 + $0x1c90] sm:$0xff]
    %v1068 = vld [vmem:[#allocation5 + $0x1c98] sm:$0xff]
    %v1069 = vld [vmem:[#allocation5 + $0x1ca0] sm:$0xff]
    %v1070 = vld [vmem:[#allocation5 + $0x1ca8] sm:$0xff]
    %v1071 = vld [vmem:[#allocation5 + $0x1cb0] sm:$0xff]
    %v1072 = vld [vmem:[#allocation5 + $0x1cb8] sm:$0xff]
    %v1073 = vld [vmem:[#allocation5 + $0x1cc0] sm:$0xff]
    %v1074 = vld [vmem:[#allocation5 + $0x1cc8] sm:$0xff]
    %v1075 = vld [vmem:[#allocation5 + $0x1cd0] sm:$0xff]
    %v1076 = vld [vmem:[#allocation5 + $0x1cd8] sm:$0xff]
    %v1077 = vld [vmem:[#allocation5 + $0x1ce0] sm:$0xff]
    %v1078 = vld [vmem:[#allocation5 + $0x1ce8] sm:$0xff]
    %v1079 = vld [vmem:[#allocation5 + $0x1cf0] sm:$0xff]
    %v1080 = vld [vmem:[#allocation5 + $0x1cf8] sm:$0xff]
    %v1081 = vld [vmem:[#allocation5 + $0x1d00] sm:$0xff]
    %v1082 = vld [vmem:[#allocation5 + $0x1d08] sm:$0xff]
    %v1083 = vld [vmem:[#allocation5 + $0x1d10] sm:$0xff]
    %v1084 = vld [vmem:[#allocation5 + $0x1d18] sm:$0xff]
    %v1085 = vld [vmem:[#allocation5 + $0x1d20] sm:$0xff]
    %v1086 = vld [vmem:[#allocation5 + $0x1d28] sm:$0xff]
    %v1087 = vld [vmem:[#allocation5 + $0x1d30] sm:$0xff]
    %v1088 = vld [vmem:[#allocation5 + $0x1d38] sm:$0xff]
    %v1089 = vld [vmem:[#allocation5 + $0x1d40] sm:$0xff]
    %v1090 = vld [vmem:[#allocation5 + $0x1d48] sm:$0xff]
    %v1091 = vld [vmem:[#allocation5 + $0x1d50] sm:$0xff]
    %v1092 = vld [vmem:[#allocation5 + $0x1d58] sm:$0xff]
    %v1093 = vld [vmem:[#allocation5 + $0x1d60] sm:$0xff]
    %v1094 = vld [vmem:[#allocation5 + $0x1d68] sm:$0xff]
    %v1095 = vld [vmem:[#allocation5 + $0x1d70] sm:$0xff]
    %v1096 = vld [vmem:[#allocation5 + $0x1d78] sm:$0xff]
    %v1097 = vld [vmem:[#allocation5 + $0x1d80] sm:$0xff]
    %v1098 = vld [vmem:[#allocation5 + $0x1d88] sm:$0xff]
    %v1099 = vld [vmem:[#allocation5 + $0x1d90] sm:$0xff]
    %v1100 = vld [vmem:[#allocation5 + $0x1d98] sm:$0xff]
    %v1101 = vld [vmem:[#allocation5 + $0x1da0] sm:$0xff]
    %v1102 = vld [vmem:[#allocation5 + $0x1da8] sm:$0xff]
    %v1103 = vld [vmem:[#allocation5 + $0x1db0] sm:$0xff]
    %v1104 = vld [vmem:[#allocation5 + $0x1db8] sm:$0xff]
    %v1105 = vld [vmem:[#allocation5 + $0x1dc0] sm:$0xff]
    %v1106 = vld [vmem:[#allocation5 + $0x1dc8] sm:$0xff]
    %v1107 = vld [vmem:[#allocation5 + $0x1dd0] sm:$0xff]
    %v1108 = vld [vmem:[#allocation5 + $0x1dd8] sm:$0xff]
    %v1109 = vld [vmem:[#allocation5 + $0x1de0] sm:$0xff]
    %v1110 = vld [vmem:[#allocation5 + $0x1de8] sm:$0xff]
    %v1111 = vld [vmem:[#allocation5 + $0x1df0] sm:$0xff]
    %v1112 = vld [vmem:[#allocation5 + $0x1df8] sm:$0xff]
    %v1113 = vld [vmem:[#allocation5 + $0x1e00] sm:$0xff]
    %v1114 = vld [vmem:[#allocation5 + $0x1e08] sm:$0xff]
    %v1115 = vld [vmem:[#allocation5 + $0x1e10] sm:$0xff]
    %v1116 = vld [vmem:[#allocation5 + $0x1e18] sm:$0xff]
    %v1117 = vld [vmem:[#allocation5 + $0x1e20] sm:$0xff]
    %v1118 = vld [vmem:[#allocation5 + $0x1e28] sm:$0xff]
    %v1119 = vld [vmem:[#allocation5 + $0x1e30] sm:$0xff]
    %v1120 = vld [vmem:[#allocation5 + $0x1e38] sm:$0xff]
    %v1121 = vld [vmem:[#allocation5 + $0x1e40] sm:$0xff]
    %v1122 = vld [vmem:[#allocation5 + $0x1e48] sm:$0xff]
    %v1123 = vld [vmem:[#allocation5 + $0x1e50] sm:$0xff]
    %v1124 = vld [vmem:[#allocation5 + $0x1e58] sm:$0xff]
    %v1125 = vld [vmem:[#allocation5 + $0x1e60] sm:$0xff]
    %v1126 = vld [vmem:[#allocation5 + $0x1e68] sm:$0xff]
    %v1127 = vld [vmem:[#allocation5 + $0x1e70] sm:$0xff]
    %v1128 = vld [vmem:[#allocation5 + $0x1e78] sm:$0xff]
    %v1129 = vld [vmem:[#allocation5 + $0x1e80] sm:$0xff]
    %v1130 = vld [vmem:[#allocation5 + $0x1e88] sm:$0xff]
    %v1131 = vld [vmem:[#allocation5 + $0x1e90] sm:$0xff]
    %v1132 = vld [vmem:[#allocation5 + $0x1e98] sm:$0xff]
    %v1133 = vld [vmem:[#allocation5 + $0x1ea0] sm:$0xff]
    %v1134 = vld [vmem:[#allocation5 + $0x1ea8] sm:$0xff]
    %v1135 = vld [vmem:[#allocation5 + $0x1eb0] sm:$0xff]
    %v1136 = vld [vmem:[#allocation5 + $0x1eb8] sm:$0xff]
    %v1137 = vld [vmem:[#allocation5 + $0x1ec0] sm:$0xff]
    %v1138 = vld [vmem:[#allocation5 + $0x1ec8] sm:$0xff]
    %v1139 = vld [vmem:[#allocation5 + $0x1ed0] sm:$0xff]
    %v1140 = vld [vmem:[#allocation5 + $0x1ed8] sm:$0xff]
    %v1141 = vld [vmem:[#allocation5 + $0x1ee0] sm:$0xff]
    %v1142 = vld [vmem:[#allocation5 + $0x1ee8] sm:$0xff]
    %v1143 = vld [vmem:[#allocation5 + $0x1ef0] sm:$0xff]
    %v1144 = vld [vmem:[#allocation5 + $0x1ef8] sm:$0xff]
    %v1145 = vld [vmem:[#allocation7] sm:$0xff]
    %v2138 = vunpack.c.l.b16 %v153
    %v2139 = vunpack.c.h.b16 %v153
    %v2140 = vunpack.c.l.b16 %v154
    %v2141 = vunpack.c.h.b16 %v154
    %v2142 = vunpack.c.l.b16 %v155
    %v2143 = vunpack.c.h.b16 %v155
    %v2144 = vunpack.c.l.b16 %v156
    %v2145 = vunpack.c.h.b16 %v156
    %v2146 = vunpack.c.l.b16 %v157
    %v2147 = vunpack.c.h.b16 %v157
    %v2148 = vunpack.c.l.b16 %v158
    %v2149 = vunpack.c.h.b16 %v158
    %v2150 = vunpack.c.l.b16 %v159
    %v2151 = vunpack.c.h.b16 %v159
    %v2152 = vunpack.c.l.b16 %v160
    %v2153 = vunpack.c.h.b16 %v160
    %v2154 = vunpack.c.l.b16 %v161
    %v2155 = vunpack.c.h.b16 %v161
    %v2156 = vunpack.c.l.b16 %v162
    %v2157 = vunpack.c.h.b16 %v162
    %v2158 = vunpack.c.l.b16 %v163
    %v2159 = vunpack.c.h.b16 %v163
    %v2160 = vunpack.c.l.b16 %v164
    %v2161 = vunpack.c.h.b16 %v164
    %v2162 = vunpack.c.l.b16 %v165
    %v2163 = vunpack.c.h.b16 %v165
    %v2164 = vunpack.c.l.b16 %v166
    %v2165 = vunpack.c.h.b16 %v166
    %v2166 = vunpack.c.l.b16 %v167
    %v2167 = vunpack.c.h.b16 %v167
    %v2168 = vunpack.c.l.b16 %v168
    %v2169 = vunpack.c.h.b16 %v168
    %v2170 = vunpack.c.l.b16 %v169
    %v2171 = vunpack.c.h.b16 %v169
    %v2172 = vunpack.c.l.b16 %v170
    %v2173 = vunpack.c.h.b16 %v170
    %v2174 = vunpack.c.l.b16 %v171
    %v2175 = vunpack.c.h.b16 %v171
    %v2176 = vunpack.c.l.b16 %v172
    %v2177 = vunpack.c.h.b16 %v172
    %v2178 = vunpack.c.l.b16 %v173
    %v2179 = vunpack.c.h.b16 %v173
    %v2180 = vunpack.c.l.b16 %v174
    %v2181 = vunpack.c.h.b16 %v174
    %v2182 = vunpack.c.l.b16 %v175
    %v2183 = vunpack.c.h.b16 %v175
    %v2184 = vunpack.c.l.b16 %v176
    %v2185 = vunpack.c.h.b16 %v176
    %v2186 = vunpack.c.l.b16 %v177
    %v2187 = vunpack.c.h.b16 %v177
    %v2188 = vunpack.c.l.b16 %v178
    %v2189 = vunpack.c.h.b16 %v178
    %v2190 = vunpack.c.l.b16 %v179
    %v2191 = vunpack.c.h.b16 %v179
    %v2192 = vunpack.c.l.b16 %v180
    %v2193 = vunpack.c.h.b16 %v180
    %v2194 = vunpack.c.l.b16 %v181
    %v2195 = vunpack.c.h.b16 %v181
    %v2196 = vunpack.c.l.b16 %v182
    %v2197 = vunpack.c.h.b16 %v182
    %v2198 = vunpack.c.l.b16 %v183
    %v2199 = vunpack.c.h.b16 %v183
    %v2200 = vunpack.c.l.b16 %v184
    %v2201 = vunpack.c.h.b16 %v184
    %v2202 = vunpack.c.l.b16 %v185
    %v2203 = vunpack.c.h.b16 %v185
    %v2204 = vunpack.c.l.b16 %v186
    %v2205 = vunpack.c.h.b16 %v186
    %v2206 = vunpack.c.l.b16 %v187
    %v2207 = vunpack.c.h.b16 %v187
    %v2208 = vunpack.c.l.b16 %v188
    %v2209 = vunpack.c.h.b16 %v188
    %v2210 = vunpack.c.l.b16 %v189
    %v2211 = vunpack.c.h.b16 %v189
    %v2212 = vunpack.c.l.b16 %v190
    %v2213 = vunpack.c.h.b16 %v190
    %v2214 = vunpack.c.l.b16 %v191
    %v2215 = vunpack.c.h.b16 %v191
    %v2216 = vunpack.c.l.b16 %v192
    %v2217 = vunpack.c.h.b16 %v192
    %v2218 = vunpack.c.l.b16 %v193
    %v2219 = vunpack.c.h.b16 %v193
    %v2220 = vunpack.c.l.b16 %v194
    %v2221 = vunpack.c.h.b16 %v194
    %v2222 = vunpack.c.l.b16 %v195
    %v2223 = vunpack.c.h.b16 %v195
    %v2224 = vunpack.c.l.b16 %v196
    %v2225 = vunpack.c.h.b16 %v196
    %v2226 = vunpack.c.l.b16 %v197
    %v2227 = vunpack.c.h.b16 %v197
    %v2228 = vunpack.c.l.b16 %v198
    %v2229 = vunpack.c.h.b16 %v198
    %v2230 = vunpack.c.l.b16 %v199
    %v2231 = vunpack.c.h.b16 %v199
    %v2232 = vunpack.c.l.b16 %v200
    %v2233 = vunpack.c.h.b16 %v200
    %v2234 = vunpack.c.l.b16 %v201
    %v2235 = vunpack.c.h.b16 %v201
    %v2236 = vunpack.c.l.b16 %v202
    %v2237 = vunpack.c.h.b16 %v202
    %v2238 = vunpack.c.l.b16 %v203
    %v2239 = vunpack.c.h.b16 %v203
    %v2240 = vunpack.c.l.b16 %v204
    %v2241 = vunpack.c.h.b16 %v204
    %v2242 = vunpack.c.l.b16 %v205
    %v2243 = vunpack.c.h.b16 %v205
    %v2244 = vunpack.c.l.b16 %v206
    %v2245 = vunpack.c.h.b16 %v206
    %v2246 = vunpack.c.l.b16 %v207
    %v2247 = vunpack.c.h.b16 %v207
    %v2248 = vunpack.c.l.b16 %v208
    %v2249 = vunpack.c.h.b16 %v208
    %v2250 = vunpack.c.l.b16 %v209
    %v2251 = vunpack.c.h.b16 %v209
    %v2252 = vunpack.c.l.b16 %v210
    %v2253 = vunpack.c.h.b16 %v210
    %v2254 = vunpack.c.l.b16 %v211
    %v2255 = vunpack.c.h.b16 %v211
    %v2256 = vunpack.c.l.b16 %v212
    %v2257 = vunpack.c.h.b16 %v212
    %v2258 = vunpack.c.l.b16 %v213
    %v2259 = vunpack.c.h.b16 %v213
    %v2260 = vunpack.c.l.b16 %v214
    %v2261 = vunpack.c.h.b16 %v214
    %v2262 = vunpack.c.l.b16 %v215
    %v2263 = vunpack.c.h.b16 %v215
    %v2264 = vunpack.c.l.b16 %v216
    %v2265 = vunpack.c.h.b16 %v216
    %v2266 = vunpack.c.l.b16 %v217
    %v2267 = vunpack.c.h.b16 %v217
    %v2268 = vunpack.c.l.b16 %v218
    %v2269 = vunpack.c.h.b16 %v218
    %v2270 = vunpack.c.l.b16 %v219
    %v2271 = vunpack.c.h.b16 %v219
    %v2272 = vunpack.c.l.b16 %v220
    %v2273 = vunpack.c.h.b16 %v220
    %v2274 = vunpack.c.l.b16 %v221
    %v2275 = vunpack.c.h.b16 %v221
    %v2276 = vunpack.c.l.b16 %v222
    %v2277 = vunpack.c.h.b16 %v222
    %v2278 = vunpack.c.l.b16 %v223
    %v2279 = vunpack.c.h.b16 %v223
    %v2280 = vunpack.c.l.b16 %v224
    %v2281 = vunpack.c.h.b16 %v224
    %v2282 = vunpack.c.l.b16 %v225
    %v2283 = vunpack.c.h.b16 %v225
    %v2284 = vunpack.c.l.b16 %v226
    %v2285 = vunpack.c.h.b16 %v226
    %v2286 = vunpack.c.l.b16 %v227
    %v2287 = vunpack.c.h.b16 %v227
    %v2288 = vunpack.c.l.b16 %v228
    %v2289 = vunpack.c.h.b16 %v228
    %v2290 = vunpack.c.l.b16 %v229
    %v2291 = vunpack.c.h.b16 %v229
    %v2292 = vunpack.c.l.b16 %v230
    %v2293 = vunpack.c.h.b16 %v230
    %v2294 = vunpack.c.l.b16 %v231
    %v2295 = vunpack.c.h.b16 %v231
    %v2296 = vunpack.c.l.b16 %v232
    %v2297 = vunpack.c.h.b16 %v232
    %v2298 = vunpack.c.l.b16 %v233
    %v2299 = vunpack.c.h.b16 %v233
    %v2300 = vunpack.c.l.b16 %v234
    %v2301 = vunpack.c.h.b16 %v234
    %v2302 = vunpack.c.l.b16 %v235
    %v2303 = vunpack.c.h.b16 %v235
    %v2304 = vunpack.c.l.b16 %v236
    %v2305 = vunpack.c.h.b16 %v236
    %v2306 = vunpack.c.l.b16 %v237
    %v2307 = vunpack.c.h.b16 %v237
    %v2308 = vunpack.c.l.b16 %v238
    %v2309 = vunpack.c.h.b16 %v238
    %v2310 = vunpack.c.l.b16 %v239
    %v2311 = vunpack.c.h.b16 %v239
    %v2312 = vunpack.c.l.b16 %v240
    %v2313 = vunpack.c.h.b16 %v240
    %v2314 = vunpack.c.l.b16 %v241
    %v2315 = vunpack.c.h.b16 %v241
    %v2316 = vunpack.c.l.b16 %v242
    %v2317 = vunpack.c.h.b16 %v242
    %v2318 = vunpack.c.l.b16 %v243
    %v2319 = vunpack.c.h.b16 %v243
    %v2320 = vunpack.c.l.b16 %v244
    %v2321 = vunpack.c.h.b16 %v244
    %v2322 = vunpack.c.l.b16 %v245
    %v2323 = vunpack.c.h.b16 %v245
    %v2324 = vunpack.c.l.b16 %v246
    %v2325 = vunpack.c.h.b16 %v246
    %v2326 = vunpack.c.l.b16 %v247
    %v2327 = vunpack.c.h.b16 %v247
    %v2328 = vunpack.c.l.b16 %v248
    %v2329 = vunpack.c.h.b16 %v248
    %v2330 = vunpack.c.l.b16 %v249
    %v2331 = vunpack.c.h.b16 %v249
    %v2332 = vunpack.c.l.b16 %v250
    %v2333 = vunpack.c.h.b16 %v250
    %v2334 = vunpack.c.l.b16 %v251
    %v2335 = vunpack.c.h.b16 %v251
    %v2336 = vunpack.c.l.b16 %v252
    %v2337 = vunpack.c.h.b16 %v252
    %v2338 = vunpack.c.l.b16 %v253
    %v2339 = vunpack.c.h.b16 %v253
    %v2340 = vunpack.c.l.b16 %v254
    %v2341 = vunpack.c.h.b16 %v254
    %v2342 = vunpack.c.l.b16 %v255
    %v2343 = vunpack.c.h.b16 %v255
    %v2344 = vunpack.c.l.b16 %v256
    %v2345 = vunpack.c.h.b16 %v256
    %v2346 = vunpack.c.l.b16 %v257
    %v2347 = vunpack.c.h.b16 %v257
    %v2348 = vunpack.c.l.b16 %v258
    %v2349 = vunpack.c.h.b16 %v258
    %v2350 = vunpack.c.l.b16 %v259
    %v2351 = vunpack.c.h.b16 %v259
    %v2352 = vunpack.c.l.b16 %v260
    %v2353 = vunpack.c.h.b16 %v260
    %v2354 = vunpack.c.l.b16 %v261
    %v2355 = vunpack.c.h.b16 %v261
    %v2356 = vunpack.c.l.b16 %v262
    %v2357 = vunpack.c.h.b16 %v262
    %v2358 = vunpack.c.l.b16 %v263
    %v2359 = vunpack.c.h.b16 %v263
    %v2360 = vunpack.c.l.b16 %v264
    %v2361 = vunpack.c.h.b16 %v264
    %v2362 = vunpack.c.l.b16 %v265
    %v2363 = vunpack.c.h.b16 %v265
    %v2364 = vunpack.c.l.b16 %v266
    %v2365 = vunpack.c.h.b16 %v266
    %v2366 = vunpack.c.l.b16 %v267
    %v2367 = vunpack.c.h.b16 %v267
    %v2368 = vunpack.c.l.b16 %v268
    %v2369 = vunpack.c.h.b16 %v268
    %v2370 = vunpack.c.l.b16 %v269
    %v2371 = vunpack.c.h.b16 %v269
    %v2372 = vunpack.c.l.b16 %v270
    %v2373 = vunpack.c.h.b16 %v270
    %v2374 = vunpack.c.l.b16 %v271
    %v2375 = vunpack.c.h.b16 %v271
    %v2376 = vunpack.c.l.b16 %v272
    %v2377 = vunpack.c.h.b16 %v272
    %v2378 = vunpack.c.l.b16 %v273
    %v2379 = vunpack.c.h.b16 %v273
    %v2380 = vunpack.c.l.b16 %v274
    %v2381 = vunpack.c.h.b16 %v274
    %v2382 = vunpack.c.l.b16 %v275
    %v2383 = vunpack.c.h.b16 %v275
    %v2384 = vunpack.c.l.b16 %v276
    %v2385 = vunpack.c.h.b16 %v276
    %v2386 = vunpack.c.l.b16 %v277
    %v2387 = vunpack.c.h.b16 %v277
    %v2388 = vunpack.c.l.b16 %v278
    %v2389 = vunpack.c.h.b16 %v278
    %v2390 = vunpack.c.l.b16 %v279
    %v2391 = vunpack.c.h.b16 %v279
    %v2392 = vunpack.c.l.b16 %v280
    %v2393 = vunpack.c.h.b16 %v280
    %v2394 = vunpack.c.l.b16 %v281
    %v2395 = vunpack.c.h.b16 %v281
    %v2396 = vunpack.c.l.b16 %v282
    %v2397 = vunpack.c.h.b16 %v282
    %v2398 = vunpack.c.l.b16 %v283
    %v2399 = vunpack.c.h.b16 %v283
    %v2400 = vunpack.c.l.b16 %v284
    %v2401 = vunpack.c.h.b16 %v284
    %v2402 = vunpack.c.l.b16 %v285
    %v2403 = vunpack.c.h.b16 %v285
    %v2404 = vunpack.c.l.b16 %v286
    %v2405 = vunpack.c.h.b16 %v286
    %v2406 = vunpack.c.l.b16 %v287
    %v2407 = vunpack.c.h.b16 %v287
    %v2408 = vunpack.c.l.b16 %v288
    %v2409 = vunpack.c.h.b16 %v288
    %v2410 = vunpack.c.l.b16 %v289
    %v2411 = vunpack.c.h.b16 %v289
    %v2412 = vunpack.c.l.b16 %v290
    %v2413 = vunpack.c.h.b16 %v290
    %v2414 = vunpack.c.l.b16 %v291
    %v2415 = vunpack.c.h.b16 %v291
    %v2416 = vunpack.c.l.b16 %v292
    %v2417 = vunpack.c.h.b16 %v292
    %v2418 = vunpack.c.l.b16 %v293
    %v2419 = vunpack.c.h.b16 %v293
    %v2420 = vunpack.c.l.b16 %v294
    %v2421 = vunpack.c.h.b16 %v294
    %v2422 = vunpack.c.l.b16 %v295
    %v2423 = vunpack.c.h.b16 %v295
    %v2424 = vunpack.c.l.b16 %v296
    %v2425 = vunpack.c.h.b16 %v296
    %v2426 = vunpack.c.l.b16 %v297
    %v2427 = vunpack.c.h.b16 %v297
    %v2428 = vunpack.c.l.b16 %v298
    %v2429 = vunpack.c.h.b16 %v298
    %v2430 = vunpack.c.l.b16 %v299
    %v2431 = vunpack.c.h.b16 %v299
    %v2432 = vunpack.c.l.b16 %v300
    %v2433 = vunpack.c.h.b16 %v300
    %v2434 = vunpack.c.l.b16 %v301
    %v2435 = vunpack.c.h.b16 %v301
    %v2436 = vunpack.c.l.b16 %v302
    %v2437 = vunpack.c.h.b16 %v302
    %v2438 = vunpack.c.l.b16 %v303
    %v2439 = vunpack.c.h.b16 %v303
    %v2440 = vunpack.c.l.b16 %v304
    %v2441 = vunpack.c.h.b16 %v304
    %v2442 = vunpack.c.l.b16 %v305
    %v2443 = vunpack.c.h.b16 %v305
    %v2444 = vunpack.c.l.b16 %v306
    %v2445 = vunpack.c.h.b16 %v306
    %v2446 = vunpack.c.l.b16 %v307
    %v2447 = vunpack.c.h.b16 %v307
    %v2448 = vunpack.c.l.b16 %v308
    %v2449 = vunpack.c.h.b16 %v308
    %v2450 = vunpack.c.l.b16 %v309
    %v2451 = vunpack.c.h.b16 %v309
    %v2452 = vunpack.c.l.b16 %v310
    %v2453 = vunpack.c.h.b16 %v310
    %v2454 = vunpack.c.l.b16 %v311
    %v2455 = vunpack.c.h.b16 %v311
    %v2456 = vunpack.c.l.b16 %v312
    %v2457 = vunpack.c.h.b16 %v312
    %v2458 = vunpack.c.l.b16 %v313
    %v2459 = vunpack.c.h.b16 %v313
    %v2460 = vunpack.c.l.b16 %v314
    %v2461 = vunpack.c.h.b16 %v314
    %v2462 = vunpack.c.l.b16 %v315
    %v2463 = vunpack.c.h.b16 %v315
    %v2464 = vunpack.c.l.b16 %v316
    %v2465 = vunpack.c.h.b16 %v316
    %v2466 = vunpack.c.l.b16 %v317
    %v2467 = vunpack.c.h.b16 %v317
    %v2468 = vunpack.c.l.b16 %v318
    %v2469 = vunpack.c.h.b16 %v318
    %v2470 = vunpack.c.l.b16 %v319
    %v2471 = vunpack.c.h.b16 %v319
    %v2472 = vunpack.c.l.b16 %v320
    %v2473 = vunpack.c.h.b16 %v320
    %v2474 = vunpack.c.l.b16 %v321
    %v2475 = vunpack.c.h.b16 %v321
    %v2476 = vunpack.c.l.b16 %v322
    %v2477 = vunpack.c.h.b16 %v322
    %v2478 = vunpack.c.l.b16 %v323
    %v2479 = vunpack.c.h.b16 %v323
    %v2480 = vunpack.c.l.b16 %v324
    %v2481 = vunpack.c.h.b16 %v324
    %v2482 = vunpack.c.l.b16 %v325
    %v2483 = vunpack.c.h.b16 %v325
    %v2484 = vunpack.c.l.b16 %v326
    %v2485 = vunpack.c.h.b16 %v326
    %v2486 = vunpack.c.l.b16 %v327
    %v2487 = vunpack.c.h.b16 %v327
    %v2488 = vunpack.c.l.b16 %v328
    %v2489 = vunpack.c.h.b16 %v328
    %v2490 = vunpack.c.l.b16 %v329
    %v2491 = vunpack.c.h.b16 %v329
    %v2492 = vunpack.c.l.b16 %v330
    %v2493 = vunpack.c.h.b16 %v330
    %v2494 = vunpack.c.l.b16 %v331
    %v2495 = vunpack.c.h.b16 %v331
    %v2496 = vunpack.c.l.b16 %v332
    %v2497 = vunpack.c.h.b16 %v332
    %v2498 = vunpack.c.l.b16 %v333
    %v2499 = vunpack.c.h.b16 %v333
    %v2500 = vunpack.c.l.b16 %v334
    %v2501 = vunpack.c.h.b16 %v334
    %v2502 = vunpack.c.l.b16 %v335
    %v2503 = vunpack.c.h.b16 %v335
    %v2504 = vunpack.c.l.b16 %v336
    %v2505 = vunpack.c.h.b16 %v336
    %v2506 = vunpack.c.l.b16 %v337
    %v2507 = vunpack.c.h.b16 %v337
    %v2508 = vunpack.c.l.b16 %v338
    %v2509 = vunpack.c.h.b16 %v338
    %v2510 = vunpack.c.l.b16 %v339
    %v2511 = vunpack.c.h.b16 %v339
    %v2512 = vunpack.c.l.b16 %v340
    %v2513 = vunpack.c.h.b16 %v340
    %v2514 = vunpack.c.l.b16 %v341
    %v2515 = vunpack.c.h.b16 %v341
    %v2516 = vunpack.c.l.b16 %v342
    %v2517 = vunpack.c.h.b16 %v342
    %v2518 = vunpack.c.l.b16 %v343
    %v2519 = vunpack.c.h.b16 %v343
    %v2520 = vunpack.c.l.b16 %v344
    %v2521 = vunpack.c.h.b16 %v344
    %v2522 = vunpack.c.l.b16 %v345
    %v2523 = vunpack.c.h.b16 %v345
    %v2524 = vunpack.c.l.b16 %v346
    %v2525 = vunpack.c.h.b16 %v346
    %v2526 = vunpack.c.l.b16 %v347
    %v2527 = vunpack.c.h.b16 %v347
    %v2528 = vunpack.c.l.b16 %v348
    %v2529 = vunpack.c.h.b16 %v348
    %v2530 = vunpack.c.l.b16 %v349
    %v2531 = vunpack.c.h.b16 %v349
    %v2532 = vunpack.c.l.b16 %v350
    %v2533 = vunpack.c.h.b16 %v350
    %v2534 = vunpack.c.l.b16 %v351
    %v2535 = vunpack.c.h.b16 %v351
    %v2536 = vunpack.c.l.b16 %v352
    %v2537 = vunpack.c.h.b16 %v352
    %v2538 = vunpack.c.l.b16 %v353
    %v2539 = vunpack.c.h.b16 %v353
    %v2540 = vunpack.c.l.b16 %v354
    %v2541 = vunpack.c.h.b16 %v354
    %v2542 = vunpack.c.l.b16 %v355
    %v2543 = vunpack.c.h.b16 %v355
    %v2544 = vunpack.c.l.b16 %v356
    %v2545 = vunpack.c.h.b16 %v356
    %v2546 = vunpack.c.l.b16 %v357
    %v2547 = vunpack.c.h.b16 %v357
    %v2548 = vunpack.c.l.b16 %v358
    %v2549 = vunpack.c.h.b16 %v358
    %v2550 = vunpack.c.l.b16 %v359
    %v2551 = vunpack.c.h.b16 %v359
    %v2552 = vunpack.c.l.b16 %v360
    %v2553 = vunpack.c.h.b16 %v360
    %v2554 = vunpack.c.l.b16 %v361
    %v2555 = vunpack.c.h.b16 %v361
    %v2556 = vunpack.c.l.b16 %v362
    %v2557 = vunpack.c.h.b16 %v362
    %v2558 = vunpack.c.l.b16 %v363
    %v2559 = vunpack.c.h.b16 %v363
    %v2560 = vunpack.c.l.b16 %v364
    %v2561 = vunpack.c.h.b16 %v364
    %v2562 = vunpack.c.l.b16 %v365
    %v2563 = vunpack.c.h.b16 %v365
    %v2564 = vunpack.c.l.b16 %v366
    %v2565 = vunpack.c.h.b16 %v366
    %v2566 = vunpack.c.l.b16 %v367
    %v2567 = vunpack.c.h.b16 %v367
    %v2568 = vunpack.c.l.b16 %v368
    %v2569 = vunpack.c.h.b16 %v368
    %v2570 = vunpack.c.l.b16 %v369
    %v2571 = vunpack.c.h.b16 %v369
    %v2572 = vunpack.c.l.b16 %v370
    %v2573 = vunpack.c.h.b16 %v370
    %v2574 = vunpack.c.l.b16 %v371
    %v2575 = vunpack.c.h.b16 %v371
    %v2576 = vunpack.c.l.b16 %v372
    %v2577 = vunpack.c.h.b16 %v372
    %v2578 = vunpack.c.l.b16 %v373
    %v2579 = vunpack.c.h.b16 %v373
    %v2580 = vunpack.c.l.b16 %v374
    %v2581 = vunpack.c.h.b16 %v374
    %v2582 = vunpack.c.l.b16 %v375
    %v2583 = vunpack.c.h.b16 %v375
    %v2584 = vunpack.c.l.b16 %v376
    %v2585 = vunpack.c.h.b16 %v376
    %v2586 = vunpack.c.l.b16 %v377
    %v2587 = vunpack.c.h.b16 %v377
    %v2588 = vunpack.c.l.b16 %v378
    %v2589 = vunpack.c.h.b16 %v378
    %v2590 = vunpack.c.l.b16 %v379
    %v2591 = vunpack.c.h.b16 %v379
    %v2592 = vunpack.c.l.b16 %v380
    %v2593 = vunpack.c.h.b16 %v380
    %v2594 = vunpack.c.l.b16 %v381
    %v2595 = vunpack.c.h.b16 %v381
    %v2596 = vunpack.c.l.b16 %v382
    %v2597 = vunpack.c.h.b16 %v382
    %v2598 = vunpack.c.l.b16 %v383
    %v2599 = vunpack.c.h.b16 %v383
    %v2600 = vunpack.c.l.b16 %v384
    %v2601 = vunpack.c.h.b16 %v384
    %v2602 = vunpack.c.l.b16 %v385
    %v2603 = vunpack.c.h.b16 %v385
    %v2604 = vunpack.c.l.b16 %v386
    %v2605 = vunpack.c.h.b16 %v386
    %v2606 = vunpack.c.l.b16 %v387
    %v2607 = vunpack.c.h.b16 %v387
    %v2608 = vunpack.c.l.b16 %v388
    %v2609 = vunpack.c.h.b16 %v388
    %v2610 = vunpack.c.l.b16 %v389
    %v2611 = vunpack.c.h.b16 %v389
    %v2612 = vunpack.c.l.b16 %v390
    %v2613 = vunpack.c.h.b16 %v390
    %v2614 = vunpack.c.l.b16 %v391
    %v2615 = vunpack.c.h.b16 %v391
    %v2616 = vunpack.c.l.b16 %v392
    %v2617 = vunpack.c.h.b16 %v392
    %v2618 = vunpack.c.l.b16 %v393
    %v2619 = vunpack.c.h.b16 %v393
    %v2620 = vunpack.c.l.b16 %v394
    %v2621 = vunpack.c.h.b16 %v394
    %v2622 = vunpack.c.l.b16 %v395
    %v2623 = vunpack.c.h.b16 %v395
    %v2624 = vunpack.c.l.b16 %v396
    %v2625 = vunpack.c.h.b16 %v396
    %v2626 = vunpack.c.l.b16 %v397
    %v2627 = vunpack.c.h.b16 %v397
    %v2628 = vunpack.c.l.b16 %v398
    %v2629 = vunpack.c.h.b16 %v398
    %v2630 = vunpack.c.l.b16 %v399
    %v2631 = vunpack.c.h.b16 %v399
    %v2632 = vunpack.c.l.b16 %v400
    %v2633 = vunpack.c.h.b16 %v400
    %v2634 = vunpack.c.l.b16 %v401
    %v2635 = vunpack.c.h.b16 %v401
    %v2636 = vunpack.c.l.b16 %v402
    %v2637 = vunpack.c.h.b16 %v402
    %v2638 = vunpack.c.l.b16 %v403
    %v2639 = vunpack.c.h.b16 %v403
    %v2640 = vunpack.c.l.b16 %v404
    %v2641 = vunpack.c.h.b16 %v404
    %v2642 = vunpack.c.l.b16 %v405
    %v2643 = vunpack.c.h.b16 %v405
    %v2644 = vunpack.c.l.b16 %v406
    %v2645 = vunpack.c.h.b16 %v406
    %v2646 = vunpack.c.l.b16 %v407
    %v2647 = vunpack.c.h.b16 %v407
    %v2648 = vunpack.c.l.b16 %v408
    %v2649 = vunpack.c.h.b16 %v408
    %v2650 = vunpack.c.l.b16 %v409
    %v2651 = vunpack.c.h.b16 %v409
    %v2652 = vunpack.c.l.b16 %v410
    %v2653 = vunpack.c.h.b16 %v410
    %v2654 = vunpack.c.l.b16 %v411
    %v2655 = vunpack.c.h.b16 %v411
    %v2656 = vunpack.c.l.b16 %v412
    %v2657 = vunpack.c.h.b16 %v412
    %v2658 = vunpack.c.l.b16 %v413
    %v2659 = vunpack.c.h.b16 %v413
    %v2660 = vunpack.c.l.b16 %v414
    %v2661 = vunpack.c.h.b16 %v414
    %v2662 = vunpack.c.l.b16 %v415
    %v2663 = vunpack.c.h.b16 %v415
    %v2664 = vunpack.c.l.b16 %v416
    %v2665 = vunpack.c.h.b16 %v416
    %v2666 = vunpack.c.l.b16 %v417
    %v2667 = vunpack.c.h.b16 %v417
    %v2668 = vunpack.c.l.b16 %v418
    %v2669 = vunpack.c.h.b16 %v418
    %v2670 = vunpack.c.l.b16 %v419
    %v2671 = vunpack.c.h.b16 %v419
    %v2672 = vunpack.c.l.b16 %v420
    %v2673 = vunpack.c.h.b16 %v420
    %v2674 = vunpack.c.l.b16 %v421
    %v2675 = vunpack.c.h.b16 %v421
    %v2676 = vunpack.c.l.b16 %v422
    %v2677 = vunpack.c.h.b16 %v422
    %v2678 = vunpack.c.l.b16 %v423
    %v2679 = vunpack.c.h.b16 %v423
    %v2680 = vunpack.c.l.b16 %v424
    %v2681 = vunpack.c.h.b16 %v424
    %v2682 = vunpack.c.l.b16 %v425
    %v2683 = vunpack.c.h.b16 %v425
    %v2684 = vunpack.c.l.b16 %v426
    %v2685 = vunpack.c.h.b16 %v426
    %v2686 = vunpack.c.l.b16 %v427
    %v2687 = vunpack.c.h.b16 %v427
    %v2688 = vunpack.c.l.b16 %v428
    %v2689 = vunpack.c.h.b16 %v428
    %v2690 = vunpack.c.l.b16 %v429
    %v2691 = vunpack.c.h.b16 %v429
    %v2692 = vunpack.c.l.b16 %v430
    %v2693 = vunpack.c.h.b16 %v430
    %v2694 = vunpack.c.l.b16 %v431
    %v2695 = vunpack.c.h.b16 %v431
    %v2696 = vunpack.c.l.b16 %v432
    %v2697 = vunpack.c.h.b16 %v432
    %v2698 = vunpack.c.l.b16 %v433
    %v2699 = vunpack.c.h.b16 %v433
    %v2700 = vunpack.c.l.b16 %v434
    %v2701 = vunpack.c.h.b16 %v434
    %v2702 = vunpack.c.l.b16 %v435
    %v2703 = vunpack.c.h.b16 %v435
    %v2704 = vunpack.c.l.b16 %v436
    %v2705 = vunpack.c.h.b16 %v436
    %v2706 = vunpack.c.l.b16 %v437
    %v2707 = vunpack.c.h.b16 %v437
    %v2708 = vunpack.c.l.b16 %v438
    %v2709 = vunpack.c.h.b16 %v438
    %v2710 = vunpack.c.l.b16 %v439
    %v2711 = vunpack.c.h.b16 %v439
    %v2712 = vunpack.c.l.b16 %v440
    %v2713 = vunpack.c.h.b16 %v440
    %v2714 = vunpack.c.l.b16 %v441
    %v2715 = vunpack.c.h.b16 %v441
    %v2716 = vunpack.c.l.b16 %v442
    %v2717 = vunpack.c.h.b16 %v442
    %v2718 = vunpack.c.l.b16 %v443
    %v2719 = vunpack.c.h.b16 %v443
    %v2720 = vunpack.c.l.b16 %v444
    %v2721 = vunpack.c.h.b16 %v444
    %v2722 = vunpack.c.l.b16 %v445
    %v2723 = vunpack.c.h.b16 %v445
    %v2724 = vunpack.c.l.b16 %v446
    %v2725 = vunpack.c.h.b16 %v446
    %v2726 = vunpack.c.l.b16 %v447
    %v2727 = vunpack.c.h.b16 %v447
    %v2728 = vunpack.c.l.b16 %v448
    %v2729 = vunpack.c.h.b16 %v448
    %v2730 = vunpack.c.l.b16 %v449
    %v2731 = vunpack.c.h.b16 %v449
    %v2732 = vunpack.c.l.b16 %v450
    %v2733 = vunpack.c.h.b16 %v450
    %v2734 = vunpack.c.l.b16 %v451
    %v2735 = vunpack.c.h.b16 %v451
    %v2736 = vunpack.c.l.b16 %v452
    %v2737 = vunpack.c.h.b16 %v452
    %v2738 = vunpack.c.l.b16 %v453
    %v2739 = vunpack.c.h.b16 %v453
    %v2740 = vunpack.c.l.b16 %v454
    %v2741 = vunpack.c.h.b16 %v454
    %v2742 = vunpack.c.l.b16 %v455
    %v2743 = vunpack.c.h.b16 %v455
    %v2744 = vunpack.c.l.b16 %v456
    %v2745 = vunpack.c.h.b16 %v456
    %v2746 = vunpack.c.l.b16 %v457
    %v2747 = vunpack.c.h.b16 %v457
    %v2748 = vunpack.c.l.b16 %v458
    %v2749 = vunpack.c.h.b16 %v458
    %v2750 = vunpack.c.l.b16 %v459
    %v2751 = vunpack.c.h.b16 %v459
    %v2752 = vunpack.c.l.b16 %v460
    %v2753 = vunpack.c.h.b16 %v460
    %v2754 = vunpack.c.l.b16 %v461
    %v2755 = vunpack.c.h.b16 %v461
    %v2756 = vunpack.c.l.b16 %v462
    %v2757 = vunpack.c.h.b16 %v462
    %v2758 = vunpack.c.l.b16 %v463
    %v2759 = vunpack.c.h.b16 %v463
    %v2760 = vunpack.c.l.b16 %v464
    %v2761 = vunpack.c.h.b16 %v464
    %v2762 = vunpack.c.l.b16 %v465
    %v2763 = vunpack.c.h.b16 %v465
    %v2764 = vunpack.c.l.b16 %v466
    %v2765 = vunpack.c.h.b16 %v466
    %v2766 = vunpack.c.l.b16 %v467
    %v2767 = vunpack.c.h.b16 %v467
    %v2768 = vunpack.c.l.b16 %v468
    %v2769 = vunpack.c.h.b16 %v468
    %v2770 = vunpack.c.l.b16 %v469
    %v2771 = vunpack.c.h.b16 %v469
    %v2772 = vunpack.c.l.b16 %v470
    %v2773 = vunpack.c.h.b16 %v470
    %v2774 = vunpack.c.l.b16 %v471
    %v2775 = vunpack.c.h.b16 %v471
    %v2776 = vunpack.c.l.b16 %v472
    %v2777 = vunpack.c.h.b16 %v472
    %v2778 = vunpack.c.l.b16 %v473
    %v2779 = vunpack.c.h.b16 %v473
    %v2780 = vunpack.c.l.b16 %v474
    %v2781 = vunpack.c.h.b16 %v474
    %v2782 = vunpack.c.l.b16 %v475
    %v2783 = vunpack.c.h.b16 %v475
    %v2784 = vunpack.c.l.b16 %v476
    %v2785 = vunpack.c.h.b16 %v476
    %v2786 = vunpack.c.l.b16 %v477
    %v2787 = vunpack.c.h.b16 %v477
    %v2788 = vunpack.c.l.b16 %v478
    %v2789 = vunpack.c.h.b16 %v478
    %v2790 = vunpack.c.l.b16 %v479
    %v2791 = vunpack.c.h.b16 %v479
    %v2792 = vunpack.c.l.b16 %v480
    %v2793 = vunpack.c.h.b16 %v480
    %v2794 = vunpack.c.l.b16 %v481
    %v2795 = vunpack.c.h.b16 %v481
    %v2796 = vunpack.c.l.b16 %v482
    %v2797 = vunpack.c.h.b16 %v482
    %v2798 = vunpack.c.l.b16 %v483
    %v2799 = vunpack.c.h.b16 %v483
    %v2800 = vunpack.c.l.b16 %v484
    %v2801 = vunpack.c.h.b16 %v484
    %v2802 = vunpack.c.l.b16 %v485
    %v2803 = vunpack.c.h.b16 %v485
    %v2804 = vunpack.c.l.b16 %v486
    %v2805 = vunpack.c.h.b16 %v486
    %v2806 = vunpack.c.l.b16 %v487
    %v2807 = vunpack.c.h.b16 %v487
    %v2808 = vunpack.c.l.b16 %v488
    %v2809 = vunpack.c.h.b16 %v488
    %v2810 = vunpack.c.l.b16 %v489
    %v2811 = vunpack.c.h.b16 %v489
    %v2812 = vunpack.c.l.b16 %v490
    %v2813 = vunpack.c.h.b16 %v490
    %v2814 = vunpack.c.l.b16 %v491
    %v2815 = vunpack.c.h.b16 %v491
    %v2816 = vunpack.c.l.b16 %v492
    %v2817 = vunpack.c.h.b16 %v492
    %v2818 = vunpack.c.l.b16 %v493
    %v2819 = vunpack.c.h.b16 %v493
    %v2820 = vunpack.c.l.b16 %v494
    %v2821 = vunpack.c.h.b16 %v494
    %v2822 = vunpack.c.l.b16 %v495
    %v2823 = vunpack.c.h.b16 %v495
    %v2824 = vunpack.c.l.b16 %v496
    %v2825 = vunpack.c.h.b16 %v496
    %v2826 = vunpack.c.l.b16 %v497
    %v2827 = vunpack.c.h.b16 %v497
    %v2828 = vunpack.c.l.b16 %v498
    %v2829 = vunpack.c.h.b16 %v498
    %v2830 = vunpack.c.l.b16 %v499
    %v2831 = vunpack.c.h.b16 %v499
    %v2832 = vunpack.c.l.b16 %v500
    %v2833 = vunpack.c.h.b16 %v500
    %v2834 = vunpack.c.l.b16 %v501
    %v2835 = vunpack.c.h.b16 %v501
    %v2836 = vunpack.c.l.b16 %v502
    %v2837 = vunpack.c.h.b16 %v502
    %v2838 = vunpack.c.l.b16 %v503
    %v2839 = vunpack.c.h.b16 %v503
    %v2840 = vunpack.c.l.b16 %v504
    %v2841 = vunpack.c.h.b16 %v504
    %v2842 = vunpack.c.l.b16 %v505
    %v2843 = vunpack.c.h.b16 %v505
    %v2844 = vunpack.c.l.b16 %v506
    %v2845 = vunpack.c.h.b16 %v506
    %v2846 = vunpack.c.l.b16 %v507
    %v2847 = vunpack.c.h.b16 %v507
    %v2848 = vunpack.c.l.b16 %v508
    %v2849 = vunpack.c.h.b16 %v508
    %v2850 = vunpack.c.l.b16 %v509
    %v2851 = vunpack.c.h.b16 %v509
    %v2852 = vunpack.c.l.b16 %v510
    %v2853 = vunpack.c.h.b16 %v510
    %v2854 = vunpack.c.l.b16 %v511
    %v2855 = vunpack.c.h.b16 %v511
    %v2856 = vunpack.c.l.b16 %v512
    %v2857 = vunpack.c.h.b16 %v512
    %v2858 = vunpack.c.l.b16 %v513
    %v2859 = vunpack.c.h.b16 %v513
    %v2860 = vunpack.c.l.b16 %v514
    %v2861 = vunpack.c.h.b16 %v514
    %v2862 = vunpack.c.l.b16 %v515
    %v2863 = vunpack.c.h.b16 %v515
    %v2864 = vunpack.c.l.b16 %v516
    %v2865 = vunpack.c.h.b16 %v516
    %v2866 = vunpack.c.l.b16 %v517
    %v2867 = vunpack.c.h.b16 %v517
    %v2868 = vunpack.c.l.b16 %v518
    %v2869 = vunpack.c.h.b16 %v518
    %v2870 = vunpack.c.l.b16 %v519
    %v2871 = vunpack.c.h.b16 %v519
    %v2872 = vunpack.c.l.b16 %v520
    %v2873 = vunpack.c.h.b16 %v520
    %v2874 = vunpack.c.l.b16 %v521
    %v2875 = vunpack.c.h.b16 %v521
    %v2876 = vunpack.c.l.b16 %v522
    %v2877 = vunpack.c.h.b16 %v522
    %v2878 = vunpack.c.l.b16 %v523
    %v2879 = vunpack.c.h.b16 %v523
    %v2880 = vunpack.c.l.b16 %v524
    %v2881 = vunpack.c.h.b16 %v524
    %v2882 = vunpack.c.l.b16 %v525
    %v2883 = vunpack.c.h.b16 %v525
    %v2884 = vunpack.c.l.b16 %v526
    %v2885 = vunpack.c.h.b16 %v526
    %v2886 = vunpack.c.l.b16 %v527
    %v2887 = vunpack.c.h.b16 %v527
    %v2888 = vunpack.c.l.b16 %v528
    %v2889 = vunpack.c.h.b16 %v528
    %v2890 = vunpack.c.l.b16 %v529
    %v2891 = vunpack.c.h.b16 %v529
    %v2892 = vunpack.c.l.b16 %v530
    %v2893 = vunpack.c.h.b16 %v530
    %v2894 = vunpack.c.l.b16 %v531
    %v2895 = vunpack.c.h.b16 %v531
    %v2896 = vunpack.c.l.b16 %v532
    %v2897 = vunpack.c.h.b16 %v532
    %v2898 = vunpack.c.l.b16 %v533
    %v2899 = vunpack.c.h.b16 %v533
    %v2900 = vunpack.c.l.b16 %v534
    %v2901 = vunpack.c.h.b16 %v534
    %v2902 = vunpack.c.l.b16 %v535
    %v2903 = vunpack.c.h.b16 %v535
    %v2904 = vunpack.c.l.b16 %v536
    %v2905 = vunpack.c.h.b16 %v536
    %v2906 = vunpack.c.l.b16 %v537
    %v2907 = vunpack.c.h.b16 %v537
    %v2908 = vunpack.c.l.b16 %v538
    %v2909 = vunpack.c.h.b16 %v538
    %v2910 = vunpack.c.l.b16 %v539
    %v2911 = vunpack.c.h.b16 %v539
    %v2912 = vunpack.c.l.b16 %v540
    %v2913 = vunpack.c.h.b16 %v540
    %v2914 = vunpack.c.l.b16 %v541
    %v2915 = vunpack.c.h.b16 %v541
    %v2916 = vunpack.c.l.b16 %v542
    %v2917 = vunpack.c.h.b16 %v542
    %v2918 = vunpack.c.l.b16 %v543
    %v2919 = vunpack.c.h.b16 %v543
    %v2920 = vunpack.c.l.b16 %v544
    %v2921 = vunpack.c.h.b16 %v544
    %v2922 = vunpack.c.l.b16 %v545
    %v2923 = vunpack.c.h.b16 %v545
    %v2924 = vunpack.c.l.b16 %v546
    %v2925 = vunpack.c.h.b16 %v546
    %v2926 = vunpack.c.l.b16 %v547
    %v2927 = vunpack.c.h.b16 %v547
    %v2928 = vunpack.c.l.b16 %v548
    %v2929 = vunpack.c.h.b16 %v548
    %v2930 = vunpack.c.l.b16 %v549
    %v2931 = vunpack.c.h.b16 %v549
    %v2932 = vunpack.c.l.b16 %v550
    %v2933 = vunpack.c.h.b16 %v550
    %v2934 = vunpack.c.l.b16 %v551
    %v2935 = vunpack.c.h.b16 %v551
    %v2936 = vunpack.c.l.b16 %v552
    %v2937 = vunpack.c.h.b16 %v552
    %v2938 = vunpack.c.l.b16 %v553
    %v2939 = vunpack.c.h.b16 %v553
    %v2940 = vunpack.c.l.b16 %v554
    %v2941 = vunpack.c.h.b16 %v554
    %v2942 = vunpack.c.l.b16 %v555
    %v2943 = vunpack.c.h.b16 %v555
    %v2944 = vunpack.c.l.b16 %v556
    %v2945 = vunpack.c.h.b16 %v556
    %v2946 = vunpack.c.l.b16 %v557
    %v2947 = vunpack.c.h.b16 %v557
    %v2948 = vunpack.c.l.b16 %v558
    %v2949 = vunpack.c.h.b16 %v558
    %v2950 = vunpack.c.l.b16 %v559
    %v2951 = vunpack.c.h.b16 %v559
    %v2952 = vunpack.c.l.b16 %v560
    %v2953 = vunpack.c.h.b16 %v560
    %v2954 = vunpack.c.l.b16 %v561
    %v2955 = vunpack.c.h.b16 %v561
    %v2956 = vunpack.c.l.b16 %v562
    %v2957 = vunpack.c.h.b16 %v562
    %v2958 = vunpack.c.l.b16 %v563
    %v2959 = vunpack.c.h.b16 %v563
    %v2960 = vunpack.c.l.b16 %v564
    %v2961 = vunpack.c.h.b16 %v564
    %v2962 = vunpack.c.l.b16 %v565
    %v2963 = vunpack.c.h.b16 %v565
    %v2964 = vunpack.c.l.b16 %v566
    %v2965 = vunpack.c.h.b16 %v566
    %v2966 = vunpack.c.l.b16 %v567
    %v2967 = vunpack.c.h.b16 %v567
    %v2968 = vunpack.c.l.b16 %v568
    %v2969 = vunpack.c.h.b16 %v568
    %v2970 = vunpack.c.l.b16 %v569
    %v2971 = vunpack.c.h.b16 %v569
    %v2972 = vunpack.c.l.b16 %v570
    %v2973 = vunpack.c.h.b16 %v570
    %v2974 = vunpack.c.l.b16 %v571
    %v2975 = vunpack.c.h.b16 %v571
    %v2976 = vunpack.c.l.b16 %v572
    %v2977 = vunpack.c.h.b16 %v572
    %v2978 = vunpack.c.l.b16 %v573
    %v2979 = vunpack.c.h.b16 %v573
    %v2980 = vunpack.c.l.b16 %v574
    %v2981 = vunpack.c.h.b16 %v574
    %v2982 = vunpack.c.l.b16 %v575
    %v2983 = vunpack.c.h.b16 %v575
    %v2984 = vunpack.c.l.b16 %v576
    %v2985 = vunpack.c.h.b16 %v576
    %v2986 = vunpack.c.l.b16 %v577
    %v2987 = vunpack.c.h.b16 %v577
    %v2988 = vunpack.c.l.b16 %v578
    %v2989 = vunpack.c.h.b16 %v578
    %v2990 = vunpack.c.l.b16 %v579
    %v2991 = vunpack.c.h.b16 %v579
    %v2992 = vunpack.c.l.b16 %v580
    %v2993 = vunpack.c.h.b16 %v580
    %v2994 = vunpack.c.l.b16 %v581
    %v2995 = vunpack.c.h.b16 %v581
    %v2996 = vunpack.c.l.b16 %v582
    %v2997 = vunpack.c.h.b16 %v582
    %v2998 = vunpack.c.l.b16 %v583
    %v2999 = vunpack.c.h.b16 %v583
    %v3000 = vunpack.c.l.b16 %v584
    %v3001 = vunpack.c.h.b16 %v584
    %v3002 = vunpack.c.l.b16 %v585
    %v3003 = vunpack.c.h.b16 %v585
    %v3004 = vunpack.c.l.b16 %v586
    %v3005 = vunpack.c.h.b16 %v586
    %v3006 = vunpack.c.l.b16 %v587
    %v3007 = vunpack.c.h.b16 %v587
    %v3008 = vunpack.c.l.b16 %v588
    %v3009 = vunpack.c.h.b16 %v588
    %v3010 = vunpack.c.l.b16 %v589
    %v3011 = vunpack.c.h.b16 %v589
    %v3012 = vunpack.c.l.b16 %v590
    %v3013 = vunpack.c.h.b16 %v590
    %v3014 = vunpack.c.l.b16 %v591
    %v3015 = vunpack.c.h.b16 %v591
    %v3016 = vunpack.c.l.b16 %v592
    %v3017 = vunpack.c.h.b16 %v592
    %v3018 = vunpack.c.l.b16 %v593
    %v3019 = vunpack.c.h.b16 %v593
    %v3020 = vunpack.c.l.b16 %v594
    %v3021 = vunpack.c.h.b16 %v594
    %v3022 = vunpack.c.l.b16 %v595
    %v3023 = vunpack.c.h.b16 %v595
    %v3024 = vunpack.c.l.b16 %v596
    %v3025 = vunpack.c.h.b16 %v596
    %v3026 = vunpack.c.l.b16 %v597
    %v3027 = vunpack.c.h.b16 %v597
    %v3028 = vunpack.c.l.b16 %v598
    %v3029 = vunpack.c.h.b16 %v598
    %v3030 = vunpack.c.l.b16 %v599
    %v3031 = vunpack.c.h.b16 %v599
    %v3032 = vunpack.c.l.b16 %v600
    %v3033 = vunpack.c.h.b16 %v600
    %v3034 = vunpack.c.l.b16 %v601
    %v3035 = vunpack.c.h.b16 %v601
    %v3036 = vunpack.c.l.b16 %v602
    %v3037 = vunpack.c.h.b16 %v602
    %v3038 = vunpack.c.l.b16 %v603
    %v3039 = vunpack.c.h.b16 %v603
    %v3040 = vunpack.c.l.b16 %v604
    %v3041 = vunpack.c.h.b16 %v604
    %v3042 = vunpack.c.l.b16 %v605
    %v3043 = vunpack.c.h.b16 %v605
    %v3044 = vunpack.c.l.b16 %v606
    %v3045 = vunpack.c.h.b16 %v606
    %v3046 = vunpack.c.l.b16 %v607
    %v3047 = vunpack.c.h.b16 %v607
    %v3048 = vunpack.c.l.b16 %v608
    %v3049 = vunpack.c.h.b16 %v608
    %v3050 = vunpack.c.l.b16 %v609
    %v3051 = vunpack.c.h.b16 %v609
    %v3052 = vunpack.c.l.b16 %v610
    %v3053 = vunpack.c.h.b16 %v610
    %v3054 = vunpack.c.l.b16 %v611
    %v3055 = vunpack.c.h.b16 %v611
    %v3056 = vunpack.c.l.b16 %v612
    %v3057 = vunpack.c.h.b16 %v612
    %v3058 = vunpack.c.l.b16 %v613
    %v3059 = vunpack.c.h.b16 %v613
    %v3060 = vunpack.c.l.b16 %v614
    %v3061 = vunpack.c.h.b16 %v614
    %v3062 = vunpack.c.l.b16 %v615
    %v3063 = vunpack.c.h.b16 %v615
    %v3064 = vunpack.c.l.b16 %v616
    %v3065 = vunpack.c.h.b16 %v616
    %v3066 = vunpack.c.l.b16 %v617
    %v3067 = vunpack.c.h.b16 %v617
    %v3068 = vunpack.c.l.b16 %v618
    %v3069 = vunpack.c.h.b16 %v618
    %v3070 = vunpack.c.l.b16 %v619
    %v3071 = vunpack.c.h.b16 %v619
    %v3072 = vunpack.c.l.b16 %v620
    %v3073 = vunpack.c.h.b16 %v620
    %v3074 = vunpack.c.l.b16 %v621
    %v3075 = vunpack.c.h.b16 %v621
    %v3076 = vunpack.c.l.b16 %v622
    %v3077 = vunpack.c.h.b16 %v622
    %v3078 = vunpack.c.l.b16 %v623
    %v3079 = vunpack.c.h.b16 %v623
    %v3080 = vunpack.c.l.b16 %v624
    %v3081 = vunpack.c.h.b16 %v624
    %v3082 = vunpack.c.l.b16 %v625
    %v3083 = vunpack.c.h.b16 %v625
    %v3084 = vunpack.c.l.b16 %v626
    %v3085 = vunpack.c.h.b16 %v626
    %v3086 = vunpack.c.l.b16 %v627
    %v3087 = vunpack.c.h.b16 %v627
    %v3088 = vunpack.c.l.b16 %v628
    %v3089 = vunpack.c.h.b16 %v628
    %v3090 = vunpack.c.l.b16 %v629
    %v3091 = vunpack.c.h.b16 %v629
    %v3092 = vunpack.c.l.b16 %v630
    %v3093 = vunpack.c.h.b16 %v630
    %v3094 = vunpack.c.l.b16 %v631
    %v3095 = vunpack.c.h.b16 %v631
    %v3096 = vunpack.c.l.b16 %v632
    %v3097 = vunpack.c.h.b16 %v632
    %v3098 = vunpack.c.l.b16 %v633
    %v3099 = vunpack.c.h.b16 %v633
    %v3100 = vunpack.c.l.b16 %v634
    %v3101 = vunpack.c.h.b16 %v634
    %v3102 = vunpack.c.l.b16 %v635
    %v3103 = vunpack.c.h.b16 %v635
    %v3104 = vunpack.c.l.b16 %v636
    %v3105 = vunpack.c.h.b16 %v636
    %v3106 = vunpack.c.l.b16 %v637
    %v3107 = vunpack.c.h.b16 %v637
    %v3108 = vunpack.c.l.b16 %v638
    %v3109 = vunpack.c.h.b16 %v638
    %v3110 = vunpack.c.l.b16 %v639
    %v3111 = vunpack.c.h.b16 %v639
    %v3112 = vunpack.c.l.b16 %v640
    %v3113 = vunpack.c.h.b16 %v640
    %v3114 = vunpack.c.l.b16 %v641
    %v3115 = vunpack.c.h.b16 %v641
    %v3116 = vunpack.c.l.b16 %v642
    %v3117 = vunpack.c.h.b16 %v642
    %v3118 = vunpack.c.l.b16 %v643
    %v3119 = vunpack.c.h.b16 %v643
    %v3120 = vunpack.c.l.b16 %v644
    %v3121 = vunpack.c.h.b16 %v644
    %v3122 = vunpack.c.l.b16 %v645
    %v3123 = vunpack.c.h.b16 %v645
    %v3124 = vunpack.c.l.b16 %v646
    %v3125 = vunpack.c.h.b16 %v646
    %v3126 = vunpack.c.l.b16 %v647
    %v3127 = vunpack.c.h.b16 %v647
    %v3128 = vunpack.c.l.b16 %v648
    %v3129 = vunpack.c.h.b16 %v648
    %v3130 = vunpack.c.l.b16 %v649
    %v3131 = vunpack.c.h.b16 %v649
    %v3132 = vunpack.c.l.b16 %v650
    %v3133 = vunpack.c.h.b16 %v650
    %v3134 = vunpack.c.l.b16 %v651
    %v3135 = vunpack.c.h.b16 %v651
    %v3136 = vunpack.c.l.b16 %v652
    %v3137 = vunpack.c.h.b16 %v652
    %v3138 = vunpack.c.l.b16 %v653
    %v3139 = vunpack.c.h.b16 %v653
    %v3140 = vunpack.c.l.b16 %v654
    %v3141 = vunpack.c.h.b16 %v654
    %v3142 = vunpack.c.l.b16 %v655
    %v3143 = vunpack.c.h.b16 %v655
    %v3144 = vunpack.c.l.b16 %v656
    %v3145 = vunpack.c.h.b16 %v656
    %v3146 = vunpack.c.l.b16 %v657
    %v3147 = vunpack.c.h.b16 %v657
    %v3148 = vunpack.c.l.b16 %v658
    %v3149 = vunpack.c.h.b16 %v658
    %v3150 = vunpack.c.l.b16 %v659
    %v3151 = vunpack.c.h.b16 %v659
    %v3152 = vunpack.c.l.b16 %v660
    %v3153 = vunpack.c.h.b16 %v660
    %v3154 = vunpack.c.l.b16 %v661
    %v3155 = vunpack.c.h.b16 %v661
    %v3156 = vunpack.c.l.b16 %v662
    %v3157 = vunpack.c.h.b16 %v662
    %v3158 = vunpack.c.l.b16 %v663
    %v3159 = vunpack.c.h.b16 %v663
    %v3160 = vunpack.c.l.b16 %v664
    %v3161 = vunpack.c.h.b16 %v664
    %v3162 = vunpack.c.l.b16 %v665
    %v3163 = vunpack.c.h.b16 %v665
    %v3164 = vunpack.c.l.b16 %v666
    %v3165 = vunpack.c.h.b16 %v666
    %v3166 = vunpack.c.l.b16 %v667
    %v3167 = vunpack.c.h.b16 %v667
    %v3168 = vunpack.c.l.b16 %v668
    %v3169 = vunpack.c.h.b16 %v668
    %v3170 = vunpack.c.l.b16 %v669
    %v3171 = vunpack.c.h.b16 %v669
    %v3172 = vunpack.c.l.b16 %v670
    %v3173 = vunpack.c.h.b16 %v670
    %v3174 = vunpack.c.l.b16 %v671
    %v3175 = vunpack.c.h.b16 %v671
    %v3176 = vunpack.c.l.b16 %v672
    %v3177 = vunpack.c.h.b16 %v672
    %v3178 = vunpack.c.l.b16 %v673
    %v3179 = vunpack.c.h.b16 %v673
    %v3180 = vunpack.c.l.b16 %v674
    %v3181 = vunpack.c.h.b16 %v674
    %v3182 = vunpack.c.l.b16 %v675
    %v3183 = vunpack.c.h.b16 %v675
    %v3184 = vunpack.c.l.b16 %v676
    %v3185 = vunpack.c.h.b16 %v676
    %v3186 = vunpack.c.l.b16 %v677
    %v3187 = vunpack.c.h.b16 %v677
    %v3188 = vunpack.c.l.b16 %v678
    %v3189 = vunpack.c.h.b16 %v678
    %v3190 = vunpack.c.l.b16 %v679
    %v3191 = vunpack.c.h.b16 %v679
    %v3192 = vunpack.c.l.b16 %v680
    %v3193 = vunpack.c.h.b16 %v680
    %v3194 = vunpack.c.l.b16 %v681
    %v3195 = vunpack.c.h.b16 %v681
    %v3196 = vunpack.c.l.b16 %v682
    %v3197 = vunpack.c.h.b16 %v682
    %v3198 = vunpack.c.l.b16 %v683
    %v3199 = vunpack.c.h.b16 %v683
    %v3200 = vunpack.c.l.b16 %v684
    %v3201 = vunpack.c.h.b16 %v684
    %v3202 = vunpack.c.l.b16 %v685
    %v3203 = vunpack.c.h.b16 %v685
    %v3204 = vunpack.c.l.b16 %v686
    %v3205 = vunpack.c.h.b16 %v686
    %v3206 = vunpack.c.l.b16 %v687
    %v3207 = vunpack.c.h.b16 %v687
    %v3208 = vunpack.c.l.b16 %v688
    %v3209 = vunpack.c.h.b16 %v688
    %v3210 = vunpack.c.l.b16 %v689
    %v3211 = vunpack.c.h.b16 %v689
    %v3212 = vunpack.c.l.b16 %v690
    %v3213 = vunpack.c.h.b16 %v690
    %v3214 = vunpack.c.l.b16 %v691
    %v3215 = vunpack.c.h.b16 %v691
    %v3216 = vunpack.c.l.b16 %v692
    %v3217 = vunpack.c.h.b16 %v692
    %v3218 = vunpack.c.l.b16 %v693
    %v3219 = vunpack.c.h.b16 %v693
    %v3220 = vunpack.c.l.b16 %v694
    %v3221 = vunpack.c.h.b16 %v694
    %v3222 = vunpack.c.l.b16 %v695
    %v3223 = vunpack.c.h.b16 %v695
    %v3224 = vunpack.c.l.b16 %v696
    %v3225 = vunpack.c.h.b16 %v696
    %v3226 = vunpack.c.l.b16 %v697
    %v3227 = vunpack.c.h.b16 %v697
    %v3228 = vunpack.c.l.b16 %v698
    %v3229 = vunpack.c.h.b16 %v698
    %v3230 = vunpack.c.l.b16 %v699
    %v3231 = vunpack.c.h.b16 %v699
    %v3232 = vunpack.c.l.b16 %v700
    %v3233 = vunpack.c.h.b16 %v700
    %v3234 = vunpack.c.l.b16 %v701
    %v3235 = vunpack.c.h.b16 %v701
    %v3236 = vunpack.c.l.b16 %v702
    %v3237 = vunpack.c.h.b16 %v702
    %v3238 = vunpack.c.l.b16 %v703
    %v3239 = vunpack.c.h.b16 %v703
    %v3240 = vunpack.c.l.b16 %v704
    %v3241 = vunpack.c.h.b16 %v704
    %v3242 = vunpack.c.l.b16 %v705
    %v3243 = vunpack.c.h.b16 %v705
    %v3244 = vunpack.c.l.b16 %v706
    %v3245 = vunpack.c.h.b16 %v706
    %v3246 = vunpack.c.l.b16 %v707
    %v3247 = vunpack.c.h.b16 %v707
    %v3248 = vunpack.c.l.b16 %v708
    %v3249 = vunpack.c.h.b16 %v708
    %v3250 = vunpack.c.l.b16 %v709
    %v3251 = vunpack.c.h.b16 %v709
    %v3252 = vunpack.c.l.b16 %v710
    %v3253 = vunpack.c.h.b16 %v710
    %v3254 = vunpack.c.l.b16 %v711
    %v3255 = vunpack.c.h.b16 %v711
    %v3256 = vunpack.c.l.b16 %v712
    %v3257 = vunpack.c.h.b16 %v712
    %v3258 = vunpack.c.l.b16 %v713
    %v3259 = vunpack.c.h.b16 %v713
    %v3260 = vunpack.c.l.b16 %v714
    %v3261 = vunpack.c.h.b16 %v714
    %v3262 = vunpack.c.l.b16 %v715
    %v3263 = vunpack.c.h.b16 %v715
    %v3264 = vunpack.c.l.b16 %v716
    %v3265 = vunpack.c.h.b16 %v716
    %v3266 = vunpack.c.l.b16 %v717
    %v3267 = vunpack.c.h.b16 %v717
    %v3268 = vunpack.c.l.b16 %v718
    %v3269 = vunpack.c.h.b16 %v718
    %v3270 = vunpack.c.l.b16 %v719
    %v3271 = vunpack.c.h.b16 %v719
    %v3272 = vunpack.c.l.b16 %v720
    %v3273 = vunpack.c.h.b16 %v720
    %v3274 = vunpack.c.l.b16 %v721
    %v3275 = vunpack.c.h.b16 %v721
    %v3276 = vunpack.c.l.b16 %v722
    %v3277 = vunpack.c.h.b16 %v722
    %v3278 = vunpack.c.l.b16 %v723
    %v3279 = vunpack.c.h.b16 %v723
    %v3280 = vunpack.c.l.b16 %v724
    %v3281 = vunpack.c.h.b16 %v724
    %v3282 = vunpack.c.l.b16 %v725
    %v3283 = vunpack.c.h.b16 %v725
    %v3284 = vunpack.c.l.b16 %v726
    %v3285 = vunpack.c.h.b16 %v726
    %v3286 = vunpack.c.l.b16 %v727
    %v3287 = vunpack.c.h.b16 %v727
    %v3288 = vunpack.c.l.b16 %v728
    %v3289 = vunpack.c.h.b16 %v728
    %v3290 = vunpack.c.l.b16 %v729
    %v3291 = vunpack.c.h.b16 %v729
    %v3292 = vunpack.c.l.b16 %v730
    %v3293 = vunpack.c.h.b16 %v730
    %v3294 = vunpack.c.l.b16 %v731
    %v3295 = vunpack.c.h.b16 %v731
    %v3296 = vunpack.c.l.b16 %v732
    %v3297 = vunpack.c.h.b16 %v732
    %v3298 = vunpack.c.l.b16 %v733
    %v3299 = vunpack.c.h.b16 %v733
    %v3300 = vunpack.c.l.b16 %v734
    %v3301 = vunpack.c.h.b16 %v734
    %v3302 = vunpack.c.l.b16 %v735
    %v3303 = vunpack.c.h.b16 %v735
    %v3304 = vunpack.c.l.b16 %v736
    %v3305 = vunpack.c.h.b16 %v736
    %v3306 = vunpack.c.l.b16 %v737
    %v3307 = vunpack.c.h.b16 %v737
    %v3308 = vunpack.c.l.b16 %v738
    %v3309 = vunpack.c.h.b16 %v738
    %v3310 = vunpack.c.l.b16 %v739
    %v3311 = vunpack.c.h.b16 %v739
    %v3312 = vunpack.c.l.b16 %v740
    %v3313 = vunpack.c.h.b16 %v740
    %v3314 = vunpack.c.l.b16 %v741
    %v3315 = vunpack.c.h.b16 %v741
    %v3316 = vunpack.c.l.b16 %v742
    %v3317 = vunpack.c.h.b16 %v742
    %v3318 = vunpack.c.l.b16 %v743
    %v3319 = vunpack.c.h.b16 %v743
    %v3320 = vunpack.c.l.b16 %v744
    %v3321 = vunpack.c.h.b16 %v744
    %v3322 = vunpack.c.l.b16 %v745
    %v3323 = vunpack.c.h.b16 %v745
    %v3324 = vunpack.c.l.b16 %v746
    %v3325 = vunpack.c.h.b16 %v746
    %v3326 = vunpack.c.l.b16 %v747
    %v3327 = vunpack.c.h.b16 %v747
    %v3328 = vunpack.c.l.b16 %v748
    %v3329 = vunpack.c.h.b16 %v748
    %v3330 = vunpack.c.l.b16 %v749
    %v3331 = vunpack.c.h.b16 %v749
    %v3332 = vunpack.c.l.b16 %v750
    %v3333 = vunpack.c.h.b16 %v750
    %v3334 = vunpack.c.l.b16 %v751
    %v3335 = vunpack.c.h.b16 %v751
    %v3336 = vunpack.c.l.b16 %v752
    %v3337 = vunpack.c.h.b16 %v752
    %v3338 = vunpack.c.l.b16 %v753
    %v3339 = vunpack.c.h.b16 %v753
    %v3340 = vunpack.c.l.b16 %v754
    %v3341 = vunpack.c.h.b16 %v754
    %v3342 = vunpack.c.l.b16 %v755
    %v3343 = vunpack.c.h.b16 %v755
    %v3344 = vunpack.c.l.b16 %v756
    %v3345 = vunpack.c.h.b16 %v756
    %v3346 = vunpack.c.l.b16 %v757
    %v3347 = vunpack.c.h.b16 %v757
    %v3348 = vunpack.c.l.b16 %v758
    %v3349 = vunpack.c.h.b16 %v758
    %v3350 = vunpack.c.l.b16 %v759
    %v3351 = vunpack.c.h.b16 %v759
    %v3352 = vunpack.c.l.b16 %v760
    %v3353 = vunpack.c.h.b16 %v760
    %v3354 = vunpack.c.l.b16 %v761
    %v3355 = vunpack.c.h.b16 %v761
    %v3356 = vunpack.c.l.b16 %v762
    %v3357 = vunpack.c.h.b16 %v762
    %v3358 = vunpack.c.l.b16 %v763
    %v3359 = vunpack.c.h.b16 %v763
    %v3360 = vunpack.c.l.b16 %v764
    %v3361 = vunpack.c.h.b16 %v764
    %v3362 = vunpack.c.l.b16 %v765
    %v3363 = vunpack.c.h.b16 %v765
    %v3364 = vunpack.c.l.b16 %v766
    %v3365 = vunpack.c.h.b16 %v766
    %v3366 = vunpack.c.l.b16 %v767
    %v3367 = vunpack.c.h.b16 %v767
    %v3368 = vunpack.c.l.b16 %v768
    %v3369 = vunpack.c.h.b16 %v768
    %v3370 = vunpack.c.l.b16 %v769
    %v3371 = vunpack.c.h.b16 %v769
    %v3372 = vunpack.c.l.b16 %v770
    %v3373 = vunpack.c.h.b16 %v770
    %v3374 = vunpack.c.l.b16 %v771
    %v3375 = vunpack.c.h.b16 %v771
    %v3376 = vunpack.c.l.b16 %v772
    %v3377 = vunpack.c.h.b16 %v772
    %v3378 = vunpack.c.l.b16 %v773
    %v3379 = vunpack.c.h.b16 %v773
    %v3380 = vunpack.c.l.b16 %v774
    %v3381 = vunpack.c.h.b16 %v774
    %v3382 = vunpack.c.l.b16 %v775
    %v3383 = vunpack.c.h.b16 %v775
    %v3384 = vunpack.c.l.b16 %v776
    %v3385 = vunpack.c.h.b16 %v776
    %v3386 = vunpack.c.l.b16 %v777
    %v3387 = vunpack.c.h.b16 %v777
    %v3388 = vunpack.c.l.b16 %v778
    %v3389 = vunpack.c.h.b16 %v778
    %v3390 = vunpack.c.l.b16 %v779
    %v3391 = vunpack.c.h.b16 %v779
    %v3392 = vunpack.c.l.b16 %v780
    %v3393 = vunpack.c.h.b16 %v780
    %v3394 = vunpack.c.l.b16 %v781
    %v3395 = vunpack.c.h.b16 %v781
    %v3396 = vunpack.c.l.b16 %v782
    %v3397 = vunpack.c.h.b16 %v782
    %v3398 = vunpack.c.l.b16 %v783
    %v3399 = vunpack.c.h.b16 %v783
    %v3400 = vunpack.c.l.b16 %v784
    %v3401 = vunpack.c.h.b16 %v784
    %v3402 = vunpack.c.l.b16 %v785
    %v3403 = vunpack.c.h.b16 %v785
    %v3404 = vunpack.c.l.b16 %v786
    %v3405 = vunpack.c.h.b16 %v786
    %v3406 = vunpack.c.l.b16 %v787
    %v3407 = vunpack.c.h.b16 %v787
    %v3408 = vunpack.c.l.b16 %v788
    %v3409 = vunpack.c.h.b16 %v788
    %v3410 = vunpack.c.l.b16 %v789
    %v3411 = vunpack.c.h.b16 %v789
    %v3412 = vunpack.c.l.b16 %v790
    %v3413 = vunpack.c.h.b16 %v790
    %v3414 = vunpack.c.l.b16 %v791
    %v3415 = vunpack.c.h.b16 %v791
    %v3416 = vunpack.c.l.b16 %v792
    %v3417 = vunpack.c.h.b16 %v792
    %v3418 = vunpack.c.l.b16 %v793
    %v3419 = vunpack.c.h.b16 %v793
    %v3420 = vunpack.c.l.b16 %v794
    %v3421 = vunpack.c.h.b16 %v794
    %v3422 = vunpack.c.l.b16 %v795
    %v3423 = vunpack.c.h.b16 %v795
    %v3424 = vunpack.c.l.b16 %v796
    %v3425 = vunpack.c.h.b16 %v796
    %v3426 = vunpack.c.l.b16 %v797
    %v3427 = vunpack.c.h.b16 %v797
    %v3428 = vunpack.c.l.b16 %v798
    %v3429 = vunpack.c.h.b16 %v798
    %v3430 = vunpack.c.l.b16 %v799
    %v3431 = vunpack.c.h.b16 %v799
    %v3432 = vunpack.c.l.b16 %v800
    %v3433 = vunpack.c.h.b16 %v800
    %v3434 = vunpack.c.l.b16 %v801
    %v3435 = vunpack.c.h.b16 %v801
    %v3436 = vunpack.c.l.b16 %v802
    %v3437 = vunpack.c.h.b16 %v802
    %v3438 = vunpack.c.l.b16 %v803
    %v3439 = vunpack.c.h.b16 %v803
    %v3440 = vunpack.c.l.b16 %v804
    %v3441 = vunpack.c.h.b16 %v804
    %v3442 = vunpack.c.l.b16 %v805
    %v3443 = vunpack.c.h.b16 %v805
    %v3444 = vunpack.c.l.b16 %v806
    %v3445 = vunpack.c.h.b16 %v806
    %v3446 = vunpack.c.l.b16 %v807
    %v3447 = vunpack.c.h.b16 %v807
    %v3448 = vunpack.c.l.b16 %v808
    %v3449 = vunpack.c.h.b16 %v808
    %v3450 = vunpack.c.l.b16 %v809
    %v3451 = vunpack.c.h.b16 %v809
    %v3452 = vunpack.c.l.b16 %v810
    %v3453 = vunpack.c.h.b16 %v810
    %v3454 = vunpack.c.l.b16 %v811
    %v3455 = vunpack.c.h.b16 %v811
    %v3456 = vunpack.c.l.b16 %v812
    %v3457 = vunpack.c.h.b16 %v812
    %v3458 = vunpack.c.l.b16 %v813
    %v3459 = vunpack.c.h.b16 %v813
    %v3460 = vunpack.c.l.b16 %v814
    %v3461 = vunpack.c.h.b16 %v814
    %v3462 = vunpack.c.l.b16 %v815
    %v3463 = vunpack.c.h.b16 %v815
    %v3464 = vunpack.c.l.b16 %v816
    %v3465 = vunpack.c.h.b16 %v816
    %v3466 = vunpack.c.l.b16 %v817
    %v3467 = vunpack.c.h.b16 %v817
    %v3468 = vunpack.c.l.b16 %v818
    %v3469 = vunpack.c.h.b16 %v818
    %v3470 = vunpack.c.l.b16 %v819
    %v3471 = vunpack.c.h.b16 %v819
    %v3472 = vunpack.c.l.b16 %v820
    %v3473 = vunpack.c.h.b16 %v820
    %v3474 = vunpack.c.l.b16 %v821
    %v3475 = vunpack.c.h.b16 %v821
    %v3476 = vunpack.c.l.b16 %v822
    %v3477 = vunpack.c.h.b16 %v822
    %v3478 = vunpack.c.l.b16 %v823
    %v3479 = vunpack.c.h.b16 %v823
    %v3480 = vunpack.c.l.b16 %v824
    %v3481 = vunpack.c.h.b16 %v824
    %v3482 = vunpack.c.l.b16 %v825
    %v3483 = vunpack.c.h.b16 %v825
    %v3484 = vunpack.c.l.b16 %v826
    %v3485 = vunpack.c.h.b16 %v826
    %v3486 = vunpack.c.l.b16 %v827
    %v3487 = vunpack.c.h.b16 %v827
    %v3488 = vunpack.c.l.b16 %v828
    %v3489 = vunpack.c.h.b16 %v828
    %v3490 = vunpack.c.l.b16 %v829
    %v3491 = vunpack.c.h.b16 %v829
    %v3492 = vunpack.c.l.b16 %v830
    %v3493 = vunpack.c.h.b16 %v830
    %v3494 = vunpack.c.l.b16 %v831
    %v3495 = vunpack.c.h.b16 %v831
    %v3496 = vunpack.c.l.b16 %v832
    %v3497 = vunpack.c.h.b16 %v832
    %v3498 = vunpack.c.l.b16 %v833
    %v3499 = vunpack.c.h.b16 %v833
    %v3500 = vunpack.c.l.b16 %v834
    %v3501 = vunpack.c.h.b16 %v834
    %v3502 = vunpack.c.l.b16 %v835
    %v3503 = vunpack.c.h.b16 %v835
    %v3504 = vunpack.c.l.b16 %v836
    %v3505 = vunpack.c.h.b16 %v836
    %v3506 = vunpack.c.l.b16 %v837
    %v3507 = vunpack.c.h.b16 %v837
    %v3508 = vunpack.c.l.b16 %v838
    %v3509 = vunpack.c.h.b16 %v838
    %v3510 = vunpack.c.l.b16 %v839
    %v3511 = vunpack.c.h.b16 %v839
    %v3512 = vunpack.c.l.b16 %v840
    %v3513 = vunpack.c.h.b16 %v840
    %v3514 = vunpack.c.l.b16 %v841
    %v3515 = vunpack.c.h.b16 %v841
    %v3516 = vunpack.c.l.b16 %v842
    %v3517 = vunpack.c.h.b16 %v842
    %v3518 = vunpack.c.l.b16 %v843
    %v3519 = vunpack.c.h.b16 %v843
    %v3520 = vunpack.c.l.b16 %v844
    %v3521 = vunpack.c.h.b16 %v844
    %v3522 = vunpack.c.l.b16 %v845
    %v3523 = vunpack.c.h.b16 %v845
    %v3524 = vunpack.c.l.b16 %v846
    %v3525 = vunpack.c.h.b16 %v846
    %v3526 = vunpack.c.l.b16 %v847
    %v3527 = vunpack.c.h.b16 %v847
    %v3528 = vunpack.c.l.b16 %v848
    %v3529 = vunpack.c.h.b16 %v848
    %v3530 = vunpack.c.l.b16 %v849
    %v3531 = vunpack.c.h.b16 %v849
    %v3532 = vunpack.c.l.b16 %v850
    %v3533 = vunpack.c.h.b16 %v850
    %v3534 = vunpack.c.l.b16 %v851
    %v3535 = vunpack.c.h.b16 %v851
    %v3536 = vunpack.c.l.b16 %v852
    %v3537 = vunpack.c.h.b16 %v852
    %v3538 = vunpack.c.l.b16 %v853
    %v3539 = vunpack.c.h.b16 %v853
    %v3540 = vunpack.c.l.b16 %v854
    %v3541 = vunpack.c.h.b16 %v854
    %v3542 = vunpack.c.l.b16 %v855
    %v3543 = vunpack.c.h.b16 %v855
    %v3544 = vunpack.c.l.b16 %v856
    %v3545 = vunpack.c.h.b16 %v856
    %v3546 = vunpack.c.l.b16 %v857
    %v3547 = vunpack.c.h.b16 %v857
    %v3548 = vunpack.c.l.b16 %v858
    %v3549 = vunpack.c.h.b16 %v858
    %v3550 = vunpack.c.l.b16 %v859
    %v3551 = vunpack.c.h.b16 %v859
    %v3552 = vunpack.c.l.b16 %v860
    %v3553 = vunpack.c.h.b16 %v860
    %v3554 = vunpack.c.l.b16 %v861
    %v3555 = vunpack.c.h.b16 %v861
    %v3556 = vunpack.c.l.b16 %v862
    %v3557 = vunpack.c.h.b16 %v862
    %v3558 = vunpack.c.l.b16 %v863
    %v3559 = vunpack.c.h.b16 %v863
    %v3560 = vunpack.c.l.b16 %v864
    %v3561 = vunpack.c.h.b16 %v864
    %v3562 = vunpack.c.l.b16 %v865
    %v3563 = vunpack.c.h.b16 %v865
    %v3564 = vunpack.c.l.b16 %v866
    %v3565 = vunpack.c.h.b16 %v866
    %v3566 = vunpack.c.l.b16 %v867
    %v3567 = vunpack.c.h.b16 %v867
    %v3568 = vunpack.c.l.b16 %v868
    %v3569 = vunpack.c.h.b16 %v868
    %v3570 = vunpack.c.l.b16 %v869
    %v3571 = vunpack.c.h.b16 %v869
    %v3572 = vunpack.c.l.b16 %v870
    %v3573 = vunpack.c.h.b16 %v870
    %v3574 = vunpack.c.l.b16 %v871
    %v3575 = vunpack.c.h.b16 %v871
    %v3576 = vunpack.c.l.b16 %v872
    %v3577 = vunpack.c.h.b16 %v872
    %v3578 = vunpack.c.l.b16 %v873
    %v3579 = vunpack.c.h.b16 %v873
    %v3580 = vunpack.c.l.b16 %v874
    %v3581 = vunpack.c.h.b16 %v874
    %v3582 = vunpack.c.l.b16 %v875
    %v3583 = vunpack.c.h.b16 %v875
    %v3584 = vunpack.c.l.b16 %v876
    %v3585 = vunpack.c.h.b16 %v876
    %v3586 = vunpack.c.l.b16 %v877
    %v3587 = vunpack.c.h.b16 %v877
    %v3588 = vunpack.c.l.b16 %v878
    %v3589 = vunpack.c.h.b16 %v878
    %v3590 = vunpack.c.l.b16 %v879
    %v3591 = vunpack.c.h.b16 %v879
    %v3592 = vunpack.c.l.b16 %v880
    %v3593 = vunpack.c.h.b16 %v880
    %v3594 = vunpack.c.l.b16 %v881
    %v3595 = vunpack.c.h.b16 %v881
    %v3596 = vunpack.c.l.b16 %v882
    %v3597 = vunpack.c.h.b16 %v882
    %v3598 = vunpack.c.l.b16 %v883
    %v3599 = vunpack.c.h.b16 %v883
    %v3600 = vunpack.c.l.b16 %v884
    %v3601 = vunpack.c.h.b16 %v884
    %v3602 = vunpack.c.l.b16 %v885
    %v3603 = vunpack.c.h.b16 %v885
    %v3604 = vunpack.c.l.b16 %v886
    %v3605 = vunpack.c.h.b16 %v886
    %v3606 = vunpack.c.l.b16 %v887
    %v3607 = vunpack.c.h.b16 %v887
    %v3608 = vunpack.c.l.b16 %v888
    %v3609 = vunpack.c.h.b16 %v888
    %v3610 = vunpack.c.l.b16 %v889
    %v3611 = vunpack.c.h.b16 %v889
    %v3612 = vunpack.c.l.b16 %v890
    %v3613 = vunpack.c.h.b16 %v890
    %v3614 = vunpack.c.l.b16 %v891
    %v3615 = vunpack.c.h.b16 %v891
    %v3616 = vunpack.c.l.b16 %v892
    %v3617 = vunpack.c.h.b16 %v892
    %v3618 = vunpack.c.l.b16 %v893
    %v3619 = vunpack.c.h.b16 %v893
    %v3620 = vunpack.c.l.b16 %v894
    %v3621 = vunpack.c.h.b16 %v894
    %v3622 = vunpack.c.l.b16 %v895
    %v3623 = vunpack.c.h.b16 %v895
    %v3624 = vunpack.c.l.b16 %v896
    %v3625 = vunpack.c.h.b16 %v896
    %v3626 = vunpack.c.l.b16 %v897
    %v3627 = vunpack.c.h.b16 %v897
    %v3628 = vunpack.c.l.b16 %v898
    %v3629 = vunpack.c.h.b16 %v898
    %v3630 = vunpack.c.l.b16 %v899
    %v3631 = vunpack.c.h.b16 %v899
    %v3632 = vunpack.c.l.b16 %v900
    %v3633 = vunpack.c.h.b16 %v900
    %v3634 = vunpack.c.l.b16 %v901
    %v3635 = vunpack.c.h.b16 %v901
    %v3636 = vunpack.c.l.b16 %v902
    %v3637 = vunpack.c.h.b16 %v902
    %v3638 = vunpack.c.l.b16 %v903
    %v3639 = vunpack.c.h.b16 %v903
    %v3640 = vunpack.c.l.b16 %v904
    %v3641 = vunpack.c.h.b16 %v904
    %v3642 = vunpack.c.l.b16 %v905
    %v3643 = vunpack.c.h.b16 %v905
    %v3644 = vunpack.c.l.b16 %v906
    %v3645 = vunpack.c.h.b16 %v906
    %v3646 = vunpack.c.l.b16 %v907
    %v3647 = vunpack.c.h.b16 %v907
    %v3648 = vunpack.c.l.b16 %v908
    %v3649 = vunpack.c.h.b16 %v908
    %v3650 = vunpack.c.l.b16 %v909
    %v3651 = vunpack.c.h.b16 %v909
    %v3652 = vunpack.c.l.b16 %v910
    %v3653 = vunpack.c.h.b16 %v910
    %v3654 = vunpack.c.l.b16 %v911
    %v3655 = vunpack.c.h.b16 %v911
    %v3656 = vunpack.c.l.b16 %v912
    %v3657 = vunpack.c.h.b16 %v912
    %v3658 = vunpack.c.l.b16 %v913
    %v3659 = vunpack.c.h.b16 %v913
    %v3660 = vunpack.c.l.b16 %v914
    %v3661 = vunpack.c.h.b16 %v914
    %v3662 = vunpack.c.l.b16 %v915
    %v3663 = vunpack.c.h.b16 %v915
    %v3664 = vunpack.c.l.b16 %v916
    %v3665 = vunpack.c.h.b16 %v916
    %v3666 = vunpack.c.l.b16 %v917
    %v3667 = vunpack.c.h.b16 %v917
    %v3668 = vunpack.c.l.b16 %v918
    %v3669 = vunpack.c.h.b16 %v918
    %v3670 = vunpack.c.l.b16 %v919
    %v3671 = vunpack.c.h.b16 %v919
    %v3672 = vunpack.c.l.b16 %v920
    %v3673 = vunpack.c.h.b16 %v920
    %v3674 = vunpack.c.l.b16 %v921
    %v3675 = vunpack.c.h.b16 %v921
    %v3676 = vunpack.c.l.b16 %v922
    %v3677 = vunpack.c.h.b16 %v922
    %v3678 = vunpack.c.l.b16 %v923
    %v3679 = vunpack.c.h.b16 %v923
    %v3680 = vunpack.c.l.b16 %v924
    %v3681 = vunpack.c.h.b16 %v924
    %v3682 = vunpack.c.l.b16 %v925
    %v3683 = vunpack.c.h.b16 %v925
    %v3684 = vunpack.c.l.b16 %v926
    %v3685 = vunpack.c.h.b16 %v926
    %v3686 = vunpack.c.l.b16 %v927
    %v3687 = vunpack.c.h.b16 %v927
    %v3688 = vunpack.c.l.b16 %v928
    %v3689 = vunpack.c.h.b16 %v928
    %v3690 = vunpack.c.l.b16 %v929
    %v3691 = vunpack.c.h.b16 %v929
    %v3692 = vunpack.c.l.b16 %v930
    %v3693 = vunpack.c.h.b16 %v930
    %v3694 = vunpack.c.l.b16 %v931
    %v3695 = vunpack.c.h.b16 %v931
    %v3696 = vunpack.c.l.b16 %v932
    %v3697 = vunpack.c.h.b16 %v932
    %v3698 = vunpack.c.l.b16 %v933
    %v3699 = vunpack.c.h.b16 %v933
    %v3700 = vunpack.c.l.b16 %v934
    %v3701 = vunpack.c.h.b16 %v934
    %v3702 = vunpack.c.l.b16 %v935
    %v3703 = vunpack.c.h.b16 %v935
    %v3704 = vunpack.c.l.b16 %v936
    %v3705 = vunpack.c.h.b16 %v936
    %v3706 = vunpack.c.l.b16 %v937
    %v3707 = vunpack.c.h.b16 %v937
    %v3708 = vunpack.c.l.b16 %v938
    %v3709 = vunpack.c.h.b16 %v938
    %v3710 = vunpack.c.l.b16 %v939
    %v3711 = vunpack.c.h.b16 %v939
    %v3712 = vunpack.c.l.b16 %v940
    %v3713 = vunpack.c.h.b16 %v940
    %v3714 = vunpack.c.l.b16 %v941
    %v3715 = vunpack.c.h.b16 %v941
    %v3716 = vunpack.c.l.b16 %v942
    %v3717 = vunpack.c.h.b16 %v942
    %v3718 = vunpack.c.l.b16 %v943
    %v3719 = vunpack.c.h.b16 %v943
    %v3720 = vunpack.c.l.b16 %v944
    %v3721 = vunpack.c.h.b16 %v944
    %v3722 = vunpack.c.l.b16 %v945
    %v3723 = vunpack.c.h.b16 %v945
    %v3724 = vunpack.c.l.b16 %v946
    %v3725 = vunpack.c.h.b16 %v946
    %v3726 = vunpack.c.l.b16 %v947
    %v3727 = vunpack.c.h.b16 %v947
    %v3728 = vunpack.c.l.b16 %v948
    %v3729 = vunpack.c.h.b16 %v948
    %v3730 = vunpack.c.l.b16 %v949
    %v3731 = vunpack.c.h.b16 %v949
    %v3732 = vunpack.c.l.b16 %v950
    %v3733 = vunpack.c.h.b16 %v950
    %v3734 = vunpack.c.l.b16 %v951
    %v3735 = vunpack.c.h.b16 %v951
    %v3736 = vunpack.c.l.b16 %v952
    %v3737 = vunpack.c.h.b16 %v952
    %v3738 = vunpack.c.l.b16 %v953
    %v3739 = vunpack.c.h.b16 %v953
    %v3740 = vunpack.c.l.b16 %v954
    %v3741 = vunpack.c.h.b16 %v954
    %v3742 = vunpack.c.l.b16 %v955
    %v3743 = vunpack.c.h.b16 %v955
    %v3744 = vunpack.c.l.b16 %v956
    %v3745 = vunpack.c.h.b16 %v956
    %v3746 = vunpack.c.l.b16 %v957
    %v3747 = vunpack.c.h.b16 %v957
    %v3748 = vunpack.c.l.b16 %v958
    %v3749 = vunpack.c.h.b16 %v958
    %v3750 = vunpack.c.l.b16 %v959
    %v3751 = vunpack.c.h.b16 %v959
    %v3752 = vunpack.c.l.b16 %v960
    %v3753 = vunpack.c.h.b16 %v960
    %v3754 = vunpack.c.l.b16 %v961
    %v3755 = vunpack.c.h.b16 %v961
    %v3756 = vunpack.c.l.b16 %v962
    %v3757 = vunpack.c.h.b16 %v962
    %v3758 = vunpack.c.l.b16 %v963
    %v3759 = vunpack.c.h.b16 %v963
    %v3760 = vunpack.c.l.b16 %v964
    %v3761 = vunpack.c.h.b16 %v964
    %v3762 = vunpack.c.l.b16 %v965
    %v3763 = vunpack.c.h.b16 %v965
    %v3764 = vunpack.c.l.b16 %v966
    %v3765 = vunpack.c.h.b16 %v966
    %v3766 = vunpack.c.l.b16 %v967
    %v3767 = vunpack.c.h.b16 %v967
    %v3768 = vunpack.c.l.b16 %v968
    %v3769 = vunpack.c.h.b16 %v968
    %v3770 = vunpack.c.l.b16 %v969
    %v3771 = vunpack.c.h.b16 %v969
    %v3772 = vunpack.c.l.b16 %v970
    %v3773 = vunpack.c.h.b16 %v970
    %v3774 = vunpack.c.l.b16 %v971
    %v3775 = vunpack.c.h.b16 %v971
    %v3776 = vunpack.c.l.b16 %v972
    %v3777 = vunpack.c.h.b16 %v972
    %v3778 = vunpack.c.l.b16 %v973
    %v3779 = vunpack.c.h.b16 %v973
    %v3780 = vunpack.c.l.b16 %v974
    %v3781 = vunpack.c.h.b16 %v974
    %v3782 = vunpack.c.l.b16 %v975
    %v3783 = vunpack.c.h.b16 %v975
    %v3784 = vunpack.c.l.b16 %v976
    %v3785 = vunpack.c.h.b16 %v976
    %v3786 = vunpack.c.l.b16 %v977
    %v3787 = vunpack.c.h.b16 %v977
    %v3788 = vunpack.c.l.b16 %v978
    %v3789 = vunpack.c.h.b16 %v978
    %v3790 = vunpack.c.l.b16 %v979
    %v3791 = vunpack.c.h.b16 %v979
    %v3792 = vunpack.c.l.b16 %v980
    %v3793 = vunpack.c.h.b16 %v980
    %v3794 = vunpack.c.l.b16 %v981
    %v3795 = vunpack.c.h.b16 %v981
    %v3796 = vunpack.c.l.b16 %v982
    %v3797 = vunpack.c.h.b16 %v982
    %v3798 = vunpack.c.l.b16 %v983
    %v3799 = vunpack.c.h.b16 %v983
    %v3800 = vunpack.c.l.b16 %v984
    %v3801 = vunpack.c.h.b16 %v984
    %v3802 = vunpack.c.l.b16 %v985
    %v3803 = vunpack.c.h.b16 %v985
    %v3804 = vunpack.c.l.b16 %v986
    %v3805 = vunpack.c.h.b16 %v986
    %v3806 = vunpack.c.l.b16 %v987
    %v3807 = vunpack.c.h.b16 %v987
    %v3808 = vunpack.c.l.b16 %v988
    %v3809 = vunpack.c.h.b16 %v988
    %v3810 = vunpack.c.l.b16 %v989
    %v3811 = vunpack.c.h.b16 %v989
    %v3812 = vunpack.c.l.b16 %v990
    %v3813 = vunpack.c.h.b16 %v990
    %v3814 = vunpack.c.l.b16 %v991
    %v3815 = vunpack.c.h.b16 %v991
    %v3816 = vunpack.c.l.b16 %v992
    %v3817 = vunpack.c.h.b16 %v992
    %v3818 = vunpack.c.l.b16 %v993
    %v3819 = vunpack.c.h.b16 %v993
    %v3820 = vunpack.c.l.b16 %v994
    %v3821 = vunpack.c.h.b16 %v994
    %v3822 = vunpack.c.l.b16 %v995
    %v3823 = vunpack.c.h.b16 %v995
    %v3824 = vunpack.c.l.b16 %v996
    %v3825 = vunpack.c.h.b16 %v996
    %v3826 = vunpack.c.l.b16 %v997
    %v3827 = vunpack.c.h.b16 %v997
    %v3828 = vunpack.c.l.b16 %v998
    %v3829 = vunpack.c.h.b16 %v998
    %v3830 = vunpack.c.l.b16 %v999
    %v3831 = vunpack.c.h.b16 %v999
    %v3832 = vunpack.c.l.b16 %v1000
    %v3833 = vunpack.c.h.b16 %v1000
    %v3834 = vunpack.c.l.b16 %v1001
    %v3835 = vunpack.c.h.b16 %v1001
    %v3836 = vunpack.c.l.b16 %v1002
    %v3837 = vunpack.c.h.b16 %v1002
    %v3838 = vunpack.c.l.b16 %v1003
    %v3839 = vunpack.c.h.b16 %v1003
    %v3840 = vunpack.c.l.b16 %v1004
    %v3841 = vunpack.c.h.b16 %v1004
    %v3842 = vunpack.c.l.b16 %v1005
    %v3843 = vunpack.c.h.b16 %v1005
    %v3844 = vunpack.c.l.b16 %v1006
    %v3845 = vunpack.c.h.b16 %v1006
    %v3846 = vunpack.c.l.b16 %v1007
    %v3847 = vunpack.c.h.b16 %v1007
    %v3848 = vunpack.c.l.b16 %v1008
    %v3849 = vunpack.c.h.b16 %v1008
    %v3850 = vunpack.c.l.b16 %v1009
    %v3851 = vunpack.c.h.b16 %v1009
    %v3852 = vunpack.c.l.b16 %v1010
    %v3853 = vunpack.c.h.b16 %v1010
    %v3854 = vunpack.c.l.b16 %v1011
    %v3855 = vunpack.c.h.b16 %v1011
    %v3856 = vunpack.c.l.b16 %v1012
    %v3857 = vunpack.c.h.b16 %v1012
    %v3858 = vunpack.c.l.b16 %v1013
    %v3859 = vunpack.c.h.b16 %v1013
    %v3860 = vunpack.c.l.b16 %v1014
    %v3861 = vunpack.c.h.b16 %v1014
    %v3862 = vunpack.c.l.b16 %v1015
    %v3863 = vunpack.c.h.b16 %v1015
    %v3864 = vunpack.c.l.b16 %v1016
    %v3865 = vunpack.c.h.b16 %v1016
    %v3866 = vunpack.c.l.b16 %v1017
    %v3867 = vunpack.c.h.b16 %v1017
    %v3868 = vunpack.c.l.b16 %v1018
    %v3869 = vunpack.c.h.b16 %v1018
    %v3870 = vunpack.c.l.b16 %v1019
    %v3871 = vunpack.c.h.b16 %v1019
    %v3872 = vunpack.c.l.b16 %v1020
    %v3873 = vunpack.c.h.b16 %v1020
    %v3874 = vunpack.c.l.b16 %v1021
    %v3875 = vunpack.c.h.b16 %v1021
    %v3876 = vunpack.c.l.b16 %v1022
    %v3877 = vunpack.c.h.b16 %v1022
    %v3878 = vunpack.c.l.b16 %v1023
    %v3879 = vunpack.c.h.b16 %v1023
    %v3880 = vunpack.c.l.b16 %v1024
    %v3881 = vunpack.c.h.b16 %v1024
    %v3882 = vunpack.c.l.b16 %v1025
    %v3883 = vunpack.c.h.b16 %v1025
    %v3884 = vunpack.c.l.b16 %v1026
    %v3885 = vunpack.c.h.b16 %v1026
    %v3886 = vunpack.c.l.b16 %v1027
    %v3887 = vunpack.c.h.b16 %v1027
    %v3888 = vunpack.c.l.b16 %v1028
    %v3889 = vunpack.c.h.b16 %v1028
    %v3890 = vunpack.c.l.b16 %v1029
    %v3891 = vunpack.c.h.b16 %v1029
    %v3892 = vunpack.c.l.b16 %v1030
    %v3893 = vunpack.c.h.b16 %v1030
    %v3894 = vunpack.c.l.b16 %v1031
    %v3895 = vunpack.c.h.b16 %v1031
    %v3896 = vunpack.c.l.b16 %v1032
    %v3897 = vunpack.c.h.b16 %v1032
    %v3898 = vunpack.c.l.b16 %v1033
    %v3899 = vunpack.c.h.b16 %v1033
    %v3900 = vunpack.c.l.b16 %v1034
    %v3901 = vunpack.c.h.b16 %v1034
    %v3902 = vunpack.c.l.b16 %v1035
    %v3903 = vunpack.c.h.b16 %v1035
    %v3904 = vunpack.c.l.b16 %v1036
    %v3905 = vunpack.c.h.b16 %v1036
    %v3906 = vunpack.c.l.b16 %v1037
    %v3907 = vunpack.c.h.b16 %v1037
    %v3908 = vunpack.c.l.b16 %v1038
    %v3909 = vunpack.c.h.b16 %v1038
    %v3910 = vunpack.c.l.b16 %v1039
    %v3911 = vunpack.c.h.b16 %v1039
    %v3912 = vunpack.c.l.b16 %v1040
    %v3913 = vunpack.c.h.b16 %v1040
    %v3914 = vunpack.c.l.b16 %v1041
    %v3915 = vunpack.c.h.b16 %v1041
    %v3916 = vunpack.c.l.b16 %v1042
    %v3917 = vunpack.c.h.b16 %v1042
    %v3918 = vunpack.c.l.b16 %v1043
    %v3919 = vunpack.c.h.b16 %v1043
    %v3920 = vunpack.c.l.b16 %v1044
    %v3921 = vunpack.c.h.b16 %v1044
    %v3922 = vunpack.c.l.b16 %v1045
    %v3923 = vunpack.c.h.b16 %v1045
    %v3924 = vunpack.c.l.b16 %v1046
    %v3925 = vunpack.c.h.b16 %v1046
    %v3926 = vunpack.c.l.b16 %v1047
    %v3927 = vunpack.c.h.b16 %v1047
    %v3928 = vunpack.c.l.b16 %v1048
    %v3929 = vunpack.c.h.b16 %v1048
    %v3930 = vunpack.c.l.b16 %v1049
    %v3931 = vunpack.c.h.b16 %v1049
    %v3932 = vunpack.c.l.b16 %v1050
    %v3933 = vunpack.c.h.b16 %v1050
    %v3934 = vunpack.c.l.b16 %v1051
    %v3935 = vunpack.c.h.b16 %v1051
    %v3936 = vunpack.c.l.b16 %v1052
    %v3937 = vunpack.c.h.b16 %v1052
    %v3938 = vunpack.c.l.b16 %v1053
    %v3939 = vunpack.c.h.b16 %v1053
    %v3940 = vunpack.c.l.b16 %v1054
    %v3941 = vunpack.c.h.b16 %v1054
    %v3942 = vunpack.c.l.b16 %v1055
    %v3943 = vunpack.c.h.b16 %v1055
    %v3944 = vunpack.c.l.b16 %v1056
    %v3945 = vunpack.c.h.b16 %v1056
    %v3946 = vunpack.c.l.b16 %v1057
    %v3947 = vunpack.c.h.b16 %v1057
    %v3948 = vunpack.c.l.b16 %v1058
    %v3949 = vunpack.c.h.b16 %v1058
    %v3950 = vunpack.c.l.b16 %v1059
    %v3951 = vunpack.c.h.b16 %v1059
    %v3952 = vunpack.c.l.b16 %v1060
    %v3953 = vunpack.c.h.b16 %v1060
    %v3954 = vunpack.c.l.b16 %v1061
    %v3955 = vunpack.c.h.b16 %v1061
    %v3956 = vunpack.c.l.b16 %v1062
    %v3957 = vunpack.c.h.b16 %v1062
    %v3958 = vunpack.c.l.b16 %v1063
    %v3959 = vunpack.c.h.b16 %v1063
    %v3960 = vunpack.c.l.b16 %v1064
    %v3961 = vunpack.c.h.b16 %v1064
    %v3962 = vunpack.c.l.b16 %v1065
    %v3963 = vunpack.c.h.b16 %v1065
    %v3964 = vunpack.c.l.b16 %v1066
    %v3965 = vunpack.c.h.b16 %v1066
    %v3966 = vunpack.c.l.b16 %v1067
    %v3967 = vunpack.c.h.b16 %v1067
    %v3968 = vunpack.c.l.b16 %v1068
    %v3969 = vunpack.c.h.b16 %v1068
    %v3970 = vunpack.c.l.b16 %v1069
    %v3971 = vunpack.c.h.b16 %v1069
    %v3972 = vunpack.c.l.b16 %v1070
    %v3973 = vunpack.c.h.b16 %v1070
    %v3974 = vunpack.c.l.b16 %v1071
    %v3975 = vunpack.c.h.b16 %v1071
    %v3976 = vunpack.c.l.b16 %v1072
    %v3977 = vunpack.c.h.b16 %v1072
    %v3978 = vunpack.c.l.b16 %v1073
    %v3979 = vunpack.c.h.b16 %v1073
    %v3980 = vunpack.c.l.b16 %v1074
    %v3981 = vunpack.c.h.b16 %v1074
    %v3982 = vunpack.c.l.b16 %v1075
    %v3983 = vunpack.c.h.b16 %v1075
    %v3984 = vunpack.c.l.b16 %v1076
    %v3985 = vunpack.c.h.b16 %v1076
    %v3986 = vunpack.c.l.b16 %v1077
    %v3987 = vunpack.c.h.b16 %v1077
    %v3988 = vunpack.c.l.b16 %v1078
    %v3989 = vunpack.c.h.b16 %v1078
    %v3990 = vunpack.c.l.b16 %v1079
    %v3991 = vunpack.c.h.b16 %v1079
    %v3992 = vunpack.c.l.b16 %v1080
    %v3993 = vunpack.c.h.b16 %v1080
    %v3994 = vunpack.c.l.b16 %v1081
    %v3995 = vunpack.c.h.b16 %v1081
    %v3996 = vunpack.c.l.b16 %v1082
    %v3997 = vunpack.c.h.b16 %v1082
    %v3998 = vunpack.c.l.b16 %v1083
    %v3999 = vunpack.c.h.b16 %v1083
    %v4000 = vunpack.c.l.b16 %v1084
    %v4001 = vunpack.c.h.b16 %v1084
    %v4002 = vunpack.c.l.b16 %v1085
    %v4003 = vunpack.c.h.b16 %v1085
    %v4004 = vunpack.c.l.b16 %v1086
    %v4005 = vunpack.c.h.b16 %v1086
    %v4006 = vunpack.c.l.b16 %v1087
    %v4007 = vunpack.c.h.b16 %v1087
    %v4008 = vunpack.c.l.b16 %v1088
    %v4009 = vunpack.c.h.b16 %v1088
    %v4010 = vunpack.c.l.b16 %v1089
    %v4011 = vunpack.c.h.b16 %v1089
    %v4012 = vunpack.c.l.b16 %v1090
    %v4013 = vunpack.c.h.b16 %v1090
    %v4014 = vunpack.c.l.b16 %v1091
    %v4015 = vunpack.c.h.b16 %v1091
    %v4016 = vunpack.c.l.b16 %v1092
    %v4017 = vunpack.c.h.b16 %v1092
    %v4018 = vunpack.c.l.b16 %v1093
    %v4019 = vunpack.c.h.b16 %v1093
    %v4020 = vunpack.c.l.b16 %v1094
    %v4021 = vunpack.c.h.b16 %v1094
    %v4022 = vunpack.c.l.b16 %v1095
    %v4023 = vunpack.c.h.b16 %v1095
    %v4024 = vunpack.c.l.b16 %v1096
    %v4025 = vunpack.c.h.b16 %v1096
    %v4026 = vunpack.c.l.b16 %v1097
    %v4027 = vunpack.c.h.b16 %v1097
    %v4028 = vunpack.c.l.b16 %v1098
    %v4029 = vunpack.c.h.b16 %v1098
    %v4030 = vunpack.c.l.b16 %v1099
    %v4031 = vunpack.c.h.b16 %v1099
    %v4032 = vunpack.c.l.b16 %v1100
    %v4033 = vunpack.c.h.b16 %v1100
    %v4034 = vunpack.c.l.b16 %v1101
    %v4035 = vunpack.c.h.b16 %v1101
    %v4036 = vunpack.c.l.b16 %v1102
    %v4037 = vunpack.c.h.b16 %v1102
    %v4038 = vunpack.c.l.b16 %v1103
    %v4039 = vunpack.c.h.b16 %v1103
    %v4040 = vunpack.c.l.b16 %v1104
    %v4041 = vunpack.c.h.b16 %v1104
    %v4042 = vunpack.c.l.b16 %v1105
    %v4043 = vunpack.c.h.b16 %v1105
    %v4044 = vunpack.c.l.b16 %v1106
    %v4045 = vunpack.c.h.b16 %v1106
    %v4046 = vunpack.c.l.b16 %v1107
    %v4047 = vunpack.c.h.b16 %v1107
    %v4048 = vunpack.c.l.b16 %v1108
    %v4049 = vunpack.c.h.b16 %v1108
    %v4050 = vunpack.c.l.b16 %v1109
    %v4051 = vunpack.c.h.b16 %v1109
    %v4052 = vunpack.c.l.b16 %v1110
    %v4053 = vunpack.c.h.b16 %v1110
    %v4054 = vunpack.c.l.b16 %v1111
    %v4055 = vunpack.c.h.b16 %v1111
    %v4056 = vunpack.c.l.b16 %v1112
    %v4057 = vunpack.c.h.b16 %v1112
    %v4058 = vunpack.c.l.b16 %v1113
    %v4059 = vunpack.c.h.b16 %v1113
    %v4060 = vunpack.c.l.b16 %v1114
    %v4061 = vunpack.c.h.b16 %v1114
    %v4062 = vunpack.c.l.b16 %v1115
    %v4063 = vunpack.c.h.b16 %v1115
    %v4064 = vunpack.c.l.b16 %v1116
    %v4065 = vunpack.c.h.b16 %v1116
    %v4066 = vunpack.c.l.b16 %v1117
    %v4067 = vunpack.c.h.b16 %v1117
    %v4068 = vunpack.c.l.b16 %v1118
    %v4069 = vunpack.c.h.b16 %v1118
    %v4070 = vunpack.c.l.b16 %v1119
    %v4071 = vunpack.c.h.b16 %v1119
    %v4072 = vunpack.c.l.b16 %v1120
    %v4073 = vunpack.c.h.b16 %v1120
    %v4074 = vunpack.c.l.b16 %v1121
    %v4075 = vunpack.c.h.b16 %v1121
    %v4076 = vunpack.c.l.b16 %v1122
    %v4077 = vunpack.c.h.b16 %v1122
    %v4078 = vunpack.c.l.b16 %v1123
    %v4079 = vunpack.c.h.b16 %v1123
    %v4080 = vunpack.c.l.b16 %v1124
    %v4081 = vunpack.c.h.b16 %v1124
    %v4082 = vunpack.c.l.b16 %v1125
    %v4083 = vunpack.c.h.b16 %v1125
    %v4084 = vunpack.c.l.b16 %v1126
    %v4085 = vunpack.c.h.b16 %v1126
    %v4086 = vunpack.c.l.b16 %v1127
    %v4087 = vunpack.c.h.b16 %v1127
    %v4088 = vunpack.c.l.b16 %v1128
    %v4089 = vunpack.c.h.b16 %v1128
    %v4090 = vunpack.c.l.b16 %v1129
    %v4091 = vunpack.c.h.b16 %v1129
    %v4092 = vunpack.c.l.b16 %v1130
    %v4093 = vunpack.c.h.b16 %v1130
    %v4094 = vunpack.c.l.b16 %v1131
    %v4095 = vunpack.c.h.b16 %v1131
    %v4096 = vunpack.c.l.b16 %v1132
    %v4097 = vunpack.c.h.b16 %v1132
    %v4098 = vunpack.c.l.b16 %v1133
    %v4099 = vunpack.c.h.b16 %v1133
    %v4100 = vunpack.c.l.b16 %v1134
    %v4101 = vunpack.c.h.b16 %v1134
    %v4102 = vunpack.c.l.b16 %v1135
    %v4103 = vunpack.c.h.b16 %v1135
    %v4104 = vunpack.c.l.b16 %v1136
    %v4105 = vunpack.c.h.b16 %v1136
    %v4106 = vunpack.c.l.b16 %v1137
    %v4107 = vunpack.c.h.b16 %v1137
    %v4108 = vunpack.c.l.b16 %v1138
    %v4109 = vunpack.c.h.b16 %v1138
    %v4110 = vunpack.c.l.b16 %v1139
    %v4111 = vunpack.c.h.b16 %v1139
    %v4112 = vunpack.c.l.b16 %v1140
    %v4113 = vunpack.c.h.b16 %v1140
    %v4114 = vunpack.c.l.b16 %v1141
    %v4115 = vunpack.c.h.b16 %v1141
    %v4116 = vunpack.c.l.b16 %v1142
    %v4117 = vunpack.c.h.b16 %v1142
    %v4118 = vunpack.c.l.b16 %v1143
    %v4119 = vunpack.c.h.b16 %v1143
    %v4120 = vunpack.c.l.b16 %v1144
    %v4121 = vunpack.c.h.b16 %v1144
    %v4122 = vpack.c.b16 %v2146, %v2138
    %v4123 = vpack.c.b16 %v2147, %v2139
    %v4124 = vpack.c.b16 %v2148, %v2140
    %v4125 = vpack.c.b16 %v2149, %v2141
    %v4126 = vpack.c.b16 %v2150, %v2142
    %v4127 = vpack.c.b16 %v2151, %v2143
    %v4128 = vpack.c.b16 %v2152, %v2144
    %v4129 = vpack.c.b16 %v2153, %v2145
    %v4130 = vpack.c.b16 %v2162, %v2154
    %v4131 = vpack.c.b16 %v2163, %v2155
    %v4132 = vpack.c.b16 %v2164, %v2156
    %v4133 = vpack.c.b16 %v2165, %v2157
    %v4134 = vpack.c.b16 %v2166, %v2158
    %v4135 = vpack.c.b16 %v2167, %v2159
    %v4136 = vpack.c.b16 %v2168, %v2160
    %v4137 = vpack.c.b16 %v2169, %v2161
    %v4138 = vpack.c.b16 %v2178, %v2170
    %v4139 = vpack.c.b16 %v2179, %v2171
    %v4140 = vpack.c.b16 %v2180, %v2172
    %v4141 = vpack.c.b16 %v2181, %v2173
    %v4142 = vpack.c.b16 %v2182, %v2174
    %v4143 = vpack.c.b16 %v2183, %v2175
    %v4144 = vpack.c.b16 %v2184, %v2176
    %v4145 = vpack.c.b16 %v2185, %v2177
    %v4146 = vpack.c.b16 %v2194, %v2186
    %v4147 = vpack.c.b16 %v2195, %v2187
    %v4148 = vpack.c.b16 %v2196, %v2188
    %v4149 = vpack.c.b16 %v2197, %v2189
    %v4150 = vpack.c.b16 %v2198, %v2190
    %v4151 = vpack.c.b16 %v2199, %v2191
    %v4152 = vpack.c.b16 %v2200, %v2192
    %v4153 = vpack.c.b16 %v2201, %v2193
    %v4154 = vpack.c.b16 %v2210, %v2202
    %v4155 = vpack.c.b16 %v2211, %v2203
    %v4156 = vpack.c.b16 %v2212, %v2204
    %v4157 = vpack.c.b16 %v2213, %v2205
    %v4158 = vpack.c.b16 %v2214, %v2206
    %v4159 = vpack.c.b16 %v2215, %v2207
    %v4160 = vpack.c.b16 %v2216, %v2208
    %v4161 = vpack.c.b16 %v2217, %v2209
    %v4162 = vpack.c.b16 %v2226, %v2218
    %v4163 = vpack.c.b16 %v2227, %v2219
    %v4164 = vpack.c.b16 %v2228, %v2220
    %v4165 = vpack.c.b16 %v2229, %v2221
    %v4166 = vpack.c.b16 %v2230, %v2222
    %v4167 = vpack.c.b16 %v2231, %v2223
    %v4168 = vpack.c.b16 %v2232, %v2224
    %v4169 = vpack.c.b16 %v2233, %v2225
    %v4170 = vpack.c.b16 %v2242, %v2234
    %v4171 = vpack.c.b16 %v2243, %v2235
    %v4172 = vpack.c.b16 %v2244, %v2236
    %v4173 = vpack.c.b16 %v2245, %v2237
    %v4174 = vpack.c.b16 %v2246, %v2238
    %v4175 = vpack.c.b16 %v2247, %v2239
    %v4176 = vpack.c.b16 %v2248, %v2240
    %v4177 = vpack.c.b16 %v2249, %v2241
    %v4178 = vpack.c.b16 %v2258, %v2250
    %v4179 = vpack.c.b16 %v2259, %v2251
    %v4180 = vpack.c.b16 %v2260, %v2252
    %v4181 = vpack.c.b16 %v2261, %v2253
    %v4182 = vpack.c.b16 %v2262, %v2254
    %v4183 = vpack.c.b16 %v2263, %v2255
    %v4184 = vpack.c.b16 %v2264, %v2256
    %v4185 = vpack.c.b16 %v2265, %v2257
    %v4186 = vpack.c.b16 %v2274, %v2266
    %v4187 = vpack.c.b16 %v2275, %v2267
    %v4188 = vpack.c.b16 %v2276, %v2268
    %v4189 = vpack.c.b16 %v2277, %v2269
    %v4190 = vpack.c.b16 %v2278, %v2270
    %v4191 = vpack.c.b16 %v2279, %v2271
    %v4192 = vpack.c.b16 %v2280, %v2272
    %v4193 = vpack.c.b16 %v2281, %v2273
    %v4194 = vpack.c.b16 %v2290, %v2282
    %v4195 = vpack.c.b16 %v2291, %v2283
    %v4196 = vpack.c.b16 %v2292, %v2284
    %v4197 = vpack.c.b16 %v2293, %v2285
    %v4198 = vpack.c.b16 %v2294, %v2286
    %v4199 = vpack.c.b16 %v2295, %v2287
    %v4200 = vpack.c.b16 %v2296, %v2288
    %v4201 = vpack.c.b16 %v2297, %v2289
    %v4202 = vpack.c.b16 %v2306, %v2298
    %v4203 = vpack.c.b16 %v2307, %v2299
    %v4204 = vpack.c.b16 %v2308, %v2300
    %v4205 = vpack.c.b16 %v2309, %v2301
    %v4206 = vpack.c.b16 %v2310, %v2302
    %v4207 = vpack.c.b16 %v2311, %v2303
    %v4208 = vpack.c.b16 %v2312, %v2304
    %v4209 = vpack.c.b16 %v2313, %v2305
    %v4210 = vpack.c.b16 %v2322, %v2314
    %v4211 = vpack.c.b16 %v2323, %v2315
    %v4212 = vpack.c.b16 %v2324, %v2316
    %v4213 = vpack.c.b16 %v2325, %v2317
    %v4214 = vpack.c.b16 %v2326, %v2318
    %v4215 = vpack.c.b16 %v2327, %v2319
    %v4216 = vpack.c.b16 %v2328, %v2320
    %v4217 = vpack.c.b16 %v2329, %v2321
    %v4218 = vpack.c.b16 %v2338, %v2330
    %v4219 = vpack.c.b16 %v2339, %v2331
    %v4220 = vpack.c.b16 %v2340, %v2332
    %v4221 = vpack.c.b16 %v2341, %v2333
    %v4222 = vpack.c.b16 %v2342, %v2334
    %v4223 = vpack.c.b16 %v2343, %v2335
    %v4224 = vpack.c.b16 %v2344, %v2336
    %v4225 = vpack.c.b16 %v2345, %v2337
    %v4226 = vpack.c.b16 %v2354, %v2346
    %v4227 = vpack.c.b16 %v2355, %v2347
    %v4228 = vpack.c.b16 %v2356, %v2348
    %v4229 = vpack.c.b16 %v2357, %v2349
    %v4230 = vpack.c.b16 %v2358, %v2350
    %v4231 = vpack.c.b16 %v2359, %v2351
    %v4232 = vpack.c.b16 %v2360, %v2352
    %v4233 = vpack.c.b16 %v2361, %v2353
    %v4234 = vpack.c.b16 %v2370, %v2362
    %v4235 = vpack.c.b16 %v2371, %v2363
    %v4236 = vpack.c.b16 %v2372, %v2364
    %v4237 = vpack.c.b16 %v2373, %v2365
    %v4238 = vpack.c.b16 %v2374, %v2366
    %v4239 = vpack.c.b16 %v2375, %v2367
    %v4240 = vpack.c.b16 %v2376, %v2368
    %v4241 = vpack.c.b16 %v2377, %v2369
    %v4242 = vpack.c.b16 %v2386, %v2378
    %v4243 = vpack.c.b16 %v2387, %v2379
    %v4244 = vpack.c.b16 %v2388, %v2380
    %v4245 = vpack.c.b16 %v2389, %v2381
    %v4246 = vpack.c.b16 %v2390, %v2382
    %v4247 = vpack.c.b16 %v2391, %v2383
    %v4248 = vpack.c.b16 %v2392, %v2384
    %v4249 = vpack.c.b16 %v2393, %v2385
    %v4250 = vpack.c.b16 %v2402, %v2394
    %v4251 = vpack.c.b16 %v2403, %v2395
    %v4252 = vpack.c.b16 %v2404, %v2396
    %v4253 = vpack.c.b16 %v2405, %v2397
    %v4254 = vpack.c.b16 %v2406, %v2398
    %v4255 = vpack.c.b16 %v2407, %v2399
    %v4256 = vpack.c.b16 %v2408, %v2400
    %v4257 = vpack.c.b16 %v2409, %v2401
    %v4258 = vpack.c.b16 %v2418, %v2410
    %v4259 = vpack.c.b16 %v2419, %v2411
    %v4260 = vpack.c.b16 %v2420, %v2412
    %v4261 = vpack.c.b16 %v2421, %v2413
    %v4262 = vpack.c.b16 %v2422, %v2414
    %v4263 = vpack.c.b16 %v2423, %v2415
    %v4264 = vpack.c.b16 %v2424, %v2416
    %v4265 = vpack.c.b16 %v2425, %v2417
    %v4266 = vpack.c.b16 %v2434, %v2426
    %v4267 = vpack.c.b16 %v2435, %v2427
    %v4268 = vpack.c.b16 %v2436, %v2428
    %v4269 = vpack.c.b16 %v2437, %v2429
    %v4270 = vpack.c.b16 %v2438, %v2430
    %v4271 = vpack.c.b16 %v2439, %v2431
    %v4272 = vpack.c.b16 %v2440, %v2432
    %v4273 = vpack.c.b16 %v2441, %v2433
    %v4274 = vpack.c.b16 %v2450, %v2442
    %v4275 = vpack.c.b16 %v2451, %v2443
    %v4276 = vpack.c.b16 %v2452, %v2444
    %v4277 = vpack.c.b16 %v2453, %v2445
    %v4278 = vpack.c.b16 %v2454, %v2446
    %v4279 = vpack.c.b16 %v2455, %v2447
    %v4280 = vpack.c.b16 %v2456, %v2448
    %v4281 = vpack.c.b16 %v2457, %v2449
    %v4282 = vpack.c.b16 %v2466, %v2458
    %v4283 = vpack.c.b16 %v2467, %v2459
    %v4284 = vpack.c.b16 %v2468, %v2460
    %v4285 = vpack.c.b16 %v2469, %v2461
    %v4286 = vpack.c.b16 %v2470, %v2462
    %v4287 = vpack.c.b16 %v2471, %v2463
    %v4288 = vpack.c.b16 %v2472, %v2464
    %v4289 = vpack.c.b16 %v2473, %v2465
    %v4290 = vpack.c.b16 %v2482, %v2474
    %v4291 = vpack.c.b16 %v2483, %v2475
    %v4292 = vpack.c.b16 %v2484, %v2476
    %v4293 = vpack.c.b16 %v2485, %v2477
    %v4294 = vpack.c.b16 %v2486, %v2478
    %v4295 = vpack.c.b16 %v2487, %v2479
    %v4296 = vpack.c.b16 %v2488, %v2480
    %v4297 = vpack.c.b16 %v2489, %v2481
    %v4298 = vpack.c.b16 %v2498, %v2490
    %v4299 = vpack.c.b16 %v2499, %v2491
    %v4300 = vpack.c.b16 %v2500, %v2492
    %v4301 = vpack.c.b16 %v2501, %v2493
    %v4302 = vpack.c.b16 %v2502, %v2494
    %v4303 = vpack.c.b16 %v2503, %v2495
    %v4304 = vpack.c.b16 %v2504, %v2496
    %v4305 = vpack.c.b16 %v2505, %v2497
    %v4306 = vpack.c.b16 %v2514, %v2506
    %v4307 = vpack.c.b16 %v2515, %v2507
    %v4308 = vpack.c.b16 %v2516, %v2508
    %v4309 = vpack.c.b16 %v2517, %v2509
    %v4310 = vpack.c.b16 %v2518, %v2510
    %v4311 = vpack.c.b16 %v2519, %v2511
    %v4312 = vpack.c.b16 %v2520, %v2512
    %v4313 = vpack.c.b16 %v2521, %v2513
    %v4314 = vpack.c.b16 %v2530, %v2522
    %v4315 = vpack.c.b16 %v2531, %v2523
    %v4316 = vpack.c.b16 %v2532, %v2524
    %v4317 = vpack.c.b16 %v2533, %v2525
    %v4318 = vpack.c.b16 %v2534, %v2526
    %v4319 = vpack.c.b16 %v2535, %v2527
    %v4320 = vpack.c.b16 %v2536, %v2528
    %v4321 = vpack.c.b16 %v2537, %v2529
    %v4322 = vpack.c.b16 %v2546, %v2538
    %v4323 = vpack.c.b16 %v2547, %v2539
    %v4324 = vpack.c.b16 %v2548, %v2540
    %v4325 = vpack.c.b16 %v2549, %v2541
    %v4326 = vpack.c.b16 %v2550, %v2542
    %v4327 = vpack.c.b16 %v2551, %v2543
    %v4328 = vpack.c.b16 %v2552, %v2544
    %v4329 = vpack.c.b16 %v2553, %v2545
    %v4330 = vpack.c.b16 %v2562, %v2554
    %v4331 = vpack.c.b16 %v2563, %v2555
    %v4332 = vpack.c.b16 %v2564, %v2556
    %v4333 = vpack.c.b16 %v2565, %v2557
    %v4334 = vpack.c.b16 %v2566, %v2558
    %v4335 = vpack.c.b16 %v2567, %v2559
    %v4336 = vpack.c.b16 %v2568, %v2560
    %v4337 = vpack.c.b16 %v2569, %v2561
    %v4338 = vpack.c.b16 %v2578, %v2570
    %v4339 = vpack.c.b16 %v2579, %v2571
    %v4340 = vpack.c.b16 %v2580, %v2572
    %v4341 = vpack.c.b16 %v2581, %v2573
    %v4342 = vpack.c.b16 %v2582, %v2574
    %v4343 = vpack.c.b16 %v2583, %v2575
    %v4344 = vpack.c.b16 %v2584, %v2576
    %v4345 = vpack.c.b16 %v2585, %v2577
    %v4346 = vpack.c.b16 %v2594, %v2586
    %v4347 = vpack.c.b16 %v2595, %v2587
    %v4348 = vpack.c.b16 %v2596, %v2588
    %v4349 = vpack.c.b16 %v2597, %v2589
    %v4350 = vpack.c.b16 %v2598, %v2590
    %v4351 = vpack.c.b16 %v2599, %v2591
    %v4352 = vpack.c.b16 %v2600, %v2592
    %v4353 = vpack.c.b16 %v2601, %v2593
    %v4354 = vpack.c.b16 %v2610, %v2602
    %v4355 = vpack.c.b16 %v2611, %v2603
    %v4356 = vpack.c.b16 %v2612, %v2604
    %v4357 = vpack.c.b16 %v2613, %v2605
    %v4358 = vpack.c.b16 %v2614, %v2606
    %v4359 = vpack.c.b16 %v2615, %v2607
    %v4360 = vpack.c.b16 %v2616, %v2608
    %v4361 = vpack.c.b16 %v2617, %v2609
    %v4362 = vpack.c.b16 %v2626, %v2618
    %v4363 = vpack.c.b16 %v2627, %v2619
    %v4364 = vpack.c.b16 %v2628, %v2620
    %v4365 = vpack.c.b16 %v2629, %v2621
    %v4366 = vpack.c.b16 %v2630, %v2622
    %v4367 = vpack.c.b16 %v2631, %v2623
    %v4368 = vpack.c.b16 %v2632, %v2624
    %v4369 = vpack.c.b16 %v2633, %v2625
    %v4370 = vpack.c.b16 %v2642, %v2634
    %v4371 = vpack.c.b16 %v2643, %v2635
    %v4372 = vpack.c.b16 %v2644, %v2636
    %v4373 = vpack.c.b16 %v2645, %v2637
    %v4374 = vpack.c.b16 %v2646, %v2638
    %v4375 = vpack.c.b16 %v2647, %v2639
    %v4376 = vpack.c.b16 %v2648, %v2640
    %v4377 = vpack.c.b16 %v2649, %v2641
    %v4378 = vpack.c.b16 %v2658, %v2650
    %v4379 = vpack.c.b16 %v2659, %v2651
    %v4380 = vpack.c.b16 %v2660, %v2652
    %v4381 = vpack.c.b16 %v2661, %v2653
    %v4382 = vpack.c.b16 %v2662, %v2654
    %v4383 = vpack.c.b16 %v2663, %v2655
    %v4384 = vpack.c.b16 %v2664, %v2656
    %v4385 = vpack.c.b16 %v2665, %v2657
    %v4386 = vpack.c.b16 %v2674, %v2666
    %v4387 = vpack.c.b16 %v2675, %v2667
    %v4388 = vpack.c.b16 %v2676, %v2668
    %v4389 = vpack.c.b16 %v2677, %v2669
    %v4390 = vpack.c.b16 %v2678, %v2670
    %v4391 = vpack.c.b16 %v2679, %v2671
    %v4392 = vpack.c.b16 %v2680, %v2672
    %v4393 = vpack.c.b16 %v2681, %v2673
    %v4394 = vpack.c.b16 %v2690, %v2682
    %v4395 = vpack.c.b16 %v2691, %v2683
    %v4396 = vpack.c.b16 %v2692, %v2684
    %v4397 = vpack.c.b16 %v2693, %v2685
    %v4398 = vpack.c.b16 %v2694, %v2686
    %v4399 = vpack.c.b16 %v2695, %v2687
    %v4400 = vpack.c.b16 %v2696, %v2688
    %v4401 = vpack.c.b16 %v2697, %v2689
    %v4402 = vpack.c.b16 %v2706, %v2698
    %v4403 = vpack.c.b16 %v2707, %v2699
    %v4404 = vpack.c.b16 %v2708, %v2700
    %v4405 = vpack.c.b16 %v2709, %v2701
    %v4406 = vpack.c.b16 %v2710, %v2702
    %v4407 = vpack.c.b16 %v2711, %v2703
    %v4408 = vpack.c.b16 %v2712, %v2704
    %v4409 = vpack.c.b16 %v2713, %v2705
    %v4410 = vpack.c.b16 %v2722, %v2714
    %v4411 = vpack.c.b16 %v2723, %v2715
    %v4412 = vpack.c.b16 %v2724, %v2716
    %v4413 = vpack.c.b16 %v2725, %v2717
    %v4414 = vpack.c.b16 %v2726, %v2718
    %v4415 = vpack.c.b16 %v2727, %v2719
    %v4416 = vpack.c.b16 %v2728, %v2720
    %v4417 = vpack.c.b16 %v2729, %v2721
    %v4418 = vpack.c.b16 %v2738, %v2730
    %v4419 = vpack.c.b16 %v2739, %v2731
    %v4420 = vpack.c.b16 %v2740, %v2732
    %v4421 = vpack.c.b16 %v2741, %v2733
    %v4422 = vpack.c.b16 %v2742, %v2734
    %v4423 = vpack.c.b16 %v2743, %v2735
    %v4424 = vpack.c.b16 %v2744, %v2736
    %v4425 = vpack.c.b16 %v2745, %v2737
    %v4426 = vpack.c.b16 %v2754, %v2746
    %v4427 = vpack.c.b16 %v2755, %v2747
    %v4428 = vpack.c.b16 %v2756, %v2748
    %v4429 = vpack.c.b16 %v2757, %v2749
    %v4430 = vpack.c.b16 %v2758, %v2750
    %v4431 = vpack.c.b16 %v2759, %v2751
    %v4432 = vpack.c.b16 %v2760, %v2752
    %v4433 = vpack.c.b16 %v2761, %v2753
    %v4434 = vpack.c.b16 %v2770, %v2762
    %v4435 = vpack.c.b16 %v2771, %v2763
    %v4436 = vpack.c.b16 %v2772, %v2764
    %v4437 = vpack.c.b16 %v2773, %v2765
    %v4438 = vpack.c.b16 %v2774, %v2766
    %v4439 = vpack.c.b16 %v2775, %v2767
    %v4440 = vpack.c.b16 %v2776, %v2768
    %v4441 = vpack.c.b16 %v2777, %v2769
    %v4442 = vpack.c.b16 %v2786, %v2778
    %v4443 = vpack.c.b16 %v2787, %v2779
    %v4444 = vpack.c.b16 %v2788, %v2780
    %v4445 = vpack.c.b16 %v2789, %v2781
    %v4446 = vpack.c.b16 %v2790, %v2782
    %v4447 = vpack.c.b16 %v2791, %v2783
    %v4448 = vpack.c.b16 %v2792, %v2784
    %v4449 = vpack.c.b16 %v2793, %v2785
    %v4450 = vpack.c.b16 %v2802, %v2794
    %v4451 = vpack.c.b16 %v2803, %v2795
    %v4452 = vpack.c.b16 %v2804, %v2796
    %v4453 = vpack.c.b16 %v2805, %v2797
    %v4454 = vpack.c.b16 %v2806, %v2798
    %v4455 = vpack.c.b16 %v2807, %v2799
    %v4456 = vpack.c.b16 %v2808, %v2800
    %v4457 = vpack.c.b16 %v2809, %v2801
    %v4458 = vpack.c.b16 %v2818, %v2810
    %v4459 = vpack.c.b16 %v2819, %v2811
    %v4460 = vpack.c.b16 %v2820, %v2812
    %v4461 = vpack.c.b16 %v2821, %v2813
    %v4462 = vpack.c.b16 %v2822, %v2814
    %v4463 = vpack.c.b16 %v2823, %v2815
    %v4464 = vpack.c.b16 %v2824, %v2816
    %v4465 = vpack.c.b16 %v2825, %v2817
    %v4466 = vpack.c.b16 %v2834, %v2826
    %v4467 = vpack.c.b16 %v2835, %v2827
    %v4468 = vpack.c.b16 %v2836, %v2828
    %v4469 = vpack.c.b16 %v2837, %v2829
    %v4470 = vpack.c.b16 %v2838, %v2830
    %v4471 = vpack.c.b16 %v2839, %v2831
    %v4472 = vpack.c.b16 %v2840, %v2832
    %v4473 = vpack.c.b16 %v2841, %v2833
    %v4474 = vpack.c.b16 %v2850, %v2842
    %v4475 = vpack.c.b16 %v2851, %v2843
    %v4476 = vpack.c.b16 %v2852, %v2844
    %v4477 = vpack.c.b16 %v2853, %v2845
    %v4478 = vpack.c.b16 %v2854, %v2846
    %v4479 = vpack.c.b16 %v2855, %v2847
    %v4480 = vpack.c.b16 %v2856, %v2848
    %v4481 = vpack.c.b16 %v2857, %v2849
    %v4482 = vpack.c.b16 %v2866, %v2858
    %v4483 = vpack.c.b16 %v2867, %v2859
    %v4484 = vpack.c.b16 %v2868, %v2860
    %v4485 = vpack.c.b16 %v2869, %v2861
    %v4486 = vpack.c.b16 %v2870, %v2862
    %v4487 = vpack.c.b16 %v2871, %v2863
    %v4488 = vpack.c.b16 %v2872, %v2864
    %v4489 = vpack.c.b16 %v2873, %v2865
    %v4490 = vpack.c.b16 %v2882, %v2874
    %v4491 = vpack.c.b16 %v2883, %v2875
    %v4492 = vpack.c.b16 %v2884, %v2876
    %v4493 = vpack.c.b16 %v2885, %v2877
    %v4494 = vpack.c.b16 %v2886, %v2878
    %v4495 = vpack.c.b16 %v2887, %v2879
    %v4496 = vpack.c.b16 %v2888, %v2880
    %v4497 = vpack.c.b16 %v2889, %v2881
    %v4498 = vpack.c.b16 %v2898, %v2890
    %v4499 = vpack.c.b16 %v2899, %v2891
    %v4500 = vpack.c.b16 %v2900, %v2892
    %v4501 = vpack.c.b16 %v2901, %v2893
    %v4502 = vpack.c.b16 %v2902, %v2894
    %v4503 = vpack.c.b16 %v2903, %v2895
    %v4504 = vpack.c.b16 %v2904, %v2896
    %v4505 = vpack.c.b16 %v2905, %v2897
    %v4506 = vpack.c.b16 %v2914, %v2906
    %v4507 = vpack.c.b16 %v2915, %v2907
    %v4508 = vpack.c.b16 %v2916, %v2908
    %v4509 = vpack.c.b16 %v2917, %v2909
    %v4510 = vpack.c.b16 %v2918, %v2910
    %v4511 = vpack.c.b16 %v2919, %v2911
    %v4512 = vpack.c.b16 %v2920, %v2912
    %v4513 = vpack.c.b16 %v2921, %v2913
    %v4514 = vpack.c.b16 %v2930, %v2922
    %v4515 = vpack.c.b16 %v2931, %v2923
    %v4516 = vpack.c.b16 %v2932, %v2924
    %v4517 = vpack.c.b16 %v2933, %v2925
    %v4518 = vpack.c.b16 %v2934, %v2926
    %v4519 = vpack.c.b16 %v2935, %v2927
    %v4520 = vpack.c.b16 %v2936, %v2928
    %v4521 = vpack.c.b16 %v2937, %v2929
    %v4522 = vpack.c.b16 %v2946, %v2938
    %v4523 = vpack.c.b16 %v2947, %v2939
    %v4524 = vpack.c.b16 %v2948, %v2940
    %v4525 = vpack.c.b16 %v2949, %v2941
    %v4526 = vpack.c.b16 %v2950, %v2942
    %v4527 = vpack.c.b16 %v2951, %v2943
    %v4528 = vpack.c.b16 %v2952, %v2944
    %v4529 = vpack.c.b16 %v2953, %v2945
    %v4530 = vpack.c.b16 %v2962, %v2954
    %v4531 = vpack.c.b16 %v2963, %v2955
    %v4532 = vpack.c.b16 %v2964, %v2956
    %v4533 = vpack.c.b16 %v2965, %v2957
    %v4534 = vpack.c.b16 %v2966, %v2958
    %v4535 = vpack.c.b16 %v2967, %v2959
    %v4536 = vpack.c.b16 %v2968, %v2960
    %v4537 = vpack.c.b16 %v2969, %v2961
    %v4538 = vpack.c.b16 %v2978, %v2970
    %v4539 = vpack.c.b16 %v2979, %v2971
    %v4540 = vpack.c.b16 %v2980, %v2972
    %v4541 = vpack.c.b16 %v2981, %v2973
    %v4542 = vpack.c.b16 %v2982, %v2974
    %v4543 = vpack.c.b16 %v2983, %v2975
    %v4544 = vpack.c.b16 %v2984, %v2976
    %v4545 = vpack.c.b16 %v2985, %v2977
    %v4546 = vpack.c.b16 %v2994, %v2986
    %v4547 = vpack.c.b16 %v2995, %v2987
    %v4548 = vpack.c.b16 %v2996, %v2988
    %v4549 = vpack.c.b16 %v2997, %v2989
    %v4550 = vpack.c.b16 %v2998, %v2990
    %v4551 = vpack.c.b16 %v2999, %v2991
    %v4552 = vpack.c.b16 %v3000, %v2992
    %v4553 = vpack.c.b16 %v3001, %v2993
    %v4554 = vpack.c.b16 %v3010, %v3002
    %v4555 = vpack.c.b16 %v3011, %v3003
    %v4556 = vpack.c.b16 %v3012, %v3004
    %v4557 = vpack.c.b16 %v3013, %v3005
    %v4558 = vpack.c.b16 %v3014, %v3006
    %v4559 = vpack.c.b16 %v3015, %v3007
    %v4560 = vpack.c.b16 %v3016, %v3008
    %v4561 = vpack.c.b16 %v3017, %v3009
    %v4562 = vpack.c.b16 %v3026, %v3018
    %v4563 = vpack.c.b16 %v3027, %v3019
    %v4564 = vpack.c.b16 %v3028, %v3020
    %v4565 = vpack.c.b16 %v3029, %v3021
    %v4566 = vpack.c.b16 %v3030, %v3022
    %v4567 = vpack.c.b16 %v3031, %v3023
    %v4568 = vpack.c.b16 %v3032, %v3024
    %v4569 = vpack.c.b16 %v3033, %v3025
    %v4570 = vpack.c.b16 %v3042, %v3034
    %v4571 = vpack.c.b16 %v3043, %v3035
    %v4572 = vpack.c.b16 %v3044, %v3036
    %v4573 = vpack.c.b16 %v3045, %v3037
    %v4574 = vpack.c.b16 %v3046, %v3038
    %v4575 = vpack.c.b16 %v3047, %v3039
    %v4576 = vpack.c.b16 %v3048, %v3040
    %v4577 = vpack.c.b16 %v3049, %v3041
    %v4578 = vpack.c.b16 %v3058, %v3050
    %v4579 = vpack.c.b16 %v3059, %v3051
    %v4580 = vpack.c.b16 %v3060, %v3052
    %v4581 = vpack.c.b16 %v3061, %v3053
    %v4582 = vpack.c.b16 %v3062, %v3054
    %v4583 = vpack.c.b16 %v3063, %v3055
    %v4584 = vpack.c.b16 %v3064, %v3056
    %v4585 = vpack.c.b16 %v3065, %v3057
    %v4586 = vpack.c.b16 %v3074, %v3066
    %v4587 = vpack.c.b16 %v3075, %v3067
    %v4588 = vpack.c.b16 %v3076, %v3068
    %v4589 = vpack.c.b16 %v3077, %v3069
    %v4590 = vpack.c.b16 %v3078, %v3070
    %v4591 = vpack.c.b16 %v3079, %v3071
    %v4592 = vpack.c.b16 %v3080, %v3072
    %v4593 = vpack.c.b16 %v3081, %v3073
    %v4594 = vpack.c.b16 %v3090, %v3082
    %v4595 = vpack.c.b16 %v3091, %v3083
    %v4596 = vpack.c.b16 %v3092, %v3084
    %v4597 = vpack.c.b16 %v3093, %v3085
    %v4598 = vpack.c.b16 %v3094, %v3086
    %v4599 = vpack.c.b16 %v3095, %v3087
    %v4600 = vpack.c.b16 %v3096, %v3088
    %v4601 = vpack.c.b16 %v3097, %v3089
    %v4602 = vpack.c.b16 %v3106, %v3098
    %v4603 = vpack.c.b16 %v3107, %v3099
    %v4604 = vpack.c.b16 %v3108, %v3100
    %v4605 = vpack.c.b16 %v3109, %v3101
    %v4606 = vpack.c.b16 %v3110, %v3102
    %v4607 = vpack.c.b16 %v3111, %v3103
    %v4608 = vpack.c.b16 %v3112, %v3104
    %v4609 = vpack.c.b16 %v3113, %v3105
    %v4610 = vpack.c.b16 %v3122, %v3114
    %v4611 = vpack.c.b16 %v3123, %v3115
    %v4612 = vpack.c.b16 %v3124, %v3116
    %v4613 = vpack.c.b16 %v3125, %v3117
    %v4614 = vpack.c.b16 %v3126, %v3118
    %v4615 = vpack.c.b16 %v3127, %v3119
    %v4616 = vpack.c.b16 %v3128, %v3120
    %v4617 = vpack.c.b16 %v3129, %v3121
    %v4618 = vpack.c.b16 %v3138, %v3130
    %v4619 = vpack.c.b16 %v3139, %v3131
    %v4620 = vpack.c.b16 %v3140, %v3132
    %v4621 = vpack.c.b16 %v3141, %v3133
    %v4622 = vpack.c.b16 %v3142, %v3134
    %v4623 = vpack.c.b16 %v3143, %v3135
    %v4624 = vpack.c.b16 %v3144, %v3136
    %v4625 = vpack.c.b16 %v3145, %v3137
    %v4626 = vpack.c.b16 %v3154, %v3146
    %v4627 = vpack.c.b16 %v3155, %v3147
    %v4628 = vpack.c.b16 %v3156, %v3148
    %v4629 = vpack.c.b16 %v3157, %v3149
    %v4630 = vpack.c.b16 %v3158, %v3150
    %v4631 = vpack.c.b16 %v3159, %v3151
    %v4632 = vpack.c.b16 %v3160, %v3152
    %v4633 = vpack.c.b16 %v3161, %v3153
    %v4634 = vpack.c.b16 %v3170, %v3162
    %v4635 = vpack.c.b16 %v3171, %v3163
    %v4636 = vpack.c.b16 %v3172, %v3164
    %v4637 = vpack.c.b16 %v3173, %v3165
    %v4638 = vpack.c.b16 %v3174, %v3166
    %v4639 = vpack.c.b16 %v3175, %v3167
    %v4640 = vpack.c.b16 %v3176, %v3168
    %v4641 = vpack.c.b16 %v3177, %v3169
    %v4642 = vpack.c.b16 %v3186, %v3178
    %v4643 = vpack.c.b16 %v3187, %v3179
    %v4644 = vpack.c.b16 %v3188, %v3180
    %v4645 = vpack.c.b16 %v3189, %v3181
    %v4646 = vpack.c.b16 %v3190, %v3182
    %v4647 = vpack.c.b16 %v3191, %v3183
    %v4648 = vpack.c.b16 %v3192, %v3184
    %v4649 = vpack.c.b16 %v3193, %v3185
    %v4650 = vpack.c.b16 %v3202, %v3194
    %v4651 = vpack.c.b16 %v3203, %v3195
    %v4652 = vpack.c.b16 %v3204, %v3196
    %v4653 = vpack.c.b16 %v3205, %v3197
    %v4654 = vpack.c.b16 %v3206, %v3198
    %v4655 = vpack.c.b16 %v3207, %v3199
    %v4656 = vpack.c.b16 %v3208, %v3200
    %v4657 = vpack.c.b16 %v3209, %v3201
    %v4658 = vpack.c.b16 %v3218, %v3210
    %v4659 = vpack.c.b16 %v3219, %v3211
    %v4660 = vpack.c.b16 %v3220, %v3212
    %v4661 = vpack.c.b16 %v3221, %v3213
    %v4662 = vpack.c.b16 %v3222, %v3214
    %v4663 = vpack.c.b16 %v3223, %v3215
    %v4664 = vpack.c.b16 %v3224, %v3216
    %v4665 = vpack.c.b16 %v3225, %v3217
    %v4666 = vpack.c.b16 %v3234, %v3226
    %v4667 = vpack.c.b16 %v3235, %v3227
    %v4668 = vpack.c.b16 %v3236, %v3228
    %v4669 = vpack.c.b16 %v3237, %v3229
    %v4670 = vpack.c.b16 %v3238, %v3230
    %v4671 = vpack.c.b16 %v3239, %v3231
    %v4672 = vpack.c.b16 %v3240, %v3232
    %v4673 = vpack.c.b16 %v3241, %v3233
    %v4674 = vpack.c.b16 %v3250, %v3242
    %v4675 = vpack.c.b16 %v3251, %v3243
    %v4676 = vpack.c.b16 %v3252, %v3244
    %v4677 = vpack.c.b16 %v3253, %v3245
    %v4678 = vpack.c.b16 %v3254, %v3246
    %v4679 = vpack.c.b16 %v3255, %v3247
    %v4680 = vpack.c.b16 %v3256, %v3248
    %v4681 = vpack.c.b16 %v3257, %v3249
    %v4682 = vpack.c.b16 %v3266, %v3258
    %v4683 = vpack.c.b16 %v3267, %v3259
    %v4684 = vpack.c.b16 %v3268, %v3260
    %v4685 = vpack.c.b16 %v3269, %v3261
    %v4686 = vpack.c.b16 %v3270, %v3262
    %v4687 = vpack.c.b16 %v3271, %v3263
    %v4688 = vpack.c.b16 %v3272, %v3264
    %v4689 = vpack.c.b16 %v3273, %v3265
    %v4690 = vpack.c.b16 %v3282, %v3274
    %v4691 = vpack.c.b16 %v3283, %v3275
    %v4692 = vpack.c.b16 %v3284, %v3276
    %v4693 = vpack.c.b16 %v3285, %v3277
    %v4694 = vpack.c.b16 %v3286, %v3278
    %v4695 = vpack.c.b16 %v3287, %v3279
    %v4696 = vpack.c.b16 %v3288, %v3280
    %v4697 = vpack.c.b16 %v3289, %v3281
    %v4698 = vpack.c.b16 %v3298, %v3290
    %v4699 = vpack.c.b16 %v3299, %v3291
    %v4700 = vpack.c.b16 %v3300, %v3292
    %v4701 = vpack.c.b16 %v3301, %v3293
    %v4702 = vpack.c.b16 %v3302, %v3294
    %v4703 = vpack.c.b16 %v3303, %v3295
    %v4704 = vpack.c.b16 %v3304, %v3296
    %v4705 = vpack.c.b16 %v3305, %v3297
    %v4706 = vpack.c.b16 %v3314, %v3306
    %v4707 = vpack.c.b16 %v3315, %v3307
    %v4708 = vpack.c.b16 %v3316, %v3308
    %v4709 = vpack.c.b16 %v3317, %v3309
    %v4710 = vpack.c.b16 %v3318, %v3310
    %v4711 = vpack.c.b16 %v3319, %v3311
    %v4712 = vpack.c.b16 %v3320, %v3312
    %v4713 = vpack.c.b16 %v3321, %v3313
    %v4714 = vpack.c.b16 %v3330, %v3322
    %v4715 = vpack.c.b16 %v3331, %v3323
    %v4716 = vpack.c.b16 %v3332, %v3324
    %v4717 = vpack.c.b16 %v3333, %v3325
    %v4718 = vpack.c.b16 %v3334, %v3326
    %v4719 = vpack.c.b16 %v3335, %v3327
    %v4720 = vpack.c.b16 %v3336, %v3328
    %v4721 = vpack.c.b16 %v3337, %v3329
    %v4722 = vpack.c.b16 %v3346, %v3338
    %v4723 = vpack.c.b16 %v3347, %v3339
    %v4724 = vpack.c.b16 %v3348, %v3340
    %v4725 = vpack.c.b16 %v3349, %v3341
    %v4726 = vpack.c.b16 %v3350, %v3342
    %v4727 = vpack.c.b16 %v3351, %v3343
    %v4728 = vpack.c.b16 %v3352, %v3344
    %v4729 = vpack.c.b16 %v3353, %v3345
    %v4730 = vpack.c.b16 %v3362, %v3354
    %v4731 = vpack.c.b16 %v3363, %v3355
    %v4732 = vpack.c.b16 %v3364, %v3356
    %v4733 = vpack.c.b16 %v3365, %v3357
    %v4734 = vpack.c.b16 %v3366, %v3358
    %v4735 = vpack.c.b16 %v3367, %v3359
    %v4736 = vpack.c.b16 %v3368, %v3360
    %v4737 = vpack.c.b16 %v3369, %v3361
    %v4738 = vpack.c.b16 %v3378, %v3370
    %v4739 = vpack.c.b16 %v3379, %v3371
    %v4740 = vpack.c.b16 %v3380, %v3372
    %v4741 = vpack.c.b16 %v3381, %v3373
    %v4742 = vpack.c.b16 %v3382, %v3374
    %v4743 = vpack.c.b16 %v3383, %v3375
    %v4744 = vpack.c.b16 %v3384, %v3376
    %v4745 = vpack.c.b16 %v3385, %v3377
    %v4746 = vpack.c.b16 %v3394, %v3386
    %v4747 = vpack.c.b16 %v3395, %v3387
    %v4748 = vpack.c.b16 %v3396, %v3388
    %v4749 = vpack.c.b16 %v3397, %v3389
    %v4750 = vpack.c.b16 %v3398, %v3390
    %v4751 = vpack.c.b16 %v3399, %v3391
    %v4752 = vpack.c.b16 %v3400, %v3392
    %v4753 = vpack.c.b16 %v3401, %v3393
    %v4754 = vpack.c.b16 %v3410, %v3402
    %v4755 = vpack.c.b16 %v3411, %v3403
    %v4756 = vpack.c.b16 %v3412, %v3404
    %v4757 = vpack.c.b16 %v3413, %v3405
    %v4758 = vpack.c.b16 %v3414, %v3406
    %v4759 = vpack.c.b16 %v3415, %v3407
    %v4760 = vpack.c.b16 %v3416, %v3408
    %v4761 = vpack.c.b16 %v3417, %v3409
    %v4762 = vpack.c.b16 %v3426, %v3418
    %v4763 = vpack.c.b16 %v3427, %v3419
    %v4764 = vpack.c.b16 %v3428, %v3420
    %v4765 = vpack.c.b16 %v3429, %v3421
    %v4766 = vpack.c.b16 %v3430, %v3422
    %v4767 = vpack.c.b16 %v3431, %v3423
    %v4768 = vpack.c.b16 %v3432, %v3424
    %v4769 = vpack.c.b16 %v3433, %v3425
    %v4770 = vpack.c.b16 %v3442, %v3434
    %v4771 = vpack.c.b16 %v3443, %v3435
    %v4772 = vpack.c.b16 %v3444, %v3436
    %v4773 = vpack.c.b16 %v3445, %v3437
    %v4774 = vpack.c.b16 %v3446, %v3438
    %v4775 = vpack.c.b16 %v3447, %v3439
    %v4776 = vpack.c.b16 %v3448, %v3440
    %v4777 = vpack.c.b16 %v3449, %v3441
    %v4778 = vpack.c.b16 %v3458, %v3450
    %v4779 = vpack.c.b16 %v3459, %v3451
    %v4780 = vpack.c.b16 %v3460, %v3452
    %v4781 = vpack.c.b16 %v3461, %v3453
    %v4782 = vpack.c.b16 %v3462, %v3454
    %v4783 = vpack.c.b16 %v3463, %v3455
    %v4784 = vpack.c.b16 %v3464, %v3456
    %v4785 = vpack.c.b16 %v3465, %v3457
    %v4786 = vpack.c.b16 %v3474, %v3466
    %v4787 = vpack.c.b16 %v3475, %v3467
    %v4788 = vpack.c.b16 %v3476, %v3468
    %v4789 = vpack.c.b16 %v3477, %v3469
    %v4790 = vpack.c.b16 %v3478, %v3470
    %v4791 = vpack.c.b16 %v3479, %v3471
    %v4792 = vpack.c.b16 %v3480, %v3472
    %v4793 = vpack.c.b16 %v3481, %v3473
    %v4794 = vpack.c.b16 %v3490, %v3482
    %v4795 = vpack.c.b16 %v3491, %v3483
    %v4796 = vpack.c.b16 %v3492, %v3484
    %v4797 = vpack.c.b16 %v3493, %v3485
    %v4798 = vpack.c.b16 %v3494, %v3486
    %v4799 = vpack.c.b16 %v3495, %v3487
    %v4800 = vpack.c.b16 %v3496, %v3488
    %v4801 = vpack.c.b16 %v3497, %v3489
    %v4802 = vpack.c.b16 %v3506, %v3498
    %v4803 = vpack.c.b16 %v3507, %v3499
    %v4804 = vpack.c.b16 %v3508, %v3500
    %v4805 = vpack.c.b16 %v3509, %v3501
    %v4806 = vpack.c.b16 %v3510, %v3502
    %v4807 = vpack.c.b16 %v3511, %v3503
    %v4808 = vpack.c.b16 %v3512, %v3504
    %v4809 = vpack.c.b16 %v3513, %v3505
    %v4810 = vpack.c.b16 %v3522, %v3514
    %v4811 = vpack.c.b16 %v3523, %v3515
    %v4812 = vpack.c.b16 %v3524, %v3516
    %v4813 = vpack.c.b16 %v3525, %v3517
    %v4814 = vpack.c.b16 %v3526, %v3518
    %v4815 = vpack.c.b16 %v3527, %v3519
    %v4816 = vpack.c.b16 %v3528, %v3520
    %v4817 = vpack.c.b16 %v3529, %v3521
    %v4818 = vpack.c.b16 %v3538, %v3530
    %v4819 = vpack.c.b16 %v3539, %v3531
    %v4820 = vpack.c.b16 %v3540, %v3532
    %v4821 = vpack.c.b16 %v3541, %v3533
    %v4822 = vpack.c.b16 %v3542, %v3534
    %v4823 = vpack.c.b16 %v3543, %v3535
    %v4824 = vpack.c.b16 %v3544, %v3536
    %v4825 = vpack.c.b16 %v3545, %v3537
    %v4826 = vpack.c.b16 %v3554, %v3546
    %v4827 = vpack.c.b16 %v3555, %v3547
    %v4828 = vpack.c.b16 %v3556, %v3548
    %v4829 = vpack.c.b16 %v3557, %v3549
    %v4830 = vpack.c.b16 %v3558, %v3550
    %v4831 = vpack.c.b16 %v3559, %v3551
    %v4832 = vpack.c.b16 %v3560, %v3552
    %v4833 = vpack.c.b16 %v3561, %v3553
    %v4834 = vpack.c.b16 %v3570, %v3562
    %v4835 = vpack.c.b16 %v3571, %v3563
    %v4836 = vpack.c.b16 %v3572, %v3564
    %v4837 = vpack.c.b16 %v3573, %v3565
    %v4838 = vpack.c.b16 %v3574, %v3566
    %v4839 = vpack.c.b16 %v3575, %v3567
    %v4840 = vpack.c.b16 %v3576, %v3568
    %v4841 = vpack.c.b16 %v3577, %v3569
    %v4842 = vpack.c.b16 %v3586, %v3578
    %v4843 = vpack.c.b16 %v3587, %v3579
    %v4844 = vpack.c.b16 %v3588, %v3580
    %v4845 = vpack.c.b16 %v3589, %v3581
    %v4846 = vpack.c.b16 %v3590, %v3582
    %v4847 = vpack.c.b16 %v3591, %v3583
    %v4848 = vpack.c.b16 %v3592, %v3584
    %v4849 = vpack.c.b16 %v3593, %v3585
    %v4850 = vpack.c.b16 %v3602, %v3594
    %v4851 = vpack.c.b16 %v3603, %v3595
    %v4852 = vpack.c.b16 %v3604, %v3596
    %v4853 = vpack.c.b16 %v3605, %v3597
    %v4854 = vpack.c.b16 %v3606, %v3598
    %v4855 = vpack.c.b16 %v3607, %v3599
    %v4856 = vpack.c.b16 %v3608, %v3600
    %v4857 = vpack.c.b16 %v3609, %v3601
    %v4858 = vpack.c.b16 %v3618, %v3610
    %v4859 = vpack.c.b16 %v3619, %v3611
    %v4860 = vpack.c.b16 %v3620, %v3612
    %v4861 = vpack.c.b16 %v3621, %v3613
    %v4862 = vpack.c.b16 %v3622, %v3614
    %v4863 = vpack.c.b16 %v3623, %v3615
    %v4864 = vpack.c.b16 %v3624, %v3616
    %v4865 = vpack.c.b16 %v3625, %v3617
    %v4866 = vpack.c.b16 %v3634, %v3626
    %v4867 = vpack.c.b16 %v3635, %v3627
    %v4868 = vpack.c.b16 %v3636, %v3628
    %v4869 = vpack.c.b16 %v3637, %v3629
    %v4870 = vpack.c.b16 %v3638, %v3630
    %v4871 = vpack.c.b16 %v3639, %v3631
    %v4872 = vpack.c.b16 %v3640, %v3632
    %v4873 = vpack.c.b16 %v3641, %v3633
    %v4874 = vpack.c.b16 %v3650, %v3642
    %v4875 = vpack.c.b16 %v3651, %v3643
    %v4876 = vpack.c.b16 %v3652, %v3644
    %v4877 = vpack.c.b16 %v3653, %v3645
    %v4878 = vpack.c.b16 %v3654, %v3646
    %v4879 = vpack.c.b16 %v3655, %v3647
    %v4880 = vpack.c.b16 %v3656, %v3648
    %v4881 = vpack.c.b16 %v3657, %v3649
    %v4882 = vpack.c.b16 %v3666, %v3658
    %v4883 = vpack.c.b16 %v3667, %v3659
    %v4884 = vpack.c.b16 %v3668, %v3660
    %v4885 = vpack.c.b16 %v3669, %v3661
    %v4886 = vpack.c.b16 %v3670, %v3662
    %v4887 = vpack.c.b16 %v3671, %v3663
    %v4888 = vpack.c.b16 %v3672, %v3664
    %v4889 = vpack.c.b16 %v3673, %v3665
    %v4890 = vpack.c.b16 %v3682, %v3674
    %v4891 = vpack.c.b16 %v3683, %v3675
    %v4892 = vpack.c.b16 %v3684, %v3676
    %v4893 = vpack.c.b16 %v3685, %v3677
    %v4894 = vpack.c.b16 %v3686, %v3678
    %v4895 = vpack.c.b16 %v3687, %v3679
    %v4896 = vpack.c.b16 %v3688, %v3680
    %v4897 = vpack.c.b16 %v3689, %v3681
    %v4898 = vpack.c.b16 %v3698, %v3690
    %v4899 = vpack.c.b16 %v3699, %v3691
    %v4900 = vpack.c.b16 %v3700, %v3692
    %v4901 = vpack.c.b16 %v3701, %v3693
    %v4902 = vpack.c.b16 %v3702, %v3694
    %v4903 = vpack.c.b16 %v3703, %v3695
    %v4904 = vpack.c.b16 %v3704, %v3696
    %v4905 = vpack.c.b16 %v3705, %v3697
    %v4906 = vpack.c.b16 %v3714, %v3706
    %v4907 = vpack.c.b16 %v3715, %v3707
    %v4908 = vpack.c.b16 %v3716, %v3708
    %v4909 = vpack.c.b16 %v3717, %v3709
    %v4910 = vpack.c.b16 %v3718, %v3710
    %v4911 = vpack.c.b16 %v3719, %v3711
    %v4912 = vpack.c.b16 %v3720, %v3712
    %v4913 = vpack.c.b16 %v3721, %v3713
    %v4914 = vpack.c.b16 %v3730, %v3722
    %v4915 = vpack.c.b16 %v3731, %v3723
    %v4916 = vpack.c.b16 %v3732, %v3724
    %v4917 = vpack.c.b16 %v3733, %v3725
    %v4918 = vpack.c.b16 %v3734, %v3726
    %v4919 = vpack.c.b16 %v3735, %v3727
    %v4920 = vpack.c.b16 %v3736, %v3728
    %v4921 = vpack.c.b16 %v3737, %v3729
    %v4922 = vpack.c.b16 %v3746, %v3738
    %v4923 = vpack.c.b16 %v3747, %v3739
    %v4924 = vpack.c.b16 %v3748, %v3740
    %v4925 = vpack.c.b16 %v3749, %v3741
    %v4926 = vpack.c.b16 %v3750, %v3742
    %v4927 = vpack.c.b16 %v3751, %v3743
    %v4928 = vpack.c.b16 %v3752, %v3744
    %v4929 = vpack.c.b16 %v3753, %v3745
    %v4930 = vpack.c.b16 %v3762, %v3754
    %v4931 = vpack.c.b16 %v3763, %v3755
    %v4932 = vpack.c.b16 %v3764, %v3756
    %v4933 = vpack.c.b16 %v3765, %v3757
    %v4934 = vpack.c.b16 %v3766, %v3758
    %v4935 = vpack.c.b16 %v3767, %v3759
    %v4936 = vpack.c.b16 %v3768, %v3760
    %v4937 = vpack.c.b16 %v3769, %v3761
    %v4938 = vpack.c.b16 %v3778, %v3770
    %v4939 = vpack.c.b16 %v3779, %v3771
    %v4940 = vpack.c.b16 %v3780, %v3772
    %v4941 = vpack.c.b16 %v3781, %v3773
    %v4942 = vpack.c.b16 %v3782, %v3774
    %v4943 = vpack.c.b16 %v3783, %v3775
    %v4944 = vpack.c.b16 %v3784, %v3776
    %v4945 = vpack.c.b16 %v3785, %v3777
    %v4946 = vpack.c.b16 %v3794, %v3786
    %v4947 = vpack.c.b16 %v3795, %v3787
    %v4948 = vpack.c.b16 %v3796, %v3788
    %v4949 = vpack.c.b16 %v3797, %v3789
    %v4950 = vpack.c.b16 %v3798, %v3790
    %v4951 = vpack.c.b16 %v3799, %v3791
    %v4952 = vpack.c.b16 %v3800, %v3792
    %v4953 = vpack.c.b16 %v3801, %v3793
    %v4954 = vpack.c.b16 %v3810, %v3802
    %v4955 = vpack.c.b16 %v3811, %v3803
    %v4956 = vpack.c.b16 %v3812, %v3804
    %v4957 = vpack.c.b16 %v3813, %v3805
    %v4958 = vpack.c.b16 %v3814, %v3806
    %v4959 = vpack.c.b16 %v3815, %v3807
    %v4960 = vpack.c.b16 %v3816, %v3808
    %v4961 = vpack.c.b16 %v3817, %v3809
    %v4962 = vpack.c.b16 %v3826, %v3818
    %v4963 = vpack.c.b16 %v3827, %v3819
    %v4964 = vpack.c.b16 %v3828, %v3820
    %v4965 = vpack.c.b16 %v3829, %v3821
    %v4966 = vpack.c.b16 %v3830, %v3822
    %v4967 = vpack.c.b16 %v3831, %v3823
    %v4968 = vpack.c.b16 %v3832, %v3824
    %v4969 = vpack.c.b16 %v3833, %v3825
    %v4970 = vpack.c.b16 %v3842, %v3834
    %v4971 = vpack.c.b16 %v3843, %v3835
    %v4972 = vpack.c.b16 %v3844, %v3836
    %v4973 = vpack.c.b16 %v3845, %v3837
    %v4974 = vpack.c.b16 %v3846, %v3838
    %v4975 = vpack.c.b16 %v3847, %v3839
    %v4976 = vpack.c.b16 %v3848, %v3840
    %v4977 = vpack.c.b16 %v3849, %v3841
    %v4978 = vpack.c.b16 %v3858, %v3850
    %v4979 = vpack.c.b16 %v3859, %v3851
    %v4980 = vpack.c.b16 %v3860, %v3852
    %v4981 = vpack.c.b16 %v3861, %v3853
    %v4982 = vpack.c.b16 %v3862, %v3854
    %v4983 = vpack.c.b16 %v3863, %v3855
    %v4984 = vpack.c.b16 %v3864, %v3856
    %v4985 = vpack.c.b16 %v3865, %v3857
    %v4986 = vpack.c.b16 %v3874, %v3866
    %v4987 = vpack.c.b16 %v3875, %v3867
    %v4988 = vpack.c.b16 %v3876, %v3868
    %v4989 = vpack.c.b16 %v3877, %v3869
    %v4990 = vpack.c.b16 %v3878, %v3870
    %v4991 = vpack.c.b16 %v3879, %v3871
    %v4992 = vpack.c.b16 %v3880, %v3872
    %v4993 = vpack.c.b16 %v3881, %v3873
    %v4994 = vpack.c.b16 %v3890, %v3882
    %v4995 = vpack.c.b16 %v3891, %v3883
    %v4996 = vpack.c.b16 %v3892, %v3884
    %v4997 = vpack.c.b16 %v3893, %v3885
    %v4998 = vpack.c.b16 %v3894, %v3886
    %v4999 = vpack.c.b16 %v3895, %v3887
    %v5000 = vpack.c.b16 %v3896, %v3888
    %v5001 = vpack.c.b16 %v3897, %v3889
    %v5002 = vpack.c.b16 %v3906, %v3898
    %v5003 = vpack.c.b16 %v3907, %v3899
    %v5004 = vpack.c.b16 %v3908, %v3900
    %v5005 = vpack.c.b16 %v3909, %v3901
    %v5006 = vpack.c.b16 %v3910, %v3902
    %v5007 = vpack.c.b16 %v3911, %v3903
    %v5008 = vpack.c.b16 %v3912, %v3904
    %v5009 = vpack.c.b16 %v3913, %v3905
    %v5010 = vpack.c.b16 %v3922, %v3914
    %v5011 = vpack.c.b16 %v3923, %v3915
    %v5012 = vpack.c.b16 %v3924, %v3916
    %v5013 = vpack.c.b16 %v3925, %v3917
    %v5014 = vpack.c.b16 %v3926, %v3918
    %v5015 = vpack.c.b16 %v3927, %v3919
    %v5016 = vpack.c.b16 %v3928, %v3920
    %v5017 = vpack.c.b16 %v3929, %v3921
    %v5018 = vpack.c.b16 %v3938, %v3930
    %v5019 = vpack.c.b16 %v3939, %v3931
    %v5020 = vpack.c.b16 %v3940, %v3932
    %v5021 = vpack.c.b16 %v3941, %v3933
    %v5022 = vpack.c.b16 %v3942, %v3934
    %v5023 = vpack.c.b16 %v3943, %v3935
    %v5024 = vpack.c.b16 %v3944, %v3936
    %v5025 = vpack.c.b16 %v3945, %v3937
    %v5026 = vpack.c.b16 %v3954, %v3946
    %v5027 = vpack.c.b16 %v3955, %v3947
    %v5028 = vpack.c.b16 %v3956, %v3948
    %v5029 = vpack.c.b16 %v3957, %v3949
    %v5030 = vpack.c.b16 %v3958, %v3950
    %v5031 = vpack.c.b16 %v3959, %v3951
    %v5032 = vpack.c.b16 %v3960, %v3952
    %v5033 = vpack.c.b16 %v3961, %v3953
    %v5034 = vpack.c.b16 %v3970, %v3962
    %v5035 = vpack.c.b16 %v3971, %v3963
    %v5036 = vpack.c.b16 %v3972, %v3964
    %v5037 = vpack.c.b16 %v3973, %v3965
    %v5038 = vpack.c.b16 %v3974, %v3966
    %v5039 = vpack.c.b16 %v3975, %v3967
    %v5040 = vpack.c.b16 %v3976, %v3968
    %v5041 = vpack.c.b16 %v3977, %v3969
    %v5042 = vpack.c.b16 %v3986, %v3978
    %v5043 = vpack.c.b16 %v3987, %v3979
    %v5044 = vpack.c.b16 %v3988, %v3980
    %v5045 = vpack.c.b16 %v3989, %v3981
    %v5046 = vpack.c.b16 %v3990, %v3982
    %v5047 = vpack.c.b16 %v3991, %v3983
    %v5048 = vpack.c.b16 %v3992, %v3984
    %v5049 = vpack.c.b16 %v3993, %v3985
    %v5050 = vpack.c.b16 %v4002, %v3994
    %v5051 = vpack.c.b16 %v4003, %v3995
    %v5052 = vpack.c.b16 %v4004, %v3996
    %v5053 = vpack.c.b16 %v4005, %v3997
    %v5054 = vpack.c.b16 %v4006, %v3998
    %v5055 = vpack.c.b16 %v4007, %v3999
    %v5056 = vpack.c.b16 %v4008, %v4000
    %v5057 = vpack.c.b16 %v4009, %v4001
    %v5058 = vpack.c.b16 %v4018, %v4010
    %v5059 = vpack.c.b16 %v4019, %v4011
    %v5060 = vpack.c.b16 %v4020, %v4012
    %v5061 = vpack.c.b16 %v4021, %v4013
    %v5062 = vpack.c.b16 %v4022, %v4014
    %v5063 = vpack.c.b16 %v4023, %v4015
    %v5064 = vpack.c.b16 %v4024, %v4016
    %v5065 = vpack.c.b16 %v4025, %v4017
    %v5066 = vpack.c.b16 %v4034, %v4026
    %v5067 = vpack.c.b16 %v4035, %v4027
    %v5068 = vpack.c.b16 %v4036, %v4028
    %v5069 = vpack.c.b16 %v4037, %v4029
    %v5070 = vpack.c.b16 %v4038, %v4030
    %v5071 = vpack.c.b16 %v4039, %v4031
    %v5072 = vpack.c.b16 %v4040, %v4032
    %v5073 = vpack.c.b16 %v4041, %v4033
    %v5074 = vpack.c.b16 %v4050, %v4042
    %v5075 = vpack.c.b16 %v4051, %v4043
    %v5076 = vpack.c.b16 %v4052, %v4044
    %v5077 = vpack.c.b16 %v4053, %v4045
    %v5078 = vpack.c.b16 %v4054, %v4046
    %v5079 = vpack.c.b16 %v4055, %v4047
    %v5080 = vpack.c.b16 %v4056, %v4048
    %v5081 = vpack.c.b16 %v4057, %v4049
    %v5082 = vpack.c.b16 %v4066, %v4058
    %v5083 = vpack.c.b16 %v4067, %v4059
    %v5084 = vpack.c.b16 %v4068, %v4060
    %v5085 = vpack.c.b16 %v4069, %v4061
    %v5086 = vpack.c.b16 %v4070, %v4062
    %v5087 = vpack.c.b16 %v4071, %v4063
    %v5088 = vpack.c.b16 %v4072, %v4064
    %v5089 = vpack.c.b16 %v4073, %v4065
    %v5090 = vpack.c.b16 %v4082, %v4074
    %v5091 = vpack.c.b16 %v4083, %v4075
    %v5092 = vpack.c.b16 %v4084, %v4076
    %v5093 = vpack.c.b16 %v4085, %v4077
    %v5094 = vpack.c.b16 %v4086, %v4078
    %v5095 = vpack.c.b16 %v4087, %v4079
    %v5096 = vpack.c.b16 %v4088, %v4080
    %v5097 = vpack.c.b16 %v4089, %v4081
    %v5098 = vpack.c.b16 %v4098, %v4090
    %v5099 = vpack.c.b16 %v4099, %v4091
    %v5100 = vpack.c.b16 %v4100, %v4092
    %v5101 = vpack.c.b16 %v4101, %v4093
    %v5102 = vpack.c.b16 %v4102, %v4094
    %v5103 = vpack.c.b16 %v4103, %v4095
    %v5104 = vpack.c.b16 %v4104, %v4096
    %v5105 = vpack.c.b16 %v4105, %v4097
    %v5106 = vpack.c.b16 %v4114, %v4106
    %v5107 = vpack.c.b16 %v4115, %v4107
    %v5108 = vpack.c.b16 %v4116, %v4108
    %v5109 = vpack.c.b16 %v4117, %v4109
    %v5110 = vpack.c.b16 %v4118, %v4110
    %v5111 = vpack.c.b16 %v4119, %v4111
    %v5112 = vpack.c.b16 %v4120, %v4112
    %v5113 = vpack.c.b16 %v4121, %v4113
    %v6107 = vlaneseq
    %v6108 = vshrl.u32 %v6107, 7
    %v6109 = vsub.s32 0, %v6108
    %v6110 = vrot.slane %v1145, %v6109
    %v6111 = vlaneseq
    %v6112 = vshrl.u32 %v6111, 7
    %v6113 = vsub.s32 1, %v6112
    %v6114 = vrot.slane %v1145, %v6113
    %v6115 = vlaneseq
    %v6116 = vshrl.u32 %v6115, 7
    %v6117 = vsub.s32 2, %v6116
    %v6118 = vrot.slane %v1145, %v6117
    %v6119 = vlaneseq
    %v6120 = vshrl.u32 %v6119, 7
    %v6121 = vsub.s32 3, %v6120
    %v6122 = vrot.slane %v1145, %v6121
    %v6123 = vlaneseq
    %v6124 = vshrl.u32 %v6123, 7
    %v6125 = vsub.s32 4, %v6124
    %v6126 = vrot.slane %v1145, %v6125
    %v6127 = vlaneseq
    %v6128 = vshrl.u32 %v6127, 7
    %v6129 = vsub.s32 5, %v6128
    %v6130 = vrot.slane %v1145, %v6129
    %v6131 = vlaneseq
    %v6132 = vshrl.u32 %v6131, 7
    %v6133 = vsub.s32 6, %v6132
    %v6134 = vrot.slane %v1145, %v6133
    %v6135 = vlaneseq
    %v6136 = vshrl.u32 %v6135, 7
    %v6137 = vsub.s32 7, %v6136
    %v6138 = vrot.slane %v1145, %v6137
    %vm6147 = vcmask 523264
    %v6149 = vsel %vm6147, %v152, 0
    %6151 = vmatprep.subr.bf16.mxu0 %v4123
    %6152 = vmatpush1.bf16.msra.mxu0 %v4122
    %6153 = vmatprep.subr.bf16.mxu0 %v4131
    %6154 = vmatpush1.bf16.msra.mxu0 %v4130
    %6155 = vmatprep.subr.bf16.mxu0 %v4139
    %6156 = vmatpush1.bf16.msra.mxu0 %v4138
    %6157 = vmatprep.subr.bf16.mxu0 %v4147
    %6158 = vmatpush1.bf16.msra.mxu0 %v4146
    %6159 = vmatprep.subr.bf16.mxu0 %v4155
    %6160 = vmatpush1.bf16.msra.mxu0 %v4154
    %6161 = vmatprep.subr.bf16.mxu0 %v4163
    %6162 = vmatpush1.bf16.msra.mxu0 %v4162
    %6163 = vmatprep.subr.bf16.mxu0 %v4171
    %6164 = vmatpush1.bf16.msra.mxu0 %v4170
    %6165 = vmatprep.subr.bf16.mxu0 %v4179
    %6166 = vmatpush1.bf16.msra.mxu0 %v4178
    %6167 = vmatprep.subr.bf16.mxu0 %v4187
    %6168 = vmatpush1.bf16.msra.mxu0 %v4186
    %6169 = vmatprep.subr.bf16.mxu0 %v4195
    %6170 = vmatpush1.bf16.msra.mxu0 %v4194
    %6171 = vmatprep.subr.bf16.mxu0 %v4203
    %6172 = vmatpush1.bf16.msra.mxu0 %v4202
    %6173 = vmatprep.subr.bf16.mxu0 %v4211
    %6174 = vmatpush1.bf16.msra.mxu0 %v4210
    %6175 = vmatprep.subr.bf16.mxu0 %v4219
    %6176 = vmatpush1.bf16.msra.mxu0 %v4218
    %6177 = vmatprep.subr.bf16.mxu0 %v4227
    %6178 = vmatpush1.bf16.msra.mxu0 %v4226
    %6179 = vmatprep.subr.bf16.mxu0 %v4235
    %6180 = vmatpush1.bf16.msra.mxu0 %v4234
    %6181 = vmatprep.subr.bf16.mxu0 %v4243
    %6182 = vmatpush1.bf16.msra.mxu0 %v4242
    %6183 = vmatprep.mubr.bf16.mxu0 %v138
    %6184 = vmatmul.mubr.bf16.gmra.mrb[0].mxu0 %v137
    %v6185 = vpop.f32.mrb[0].mxu0
    %v6186 = vadd.f32 %v6110, %v6185
    %v6187 = vpop.f32.mrb[0].mxu0
    %v6188 = vadd.f32 %v6114, %v6187
    %v6189 = vpop.f32.mrb[0].mxu0
    %v6190 = vpop.f32.mrb[0].mxu0
    %6191 = vdwg.mxu0
    %6192 = vmatprep.subr.bf16.mxu0 %v4251
    %6193 = vmatpush1.bf16.msra.mxu0 %v4250
    %6194 = vmatprep.subr.bf16.mxu0 %v4259
    %6195 = vmatpush1.bf16.msra.mxu0 %v4258
    %6196 = vmatprep.subr.bf16.mxu0 %v4267
    %6197 = vmatpush1.bf16.msra.mxu0 %v4266
    %6198 = vmatprep.subr.bf16.mxu0 %v4275
    %6199 = vmatpush1.bf16.msra.mxu0 %v4274
    %6200 = vmatprep.subr.bf16.mxu0 %v4283
    %6201 = vmatpush1.bf16.msra.mxu0 %v4282
    %6202 = vmatprep.subr.bf16.mxu0 %v4291
    %6203 = vmatpush1.bf16.msra.mxu0 %v4290
    %6204 = vmatprep.subr.bf16.mxu0 %v4299
    %6205 = vmatpush1.bf16.msra.mxu0 %v4298
    %6206 = vmatprep.subr.bf16.mxu0 %v4307
    %6207 = vmatpush1.bf16.msra.mxu0 %v4306
    %6208 = vmatprep.subr.bf16.mxu0 %v4315
    %6209 = vmatpush1.bf16.msra.mxu0 %v4314
    %6210 = vmatprep.subr.bf16.mxu0 %v4323
    %6211 = vmatpush1.bf16.msra.mxu0 %v4322
    %6212 = vmatprep.subr.bf16.mxu0 %v4331
    %6213 = vmatpush1.bf16.msra.mxu0 %v4330
    %6214 = vmatprep.subr.bf16.mxu0 %v4339
    %6215 = vmatpush1.bf16.msra.mxu0 %v4338
    %6216 = vmatprep.subr.bf16.mxu0 %v4347
    %6217 = vmatpush1.bf16.msra.mxu0 %v4346
    %6218 = vmatprep.subr.bf16.mxu0 %v4355
    %6219 = vmatpush1.bf16.msra.mxu0 %v4354
    %6220 = vmatprep.subr.bf16.mxu0 %v4363
    %6221 = vmatpush1.bf16.msra.mxu0 %v4362
    %6222 = vmatprep.subr.bf16.mxu0 %v4371
    %6223 = vmatpush1.bf16.msra.mxu0 %v4370
    %6224 = vmatprep.mubr.bf16.mxu0 %v140
    %6225 = vmatmul.mubr.bf16.gmra.mrb[0].mxu0 %v139
    %v6226 = vpop.f32.mrb[0].mxu0
    %v6227 = vadd.f32 %v6186, %v6226
    %v6228 = vpop.f32.mrb[0].mxu0
    %v6229 = vadd.f32 %v6188, %v6228
    %v6230 = vpop.f32.mrb[0].mxu0
    %v6231 = vpop.f32.mrb[0].mxu0
    %6232 = vdwg.mxu0
    %6233 = vmatprep.subr.bf16.mxu0 %v4379
    %6234 = vmatpush1.bf16.msra.mxu0 %v4378
    %6235 = vmatprep.subr.bf16.mxu0 %v4387
    %6236 = vmatpush1.bf16.msra.mxu0 %v4386
    %6237 = vmatprep.subr.bf16.mxu0 %v4395
    %6238 = vmatpush1.bf16.msra.mxu0 %v4394
    %6239 = vmatprep.subr.bf16.mxu0 %v4403
    %6240 = vmatpush1.bf16.msra.mxu0 %v4402
    %6241 = vmatprep.subr.bf16.mxu0 %v4411
    %6242 = vmatpush1.bf16.msra.mxu0 %v4410
    %6243 = vmatprep.subr.bf16.mxu0 %v4419
    %6244 = vmatpush1.bf16.msra.mxu0 %v4418
    %6245 = vmatprep.subr.bf16.mxu0 %v4427
    %6246 = vmatpush1.bf16.msra.mxu0 %v4426
    %6247 = vmatprep.subr.bf16.mxu0 %v4435
    %6248 = vmatpush1.bf16.msra.mxu0 %v4434
    %6249 = vmatprep.subr.bf16.mxu0 %v4443
    %6250 = vmatpush1.bf16.msra.mxu0 %v4442
    %6251 = vmatprep.subr.bf16.mxu0 %v4451
    %6252 = vmatpush1.bf16.msra.mxu0 %v4450
    %6253 = vmatprep.subr.bf16.mxu0 %v4459
    %6254 = vmatpush1.bf16.msra.mxu0 %v4458
    %6255 = vmatprep.subr.bf16.mxu0 %v4467
    %6256 = vmatpush1.bf16.msra.mxu0 %v4466
    %6257 = vmatprep.subr.bf16.mxu0 %v4475
    %6258 = vmatpush1.bf16.msra.mxu0 %v4474
    %6259 = vmatprep.subr.bf16.mxu0 %v4483
    %6260 = vmatpush1.bf16.msra.mxu0 %v4482
    %6261 = vmatprep.subr.bf16.mxu0 %v4491
    %6262 = vmatpush1.bf16.msra.mxu0 %v4490
    %6263 = vmatprep.subr.bf16.mxu0 %v4499
    %6264 = vmatpush1.bf16.msra.mxu0 %v4498
    %6265 = vmatprep.mubr.bf16.mxu0 %v142
    %6266 = vmatmul.mubr.bf16.gmra.mrb[0].mxu0 %v141
    %v6267 = vpop.f32.mrb[0].mxu0
    %v6268 = vadd.f32 %v6227, %v6267
    %v6269 = vpop.f32.mrb[0].mxu0
    %v6270 = vadd.f32 %v6229, %v6269
    %v6271 = vpop.f32.mrb[0].mxu0
    %v6272 = vpop.f32.mrb[0].mxu0
    %6273 = vdwg.mxu0
    %6274 = vmatprep.subr.bf16.mxu0 %v4507
    %6275 = vmatpush1.bf16.msra.mxu0 %v4506
    %6276 = vmatprep.subr.bf16.mxu0 %v4515
    %6277 = vmatpush1.bf16.msra.mxu0 %v4514
    %6278 = vmatprep.subr.bf16.mxu0 %v4523
    %6279 = vmatpush1.bf16.msra.mxu0 %v4522
    %6280 = vmatprep.subr.bf16.mxu0 %v4531
    %6281 = vmatpush1.bf16.msra.mxu0 %v4530
    %6282 = vmatprep.subr.bf16.mxu0 %v4539
    %6283 = vmatpush1.bf16.msra.mxu0 %v4538
    %6284 = vmatprep.subr.bf16.mxu0 %v4547
    %6285 = vmatpush1.bf16.msra.mxu0 %v4546
    %6286 = vmatprep.subr.bf16.mxu0 %v4555
    %6287 = vmatpush1.bf16.msra.mxu0 %v4554
    %6288 = vmatprep.subr.bf16.mxu0 %v4563
    %6289 = vmatpush1.bf16.msra.mxu0 %v4562
    %6290 = vmatprep.subr.bf16.mxu0 %v4571
    %6291 = vmatpush1.bf16.msra.mxu0 %v4570
    %6292 = vmatprep.subr.bf16.mxu0 %v4579
    %6293 = vmatpush1.bf16.msra.mxu0 %v4578
    %6294 = vmatprep.subr.bf16.mxu0 %v4587
    %6295 = vmatpush1.bf16.msra.mxu0 %v4586
    %6296 = vmatprep.subr.bf16.mxu0 %v4595
    %6297 = vmatpush1.bf16.msra.mxu0 %v4594
    %6298 = vmatprep.subr.bf16.mxu0 %v4603
    %6299 = vmatpush1.bf16.msra.mxu0 %v4602
    %6300 = vmatprep.subr.bf16.mxu0 %v4611
    %6301 = vmatpush1.bf16.msra.mxu0 %v4610
    %6302 = vmatprep.subr.bf16.mxu0 %v4619
    %6303 = vmatpush1.bf16.msra.mxu0 %v4618
    %6304 = vmatprep.subr.bf16.mxu0 %v4627
    %6305 = vmatpush1.bf16.msra.mxu0 %v4626
    %6306 = vmatprep.mubr.bf16.mxu0 %v144
    %6307 = vmatmul.mubr.bf16.gmra.mrb[0].mxu0 %v143
    %v6308 = vpop.f32.mrb[0].mxu0
    %v6309 = vadd.f32 %v6268, %v6308
    %v6310 = vpop.f32.mrb[0].mxu0
    %v6311 = vadd.f32 %v6270, %v6310
    %v6312 = vpop.f32.mrb[0].mxu0
    %v6313 = vpop.f32.mrb[0].mxu0
    %6314 = vdwg.mxu0
    %6315 = vmatprep.subr.bf16.mxu0 %v4635
    %6316 = vmatpush1.bf16.msra.mxu0 %v4634
    %6317 = vmatprep.subr.bf16.mxu0 %v4643
    %6318 = vmatpush1.bf16.msra.mxu0 %v4642
    %6319 = vmatprep.subr.bf16.mxu0 %v4651
    %6320 = vmatpush1.bf16.msra.mxu0 %v4650
    %6321 = vmatprep.subr.bf16.mxu0 %v4659
    %6322 = vmatpush1.bf16.msra.mxu0 %v4658
    %6323 = vmatprep.subr.bf16.mxu0 %v4667
    %6324 = vmatpush1.bf16.msra.mxu0 %v4666
    %6325 = vmatprep.subr.bf16.mxu0 %v4675
    %6326 = vmatpush1.bf16.msra.mxu0 %v4674
    %6327 = vmatprep.subr.bf16.mxu0 %v4683
    %6328 = vmatpush1.bf16.msra.mxu0 %v4682
    %6329 = vmatprep.subr.bf16.mxu0 %v4691
    %6330 = vmatpush1.bf16.msra.mxu0 %v4690
    %6331 = vmatprep.subr.bf16.mxu0 %v4699
    %6332 = vmatpush1.bf16.msra.mxu0 %v4698
    %6333 = vmatprep.subr.bf16.mxu0 %v4707
    %6334 = vmatpush1.bf16.msra.mxu0 %v4706
    %6335 = vmatprep.subr.bf16.mxu0 %v4715
    %6336 = vmatpush1.bf16.msra.mxu0 %v4714
    %6337 = vmatprep.subr.bf16.mxu0 %v4723
    %6338 = vmatpush1.bf16.msra.mxu0 %v4722
    %6339 = vmatprep.subr.bf16.mxu0 %v4731
    %6340 = vmatpush1.bf16.msra.mxu0 %v4730
    %6341 = vmatprep.subr.bf16.mxu0 %v4739
    %6342 = vmatpush1.bf16.msra.mxu0 %v4738
    %6343 = vmatprep.subr.bf16.mxu0 %v4747
    %6344 = vmatpush1.bf16.msra.mxu0 %v4746
    %6345 = vmatprep.subr.bf16.mxu0 %v4755
    %6346 = vmatpush1.bf16.msra.mxu0 %v4754
    %6347 = vmatprep.mubr.bf16.mxu0 %v146
    %6348 = vmatmul.mubr.bf16.gmra.mrb[0].mxu0 %v145
    %v6349 = vpop.f32.mrb[0].mxu0
    %v6350 = vadd.f32 %v6309, %v6349
    %v6351 = vpop.f32.mrb[0].mxu0
    %v6352 = vadd.f32 %v6311, %v6351
    %v6353 = vpop.f32.mrb[0].mxu0
    %v6354 = vpop.f32.mrb[0].mxu0
    %6355 = vdwg.mxu0
    %6356 = vmatprep.subr.bf16.mxu0 %v4763
    %6357 = vmatpush1.bf16.msra.mxu0 %v4762
    %6358 = vmatprep.subr.bf16.mxu0 %v4771
    %6359 = vmatpush1.bf16.msra.mxu0 %v4770
    %6360 = vmatprep.subr.bf16.mxu0 %v4779
    %6361 = vmatpush1.bf16.msra.mxu0 %v4778
    %6362 = vmatprep.subr.bf16.mxu0 %v4787
    %6363 = vmatpush1.bf16.msra.mxu0 %v4786
    %6364 = vmatprep.subr.bf16.mxu0 %v4795
    %6365 = vmatpush1.bf16.msra.mxu0 %v4794
    %6366 = vmatprep.subr.bf16.mxu0 %v4803
    %6367 = vmatpush1.bf16.msra.mxu0 %v4802
    %6368 = vmatprep.subr.bf16.mxu0 %v4811
    %6369 = vmatpush1.bf16.msra.mxu0 %v4810
    %6370 = vmatprep.subr.bf16.mxu0 %v4819
    %6371 = vmatpush1.bf16.msra.mxu0 %v4818
    %6372 = vmatprep.subr.bf16.mxu0 %v4827
    %6373 = vmatpush1.bf16.msra.mxu0 %v4826
    %6374 = vmatprep.subr.bf16.mxu0 %v4835
    %6375 = vmatpush1.bf16.msra.mxu0 %v4834
    %6376 = vmatprep.subr.bf16.mxu0 %v4843
    %6377 = vmatpush1.bf16.msra.mxu0 %v4842
    %6378 = vmatprep.subr.bf16.mxu0 %v4851
    %6379 = vmatpush1.bf16.msra.mxu0 %v4850
    %6380 = vmatprep.subr.bf16.mxu0 %v4859
    %6381 = vmatpush1.bf16.msra.mxu0 %v4858
    %6382 = vmatprep.subr.bf16.mxu0 %v4867
    %6383 = vmatpush1.bf16.msra.mxu0 %v4866
    %6384 = vmatprep.subr.bf16.mxu0 %v4875
    %6385 = vmatpush1.bf16.msra.mxu0 %v4874
    %6386 = vmatprep.subr.bf16.mxu0 %v4883
    %6387 = vmatpush1.bf16.msra.mxu0 %v4882
    %6388 = vmatprep.mubr.bf16.mxu0 %v148
    %6389 = vmatmul.mubr.bf16.gmra.mrb[0].mxu0 %v147
    %v6390 = vpop.f32.mrb[0].mxu0
    %v6391 = vadd.f32 %v6350, %v6390
    %v6392 = vpop.f32.mrb[0].mxu0
    %v6393 = vadd.f32 %v6352, %v6392
    %v6394 = vpop.f32.mrb[0].mxu0
    %v6395 = vpop.f32.mrb[0].mxu0
    %6396 = vdwg.mxu0
    %6397 = vmatprep.subr.bf16.mxu0 %v4891
    %6398 = vmatpush1.bf16.msra.mxu0 %v4890
    %6399 = vmatprep.subr.bf16.mxu0 %v4899
    %6400 = vmatpush1.bf16.msra.mxu0 %v4898
    %6401 = vmatprep.subr.bf16.mxu0 %v4907
    %6402 = vmatpush1.bf16.msra.mxu0 %v4906
    %6403 = vmatprep.subr.bf16.mxu0 %v4915
    %6404 = vmatpush1.bf16.msra.mxu0 %v4914
    %6405 = vmatprep.subr.bf16.mxu0 %v4923
    %6406 = vmatpush1.bf16.msra.mxu0 %v4922
    %6407 = vmatprep.subr.bf16.mxu0 %v4931
    %6408 = vmatpush1.bf16.msra.mxu0 %v4930
    %6409 = vmatprep.subr.bf16.mxu0 %v4939
    %6410 = vmatpush1.bf16.msra.mxu0 %v4938
    %6411 = vmatprep.subr.bf16.mxu0 %v4947
    %6412 = vmatpush1.bf16.msra.mxu0 %v4946
    %6413 = vmatprep.subr.bf16.mxu0 %v4955
    %6414 = vmatpush1.bf16.msra.mxu0 %v4954
    %6415 = vmatprep.subr.bf16.mxu0 %v4963
    %6416 = vmatpush1.bf16.msra.mxu0 %v4962
    %6417 = vmatprep.subr.bf16.mxu0 %v4971
    %6418 = vmatpush1.bf16.msra.mxu0 %v4970
    %6419 = vmatprep.subr.bf16.mxu0 %v4979
    %6420 = vmatpush1.bf16.msra.mxu0 %v4978
    %6421 = vmatprep.subr.bf16.mxu0 %v4987
    %6422 = vmatpush1.bf16.msra.mxu0 %v4986
    %6423 = vmatprep.subr.bf16.mxu0 %v4995
    %6424 = vmatpush1.bf16.msra.mxu0 %v4994
    %6425 = vmatprep.subr.bf16.mxu0 %v5003
    %6426 = vmatpush1.bf16.msra.mxu0 %v5002
    %6427 = vmatprep.subr.bf16.mxu0 %v5011
    %6428 = vmatpush1.bf16.msra.mxu0 %v5010
    %6429 = vmatprep.mubr.bf16.mxu0 %v150
    %6430 = vmatmul.mubr.bf16.gmra.mrb[0].mxu0 %v149
    %v6431 = vpop.f32.mrb[0].mxu0
    %v6432 = vadd.f32 %v6391, %v6431
    %v6433 = vpop.f32.mrb[0].mxu0
    %v6434 = vadd.f32 %v6393, %v6433
    %v6435 = vpop.f32.mrb[0].mxu0
    %v6436 = vpop.f32.mrb[0].mxu0
    %6437 = vdwg.mxu0
    %6438 = vmatprep.subr.bf16.mxu0 %v5019
    %6439 = vmatpush1.bf16.msra.mxu0 %v5018
    %6440 = vmatprep.subr.bf16.mxu0 %v5027
    %6441 = vmatpush1.bf16.msra.mxu0 %v5026
    %6442 = vmatprep.subr.bf16.mxu0 %v5035
    %6443 = vmatpush1.bf16.msra.mxu0 %v5034
    %6444 = vmatprep.subr.bf16.mxu0 %v5043
    %6445 = vmatpush1.bf16.msra.mxu0 %v5042
    %6446 = vmatprep.subr.bf16.mxu0 %v5051
    %6447 = vmatpush1.bf16.msra.mxu0 %v5050
    %6448 = vmatprep.subr.bf16.mxu0 %v5059
    %6449 = vmatpush1.bf16.msra.mxu0 %v5058
    %6450 = vmatprep.subr.bf16.mxu0 %v5067
    %6451 = vmatpush1.bf16.msra.mxu0 %v5066
    %6452 = vmatprep.subr.bf16.mxu0 %v5075
    %6453 = vmatpush1.bf16.msra.mxu0 %v5074
    %6454 = vmatprep.subr.bf16.mxu0 %v5083
    %6455 = vmatpush1.bf16.msra.mxu0 %v5082
    %6456 = vmatprep.subr.bf16.mxu0 %v5091
    %6457 = vmatpush1.bf16.msra.mxu0 %v5090
    %6458 = vmatprep.subr.bf16.mxu0 %v5099
    %6459 = vmatpush1.bf16.msra.mxu0 %v5098
    %6460 = vmatprep.subr.bf16.mxu0 %v5107
    %6461 = vmatpush1.bf16.msra.mxu0 %v5106
    %6462 = vmatprep.subr.bf16.mxu0 0
    %6463 = vmatpush1.bf16.msra.mxu0 0
    %6464 = vmatprep.subr.bf16.mxu0 0
    %6465 = vmatpush1.bf16.msra.mxu0 0
    %6466 = vmatprep.subr.bf16.mxu0 0
    %6467 = vmatpush1.bf16.msra.mxu0 0
    %6468 = vmatprep.subr.bf16.mxu0 0
    %6469 = vmatpush1.bf16.msra.mxu0 0
    %6470 = vmatprep.mubr.bf16.mxu0 %v6149
    %6471 = vmatmul.mubr.bf16.gmra.mrb[0].mxu0 %v151
    %v6472 = vpop.f32.mrb[0].mxu0
    %v6473 = vadd.f32 %v6432, %v6472
    %v6474 = vpop.f32.mrb[0].mxu0
    %v6475 = vadd.f32 %v6434, %v6474
    %v6476 = vpop.f32.mrb[0].mxu0
    %v6477 = vpop.f32.mrb[0].mxu0
    %6478 = vdwg.mxu0
    %6479 = vmatprep.subr.bf16.mxu0 %v4125
    %6480 = vmatpush1.bf16.msra.mxu0 %v4124
    %6481 = vmatprep.subr.bf16.mxu0 %v4133
    %6482 = vmatpush1.bf16.msra.mxu0 %v4132
    %6483 = vmatprep.subr.bf16.mxu0 %v4141
    %6484 = vmatpush1.bf16.msra.mxu0 %v4140
    %6485 = vmatprep.subr.bf16.mxu0 %v4149
    %6486 = vmatpush1.bf16.msra.mxu0 %v4148
    %6487 = vmatprep.subr.bf16.mxu0 %v4157
    %6488 = vmatpush1.bf16.msra.mxu0 %v4156
    %6489 = vmatprep.subr.bf16.mxu0 %v4165
    %6490 = vmatpush1.bf16.msra.mxu0 %v4164
    %6491 = vmatprep.subr.bf16.mxu0 %v4173
    %6492 = vmatpush1.bf16.msra.mxu0 %v4172
    %6493 = vmatprep.subr.bf16.mxu0 %v4181
    %6494 = vmatpush1.bf16.msra.mxu0 %v4180
    %6495 = vmatprep.subr.bf16.mxu0 %v4189
    %6496 = vmatpush1.bf16.msra.mxu0 %v4188
    %6497 = vmatprep.subr.bf16.mxu0 %v4197
    %6498 = vmatpush1.bf16.msra.mxu0 %v4196
    %6499 = vmatprep.subr.bf16.mxu0 %v4205
    %6500 = vmatpush1.bf16.msra.mxu0 %v4204
    %6501 = vmatprep.subr.bf16.mxu0 %v4213
    %6502 = vmatpush1.bf16.msra.mxu0 %v4212
    %6503 = vmatprep.subr.bf16.mxu0 %v4221
    %6504 = vmatpush1.bf16.msra.mxu0 %v4220
    %6505 = vmatprep.subr.bf16.mxu0 %v4229
    %6506 = vmatpush1.bf16.msra.mxu0 %v4228
    %6507 = vmatprep.subr.bf16.mxu0 %v4237
    %6508 = vmatpush1.bf16.msra.mxu0 %v4236
    %6509 = vmatprep.subr.bf16.mxu0 %v4245
    %6510 = vmatpush1.bf16.msra.mxu0 %v4244
    %6511 = vmatprep.mubr.bf16.mxu0 %v138
    %6512 = vmatmul.mubr.bf16.gmra.mrb[0].mxu0 %v137
    %v6513 = vpop.f32.mrb[0].mxu0
    %v6514 = vadd.f32 %v6118, %v6513
    %v6515 = vpop.f32.mrb[0].mxu0
    %v6516 = vadd.f32 %v6122, %v6515
    %v6517 = vpop.f32.mrb[0].mxu0
    %v6518 = vpop.f32.mrb[0].mxu0
    %6519 = vdwg.mxu0
    %6520 = vmatprep.subr.bf16.mxu0 %v4253
    %6521 = vmatpush1.bf16.msra.mxu0 %v4252
    %6522 = vmatprep.subr.bf16.mxu0 %v4261
    %6523 = vmatpush1.bf16.msra.mxu0 %v4260
    %6524 = vmatprep.subr.bf16.mxu0 %v4269
    %6525 = vmatpush1.bf16.msra.mxu0 %v4268
    %6526 = vmatprep.subr.bf16.mxu0 %v4277
    %6527 = vmatpush1.bf16.msra.mxu0 %v4276
    %6528 = vmatprep.subr.bf16.mxu0 %v4285
    %6529 = vmatpush1.bf16.msra.mxu0 %v4284
    %6530 = vmatprep.subr.bf16.mxu0 %v4293
    %6531 = vmatpush1.bf16.msra.mxu0 %v4292
    %6532 = vmatprep.subr.bf16.mxu0 %v4301
    %6533 = vmatpush1.bf16.msra.mxu0 %v4300
    %6534 = vmatprep.subr.bf16.mxu0 %v4309
    %6535 = vmatpush1.bf16.msra.mxu0 %v4308
    %6536 = vmatprep.subr.bf16.mxu0 %v4317
    %6537 = vmatpush1.bf16.msra.mxu0 %v4316
    %6538 = vmatprep.subr.bf16.mxu0 %v4325
    %6539 = vmatpush1.bf16.msra.mxu0 %v4324
    %6540 = vmatprep.subr.bf16.mxu0 %v4333
    %6541 = vmatpush1.bf16.msra.mxu0 %v4332
    %6542 = vmatprep.subr.bf16.mxu0 %v4341
    %6543 = vmatpush1.bf16.msra.mxu0 %v4340
    %6544 = vmatprep.subr.bf16.mxu0 %v4349
    %6545 = vmatpush1.bf16.msra.mxu0 %v4348
    %6546 = vmatprep.subr.bf16.mxu0 %v4357
    %6547 = vmatpush1.bf16.msra.mxu0 %v4356
    %6548 = vmatprep.subr.bf16.mxu0 %v4365
    %6549 = vmatpush1.bf16.msra.mxu0 %v4364
    %6550 = vmatprep.subr.bf16.mxu0 %v4373
    %6551 = vmatpush1.bf16.msra.mxu0 %v4372
    %6552 = vmatprep.mubr.bf16.mxu0 %v140
    %6553 = vmatmul.mubr.bf16.gmra.mrb[0].mxu0 %v139
    %v6554 = vpop.f32.mrb[0].mxu0
    %v6555 = vadd.f32 %v6514, %v6554
    %v6556 = vpop.f32.mrb[0].mxu0
    %v6557 = vadd.f32 %v6516, %v6556
    %v6558 = vpop.f32.mrb[0].mxu0
    %v6559 = vpop.f32.mrb[0].mxu0
    %6560 = vdwg.mxu0
    %6561 = vmatprep.subr.bf16.mxu0 %v4381
    %6562 = vmatpush1.bf16.msra.mxu0 %v4380
    %6563 = vmatprep.subr.bf16.mxu0 %v4389
    %6564 = vmatpush1.bf16.msra.mxu0 %v4388
    %6565 = vmatprep.subr.bf16.mxu0 %v4397
    %6566 = vmatpush1.bf16.msra.mxu0 %v4396
    %6567 = vmatprep.subr.bf16.mxu0 %v4405
    %6568 = vmatpush1.bf16.msra.mxu0 %v4404
    %6569 = vmatprep.subr.bf16.mxu0 %v4413
    %6570 = vmatpush1.bf16.msra.mxu0 %v4412
    %6571 = vmatprep.subr.bf16.mxu0 %v4421
    %6572 = vmatpush1.bf16.msra.mxu0 %v4420
    %6573 = vmatprep.subr.bf16.mxu0 %v4429
    %6574 = vmatpush1.bf16.msra.mxu0 %v4428
    %6575 = vmatprep.subr.bf16.mxu0 %v4437
    %6576 = vmatpush1.bf16.msra.mxu0 %v4436
    %6577 = vmatprep.subr.bf16.mxu0 %v4445
    %6578 = vmatpush1.bf16.msra.mxu0 %v4444
    %6579 = vmatprep.subr.bf16.mxu0 %v4453
    %6580 = vmatpush1.bf16.msra.mxu0 %v4452
    %6581 = vmatprep.subr.bf16.mxu0 %v4461
    %6582 = vmatpush1.bf16.msra.mxu0 %v4460
    %6583 = vmatprep.subr.bf16.mxu0 %v4469
    %6584 = vmatpush1.bf16.msra.mxu0 %v4468
    %6585 = vmatprep.subr.bf16.mxu0 %v4477
    %6586 = vmatpush1.bf16.msra.mxu0 %v4476
    %6587 = vmatprep.subr.bf16.mxu0 %v4485
    %6588 = vmatpush1.bf16.msra.mxu0 %v4484
    %6589 = vmatprep.subr.bf16.mxu0 %v4493
    %6590 = vmatpush1.bf16.msra.mxu0 %v4492
    %6591 = vmatprep.subr.bf16.mxu0 %v4501
    %6592 = vmatpush1.bf16.msra.mxu0 %v4500
    %6593 = vmatprep.mubr.bf16.mxu0 %v142
    %6594 = vmatmul.mubr.bf16.gmra.mrb[0].mxu0 %v141
    %v6595 = vpop.f32.mrb[0].mxu0
    %v6596 = vadd.f32 %v6555, %v6595
    %v6597 = vpop.f32.mrb[0].mxu0
    %v6598 = vadd.f32 %v6557, %v6597
    %v6599 = vpop.f32.mrb[0].mxu0
    %v6600 = vpop.f32.mrb[0].mxu0
    %6601 = vdwg.mxu0
    %6602 = vmatprep.subr.bf16.mxu0 %v4509
    %6603 = vmatpush1.bf16.msra.mxu0 %v4508
    %6604 = vmatprep.subr.bf16.mxu0 %v4517
    %6605 = vmatpush1.bf16.msra.mxu0 %v4516
    %6606 = vmatprep.subr.bf16.mxu0 %v4525
    %6607 = vmatpush1.bf16.msra.mxu0 %v4524
    %6608 = vmatprep.subr.bf16.mxu0 %v4533
    %6609 = vmatpush1.bf16.msra.mxu0 %v4532
    %6610 = vmatprep.subr.bf16.mxu0 %v4541
    %6611 = vmatpush1.bf16.msra.mxu0 %v4540
    %6612 = vmatprep.subr.bf16.mxu0 %v4549
    %6613 = vmatpush1.bf16.msra.mxu0 %v4548
    %6614 = vmatprep.subr.bf16.mxu0 %v4557
    %6615 = vmatpush1.bf16.msra.mxu0 %v4556
    %6616 = vmatprep.subr.bf16.mxu0 %v4565
    %6617 = vmatpush1.bf16.msra.mxu0 %v4564
    %6618 = vmatprep.subr.bf16.mxu0 %v4573
    %6619 = vmatpush1.bf16.msra.mxu0 %v4572
    %6620 = vmatprep.subr.bf16.mxu0 %v4581
    %6621 = vmatpush1.bf16.msra.mxu0 %v4580
    %6622 = vmatprep.subr.bf16.mxu0 %v4589
    %6623 = vmatpush1.bf16.msra.mxu0 %v4588
    %6624 = vmatprep.subr.bf16.mxu0 %v4597
    %6625 = vmatpush1.bf16.msra.mxu0 %v4596
    %6626 = vmatprep.subr.bf16.mxu0 %v4605
    %6627 = vmatpush1.bf16.msra.mxu0 %v4604
    %6628 = vmatprep.subr.bf16.mxu0 %v4613
    %6629 = vmatpush1.bf16.msra.mxu0 %v4612
    %6630 = vmatprep.subr.bf16.mxu0 %v4621
    %6631 = vmatpush1.bf16.msra.mxu0 %v4620
    %6632 = vmatprep.subr.bf16.mxu0 %v4629
    %6633 = vmatpush1.bf16.msra.mxu0 %v4628
    %6634 = vmatprep.mubr.bf16.mxu0 %v144
    %6635 = vmatmul.mubr.bf16.gmra.mrb[0].mxu0 %v143
    %v6636 = vpop.f32.mrb[0].mxu0
    %v6637 = vadd.f32 %v6596, %v6636
    %v6638 = vpop.f32.mrb[0].mxu0
    %v6639 = vadd.f32 %v6598, %v6638
    %v6640 = vpop.f32.mrb[0].mxu0
    %v6641 = vpop.f32.mrb[0].mxu0
    %6642 = vdwg.mxu0
    %6643 = vmatprep.subr.bf16.mxu0 %v4637
    %6644 = vmatpush1.bf16.msra.mxu0 %v4636
    %6645 = vmatprep.subr.bf16.mxu0 %v4645
    %6646 = vmatpush1.bf16.msra.mxu0 %v4644
    %6647 = vmatprep.subr.bf16.mxu0 %v4653
    %6648 = vmatpush1.bf16.msra.mxu0 %v4652
    %6649 = vmatprep.subr.bf16.mxu0 %v4661
    %6650 = vmatpush1.bf16.msra.mxu0 %v4660
    %6651 = vmatprep.subr.bf16.mxu0 %v4669
    %6652 = vmatpush1.bf16.msra.mxu0 %v4668
    %6653 = vmatprep.subr.bf16.mxu0 %v4677
    %6654 = vmatpush1.bf16.msra.mxu0 %v4676
    %6655 = vmatprep.subr.bf16.mxu0 %v4685
    %6656 = vmatpush1.bf16.msra.mxu0 %v4684
    %6657 = vmatprep.subr.bf16.mxu0 %v4693
    %6658 = vmatpush1.bf16.msra.mxu0 %v4692
    %6659 = vmatprep.subr.bf16.mxu0 %v4701
    %6660 = vmatpush1.bf16.msra.mxu0 %v4700
    %6661 = vmatprep.subr.bf16.mxu0 %v4709
    %6662 = vmatpush1.bf16.msra.mxu0 %v4708
    %6663 = vmatprep.subr.bf16.mxu0 %v4717
    %6664 = vmatpush1.bf16.msra.mxu0 %v4716
    %6665 = vmatprep.subr.bf16.mxu0 %v4725
    %6666 = vmatpush1.bf16.msra.mxu0 %v4724
    %6667 = vmatprep.subr.bf16.mxu0 %v4733
    %6668 = vmatpush1.bf16.msra.mxu0 %v4732
    %6669 = vmatprep.subr.bf16.mxu0 %v4741
    %6670 = vmatpush1.bf16.msra.mxu0 %v4740
    %6671 = vmatprep.subr.bf16.mxu0 %v4749
    %6672 = vmatpush1.bf16.msra.mxu0 %v4748
    %6673 = vmatprep.subr.bf16.mxu0 %v4757
    %6674 = vmatpush1.bf16.msra.mxu0 %v4756
    %6675 = vmatprep.mubr.bf16.mxu0 %v146
    %6676 = vmatmul.mubr.bf16.gmra.mrb[0].mxu0 %v145
    %v6677 = vpop.f32.mrb[0].mxu0
    %v6678 = vadd.f32 %v6637, %v6677
    %v6679 = vpop.f32.mrb[0].mxu0
    %v6680 = vadd.f32 %v6639, %v6679
    %v6681 = vpop.f32.mrb[0].mxu0
    %v6682 = vpop.f32.mrb[0].mxu0
    %6683 = vdwg.mxu0
    %6684 = vmatprep.subr.bf16.mxu0 %v4765
    %6685 = vmatpush1.bf16.msra.mxu0 %v4764
    %6686 = vmatprep.subr.bf16.mxu0 %v4773
    %6687 = vmatpush1.bf16.msra.mxu0 %v4772
    %6688 = vmatprep.subr.bf16.mxu0 %v4781
    %6689 = vmatpush1.bf16.msra.mxu0 %v4780
    %6690 = vmatprep.subr.bf16.mxu0 %v4789
    %6691 = vmatpush1.bf16.msra.mxu0 %v4788
    %6692 = vmatprep.subr.bf16.mxu0 %v4797
    %6693 = vmatpush1.bf16.msra.mxu0 %v4796
    %6694 = vmatprep.subr.bf16.mxu0 %v4805
    %6695 = vmatpush1.bf16.msra.mxu0 %v4804
    %6696 = vmatprep.subr.bf16.mxu0 %v4813
    %6697 = vmatpush1.bf16.msra.mxu0 %v4812
    %6698 = vmatprep.subr.bf16.mxu0 %v4821
    %6699 = vmatpush1.bf16.msra.mxu0 %v4820
    %6700 = vmatprep.subr.bf16.mxu0 %v4829
    %6701 = vmatpush1.bf16.msra.mxu0 %v4828
    %6702 = vmatprep.subr.bf16.mxu0 %v4837
    %6703 = vmatpush1.bf16.msra.mxu0 %v4836
    %6704 = vmatprep.subr.bf16.mxu0 %v4845
    %6705 = vmatpush1.bf16.msra.mxu0 %v4844
    %6706 = vmatprep.subr.bf16.mxu0 %v4853
    %6707 = vmatpush1.bf16.msra.mxu0 %v4852
    %6708 = vmatprep.subr.bf16.mxu0 %v4861
    %6709 = vmatpush1.bf16.msra.mxu0 %v4860
    %6710 = vmatprep.subr.bf16.mxu0 %v4869
    %6711 = vmatpush1.bf16.msra.mxu0 %v4868
    %6712 = vmatprep.subr.bf16.mxu0 %v4877
    %6713 = vmatpush1.bf16.msra.mxu0 %v4876
    %6714 = vmatprep.subr.bf16.mxu0 %v4885
    %6715 = vmatpush1.bf16.msra.mxu0 %v4884
    %6716 = vmatprep.mubr.bf16.mxu0 %v148
    %6717 = vmatmul.mubr.bf16.gmra.mrb[0].mxu0 %v147
    %v6718 = vpop.f32.mrb[0].mxu0
    %v6719 = vadd.f32 %v6678, %v6718
    %v6720 = vpop.f32.mrb[0].mxu0
    %v6721 = vadd.f32 %v6680, %v6720
    %v6722 = vpop.f32.mrb[0].mxu0
    %v6723 = vpop.f32.mrb[0].mxu0
    %6724 = vdwg.mxu0
    %6725 = vmatprep.subr.bf16.mxu0 %v4893
    %6726 = vmatpush1.bf16.msra.mxu0 %v4892
    %6727 = vmatprep.subr.bf16.mxu0 %v4901
    %6728 = vmatpush1.bf16.msra.mxu0 %v4900
    %6729 = vmatprep.subr.bf16.mxu0 %v4909
    %6730 = vmatpush1.bf16.msra.mxu0 %v4908
    %6731 = vmatprep.subr.bf16.mxu0 %v4917
    %6732 = vmatpush1.bf16.msra.mxu0 %v4916
    %6733 = vmatprep.subr.bf16.mxu0 %v4925
    %6734 = vmatpush1.bf16.msra.mxu0 %v4924
    %6735 = vmatprep.subr.bf16.mxu0 %v4933
    %6736 = vmatpush1.bf16.msra.mxu0 %v4932
    %6737 = vmatprep.subr.bf16.mxu0 %v4941
    %6738 = vmatpush1.bf16.msra.mxu0 %v4940
    %6739 = vmatprep.subr.bf16.mxu0 %v4949
    %6740 = vmatpush1.bf16.msra.mxu0 %v4948
    %6741 = vmatprep.subr.bf16.mxu0 %v4957
    %6742 = vmatpush1.bf16.msra.mxu0 %v4956
    %6743 = vmatprep.subr.bf16.mxu0 %v4965
    %6744 = vmatpush1.bf16.msra.mxu0 %v4964
    %6745 = vmatprep.subr.bf16.mxu0 %v4973
    %6746 = vmatpush1.bf16.msra.mxu0 %v4972
    %6747 = vmatprep.subr.bf16.mxu0 %v4981
    %6748 = vmatpush1.bf16.msra.mxu0 %v4980
    %6749 = vmatprep.subr.bf16.mxu0 %v4989
    %6750 = vmatpush1.bf16.msra.mxu0 %v4988
    %6751 = vmatprep.subr.bf16.mxu0 %v4997
    %6752 = vmatpush1.bf16.msra.mxu0 %v4996
    %6753 = vmatprep.subr.bf16.mxu0 %v5005
    %6754 = vmatpush1.bf16.msra.mxu0 %v5004
    %6755 = vmatprep.subr.bf16.mxu0 %v5013
    %6756 = vmatpush1.bf16.msra.mxu0 %v5012
    %6757 = vmatprep.mubr.bf16.mxu0 %v150
    %6758 = vmatmul.mubr.bf16.gmra.mrb[0].mxu0 %v149
    %v6759 = vpop.f32.mrb[0].mxu0
    %v6760 = vadd.f32 %v6719, %v6759
    %v6761 = vpop.f32.mrb[0].mxu0
    %v6762 = vadd.f32 %v6721, %v6761
    %v6763 = vpop.f32.mrb[0].mxu0
    %v6764 = vpop.f32.mrb[0].mxu0
    %6765 = vdwg.mxu0
    %6766 = vmatprep.subr.bf16.mxu0 %v5021
    %6767 = vmatpush1.bf16.msra.mxu0 %v5020
    %6768 = vmatprep.subr.bf16.mxu0 %v5029
    %6769 = vmatpush1.bf16.msra.mxu0 %v5028
    %6770 = vmatprep.subr.bf16.mxu0 %v5037
    %6771 = vmatpush1.bf16.msra.mxu0 %v5036
    %6772 = vmatprep.subr.bf16.mxu0 %v5045
    %6773 = vmatpush1.bf16.msra.mxu0 %v5044
    %6774 = vmatprep.subr.bf16.mxu0 %v5053
    %6775 = vmatpush1.bf16.msra.mxu0 %v5052
    %6776 = vmatprep.subr.bf16.mxu0 %v5061
    %6777 = vmatpush1.bf16.msra.mxu0 %v5060
    %6778 = vmatprep.subr.bf16.mxu0 %v5069
    %6779 = vmatpush1.bf16.msra.mxu0 %v5068
    %6780 = vmatprep.subr.bf16.mxu0 %v5077
    %6781 = vmatpush1.bf16.msra.mxu0 %v5076
    %6782 = vmatprep.subr.bf16.mxu0 %v5085
    %6783 = vmatpush1.bf16.msra.mxu0 %v5084
    %6784 = vmatprep.subr.bf16.mxu0 %v5093
    %6785 = vmatpush1.bf16.msra.mxu0 %v5092
    %6786 = vmatprep.subr.bf16.mxu0 %v5101
    %6787 = vmatpush1.bf16.msra.mxu0 %v5100
    %6788 = vmatprep.subr.bf16.mxu0 %v5109
    %6789 = vmatpush1.bf16.msra.mxu0 %v5108
    %6790 = vmatprep.subr.bf16.mxu0 0
    %6791 = vmatpush1.bf16.msra.mxu0 0
    %6792 = vmatprep.subr.bf16.mxu0 0
    %6793 = vmatpush1.bf16.msra.mxu0 0
    %6794 = vmatprep.subr.bf16.mxu0 0
    %6795 = vmatpush1.bf16.msra.mxu0 0
    %6796 = vmatprep.subr.bf16.mxu0 0
    %6797 = vmatpush1.bf16.msra.mxu0 0
    %6798 = vmatprep.mubr.bf16.mxu0 %v6149
    %6799 = vmatmul.mubr.bf16.gmra.mrb[0].mxu0 %v151
    %v6800 = vpop.f32.mrb[0].mxu0
    %v6801 = vadd.f32 %v6760, %v6800
    %v6802 = vpop.f32.mrb[0].mxu0
    %v6803 = vadd.f32 %v6762, %v6802
    %v6804 = vpop.f32.mrb[0].mxu0
    %v6805 = vpop.f32.mrb[0].mxu0
    %6806 = vdwg.mxu0
    %6807 = vmatprep.subr.bf16.mxu0 %v4127
    %6808 = vmatpush1.bf16.msra.mxu0 %v4126
    %6809 = vmatprep.subr.bf16.mxu0 %v4135
    %6810 = vmatpush1.bf16.msra.mxu0 %v4134
    %6811 = vmatprep.subr.bf16.mxu0 %v4143
    %6812 = vmatpush1.bf16.msra.mxu0 %v4142
    %6813 = vmatprep.subr.bf16.mxu0 %v4151
    %6814 = vmatpush1.bf16.msra.mxu0 %v4150
    %6815 = vmatprep.subr.bf16.mxu0 %v4159
    %6816 = vmatpush1.bf16.msra.mxu0 %v4158
    %6817 = vmatprep.subr.bf16.mxu0 %v4167
    %6818 = vmatpush1.bf16.msra.mxu0 %v4166
    %6819 = vmatprep.subr.bf16.mxu0 %v4175
    %6820 = vmatpush1.bf16.msra.mxu0 %v4174
    %6821 = vmatprep.subr.bf16.mxu0 %v4183
    %6822 = vmatpush1.bf16.msra.mxu0 %v4182
    %6823 = vmatprep.subr.bf16.mxu0 %v4191
    %6824 = vmatpush1.bf16.msra.mxu0 %v4190
    %6825 = vmatprep.subr.bf16.mxu0 %v4199
    %6826 = vmatpush1.bf16.msra.mxu0 %v4198
    %6827 = vmatprep.subr.bf16.mxu0 %v4207
    %6828 = vmatpush1.bf16.msra.mxu0 %v4206
    %6829 = vmatprep.subr.bf16.mxu0 %v4215
    %6830 = vmatpush1.bf16.msra.mxu0 %v4214
    %6831 = vmatprep.subr.bf16.mxu0 %v4223
    %6832 = vmatpush1.bf16.msra.mxu0 %v4222
    %6833 = vmatprep.subr.bf16.mxu0 %v4231
    %6834 = vmatpush1.bf16.msra.mxu0 %v4230
    %6835 = vmatprep.subr.bf16.mxu0 %v4239
    %6836 = vmatpush1.bf16.msra.mxu0 %v4238
    %6837 = vmatprep.subr.bf16.mxu0 %v4247
    %6838 = vmatpush1.bf16.msra.mxu0 %v4246
    %6839 = vmatprep.mubr.bf16.mxu0 %v138
    %6840 = vmatmul.mubr.bf16.gmra.mrb[0].mxu0 %v137
    %v6841 = vpop.f32.mrb[0].mxu0
    %v6842 = vadd.f32 %v6126, %v6841
    %v6843 = vpop.f32.mrb[0].mxu0
    %v6844 = vadd.f32 %v6130, %v6843
    %v6845 = vpop.f32.mrb[0].mxu0
    %v6846 = vpop.f32.mrb[0].mxu0
    %6847 = vdwg.mxu0
    %6848 = vmatprep.subr.bf16.mxu0 %v4255
    %6849 = vmatpush1.bf16.msra.mxu0 %v4254
    %6850 = vmatprep.subr.bf16.mxu0 %v4263
    %6851 = vmatpush1.bf16.msra.mxu0 %v4262
    %6852 = vmatprep.subr.bf16.mxu0 %v4271
    %6853 = vmatpush1.bf16.msra.mxu0 %v4270
    %6854 = vmatprep.subr.bf16.mxu0 %v4279
    %6855 = vmatpush1.bf16.msra.mxu0 %v4278
    %6856 = vmatprep.subr.bf16.mxu0 %v4287
    %6857 = vmatpush1.bf16.msra.mxu0 %v4286
    %6858 = vmatprep.subr.bf16.mxu0 %v4295
    %6859 = vmatpush1.bf16.msra.mxu0 %v4294
    %6860 = vmatprep.subr.bf16.mxu0 %v4303
    %6861 = vmatpush1.bf16.msra.mxu0 %v4302
    %6862 = vmatprep.subr.bf16.mxu0 %v4311
    %6863 = vmatpush1.bf16.msra.mxu0 %v4310
    %6864 = vmatprep.subr.bf16.mxu0 %v4319
    %6865 = vmatpush1.bf16.msra.mxu0 %v4318
    %6866 = vmatprep.subr.bf16.mxu0 %v4327
    %6867 = vmatpush1.bf16.msra.mxu0 %v4326
    %6868 = vmatprep.subr.bf16.mxu0 %v4335
    %6869 = vmatpush1.bf16.msra.mxu0 %v4334
    %6870 = vmatprep.subr.bf16.mxu0 %v4343
    %6871 = vmatpush1.bf16.msra.mxu0 %v4342
    %6872 = vmatprep.subr.bf16.mxu0 %v4351
    %6873 = vmatpush1.bf16.msra.mxu0 %v4350
    %6874 = vmatprep.subr.bf16.mxu0 %v4359
    %6875 = vmatpush1.bf16.msra.mxu0 %v4358
    %6876 = vmatprep.subr.bf16.mxu0 %v4367
    %6877 = vmatpush1.bf16.msra.mxu0 %v4366
    %6878 = vmatprep.subr.bf16.mxu0 %v4375
    %6879 = vmatpush1.bf16.msra.mxu0 %v4374
    %6880 = vmatprep.mubr.bf16.mxu0 %v140
    %6881 = vmatmul.mubr.bf16.gmra.mrb[0].mxu0 %v139
    %v6882 = vpop.f32.mrb[0].mxu0
    %v6883 = vadd.f32 %v6842, %v6882
    %v6884 = vpop.f32.mrb[0].mxu0
    %v6885 = vadd.f32 %v6844, %v6884
    %v6886 = vpop.f32.mrb[0].mxu0
    %v6887 = vpop.f32.mrb[0].mxu0
    %6888 = vdwg.mxu0
    %6889 = vmatprep.subr.bf16.mxu0 %v4383
    %6890 = vmatpush1.bf16.msra.mxu0 %v4382
    %6891 = vmatprep.subr.bf16.mxu0 %v4391
    %6892 = vmatpush1.bf16.msra.mxu0 %v4390
    %6893 = vmatprep.subr.bf16.mxu0 %v4399
    %6894 = vmatpush1.bf16.msra.mxu0 %v4398
    %6895 = vmatprep.subr.bf16.mxu0 %v4407
    %6896 = vmatpush1.bf16.msra.mxu0 %v4406
    %6897 = vmatprep.subr.bf16.mxu0 %v4415
    %6898 = vmatpush1.bf16.msra.mxu0 %v4414
    %6899 = vmatprep.subr.bf16.mxu0 %v4423
    %6900 = vmatpush1.bf16.msra.mxu0 %v4422
    %6901 = vmatprep.subr.bf16.mxu0 %v4431
    %6902 = vmatpush1.bf16.msra.mxu0 %v4430
    %6903 = vmatprep.subr.bf16.mxu0 %v4439
    %6904 = vmatpush1.bf16.msra.mxu0 %v4438
    %6905 = vmatprep.subr.bf16.mxu0 %v4447
    %6906 = vmatpush1.bf16.msra.mxu0 %v4446
    %6907 = vmatprep.subr.bf16.mxu0 %v4455
    %6908 = vmatpush1.bf16.msra.mxu0 %v4454
    %6909 = vmatprep.subr.bf16.mxu0 %v4463
    %6910 = vmatpush1.bf16.msra.mxu0 %v4462
    %6911 = vmatprep.subr.bf16.mxu0 %v4471
    %6912 = vmatpush1.bf16.msra.mxu0 %v4470
    %6913 = vmatprep.subr.bf16.mxu0 %v4479
    %6914 = vmatpush1.bf16.msra.mxu0 %v4478
    %6915 = vmatprep.subr.bf16.mxu0 %v4487
    %6916 = vmatpush1.bf16.msra.mxu0 %v4486
    %6917 = vmatprep.subr.bf16.mxu0 %v4495
    %6918 = vmatpush1.bf16.msra.mxu0 %v4494
    %6919 = vmatprep.subr.bf16.mxu0 %v4503
    %6920 = vmatpush1.bf16.msra.mxu0 %v4502
    %6921 = vmatprep.mubr.bf16.mxu0 %v142
    %6922 = vmatmul.mubr.bf16.gmra.mrb[0].mxu0 %v141
    %v6923 = vpop.f32.mrb[0].mxu0
    %v6924 = vadd.f32 %v6883, %v6923
    %v6925 = vpop.f32.mrb[0].mxu0
    %v6926 = vadd.f32 %v6885, %v6925
    %v6927 = vpop.f32.mrb[0].mxu0
    %v6928 = vpop.f32.mrb[0].mxu0
    %6929 = vdwg.mxu0
    %6930 = vmatprep.subr.bf16.mxu0 %v4511
    %6931 = vmatpush1.bf16.msra.mxu0 %v4510
    %6932 = vmatprep.subr.bf16.mxu0 %v4519
    %6933 = vmatpush1.bf16.msra.mxu0 %v4518
    %6934 = vmatprep.subr.bf16.mxu0 %v4527
    %6935 = vmatpush1.bf16.msra.mxu0 %v4526
    %6936 = vmatprep.subr.bf16.mxu0 %v4535
    %6937 = vmatpush1.bf16.msra.mxu0 %v4534
    %6938 = vmatprep.subr.bf16.mxu0 %v4543
    %6939 = vmatpush1.bf16.msra.mxu0 %v4542
    %6940 = vmatprep.subr.bf16.mxu0 %v4551
    %6941 = vmatpush1.bf16.msra.mxu0 %v4550
    %6942 = vmatprep.subr.bf16.mxu0 %v4559
    %6943 = vmatpush1.bf16.msra.mxu0 %v4558
    %6944 = vmatprep.subr.bf16.mxu0 %v4567
    %6945 = vmatpush1.bf16.msra.mxu0 %v4566
    %6946 = vmatprep.subr.bf16.mxu0 %v4575
    %6947 = vmatpush1.bf16.msra.mxu0 %v4574
    %6948 = vmatprep.subr.bf16.mxu0 %v4583
    %6949 = vmatpush1.bf16.msra.mxu0 %v4582
    %6950 = vmatprep.subr.bf16.mxu0 %v4591
    %6951 = vmatpush1.bf16.msra.mxu0 %v4590
    %6952 = vmatprep.subr.bf16.mxu0 %v4599
    %6953 = vmatpush1.bf16.msra.mxu0 %v4598
    %6954 = vmatprep.subr.bf16.mxu0 %v4607
    %6955 = vmatpush1.bf16.msra.mxu0 %v4606
    %6956 = vmatprep.subr.bf16.mxu0 %v4615
    %6957 = vmatpush1.bf16.msra.mxu0 %v4614
    %6958 = vmatprep.subr.bf16.mxu0 %v4623
    %6959 = vmatpush1.bf16.msra.mxu0 %v4622
    %6960 = vmatprep.subr.bf16.mxu0 %v4631
    %6961 = vmatpush1.bf16.msra.mxu0 %v4630
    %6962 = vmatprep.mubr.bf16.mxu0 %v144
    %6963 = vmatmul.mubr.bf16.gmra.mrb[0].mxu0 %v143
    %v6964 = vpop.f32.mrb[0].mxu0
    %v6965 = vadd.f32 %v6924, %v6964
    %v6966 = vpop.f32.mrb[0].mxu0
    %v6967 = vadd.f32 %v6926, %v6966
    %v6968 = vpop.f32.mrb[0].mxu0
    %v6969 = vpop.f32.mrb[0].mxu0
    %6970 = vdwg.mxu0
    %6971 = vmatprep.subr.bf16.mxu0 %v4639
    %6972 = vmatpush1.bf16.msra.mxu0 %v4638
    %6973 = vmatprep.subr.bf16.mxu0 %v4647
    %6974 = vmatpush1.bf16.msra.mxu0 %v4646
    %6975 = vmatprep.subr.bf16.mxu0 %v4655
    %6976 = vmatpush1.bf16.msra.mxu0 %v4654
    %6977 = vmatprep.subr.bf16.mxu0 %v4663
    %6978 = vmatpush1.bf16.msra.mxu0 %v4662
    %6979 = vmatprep.subr.bf16.mxu0 %v4671
    %6980 = vmatpush1.bf16.msra.mxu0 %v4670
    %6981 = vmatprep.subr.bf16.mxu0 %v4679
    %6982 = vmatpush1.bf16.msra.mxu0 %v4678
    %6983 = vmatprep.subr.bf16.mxu0 %v4687
    %6984 = vmatpush1.bf16.msra.mxu0 %v4686
    %6985 = vmatprep.subr.bf16.mxu0 %v4695
    %6986 = vmatpush1.bf16.msra.mxu0 %v4694
    %6987 = vmatprep.subr.bf16.mxu0 %v4703
    %6988 = vmatpush1.bf16.msra.mxu0 %v4702
    %6989 = vmatprep.subr.bf16.mxu0 %v4711
    %6990 = vmatpush1.bf16.msra.mxu0 %v4710
    %6991 = vmatprep.subr.bf16.mxu0 %v4719
    %6992 = vmatpush1.bf16.msra.mxu0 %v4718
    %6993 = vmatprep.subr.bf16.mxu0 %v4727
    %6994 = vmatpush1.bf16.msra.mxu0 %v4726
    %6995 = vmatprep.subr.bf16.mxu0 %v4735
    %6996 = vmatpush1.bf16.msra.mxu0 %v4734
    %6997 = vmatprep.subr.bf16.mxu0 %v4743
    %6998 = vmatpush1.bf16.msra.mxu0 %v4742
    %6999 = vmatprep.subr.bf16.mxu0 %v4751
    %7000 = vmatpush1.bf16.msra.mxu0 %v4750
    %7001 = vmatprep.subr.bf16.mxu0 %v4759
    %7002 = vmatpush1.bf16.msra.mxu0 %v4758
    %7003 = vmatprep.mubr.bf16.mxu0 %v146
    %7004 = vmatmul.mubr.bf16.gmra.mrb[0].mxu0 %v145
    %v7005 = vpop.f32.mrb[0].mxu0
    %v7006 = vadd.f32 %v6965, %v7005
    %v7007 = vpop.f32.mrb[0].mxu0
    %v7008 = vadd.f32 %v6967, %v7007
    %v7009 = vpop.f32.mrb[0].mxu0
    %v7010 = vpop.f32.mrb[0].mxu0
    %7011 = vdwg.mxu0
    %7012 = vmatprep.subr.bf16.mxu0 %v4767
    %7013 = vmatpush1.bf16.msra.mxu0 %v4766
    %7014 = vmatprep.subr.bf16.mxu0 %v4775
    %7015 = vmatpush1.bf16.msra.mxu0 %v4774
    %7016 = vmatprep.subr.bf16.mxu0 %v4783
    %7017 = vmatpush1.bf16.msra.mxu0 %v4782
    %7018 = vmatprep.subr.bf16.mxu0 %v4791
    %7019 = vmatpush1.bf16.msra.mxu0 %v4790
    %7020 = vmatprep.subr.bf16.mxu0 %v4799
    %7021 = vmatpush1.bf16.msra.mxu0 %v4798
    %7022 = vmatprep.subr.bf16.mxu0 %v4807
    %7023 = vmatpush1.bf16.msra.mxu0 %v4806
    %7024 = vmatprep.subr.bf16.mxu0 %v4815
    %7025 = vmatpush1.bf16.msra.mxu0 %v4814
    %7026 = vmatprep.subr.bf16.mxu0 %v4823
    %7027 = vmatpush1.bf16.msra.mxu0 %v4822
    %7028 = vmatprep.subr.bf16.mxu0 %v4831
    %7029 = vmatpush1.bf16.msra.mxu0 %v4830
    %7030 = vmatprep.subr.bf16.mxu0 %v4839
    %7031 = vmatpush1.bf16.msra.mxu0 %v4838
    %7032 = vmatprep.subr.bf16.mxu0 %v4847
    %7033 = vmatpush1.bf16.msra.mxu0 %v4846
    %7034 = vmatprep.subr.bf16.mxu0 %v4855
    %7035 = vmatpush1.bf16.msra.mxu0 %v4854
    %7036 = vmatprep.subr.bf16.mxu0 %v4863
    %7037 = vmatpush1.bf16.msra.mxu0 %v4862
    %7038 = vmatprep.subr.bf16.mxu0 %v4871
    %7039 = vmatpush1.bf16.msra.mxu0 %v4870
    %7040 = vmatprep.subr.bf16.mxu0 %v4879
    %7041 = vmatpush1.bf16.msra.mxu0 %v4878
    %7042 = vmatprep.subr.bf16.mxu0 %v4887
    %7043 = vmatpush1.bf16.msra.mxu0 %v4886
    %7044 = vmatprep.mubr.bf16.mxu0 %v148
    %7045 = vmatmul.mubr.bf16.gmra.mrb[0].mxu0 %v147
    %v7046 = vpop.f32.mrb[0].mxu0
    %v7047 = vadd.f32 %v7006, %v7046
    %v7048 = vpop.f32.mrb[0].mxu0
    %v7049 = vadd.f32 %v7008, %v7048
    %v7050 = vpop.f32.mrb[0].mxu0
    %v7051 = vpop.f32.mrb[0].mxu0
    %7052 = vdwg.mxu0
    %7053 = vmatprep.subr.bf16.mxu0 %v4895
    %7054 = vmatpush1.bf16.msra.mxu0 %v4894
    %7055 = vmatprep.subr.bf16.mxu0 %v4903
    %7056 = vmatpush1.bf16.msra.mxu0 %v4902
    %7057 = vmatprep.subr.bf16.mxu0 %v4911
    %7058 = vmatpush1.bf16.msra.mxu0 %v4910
    %7059 = vmatprep.subr.bf16.mxu0 %v4919
    %7060 = vmatpush1.bf16.msra.mxu0 %v4918
    %7061 = vmatprep.subr.bf16.mxu0 %v4927
    %7062 = vmatpush1.bf16.msra.mxu0 %v4926
    %7063 = vmatprep.subr.bf16.mxu0 %v4935
    %7064 = vmatpush1.bf16.msra.mxu0 %v4934
    %7065 = vmatprep.subr.bf16.mxu0 %v4943
    %7066 = vmatpush1.bf16.msra.mxu0 %v4942
    %7067 = vmatprep.subr.bf16.mxu0 %v4951
    %7068 = vmatpush1.bf16.msra.mxu0 %v4950
    %7069 = vmatprep.subr.bf16.mxu0 %v4959
    %7070 = vmatpush1.bf16.msra.mxu0 %v4958
    %7071 = vmatprep.subr.bf16.mxu0 %v4967
    %7072 = vmatpush1.bf16.msra.mxu0 %v4966
    %7073 = vmatprep.subr.bf16.mxu0 %v4975
    %7074 = vmatpush1.bf16.msra.mxu0 %v4974
    %7075 = vmatprep.subr.bf16.mxu0 %v4983
    %7076 = vmatpush1.bf16.msra.mxu0 %v4982
    %7077 = vmatprep.subr.bf16.mxu0 %v4991
    %7078 = vmatpush1.bf16.msra.mxu0 %v4990
    %7079 = vmatprep.subr.bf16.mxu0 %v4999
    %7080 = vmatpush1.bf16.msra.mxu0 %v4998
    %7081 = vmatprep.subr.bf16.mxu0 %v5007
    %7082 = vmatpush1.bf16.msra.mxu0 %v5006
    %7083 = vmatprep.subr.bf16.mxu0 %v5015
    %7084 = vmatpush1.bf16.msra.mxu0 %v5014
    %7085 = vmatprep.mubr.bf16.mxu0 %v150
    %7086 = vmatmul.mubr.bf16.gmra.mrb[0].mxu0 %v149
    %v7087 = vpop.f32.mrb[0].mxu0
    %v7088 = vadd.f32 %v7047, %v7087
    %v7089 = vpop.f32.mrb[0].mxu0
    %v7090 = vadd.f32 %v7049, %v7089
    %v7091 = vpop.f32.mrb[0].mxu0
    %v7092 = vpop.f32.mrb[0].mxu0
    %7093 = vdwg.mxu0
    %7094 = vmatprep.subr.bf16.mxu0 %v5023
    %7095 = vmatpush1.bf16.msra.mxu0 %v5022
    %7096 = vmatprep.subr.bf16.mxu0 %v5031
    %7097 = vmatpush1.bf16.msra.mxu0 %v5030
    %7098 = vmatprep.subr.bf16.mxu0 %v5039
    %7099 = vmatpush1.bf16.msra.mxu0 %v5038
    %7100 = vmatprep.subr.bf16.mxu0 %v5047
    %7101 = vmatpush1.bf16.msra.mxu0 %v5046
    %7102 = vmatprep.subr.bf16.mxu0 %v5055
    %7103 = vmatpush1.bf16.msra.mxu0 %v5054
    %7104 = vmatprep.subr.bf16.mxu0 %v5063
    %7105 = vmatpush1.bf16.msra.mxu0 %v5062
    %7106 = vmatprep.subr.bf16.mxu0 %v5071
    %7107 = vmatpush1.bf16.msra.mxu0 %v5070
    %7108 = vmatprep.subr.bf16.mxu0 %v5079
    %7109 = vmatpush1.bf16.msra.mxu0 %v5078
    %7110 = vmatprep.subr.bf16.mxu0 %v5087
    %7111 = vmatpush1.bf16.msra.mxu0 %v5086
    %7112 = vmatprep.subr.bf16.mxu0 %v5095
    %7113 = vmatpush1.bf16.msra.mxu0 %v5094
    %7114 = vmatprep.subr.bf16.mxu0 %v5103
    %7115 = vmatpush1.bf16.msra.mxu0 %v5102
    %7116 = vmatprep.subr.bf16.mxu0 %v5111
    %7117 = vmatpush1.bf16.msra.mxu0 %v5110
    %7118 = vmatprep.subr.bf16.mxu0 0
    %7119 = vmatpush1.bf16.msra.mxu0 0
    %7120 = vmatprep.subr.bf16.mxu0 0
    %7121 = vmatpush1.bf16.msra.mxu0 0
    %7122 = vmatprep.subr.bf16.mxu0 0
    %7123 = vmatpush1.bf16.msra.mxu0 0
    %7124 = vmatprep.subr.bf16.mxu0 0
    %7125 = vmatpush1.bf16.msra.mxu0 0
    %7126 = vmatprep.mubr.bf16.mxu0 %v6149
    %7127 = vmatmul.mubr.bf16.gmra.mrb[0].mxu0 %v151
    %v7128 = vpop.f32.mrb[0].mxu0
    %v7129 = vadd.f32 %v7088, %v7128
    %v7130 = vpop.f32.mrb[0].mxu0
    %v7131 = vadd.f32 %v7090, %v7130
    %v7132 = vpop.f32.mrb[0].mxu0
    %v7133 = vpop.f32.mrb[0].mxu0
    %7134 = vdwg.mxu0
    %7135 = vmatprep.subr.bf16.mxu0 %v4129
    %7136 = vmatpush1.bf16.msra.mxu0 %v4128
    %7137 = vmatprep.subr.bf16.mxu0 %v4137
    %7138 = vmatpush1.bf16.msra.mxu0 %v4136
    %7139 = vmatprep.subr.bf16.mxu0 %v4145
    %7140 = vmatpush1.bf16.msra.mxu0 %v4144
    %7141 = vmatprep.subr.bf16.mxu0 %v4153
    %7142 = vmatpush1.bf16.msra.mxu0 %v4152
    %7143 = vmatprep.subr.bf16.mxu0 %v4161
    %7144 = vmatpush1.bf16.msra.mxu0 %v4160
    %7145 = vmatprep.subr.bf16.mxu0 %v4169
    %7146 = vmatpush1.bf16.msra.mxu0 %v4168
    %7147 = vmatprep.subr.bf16.mxu0 %v4177
    %7148 = vmatpush1.bf16.msra.mxu0 %v4176
    %7149 = vmatprep.subr.bf16.mxu0 %v4185
    %7150 = vmatpush1.bf16.msra.mxu0 %v4184
    %7151 = vmatprep.subr.bf16.mxu0 %v4193
    %7152 = vmatpush1.bf16.msra.mxu0 %v4192
    %7153 = vmatprep.subr.bf16.mxu0 %v4201
    %7154 = vmatpush1.bf16.msra.mxu0 %v4200
    %7155 = vmatprep.subr.bf16.mxu0 %v4209
    %7156 = vmatpush1.bf16.msra.mxu0 %v4208
    %7157 = vmatprep.subr.bf16.mxu0 %v4217
    %7158 = vmatpush1.bf16.msra.mxu0 %v4216
    %7159 = vmatprep.subr.bf16.mxu0 %v4225
    %7160 = vmatpush1.bf16.msra.mxu0 %v4224
    %7161 = vmatprep.subr.bf16.mxu0 %v4233
    %7162 = vmatpush1.bf16.msra.mxu0 %v4232
    %7163 = vmatprep.subr.bf16.mxu0 %v4241
    %7164 = vmatpush1.bf16.msra.mxu0 %v4240
    %7165 = vmatprep.subr.bf16.mxu0 %v4249
    %7166 = vmatpush1.bf16.msra.mxu0 %v4248
    %7167 = vmatprep.mubr.bf16.mxu0 %v138
    %7168 = vmatmul.mubr.bf16.gmra.mrb[0].mxu0 %v137
    %v7169 = vpop.f32.mrb[0].mxu0
    %v7170 = vadd.f32 %v6134, %v7169
    %v7171 = vpop.f32.mrb[0].mxu0
    %v7172 = vadd.f32 %v6138, %v7171
    %v7173 = vpop.f32.mrb[0].mxu0
    %v7174 = vpop.f32.mrb[0].mxu0
    %7175 = vdwg.mxu0
    %7176 = vmatprep.subr.bf16.mxu0 %v4257
    %7177 = vmatpush1.bf16.msra.mxu0 %v4256
    %7178 = vmatprep.subr.bf16.mxu0 %v4265
    %7179 = vmatpush1.bf16.msra.mxu0 %v4264
    %7180 = vmatprep.subr.bf16.mxu0 %v4273
    %7181 = vmatpush1.bf16.msra.mxu0 %v4272
    %7182 = vmatprep.subr.bf16.mxu0 %v4281
    %7183 = vmatpush1.bf16.msra.mxu0 %v4280
    %7184 = vmatprep.subr.bf16.mxu0 %v4289
    %7185 = vmatpush1.bf16.msra.mxu0 %v4288
    %7186 = vmatprep.subr.bf16.mxu0 %v4297
    %7187 = vmatpush1.bf16.msra.mxu0 %v4296
    %7188 = vmatprep.subr.bf16.mxu0 %v4305
    %7189 = vmatpush1.bf16.msra.mxu0 %v4304
    %7190 = vmatprep.subr.bf16.mxu0 %v4313
    %7191 = vmatpush1.bf16.msra.mxu0 %v4312
    %7192 = vmatprep.subr.bf16.mxu0 %v4321
    %7193 = vmatpush1.bf16.msra.mxu0 %v4320
    %7194 = vmatprep.subr.bf16.mxu0 %v4329
    %7195 = vmatpush1.bf16.msra.mxu0 %v4328
    %7196 = vmatprep.subr.bf16.mxu0 %v4337
    %7197 = vmatpush1.bf16.msra.mxu0 %v4336
    %7198 = vmatprep.subr.bf16.mxu0 %v4345
    %7199 = vmatpush1.bf16.msra.mxu0 %v4344
    %7200 = vmatprep.subr.bf16.mxu0 %v4353
    %7201 = vmatpush1.bf16.msra.mxu0 %v4352
    %7202 = vmatprep.subr.bf16.mxu0 %v4361
    %7203 = vmatpush1.bf16.msra.mxu0 %v4360
    %7204 = vmatprep.subr.bf16.mxu0 %v4369
    %7205 = vmatpush1.bf16.msra.mxu0 %v4368
    %7206 = vmatprep.subr.bf16.mxu0 %v4377
    %7207 = vmatpush1.bf16.msra.mxu0 %v4376
    %7208 = vmatprep.mubr.bf16.mxu0 %v140
    %7209 = vmatmul.mubr.bf16.gmra.mrb[0].mxu0 %v139
    %v7210 = vpop.f32.mrb[0].mxu0
    %v7211 = vadd.f32 %v7170, %v7210
    %v7212 = vpop.f32.mrb[0].mxu0
    %v7213 = vadd.f32 %v7172, %v7212
    %v7214 = vpop.f32.mrb[0].mxu0
    %v7215 = vpop.f32.mrb[0].mxu0
    %7216 = vdwg.mxu0
    %7217 = vmatprep.subr.bf16.mxu0 %v4385
    %7218 = vmatpush1.bf16.msra.mxu0 %v4384
    %7219 = vmatprep.subr.bf16.mxu0 %v4393
    %7220 = vmatpush1.bf16.msra.mxu0 %v4392
    %7221 = vmatprep.subr.bf16.mxu0 %v4401
    %7222 = vmatpush1.bf16.msra.mxu0 %v4400
    %7223 = vmatprep.subr.bf16.mxu0 %v4409
    %7224 = vmatpush1.bf16.msra.mxu0 %v4408
    %7225 = vmatprep.subr.bf16.mxu0 %v4417
    %7226 = vmatpush1.bf16.msra.mxu0 %v4416
    %7227 = vmatprep.subr.bf16.mxu0 %v4425
    %7228 = vmatpush1.bf16.msra.mxu0 %v4424
    %7229 = vmatprep.subr.bf16.mxu0 %v4433
    %7230 = vmatpush1.bf16.msra.mxu0 %v4432
    %7231 = vmatprep.subr.bf16.mxu0 %v4441
    %7232 = vmatpush1.bf16.msra.mxu0 %v4440
    %7233 = vmatprep.subr.bf16.mxu0 %v4449
    %7234 = vmatpush1.bf16.msra.mxu0 %v4448
    %7235 = vmatprep.subr.bf16.mxu0 %v4457
    %7236 = vmatpush1.bf16.msra.mxu0 %v4456
    %7237 = vmatprep.subr.bf16.mxu0 %v4465
    %7238 = vmatpush1.bf16.msra.mxu0 %v4464
    %7239 = vmatprep.subr.bf16.mxu0 %v4473
    %7240 = vmatpush1.bf16.msra.mxu0 %v4472
    %7241 = vmatprep.subr.bf16.mxu0 %v4481
    %7242 = vmatpush1.bf16.msra.mxu0 %v4480
    %7243 = vmatprep.subr.bf16.mxu0 %v4489
    %7244 = vmatpush1.bf16.msra.mxu0 %v4488
    %7245 = vmatprep.subr.bf16.mxu0 %v4497
    %7246 = vmatpush1.bf16.msra.mxu0 %v4496
    %7247 = vmatprep.subr.bf16.mxu0 %v4505
    %7248 = vmatpush1.bf16.msra.mxu0 %v4504
    %7249 = vmatprep.mubr.bf16.mxu0 %v142
    %7250 = vmatmul.mubr.bf16.gmra.mrb[0].mxu0 %v141
    %v7251 = vpop.f32.mrb[0].mxu0
    %v7252 = vadd.f32 %v7211, %v7251
    %v7253 = vpop.f32.mrb[0].mxu0
    %v7254 = vadd.f32 %v7213, %v7253
    %v7255 = vpop.f32.mrb[0].mxu0
    %v7256 = vpop.f32.mrb[0].mxu0
    %7257 = vdwg.mxu0
    %7258 = vmatprep.subr.bf16.mxu0 %v4513
    %7259 = vmatpush1.bf16.msra.mxu0 %v4512
    %7260 = vmatprep.subr.bf16.mxu0 %v4521
    %7261 = vmatpush1.bf16.msra.mxu0 %v4520
    %7262 = vmatprep.subr.bf16.mxu0 %v4529
    %7263 = vmatpush1.bf16.msra.mxu0 %v4528
    %7264 = vmatprep.subr.bf16.mxu0 %v4537
    %7265 = vmatpush1.bf16.msra.mxu0 %v4536
    %7266 = vmatprep.subr.bf16.mxu0 %v4545
    %7267 = vmatpush1.bf16.msra.mxu0 %v4544
    %7268 = vmatprep.subr.bf16.mxu0 %v4553
    %7269 = vmatpush1.bf16.msra.mxu0 %v4552
    %7270 = vmatprep.subr.bf16.mxu0 %v4561
    %7271 = vmatpush1.bf16.msra.mxu0 %v4560
    %7272 = vmatprep.subr.bf16.mxu0 %v4569
    %7273 = vmatpush1.bf16.msra.mxu0 %v4568
    %7274 = vmatprep.subr.bf16.mxu0 %v4577
    %7275 = vmatpush1.bf16.msra.mxu0 %v4576
    %7276 = vmatprep.subr.bf16.mxu0 %v4585
    %7277 = vmatpush1.bf16.msra.mxu0 %v4584
    %7278 = vmatprep.subr.bf16.mxu0 %v4593
    %7279 = vmatpush1.bf16.msra.mxu0 %v4592
    %7280 = vmatprep.subr.bf16.mxu0 %v4601
    %7281 = vmatpush1.bf16.msra.mxu0 %v4600
    %7282 = vmatprep.subr.bf16.mxu0 %v4609
    %7283 = vmatpush1.bf16.msra.mxu0 %v4608
    %7284 = vmatprep.subr.bf16.mxu0 %v4617
    %7285 = vmatpush1.bf16.msra.mxu0 %v4616
    %7286 = vmatprep.subr.bf16.mxu0 %v4625
    %7287 = vmatpush1.bf16.msra.mxu0 %v4624
    %7288 = vmatprep.subr.bf16.mxu0 %v4633
    %7289 = vmatpush1.bf16.msra.mxu0 %v4632
    %7290 = vmatprep.mubr.bf16.mxu0 %v144
    %7291 = vmatmul.mubr.bf16.gmra.mrb[0].mxu0 %v143
    %v7292 = vpop.f32.mrb[0].mxu0
    %v7293 = vadd.f32 %v7252, %v7292
    %v7294 = vpop.f32.mrb[0].mxu0
    %v7295 = vadd.f32 %v7254, %v7294
    %v7296 = vpop.f32.mrb[0].mxu0
    %v7297 = vpop.f32.mrb[0].mxu0
    %7298 = vdwg.mxu0
    %7299 = vmatprep.subr.bf16.mxu0 %v4641
    %7300 = vmatpush1.bf16.msra.mxu0 %v4640
    %7301 = vmatprep.subr.bf16.mxu0 %v4649
    %7302 = vmatpush1.bf16.msra.mxu0 %v4648
    %7303 = vmatprep.subr.bf16.mxu0 %v4657
    %7304 = vmatpush1.bf16.msra.mxu0 %v4656
    %7305 = vmatprep.subr.bf16.mxu0 %v4665
    %7306 = vmatpush1.bf16.msra.mxu0 %v4664
    %7307 = vmatprep.subr.bf16.mxu0 %v4673
    %7308 = vmatpush1.bf16.msra.mxu0 %v4672
    %7309 = vmatprep.subr.bf16.mxu0 %v4681
    %7310 = vmatpush1.bf16.msra.mxu0 %v4680
    %7311 = vmatprep.subr.bf16.mxu0 %v4689
    %7312 = vmatpush1.bf16.msra.mxu0 %v4688
    %7313 = vmatprep.subr.bf16.mxu0 %v4697
    %7314 = vmatpush1.bf16.msra.mxu0 %v4696
    %7315 = vmatprep.subr.bf16.mxu0 %v4705
    %7316 = vmatpush1.bf16.msra.mxu0 %v4704
    %7317 = vmatprep.subr.bf16.mxu0 %v4713
    %7318 = vmatpush1.bf16.msra.mxu0 %v4712
    %7319 = vmatprep.subr.bf16.mxu0 %v4721
    %7320 = vmatpush1.bf16.msra.mxu0 %v4720
    %7321 = vmatprep.subr.bf16.mxu0 %v4729
    %7322 = vmatpush1.bf16.msra.mxu0 %v4728
    %7323 = vmatprep.subr.bf16.mxu0 %v4737
    %7324 = vmatpush1.bf16.msra.mxu0 %v4736
    %7325 = vmatprep.subr.bf16.mxu0 %v4745
    %7326 = vmatpush1.bf16.msra.mxu0 %v4744
    %7327 = vmatprep.subr.bf16.mxu0 %v4753
    %7328 = vmatpush1.bf16.msra.mxu0 %v4752
    %7329 = vmatprep.subr.bf16.mxu0 %v4761
    %7330 = vmatpush1.bf16.msra.mxu0 %v4760
    %7331 = vmatprep.mubr.bf16.mxu0 %v146
    %7332 = vmatmul.mubr.bf16.gmra.mrb[0].mxu0 %v145
    %v7333 = vpop.f32.mrb[0].mxu0
    %v7334 = vadd.f32 %v7293, %v7333
    %v7335 = vpop.f32.mrb[0].mxu0
    %v7336 = vadd.f32 %v7295, %v7335
    %v7337 = vpop.f32.mrb[0].mxu0
    %v7338 = vpop.f32.mrb[0].mxu0
    %7339 = vdwg.mxu0
    %7340 = vmatprep.subr.bf16.mxu0 %v4769
    %7341 = vmatpush1.bf16.msra.mxu0 %v4768
    %7342 = vmatprep.subr.bf16.mxu0 %v4777
    %7343 = vmatpush1.bf16.msra.mxu0 %v4776
    %7344 = vmatprep.subr.bf16.mxu0 %v4785
    %7345 = vmatpush1.bf16.msra.mxu0 %v4784
    %7346 = vmatprep.subr.bf16.mxu0 %v4793
    %7347 = vmatpush1.bf16.msra.mxu0 %v4792
    %7348 = vmatprep.subr.bf16.mxu0 %v4801
    %7349 = vmatpush1.bf16.msra.mxu0 %v4800
    %7350 = vmatprep.subr.bf16.mxu0 %v4809
    %7351 = vmatpush1.bf16.msra.mxu0 %v4808
    %7352 = vmatprep.subr.bf16.mxu0 %v4817
    %7353 = vmatpush1.bf16.msra.mxu0 %v4816
    %7354 = vmatprep.subr.bf16.mxu0 %v4825
    %7355 = vmatpush1.bf16.msra.mxu0 %v4824
    %7356 = vmatprep.subr.bf16.mxu0 %v4833
    %7357 = vmatpush1.bf16.msra.mxu0 %v4832
    %7358 = vmatprep.subr.bf16.mxu0 %v4841
    %7359 = vmatpush1.bf16.msra.mxu0 %v4840
    %7360 = vmatprep.subr.bf16.mxu0 %v4849
    %7361 = vmatpush1.bf16.msra.mxu0 %v4848
    %7362 = vmatprep.subr.bf16.mxu0 %v4857
    %7363 = vmatpush1.bf16.msra.mxu0 %v4856
    %7364 = vmatprep.subr.bf16.mxu0 %v4865
    %7365 = vmatpush1.bf16.msra.mxu0 %v4864
    %7366 = vmatprep.subr.bf16.mxu0 %v4873
    %7367 = vmatpush1.bf16.msra.mxu0 %v4872
    %7368 = vmatprep.subr.bf16.mxu0 %v4881
    %7369 = vmatpush1.bf16.msra.mxu0 %v4880
    %7370 = vmatprep.subr.bf16.mxu0 %v4889
    %7371 = vmatpush1.bf16.msra.mxu0 %v4888
    %7372 = vmatprep.mubr.bf16.mxu0 %v148
    %7373 = vmatmul.mubr.bf16.gmra.mrb[0].mxu0 %v147
    %v7374 = vpop.f32.mrb[0].mxu0
    %v7375 = vadd.f32 %v7334, %v7374
    %v7376 = vpop.f32.mrb[0].mxu0
    %v7377 = vadd.f32 %v7336, %v7376
    %v7378 = vpop.f32.mrb[0].mxu0
    %v7379 = vpop.f32.mrb[0].mxu0
    %7380 = vdwg.mxu0
    %7381 = vmatprep.subr.bf16.mxu0 %v4897
    %7382 = vmatpush1.bf16.msra.mxu0 %v4896
    %7383 = vmatprep.subr.bf16.mxu0 %v4905
    %7384 = vmatpush1.bf16.msra.mxu0 %v4904
    %7385 = vmatprep.subr.bf16.mxu0 %v4913
    %7386 = vmatpush1.bf16.msra.mxu0 %v4912
    %7387 = vmatprep.subr.bf16.mxu0 %v4921
    %7388 = vmatpush1.bf16.msra.mxu0 %v4920
    %7389 = vmatprep.subr.bf16.mxu0 %v4929
    %7390 = vmatpush1.bf16.msra.mxu0 %v4928
    %7391 = vmatprep.subr.bf16.mxu0 %v4937
    %7392 = vmatpush1.bf16.msra.mxu0 %v4936
    %7393 = vmatprep.subr.bf16.mxu0 %v4945
    %7394 = vmatpush1.bf16.msra.mxu0 %v4944
    %7395 = vmatprep.subr.bf16.mxu0 %v4953
    %7396 = vmatpush1.bf16.msra.mxu0 %v4952
    %7397 = vmatprep.subr.bf16.mxu0 %v4961
    %7398 = vmatpush1.bf16.msra.mxu0 %v4960
    %7399 = vmatprep.subr.bf16.mxu0 %v4969
    %7400 = vmatpush1.bf16.msra.mxu0 %v4968
    %7401 = vmatprep.subr.bf16.mxu0 %v4977
    %7402 = vmatpush1.bf16.msra.mxu0 %v4976
    %7403 = vmatprep.subr.bf16.mxu0 %v4985
    %7404 = vmatpush1.bf16.msra.mxu0 %v4984
    %7405 = vmatprep.subr.bf16.mxu0 %v4993
    %7406 = vmatpush1.bf16.msra.mxu0 %v4992
    %7407 = vmatprep.subr.bf16.mxu0 %v5001
    %7408 = vmatpush1.bf16.msra.mxu0 %v5000
    %7409 = vmatprep.subr.bf16.mxu0 %v5009
    %7410 = vmatpush1.bf16.msra.mxu0 %v5008
    %7411 = vmatprep.subr.bf16.mxu0 %v5017
    %7412 = vmatpush1.bf16.msra.mxu0 %v5016
    %7413 = vmatprep.mubr.bf16.mxu0 %v150
    %7414 = vmatmul.mubr.bf16.gmra.mrb[0].mxu0 %v149
    %v7415 = vpop.f32.mrb[0].mxu0
    %v7416 = vadd.f32 %v7375, %v7415
    %v7417 = vpop.f32.mrb[0].mxu0
    %v7418 = vadd.f32 %v7377, %v7417
    %v7419 = vpop.f32.mrb[0].mxu0
    %v7420 = vpop.f32.mrb[0].mxu0
    %7421 = vdwg.mxu0
    %7422 = vmatprep.subr.bf16.mxu0 %v5025
    %7423 = vmatpush1.bf16.msra.mxu0 %v5024
    %7424 = vmatprep.subr.bf16.mxu0 %v5033
    %7425 = vmatpush1.bf16.msra.mxu0 %v5032
    %7426 = vmatprep.subr.bf16.mxu0 %v5041
    %7427 = vmatpush1.bf16.msra.mxu0 %v5040
    %7428 = vmatprep.subr.bf16.mxu0 %v5049
    %7429 = vmatpush1.bf16.msra.mxu0 %v5048
    %7430 = vmatprep.subr.bf16.mxu0 %v5057
    %7431 = vmatpush1.bf16.msra.mxu0 %v5056
    %7432 = vmatprep.subr.bf16.mxu0 %v5065
    %7433 = vmatpush1.bf16.msra.mxu0 %v5064
    %7434 = vmatprep.subr.bf16.mxu0 %v5073
    %7435 = vmatpush1.bf16.msra.mxu0 %v5072
    %7436 = vmatprep.subr.bf16.mxu0 %v5081
    %7437 = vmatpush1.bf16.msra.mxu0 %v5080
    %7438 = vmatprep.subr.bf16.mxu0 %v5089
    %7439 = vmatpush1.bf16.msra.mxu0 %v5088
    %7440 = vmatprep.subr.bf16.mxu0 %v5097
    %7441 = vmatpush1.bf16.msra.mxu0 %v5096
    %7442 = vmatprep.subr.bf16.mxu0 %v5105
    %7443 = vmatpush1.bf16.msra.mxu0 %v5104
    %7444 = vmatprep.subr.bf16.mxu0 %v5113
    %7445 = vmatpush1.bf16.msra.mxu0 %v5112
    %7446 = vmatprep.subr.bf16.mxu0 0
    %7447 = vmatpush1.bf16.msra.mxu0 0
    %7448 = vmatprep.subr.bf16.mxu0 0
    %7449 = vmatpush1.bf16.msra.mxu0 0
    %7450 = vmatprep.subr.bf16.mxu0 0
    %7451 = vmatpush1.bf16.msra.mxu0 0
    %7452 = vmatprep.subr.bf16.mxu0 0
    %7453 = vmatpush1.bf16.msra.mxu0 0
    %7454 = vmatprep.mubr.bf16.mxu0 %v6149
    %7455 = vmatmul.mubr.bf16.gmra.mrb[0].mxu0 %v151
    %v7456 = vpop.f32.mrb[0].mxu0
    %v7457 = vadd.f32 %v7416, %v7456
    %v7458 = vpop.f32.mrb[0].mxu0
    %v7459 = vadd.f32 %v7418, %v7458
    %v7460 = vpop.f32.mrb[0].mxu0
    %v7461 = vpop.f32.mrb[0].mxu0
    %7462 = vdwg.mxu0
    %v7471 = vcombine.low %v6473, %v6475
    %v7472 = vcombine.low %v6801, %v6803
    %v7473 = vcombine.low %v7129, %v7131
    %v7474 = vcombine.low %v7457, %v7459
    %v7476 = vunpack.c.l.s4 1966171168
    %v7477 = vunpack.c.0.s8 %v7476
    %v7478 = vlaneseq
    %v7479 = vshrl.u32 %v7478, 7
    %v7480 = vsub.s32 %v7477, %v7479
    %v7481 = vrot.slane %v7471, %v7480
    %v7483 = vunpack.c.l.s4 1966171168
    %v7484 = vunpack.c.0.s8 %v7483
    %v7485 = vlaneseq
    %v7486 = vshrl.u32 %v7485, 7
    %v7487 = vsub.s32 %v7484, %v7486
    %v7488 = vrot.slane %v7472, %v7487
    %v7490 = vunpack.c.l.s4 1966171168
    %v7491 = vunpack.c.0.s8 %v7490
    %v7492 = vlaneseq
    %v7493 = vshrl.u32 %v7492, 7
    %v7494 = vsub.s32 %v7491, %v7493
    %v7495 = vrot.slane %v7473, %v7494
    %v7497 = vunpack.c.l.s4 1966171168
    %v7498 = vunpack.c.0.s8 %v7497
    %v7499 = vlaneseq
    %v7500 = vshrl.u32 %v7499, 7
    %v7501 = vsub.s32 %v7498, %v7500
    %v7502 = vrot.slane %v7474, %v7501
    %v7503 = vcombine.low %v7481, %v7488
    %v7504 = vcombine.low %v7495, %v7502
    %v7506 = vunpack.c.l.s4 1966171168
    %v7507 = vunpack.c.0.s8 %v7506
    %v7508 = vlaneseq
    %v7509 = vshrl.u32 %v7508, 7
    %v7510 = vsub.s32 %v7507, %v7509
    %v7511 = vrot.slane %v7503, %v7510
    %v7513 = vunpack.c.l.s4 1966171168
    %v7514 = vunpack.c.0.s8 %v7513
    %v7515 = vlaneseq
    %v7516 = vshrl.u32 %v7515, 7
    %v7517 = vsub.s32 %v7514, %v7516
    %v7518 = vrot.slane %v7504, %v7517
    %v7519 = vcombine.low %v7511, %v7518
    %7521 = vst [vmem:[#allocation8] sm:$0xff] %v7519
    // Predicated region
    $region26: #{tpu_custom_call.1} parent=1 // pred_check
      _
    $region27: #{tpu_custom_call.1} parent=1 // pred_check_branch
      %7523 = sbr.rel (0) target = $region29
    $region28: #{tpu_custom_call.1} parent=1 // pred_region
      %s7525 = ssub.s32 128, 128
      %7526 = vsyncadd [#allocation4], %s7525
      %s7528 = sshll.u32 [#allocation8], 4
      %s7529 = int_to_ptr.vmem [resolvable:$true] %s7528
      %7531 = dma.vmem_to_hbm [thread:$0]  %s7529, 128, %s3, [#allocation4]
    $region29: #{tpu_custom_call.1} parent=1 // pred_fallthru
      _
    // Predicated region
    $region30: #{tpu_custom_call.1} parent=1 // pred_check
      _
    $region31: #{tpu_custom_call.1} parent=1 // pred_check_branch
      %7533 = sbr.rel (0) target = $region33
    $region32: #{tpu_custom_call.1} parent=1 // pred_region
      %7534 = dma.done [#allocation4], 128
    $region33: #{tpu_custom_call.1} parent=1 // pred_fallthru
      _
    %7535 = vsyncpa [#allocation3], 1
    %7536 = vsyncpa [#allocation6], 1
    %7537 = vsyncpa [#allocation4], 1

// kernel: tpu_custom_call.1
$region0: #{tpu_custom_call.1}
  #allocation0 [shape = 'u32[]', space=smem, size = 0x4, offset = 0x4, fixed_abs, tag = 'smem constant byte address 0x4 - core index']
  #allocation1 [shape = 'u32[144,128]{1,0:T(1,128)}', space=vmem, size = 0x12000, scoped, tag = 'internal scratch']
  %s0 = inlined_call_operand.hbm [shape: f32[1,1984], index: 0, kind: input, shape index: {}]
  %s1 = inlined_call_operand.hbm [shape: bf16[1984,1024], index: 1, kind: input, shape index: {}]
  %s2 = inlined_call_operand.hbm [shape: f32[1,1024], index: 2, kind: input, shape index: {}]
  %s3 = inlined_call_operand.hbm [shape: f32[1,1024], index: 3, kind: output, shape index: {}]
  %s4 = sld [smem:[#allocation0]]
  $region34: #{tpu_custom_call.1} parent=0
    _
  %s6 = ssub.s32 1, %s4
  %s7 = scalar_select 0, %s6, %s4
  $region1: #{tpu_custom_call.1} parent=0
    #allocation2 [shape = 'u8[8192]{0}', space=vmem, size = 0x2000, scoped, tag = 'input window, operand 0, single buffered']
    #allocation3 [shape = 's32[1]{0}', space=sflag, size = 0x4, scoped, tag = 'scoped memory for tpu_custom_call.1']
    #allocation4 [shape = 's32[1]{0}', space=sflag, size = 0x4, scoped, tag = 'scoped memory for tpu_custom_call.1']
    #allocation5 [shape = 'u8[4063232]{0}', space=vmem, size = 0x3e0000, scoped, tag = 'input window, operand 1, single buffered']
    #allocation6 [shape = 's32[1]{0}', space=sflag, size = 0x4, scoped, tag = 'scoped memory for tpu_custom_call.1']
    #allocation7 [shape = 'u8[4096]{0}', space=vmem, size = 0x1000, scoped, tag = 'input window, operand 2, single buffered']
    #allocation8 [shape = 'u8[4096]{0}', space=vmem, size = 0x1000, scoped, tag = 'output window, operand 0, single buffered']
    %8 = vsyncpa [#allocation3], 0
    %9 = vsyncpa [#allocation6], 0
    %10 = vsyncpa [#allocation4], 0
    // Predicated region
    $region2: #{tpu_custom_call.1} parent=1 // pred_check
      _
    $region3: #{tpu_custom_call.1} parent=1 // pred_check_branch
      %12 = sbr.rel (0) target = $region5
    $region4: #{tpu_custom_call.1} parent=1 // pred_region
      %s14 = ssub.s32 256, 256
      %15 = vsyncadd [#allocation3], %s14
      %s17 = sshll.u32 [#allocation2], 4
      %s18 = int_to_ptr.vmem [resolvable:$true] %s17
      %20 = dma.hbm_to_vmem [thread:$0]  %s0, 256, %s18, [#allocation3]
    $region5: #{tpu_custom_call.1} parent=1 // pred_fallthru
      _
    // Predicated region
    $region6: #{tpu_custom_call.1} parent=1 // pred_check
      _
    $region7: #{tpu_custom_call.1} parent=1 // pred_check_branch
      %22 = sbr.rel (0) target = $region9
    $region8: #{tpu_custom_call.1} parent=1 // pred_region
      %s24 = ssub.s32 126976, 126976
      %25 = vsyncadd [#allocation6], %s24
      %s26 = sshll.u32 [#allocation5], 4
      %s27 = int_to_ptr.vmem [resolvable:$true] %s26
      %32 = dma.hbm_to_vmem [thread:$0]  %s1, 126976, %s27, [#allocation6], 512, 512, 32
    $region9: #{tpu_custom_call.1} parent=1 // pred_fallthru
      _
    // Predicated region
    $region10: #{tpu_custom_call.1} parent=1 // pred_check
      _
    $region11: #{tpu_custom_call.1} parent=1 // pred_check_branch
      %34 = sbr.rel (0) target = $region13
    $region12: #{tpu_custom_call.1} parent=1 // pred_region
      %s36 = ssub.s32 128, 128
      %37 = vsyncadd [#allocation6], %s36
      %s39 = sshll.u32 [#allocation7], 4
      %s40 = int_to_ptr.vmem [resolvable:$true] %s39
      %42 = dma.hbm_to_vmem [thread:$0]  %s2, 128, %s40, [#allocation6]
    $region13: #{tpu_custom_call.1} parent=1 // pred_fallthru
      _
    // Predicated region
    $region14: #{tpu_custom_call.1} parent=1 // pred_check
      _
    $region15: #{tpu_custom_call.1} parent=1 // pred_check_branch
      %44 = sbr.rel (0) target = $region17
    $region16: #{tpu_custom_call.1} parent=1 // pred_region
      %45 = dma.done [#allocation3], 256
    $region17: #{tpu_custom_call.1} parent=1 // pred_fallthru
      _
    // Predicated region
    $region18: #{tpu_custom_call.1} parent=1 // pred_check
      _
    $region19: #{tpu_custom_call.1} parent=1 // pred_check_branch
      %47 = sbr.rel (0) target = $region21
    $region20: #{tpu_custom_call.1} parent=1 // pred_region
      %48 = dma.done [#allocation6], 126976
    $region21: #{tpu_custom_call.1} parent=1 // pred_fallthru
      _
    // Predicated region
    $region22: #{tpu_custom_call.1} parent=1 // pred_check
      _
    $region23: #{tpu_custom_call.1} parent=1 // pred_check_branch
      %50 = sbr.rel (0) target = $region25
    $region24: #{tpu_custom_call.1} parent=1 // pred_region
      %51 = dma.done [#allocation6], 128
    $region25: #{tpu_custom_call.1} parent=1 // pred_fallthru
      _
    %v53 = vld [vmem:[#allocation2] sm:$0xff]
    %v54 = vld [vmem:[#allocation2 + $0x8] sm:$0xff]
    %v57 = vlaneseq
    %v58 = vshrl.u32 %v57, 7
    %v59 = vsub.s32 0, %v58
    %v60 = vrot.slane %v53, %v59
    %v61 = vlaneseq
    %v62 = vshrl.u32 %v61, 7
    %v63 = vsub.s32 1, %v62
    %v64 = vrot.slane %v53, %v63
    %v65 = vlaneseq
    %v66 = vshrl.u32 %v65, 7
    %v67 = vsub.s32 2, %v66
    %v68 = vrot.slane %v53, %v67
    %v69 = vlaneseq
    %v70 = vshrl.u32 %v69, 7
    %v71 = vsub.s32 3, %v70
    %v72 = vrot.slane %v53, %v71
    %v73 = vlaneseq
    %v74 = vshrl.u32 %v73, 7
    %v75 = vsub.s32 4, %v74
    %v76 = vrot.slane %v53, %v75
    %v77 = vlaneseq
    %v78 = vshrl.u32 %v77, 7
    %v79 = vsub.s32 5, %v78
    %v80 = vrot.slane %v53, %v79
    %v81 = vlaneseq
    %v82 = vshrl.u32 %v81, 7
    %v83 = vsub.s32 6, %v82
    %v84 = vrot.slane %v53, %v83
    %v85 = vlaneseq
    %v86 = vshrl.u32 %v85, 7
    %v87 = vsub.s32 7, %v86
    %v88 = vrot.slane %v53, %v87
    %v89 = vlaneseq
    %v90 = vshrl.u32 %v89, 7
    %v91 = vsub.s32 0, %v90
    %v92 = vrot.slane %v54, %v91
    %v93 = vlaneseq
    %v94 = vshrl.u32 %v93, 7
    %v95 = vsub.s32 1, %v94
    %v96 = vrot.slane %v54, %v95
    %v97 = vlaneseq
    %v98 = vshrl.u32 %v97, 7
    %v99 = vsub.s32 2, %v98
    %v100 = vrot.slane %v54, %v99
    %v101 = vlaneseq
    %v102 = vshrl.u32 %v101, 7
    %v103 = vsub.s32 3, %v102
    %v104 = vrot.slane %v54, %v103
    %v105 = vlaneseq
    %v106 = vshrl.u32 %v105, 7
    %v107 = vsub.s32 4, %v106
    %v108 = vrot.slane %v54, %v107
    %v109 = vlaneseq
    %v110 = vshrl.u32 %v109, 7
    %v111 = vsub.s32 5, %v110
    %v112 = vrot.slane %v54, %v111
    %v113 = vlaneseq
    %v114 = vshrl.u32 %v113, 7
    %v115 = vsub.s32 6, %v114
    %v116 = vrot.slane %v54, %v115
    %v117 = vlaneseq
    %v118 = vshrl.u32 %v117, 7
    %v119 = vsub.s32 7, %v118
    %v120 = vrot.slane %v54, %v119
    %v137 = vpack.c.bf16 %v60, %v60
    %v138 = vpack.c.bf16 %v64, %v64
    %v139 = vpack.c.bf16 %v68, %v68
    %v140 = vpack.c.bf16 %v72, %v72
    %v141 = vpack.c.bf16 %v76, %v76
    %v142 = vpack.c.bf16 %v80, %v80
    %v143 = vpack.c.bf16 %v84, %v84
    %v144 = vpack.c.bf16 %v88, %v88
    %v145 = vpack.c.bf16 %v92, %v92
    %v146 = vpack.c.bf16 %v96, %v96
    %v147 = vpack.c.bf16 %v100, %v100
    %v148 = vpack.c.bf16 %v104, %v104
    %v149 = vpack.c.bf16 %v108, %v108
    %v150 = vpack.c.bf16 %v112, %v112
    %v151 = vpack.c.bf16 %v116, %v116
    %v152 = vpack.c.bf16 %v120, %v120
    %v153 = vld [vmem:[#allocation5] sm:$0xff]
    %v154 = vld [vmem:[#allocation5 + $0x8] sm:$0xff]
    %v155 = vld [vmem:[#allocation5 + $0x10] sm:$0xff]
    %v156 = vld [vmem:[#allocation5 + $0x18] sm:$0xff]
    %v157 = vld [vmem:[#allocation5 + $0x20] sm:$0xff]
    %v158 = vld [vmem:[#allocation5 + $0x28] sm:$0xff]
    %v159 = vld [vmem:[#allocation5 + $0x30] sm:$0xff]
    %v160 = vld [vmem:[#allocation5 + $0x38] sm:$0xff]
    %v161 = vld [vmem:[#allocation5 + $0x40] sm:$0xff]
    %v162 = vld [vmem:[#allocation5 + $0x48] sm:$0xff]
    %v163 = vld [vmem:[#allocation5 + $0x50] sm:$0xff]
    %v164 = vld [vmem:[#allocation5 + $0x58] sm:$0xff]
    %v165 = vld [vmem:[#allocation5 + $0x60] sm:$0xff]
    %v166 = vld [vmem:[#allocation5 + $0x68] sm:$0xff]
    %v167 = vld [vmem:[#allocation5 + $0x70] sm:$0xff]
    %v168 = vld [vmem:[#allocation5 + $0x78] sm:$0xff]
    %v169 = vld [vmem:[#allocation5 + $0x80] sm:$0xff]
    %v170 = vld [vmem:[#allocation5 + $0x88] sm:$0xff]
    %v171 = vld [vmem:[#allocation5 + $0x90] sm:$0xff]
    %v172 = vld [vmem:[#allocation5 + $0x98] sm:$0xff]
    %v173 = vld [vmem:[#allocation5 + $0xa0] sm:$0xff]
    %v174 = vld [vmem:[#allocation5 + $0xa8] sm:$0xff]
    %v175 = vld [vmem:[#allocation5 + $0xb0] sm:$0xff]
    %v176 = vld [vmem:[#allocation5 + $0xb8] sm:$0xff]
    %v177 = vld [vmem:[#allocation5 + $0xc0] sm:$0xff]
    %v178 = vld [vmem:[#allocation5 + $0xc8] sm:$0xff]
    %v179 = vld [vmem:[#allocation5 + $0xd0] sm:$0xff]
    %v180 = vld [vmem:[#allocation5 + $0xd8] sm:$0xff]
    %v181 = vld [vmem:[#allocation5 + $0xe0] sm:$0xff]
    %v182 = vld [vmem:[#allocation5 + $0xe8] sm:$0xff]
    %v183 = vld [vmem:[#allocation5 + $0xf0] sm:$0xff]
    %v184 = vld [vmem:[#allocation5 + $0xf8] sm:$0xff]
    %v185 = vld [vmem:[#allocation5 + $0x100] sm:$0xff]
    %v186 = vld [vmem:[#allocation5 + $0x108] sm:$0xff]
    %v187 = vld [vmem:[#allocation5 + $0x110] sm:$0xff]
    %v188 = vld [vmem:[#allocation5 + $0x118] sm:$0xff]
    %v189 = vld [vmem:[#allocation5 + $0x120] sm:$0xff]
    %v190 = vld [vmem:[#allocation5 + $0x128] sm:$0xff]
    %v191 = vld [vmem:[#allocation5 + $0x130] sm:$0xff]
    %v192 = vld [vmem:[#allocation5 + $0x138] sm:$0xff]
    %v193 = vld [vmem:[#allocation5 + $0x140] sm:$0xff]
    %v194 = vld [vmem:[#allocation5 + $0x148] sm:$0xff]
    %v195 = vld [vmem:[#allocation5 + $0x150] sm:$0xff]
    %v196 = vld [vmem:[#allocation5 + $0x158] sm:$0xff]
    %v197 = vld [vmem:[#allocation5 + $0x160] sm:$0xff]
    %v198 = vld [vmem:[#allocation5 + $0x168] sm:$0xff]
    %v199 = vld [vmem:[#allocation5 + $0x170] sm:$0xff]
    %v200 = vld [vmem:[#allocation5 + $0x178] sm:$0xff]
    %v201 = vld [vmem:[#allocation5 + $0x180] sm:$0xff]
    %v202 = vld [vmem:[#allocation5 + $0x188] sm:$0xff]
    %v203 = vld [vmem:[#allocation5 + $0x190] sm:$0xff]
    %v204 = vld [vmem:[#allocation5 + $0x198] sm:$0xff]
    %v205 = vld [vmem:[#allocation5 + $0x1a0] sm:$0xff]
    %v206 = vld [vmem:[#allocation5 + $0x1a8] sm:$0xff]
    %v207 = vld [vmem:[#allocation5 + $0x1b0] sm:$0xff]
    %v208 = vld [vmem:[#allocation5 + $0x1b8] sm:$0xff]
    %v209 = vld [vmem:[#allocation5 + $0x1c0] sm:$0xff]
    %v210 = vld [vmem:[#allocation5 + $0x1c8] sm:$0xff]
    %v211 = vld [vmem:[#allocation5 + $0x1d0] sm:$0xff]
    %v212 = vld [vmem:[#allocation5 + $0x1d8] sm:$0xff]
    %v213 = vld [vmem:[#allocation5 + $0x1e0] sm:$0xff]
    %v214 = vld [vmem:[#allocation5 + $0x1e8] sm:$0xff]
    %v215 = vld [vmem:[#allocation5 + $0x1f0] sm:$0xff]
    %v216 = vld [vmem:[#allocation5 + $0x1f8] sm:$0xff]
    %v217 = vld [vmem:[#allocation5 + $0x200] sm:$0xff]
    %v218 = vld [vmem:[#allocation5 + $0x208] sm:$0xff]
    %v219 = vld [vmem:[#allocation5 + $0x210] sm:$0xff]
    %v220 = vld [vmem:[#allocation5 + $0x218] sm:$0xff]
    %v221 = vld [vmem:[#allocation5 + $0x220] sm:$0xff]
    %v222 = vld [vmem:[#allocation5 + $0x228] sm:$0xff]
    %v223 = vld [vmem:[#allocation5 + $0x230] sm:$0xff]
    %v224 = vld [vmem:[#allocation5 + $0x238] sm:$0xff]
    %v225 = vld [vmem:[#allocation5 + $0x240] sm:$0xff]
    %v226 = vld [vmem:[#allocation5 + $0x248] sm:$0xff]
    %v227 = vld [vmem:[#allocation5 + $0x250] sm:$0xff]
    %v228 = vld [vmem:[#allocation5 + $0x258] sm:$0xff]
    %v229 = vld [vmem:[#allocation5 + $0x260] sm:$0xff]
    %v230 = vld [vmem:[#allocation5 + $0x268] sm:$0xff]
    %v231 = vld [vmem:[#allocation5 + $0x270] sm:$0xff]
    %v232 = vld [vmem:[#allocation5 + $0x278] sm:$0xff]
    %v233 = vld [vmem:[#allocation5 + $0x280] sm:$0xff]
    %v234 = vld [vmem:[#allocation5 + $0x288] sm:$0xff]
    %v235 = vld [vmem:[#allocation5 + $0x290] sm:$0xff]
    %v236 = vld [vmem:[#allocation5 + $0x298] sm:$0xff]
    %v237 = vld [vmem:[#allocation5 + $0x2a0] sm:$0xff]
    %v238 = vld [vmem:[#allocation5 + $0x2a8] sm:$0xff]
    %v239 = vld [vmem:[#allocation5 + $0x2b0] sm:$0xff]
    %v240 = vld [vmem:[#allocation5 + $0x2b8] sm:$0xff]
    %v241 = vld [vmem:[#allocation5 + $0x2c0] sm:$0xff]
    %v242 = vld [vmem:[#allocation5 + $0x2c8] sm:$0xff]
    %v243 = vld [vmem:[#allocation5 + $0x2d0] sm:$0xff]
    %v244 = vld [vmem:[#allocation5 + $0x2d8] sm:$0xff]
    %v245 = vld [vmem:[#allocation5 + $0x2e0] sm:$0xff]
    %v246 = vld [vmem:[#allocation5 + $0x2e8] sm:$0xff]
    %v247 = vld [vmem:[#allocation5 + $0x2f0] sm:$0xff]
    %v248 = vld [vmem:[#allocation5 + $0x2f8] sm:$0xff]
    %v249 = vld [vmem:[#allocation5 + $0x300] sm:$0xff]
    %v250 = vld [vmem:[#allocation5 + $0x308] sm:$0xff]
    %v251 = vld [vmem:[#allocation5 + $0x310] sm:$0xff]
    %v252 = vld [vmem:[#allocation5 + $0x318] sm:$0xff]
    %v253 = vld [vmem:[#allocation5 + $0x320] sm:$0xff]
    %v254 = vld [vmem:[#allocation5 + $0x328] sm:$0xff]
    %v255 = vld [vmem:[#allocation5 + $0x330] sm:$0xff]
    %v256 = vld [vmem:[#allocation5 + $0x338] sm:$0xff]
    %v257 = vld [vmem:[#allocation5 + $0x340] sm:$0xff]
    %v258 = vld [vmem:[#allocation5 + $0x348] sm:$0xff]
    %v259 = vld [vmem:[#allocation5 + $0x350] sm:$0xff]
    %v260 = vld [vmem:[#allocation5 + $0x358] sm:$0xff]
    %v261 = vld [vmem:[#allocation5 + $0x360] sm:$0xff]
    %v262 = vld [vmem:[#allocation5 + $0x368] sm:$0xff]
    %v263 = vld [vmem:[#allocation5 + $0x370] sm:$0xff]
    %v264 = vld [vmem:[#allocation5 + $0x378] sm:$0xff]
    %v265 = vld [vmem:[#allocation5 + $0x380] sm:$0xff]
    %v266 = vld [vmem:[#allocation5 + $0x388] sm:$0xff]
    %v267 = vld [vmem:[#allocation5 + $0x390] sm:$0xff]
    %v268 = vld [vmem:[#allocation5 + $0x398] sm:$0xff]
    %v269 = vld [vmem:[#allocation5 + $0x3a0] sm:$0xff]
    %v270 = vld [vmem:[#allocation5 + $0x3a8] sm:$0xff]
    %v271 = vld [vmem:[#allocation5 + $0x3b0] sm:$0xff]
    %v272 = vld [vmem:[#allocation5 + $0x3b8] sm:$0xff]
    %v273 = vld [vmem:[#allocation5 + $0x3c0] sm:$0xff]
    %v274 = vld [vmem:[#allocation5 + $0x3c8] sm:$0xff]
    %v275 = vld [vmem:[#allocation5 + $0x3d0] sm:$0xff]
    %v276 = vld [vmem:[#allocation5 + $0x3d8] sm:$0xff]
    %v277 = vld [vmem:[#allocation5 + $0x3e0] sm:$0xff]
    %v278 = vld [vmem:[#allocation5 + $0x3e8] sm:$0xff]
    %v279 = vld [vmem:[#allocation5 + $0x3f0] sm:$0xff]
    %v280 = vld [vmem:[#allocation5 + $0x3f8] sm:$0xff]
    %v281 = vld [vmem:[#allocation5 + $0x400] sm:$0xff]
    %v282 = vld [vmem:[#allocation5 + $0x408] sm:$0xff]
    %v283 = vld [vmem:[#allocation5 + $0x410] sm:$0xff]
    %v284 = vld [vmem:[#allocation5 + $0x418] sm:$0xff]
    %v285 = vld [vmem:[#allocation5 + $0x420] sm:$0xff]
    %v286 = vld [vmem:[#allocation5 + $0x428] sm:$0xff]
    %v287 = vld [vmem:[#allocation5 + $0x430] sm:$0xff]
    %v288 = vld [vmem:[#allocation5 + $0x438] sm:$0xff]
    %v289 = vld [vmem:[#allocation5 + $0x440] sm:$0xff]
    %v290 = vld [vmem:[#allocation5 + $0x448] sm:$0xff]
    %v291 = vld [vmem:[#allocation5 + $0x450] sm:$0xff]
    %v292 = vld [vmem:[#allocation5 + $0x458] sm:$0xff]
    %v293 = vld [vmem:[#allocation5 + $0x460] sm:$0xff]
    %v294 = vld [vmem:[#allocation5 + $0x468] sm:$0xff]
    %v295 = vld [vmem:[#allocation5 + $0x470] sm:$0xff]
    %v296 = vld [vmem:[#allocation5 + $0x478] sm:$0xff]
    %v297 = vld [vmem:[#allocation5 + $0x480] sm:$0xff]
    %v298 = vld [vmem:[#allocation5 + $0x488] sm:$0xff]
    %v299 = vld [vmem:[#allocation5 + $0x490] sm:$0xff]
    %v300 = vld [vmem:[#allocation5 + $0x498] sm:$0xff]
    %v301 = vld [vmem:[#allocation5 + $0x4a0] sm:$0xff]
    %v302 = vld [vmem:[#allocation5 + $0x4a8] sm:$0xff]
    %v303 = vld [vmem:[#allocation5 + $0x4b0] sm:$0xff]
    %v304 = vld [vmem:[#allocation5 + $0x4b8] sm:$0xff]
    %v305 = vld [vmem:[#allocation5 + $0x4c0] sm:$0xff]
    %v306 = vld [vmem:[#allocation5 + $0x4c8] sm:$0xff]
    %v307 = vld [vmem:[#allocation5 + $0x4d0] sm:$0xff]
    %v308 = vld [vmem:[#allocation5 + $0x4d8] sm:$0xff]
    %v309 = vld [vmem:[#allocation5 + $0x4e0] sm:$0xff]
    %v310 = vld [vmem:[#allocation5 + $0x4e8] sm:$0xff]
    %v311 = vld [vmem:[#allocation5 + $0x4f0] sm:$0xff]
    %v312 = vld [vmem:[#allocation5 + $0x4f8] sm:$0xff]
    %v313 = vld [vmem:[#allocation5 + $0x500] sm:$0xff]
    %v314 = vld [vmem:[#allocation5 + $0x508] sm:$0xff]
    %v315 = vld [vmem:[#allocation5 + $0x510] sm:$0xff]
    %v316 = vld [vmem:[#allocation5 + $0x518] sm:$0xff]
    %v317 = vld [vmem:[#allocation5 + $0x520] sm:$0xff]
    %v318 = vld [vmem:[#allocation5 + $0x528] sm:$0xff]
    %v319 = vld [vmem:[#allocation5 + $0x530] sm:$0xff]
    %v320 = vld [vmem:[#allocation5 + $0x538] sm:$0xff]
    %v321 = vld [vmem:[#allocation5 + $0x540] sm:$0xff]
    %v322 = vld [vmem:[#allocation5 + $0x548] sm:$0xff]
    %v323 = vld [vmem:[#allocation5 + $0x550] sm:$0xff]
    %v324 = vld [vmem:[#allocation5 + $0x558] sm:$0xff]
    %v325 = vld [vmem:[#allocation5 + $0x560] sm:$0xff]
    %v326 = vld [vmem:[#allocation5 + $0x568] sm:$0xff]
    %v327 = vld [vmem:[#allocation5 + $0x570] sm:$0xff]
    %v328 = vld [vmem:[#allocation5 + $0x578] sm:$0xff]
    %v329 = vld [vmem:[#allocation5 + $0x580] sm:$0xff]
    %v330 = vld [vmem:[#allocation5 + $0x588] sm:$0xff]
    %v331 = vld [vmem:[#allocation5 + $0x590] sm:$0xff]
    %v332 = vld [vmem:[#allocation5 + $0x598] sm:$0xff]
    %v333 = vld [vmem:[#allocation5 + $0x5a0] sm:$0xff]
    %v334 = vld [vmem:[#allocation5 + $0x5a8] sm:$0xff]
    %v335 = vld [vmem:[#allocation5 + $0x5b0] sm:$0xff]
    %v336 = vld [vmem:[#allocation5 + $0x5b8] sm:$0xff]
    %v337 = vld [vmem:[#allocation5 + $0x5c0] sm:$0xff]
    %v338 = vld [vmem:[#allocation5 + $0x5c8] sm:$0xff]
    %v339 = vld [vmem:[#allocation5 + $0x5d0] sm:$0xff]
    %v340 = vld [vmem:[#allocation5 + $0x5d8] sm:$0xff]
    %v341 = vld [vmem:[#allocation5 + $0x5e0] sm:$0xff]
    %v342 = vld [vmem:[#allocation5 + $0x5e8] sm:$0xff]
    %v343 = vld [vmem:[#allocation5 + $0x5f0] sm:$0xff]
    %v344 = vld [vmem:[#allocation5 + $0x5f8] sm:$0xff]
    %v345 = vld [vmem:[#allocation5 + $0x600] sm:$0xff]
    %v346 = vld [vmem:[#allocation5 + $0x608] sm:$0xff]
    %v347 = vld [vmem:[#allocation5 + $0x610] sm:$0xff]
    %v348 = vld [vmem:[#allocation5 + $0x618] sm:$0xff]
    %v349 = vld [vmem:[#allocation5 + $0x620] sm:$0xff]
    %v350 = vld [vmem:[#allocation5 + $0x628] sm:$0xff]
    %v351 = vld [vmem:[#allocation5 + $0x630] sm:$0xff]
    %v352 = vld [vmem:[#allocation5 + $0x638] sm:$0xff]
    %v353 = vld [vmem:[#allocation5 + $0x640] sm:$0xff]
    %v354 = vld [vmem:[#allocation5 + $0x648] sm:$0xff]
    %v355 = vld [vmem:[#allocation5 + $0x650] sm:$0xff]
    %v356 = vld [vmem:[#allocation5 + $0x658] sm:$0xff]
    %v357 = vld [vmem:[#allocation5 + $0x660] sm:$0xff]
    %v358 = vld [vmem:[#allocation5 + $0x668] sm:$0xff]
    %v359 = vld [vmem:[#allocation5 + $0x670] sm:$0xff]
    %v360 = vld [vmem:[#allocation5 + $0x678] sm:$0xff]
    %v361 = vld [vmem:[#allocation5 + $0x680] sm:$0xff]
    %v362 = vld [vmem:[#allocation5 + $0x688] sm:$0xff]
    %v363 = vld [vmem:[#allocation5 + $0x690] sm:$0xff]
    %v364 = vld [vmem:[#allocation5 + $0x698] sm:$0xff]
    %v365 = vld [vmem:[#allocation5 + $0x6a0] sm:$0xff]
    %v366 = vld [vmem:[#allocation5 + $0x6a8] sm:$0xff]
    %v367 = vld [vmem:[#allocation5 + $0x6b0] sm:$0xff]
    %v368 = vld [vmem:[#allocation5 + $0x6b8] sm:$0xff]
    %v369 = vld [vmem:[#allocation5 + $0x6c0] sm:$0xff]
    %v370 = vld [vmem:[#allocation5 + $0x6c8] sm:$0xff]
    %v371 = vld [vmem:[#allocation5 + $0x6d0] sm:$0xff]
    %v372 = vld [vmem:[#allocation5 + $0x6d8] sm:$0xff]
    %v373 = vld [vmem:[#allocation5 + $0x6e0] sm:$0xff]
    %v374 = vld [vmem:[#allocation5 + $0x6e8] sm:$0xff]
    %v375 = vld [vmem:[#allocation5 + $0x6f0] sm:$0xff]
    %v376 = vld [vmem:[#allocation5 + $0x6f8] sm:$0xff]
    %v377 = vld [vmem:[#allocation5 + $0x700] sm:$0xff]
    %v378 = vld [vmem:[#allocation5 + $0x708] sm:$0xff]
    %v379 = vld [vmem:[#allocation5 + $0x710] sm:$0xff]
    %v380 = vld [vmem:[#allocation5 + $0x718] sm:$0xff]
    %v381 = vld [vmem:[#allocation5 + $0x720] sm:$0xff]
    %v382 = vld [vmem:[#allocation5 + $0x728] sm:$0xff]
    %v383 = vld [vmem:[#allocation5 + $0x730] sm:$0xff]
    %v384 = vld [vmem:[#allocation5 + $0x738] sm:$0xff]
    %v385 = vld [vmem:[#allocation5 + $0x740] sm:$0xff]
    %v386 = vld [vmem:[#allocation5 + $0x748] sm:$0xff]
    %v387 = vld [vmem:[#allocation5 + $0x750] sm:$0xff]
    %v388 = vld [vmem:[#allocation5 + $0x758] sm:$0xff]
    %v389 = vld [vmem:[#allocation5 + $0x760] sm:$0xff]
    %v390 = vld [vmem:[#allocation5 + $0x768] sm:$0xff]
    %v391 = vld [vmem:[#allocation5 + $0x770] sm:$0xff]
    %v392 = vld [vmem:[#allocation5 + $0x778] sm:$0xff]
    %v393 = vld [vmem:[#allocation5 + $0x780] sm:$0xff]
    %v394 = vld [vmem:[#allocation5 + $0x788] sm:$0xff]
    %v395 = vld [vmem:[#allocation5 + $0x790] sm:$0xff]
    %v396 = vld [vmem:[#allocation5 + $0x798] sm:$0xff]
    %v397 = vld [vmem:[#allocation5 + $0x7a0] sm:$0xff]
    %v398 = vld [vmem:[#allocation5 + $0x7a8] sm:$0xff]
    %v399 = vld [vmem:[#allocation5 + $0x7b0] sm:$0xff]
    %v400 = vld [vmem:[#allocation5 + $0x7b8] sm:$0xff]
    %v401 = vld [vmem:[#allocation5 + $0x7c0] sm:$0xff]
    %v402 = vld [vmem:[#allocation5 + $0x7c8] sm:$0xff]
    %v403 = vld [vmem:[#allocation5 + $0x7d0] sm:$0xff]
    %v404 = vld [vmem:[#allocation5 + $0x7d8] sm:$0xff]
    %v405 = vld [vmem:[#allocation5 + $0x7e0] sm:$0xff]
    %v406 = vld [vmem:[#allocation5 + $0x7e8] sm:$0xff]
    %v407 = vld [vmem:[#allocation5 + $0x7f0] sm:$0xff]
    %v408 = vld [vmem:[#allocation5 + $0x7f8] sm:$0xff]
    %v409 = vld [vmem:[#allocation5 + $0x800] sm:$0xff]
    %v410 = vld [vmem:[#allocation5 + $0x808] sm:$0xff]
    %v411 = vld [vmem:[#allocation5 + $0x810] sm:$0xff]
    %v412 = vld [vmem:[#allocation5 + $0x818] sm:$0xff]
    %v413 = vld [vmem:[#allocation5 + $0x820] sm:$0xff]
    %v414 = vld [vmem:[#allocation5 + $0x828] sm:$0xff]
    %v415 = vld [vmem:[#allocation5 + $0x830] sm:$0xff]
    %v416 = vld [vmem:[#allocation5 + $0x838] sm:$0xff]
    %v417 = vld [vmem:[#allocation5 + $0x840] sm:$0xff]
    %v418 = vld [vmem:[#allocation5 + $0x848] sm:$0xff]
    %v419 = vld [vmem:[#allocation5 + $0x850] sm:$0xff]
    %v420 = vld [vmem:[#allocation5 + $0x858] sm:$0xff]
    %v421 = vld [vmem:[#allocation5 + $0x860] sm:$0xff]
    %v422 = vld [vmem:[#allocation5 + $0x868] sm:$0xff]
    %v423 = vld [vmem:[#allocation5 + $0x870] sm:$0xff]
    %v424 = vld [vmem:[#allocation5 + $0x878] sm:$0xff]
    %v425 = vld [vmem:[#allocation5 + $0x880] sm:$0xff]
    %v426 = vld [vmem:[#allocation5 + $0x888] sm:$0xff]
    %v427 = vld [vmem:[#allocation5 + $0x890] sm:$0xff]
    %v428 = vld [vmem:[#allocation5 + $0x898] sm:$0xff]
    %v429 = vld [vmem:[#allocation5 + $0x8a0] sm:$0xff]
    %v430 = vld [vmem:[#allocation5 + $0x8a8] sm:$0xff]
    %v431 = vld [vmem:[#allocation5 + $0x8b0] sm:$0xff]
    %v432 = vld [vmem:[#allocation5 + $0x8b8] sm:$0xff]
    %v433 = vld [vmem:[#allocation5 + $0x8c0] sm:$0xff]
    %v434 = vld [vmem:[#allocation5 + $0x8c8] sm:$0xff]
    %v435 = vld [vmem:[#allocation5 + $0x8d0] sm:$0xff]
    %v436 = vld [vmem:[#allocation5 + $0x8d8] sm:$0xff]
    %v437 = vld [vmem:[#allocation5 + $0x8e0] sm:$0xff]
    %v438 = vld [vmem:[#allocation5 + $0x8e8] sm:$0xff]
    %v439 = vld [vmem:[#allocation5 + $0x8f0] sm:$0xff]
    %v440 = vld [vmem:[#allocation5 + $0x8f8] sm:$0xff]
    %v441 = vld [vmem:[#allocation5 + $0x900] sm:$0xff]
    %v442 = vld [vmem:[#allocation5 + $0x908] sm:$0xff]
    %v443 = vld [vmem:[#allocation5 + $0x910] sm:$0xff]
    %v444 = vld [vmem:[#allocation5 + $0x918] sm:$0xff]
    %v445 = vld [vmem:[#allocation5 + $0x920] sm:$0xff]
    %v446 = vld [vmem:[#allocation5 + $0x928] sm:$0xff]
    %v447 = vld [vmem:[#allocation5 + $0x930] sm:$0xff]
    %v448 = vld [vmem:[#allocation5 + $0x938] sm:$0xff]
    %v449 = vld [vmem:[#allocation5 + $0x940] sm:$0xff]
    %v450 = vld [vmem:[#allocation5 + $0x948] sm:$0xff]
    %v451 = vld [vmem:[#allocation5 + $0x950] sm:$0xff]
    %v452 = vld [vmem:[#allocation5 + $0x958] sm:$0xff]
    %v453 = vld [vmem:[#allocation5 + $0x960] sm:$0xff]
    %v454 = vld [vmem:[#allocation5 + $0x968] sm:$0xff]
    %v455 = vld [vmem:[#allocation5 + $0x970] sm:$0xff]
    %v456 = vld [vmem:[#allocation5 + $0x978] sm:$0xff]
    %v457 = vld [vmem:[#allocation5 + $0x980] sm:$0xff]
    %v458 = vld [vmem:[#allocation5 + $0x988] sm:$0xff]
    %v459 = vld [vmem:[#allocation5 + $0x990] sm:$0xff]
    %v460 = vld [vmem:[#allocation5 + $0x998] sm:$0xff]
    %v461 = vld [vmem:[#allocation5 + $0x9a0] sm:$0xff]
    %v462 = vld [vmem:[#allocation5 + $0x9a8] sm:$0xff]
    %v463 = vld [vmem:[#allocation5 + $0x9b0] sm:$0xff]
    %v464 = vld [vmem:[#allocation5 + $0x9b8] sm:$0xff]
    %v465 = vld [vmem:[#allocation5 + $0x9c0] sm:$0xff]
    %v466 = vld [vmem:[#allocation5 + $0x9c8] sm:$0xff]
    %v467 = vld [vmem:[#allocation5 + $0x9d0] sm:$0xff]
    %v468 = vld [vmem:[#allocation5 + $0x9d8] sm:$0xff]
    %v469 = vld [vmem:[#allocation5 + $0x9e0] sm:$0xff]
    %v470 = vld [vmem:[#allocation5 + $0x9e8] sm:$0xff]
    %v471 = vld [vmem:[#allocation5 + $0x9f0] sm:$0xff]
    %v472 = vld [vmem:[#allocation5 + $0x9f8] sm:$0xff]
    %v473 = vld [vmem:[#allocation5 + $0xa00] sm:$0xff]
    %v474 = vld [vmem:[#allocation5 + $0xa08] sm:$0xff]
    %v475 = vld [vmem:[#allocation5 + $0xa10] sm:$0xff]
    %v476 = vld [vmem:[#allocation5 + $0xa18] sm:$0xff]
    %v477 = vld [vmem:[#allocation5 + $0xa20] sm:$0xff]
    %v478 = vld [vmem:[#allocation5 + $0xa28] sm:$0xff]
    %v479 = vld [vmem:[#allocation5 + $0xa30] sm:$0xff]
    %v480 = vld [vmem:[#allocation5 + $0xa38] sm:$0xff]
    %v481 = vld [vmem:[#allocation5 + $0xa40] sm:$0xff]
    %v482 = vld [vmem:[#allocation5 + $0xa48] sm:$0xff]
    %v483 = vld [vmem:[#allocation5 + $0xa50] sm:$0xff]
    %v484 = vld [vmem:[#allocation5 + $0xa58] sm:$0xff]
    %v485 = vld [vmem:[#allocation5 + $0xa60] sm:$0xff]
    %v486 = vld [vmem:[#allocation5 + $0xa68] sm:$0xff]
    %v487 = vld [vmem:[#allocation5 + $0xa70] sm:$0xff]
    %v488 = vld [vmem:[#allocation5 + $0xa78] sm:$0xff]
    %v489 = vld [vmem:[#allocation5 + $0xa80] sm:$0xff]
    %v490 = vld [vmem:[#allocation5 + $0xa88] sm:$0xff]
    %v491 = vld [vmem:[#allocation5 + $0xa90] sm:$0xff]
    %v492 = vld [vmem:[#allocation5 + $0xa98] sm:$0xff]
    %v493 = vld [vmem:[#allocation5 + $0xaa0] sm:$0xff]
    %v494 = vld [vmem:[#allocation5 + $0xaa8] sm:$0xff]
    %v495 = vld [vmem:[#allocation5 + $0xab0] sm:$0xff]
    %v496 = vld [vmem:[#allocation5 + $0xab8] sm:$0xff]
    %v497 = vld [vmem:[#allocation5 + $0xac0] sm:$0xff]
    %v498 = vld [vmem:[#allocation5 + $0xac8] sm:$0xff]
    %v499 = vld [vmem:[#allocation5 + $0xad0] sm:$0xff]
    %v500 = vld [vmem:[#allocation5 + $0xad8] sm:$0xff]
    %v501 = vld [vmem:[#allocation5 + $0xae0] sm:$0xff]
    %v502 = vld [vmem:[#allocation5 + $0xae8] sm:$0xff]
    %v503 = vld [vmem:[#allocation5 + $0xaf0] sm:$0xff]
    %v504 = vld [vmem:[#allocation5 + $0xaf8] sm:$0xff]
    %v505 = vld [vmem:[#allocation5 + $0xb00] sm:$0xff]
    %v506 = vld [vmem:[#allocation5 + $0xb08] sm:$0xff]
    %v507 = vld [vmem:[#allocation5 + $0xb10] sm:$0xff]
    %v508 = vld [vmem:[#allocation5 + $0xb18] sm:$0xff]
    %v509 = vld [vmem:[#allocation5 + $0xb20] sm:$0xff]
    %v510 = vld [vmem:[#allocation5 + $0xb28] sm:$0xff]
    %v511 = vld [vmem:[#allocation5 + $0xb30] sm:$0xff]
    %v512 = vld [vmem:[#allocation5 + $0xb38] sm:$0xff]
    %v513 = vld [vmem:[#allocation5 + $0xb40] sm:$0xff]
    %v514 = vld [vmem:[#allocation5 + $0xb48] sm:$0xff]
    %v515 = vld [vmem:[#allocation5 + $0xb50] sm:$0xff]
    %v516 = vld [vmem:[#allocation5 + $0xb58] sm:$0xff]
    %v517 = vld [vmem:[#allocation5 + $0xb60] sm:$0xff]
    %v518 = vld [vmem:[#allocation5 + $0xb68] sm:$0xff]
    %v519 = vld [vmem:[#allocation5 + $0xb70] sm:$0xff]
    %v520 = vld [vmem:[#allocation5 + $0xb78] sm:$0xff]
    %v521 = vld [vmem:[#allocation5 + $0xb80] sm:$0xff]
    %v522 = vld [vmem:[#allocation5 + $0xb88] sm:$0xff]
    %v523 = vld [vmem:[#allocation5 + $0xb90] sm:$0xff]
    %v524 = vld [vmem:[#allocation5 + $0xb98] sm:$0xff]
    %v525 = vld [vmem:[#allocation5 + $0xba0] sm:$0xff]
    %v526 = vld [vmem:[#allocation5 + $0xba8] sm:$0xff]
    %v527 = vld [vmem:[#allocation5 + $0xbb0] sm:$0xff]
    %v528 = vld [vmem:[#allocation5 + $0xbb8] sm:$0xff]
    %v529 = vld [vmem:[#allocation5 + $0xbc0] sm:$0xff]
    %v530 = vld [vmem:[#allocation5 + $0xbc8] sm:$0xff]
    %v531 = vld [vmem:[#allocation5 + $0xbd0] sm:$0xff]
    %v532 = vld [vmem:[#allocation5 + $0xbd8] sm:$0xff]
    %v533 = vld [vmem:[#allocation5 + $0xbe0] sm:$0xff]
    %v534 = vld [vmem:[#allocation5 + $0xbe8] sm:$0xff]
    %v535 = vld [vmem:[#allocation5 + $0xbf0] sm:$0xff]
    %v536 = vld [vmem:[#allocation5 + $0xbf8] sm:$0xff]
    %v537 = vld [vmem:[#allocation5 + $0xc00] sm:$0xff]
    %v538 = vld [vmem:[#allocation5 + $0xc08] sm:$0xff]
    %v539 = vld [vmem:[#allocation5 + $0xc10] sm:$0xff]
    %v540 = vld [vmem:[#allocation5 + $0xc18] sm:$0xff]
    %v541 = vld [vmem:[#allocation5 + $0xc20] sm:$0xff]
    %v542 = vld [vmem:[#allocation5 + $0xc28] sm:$0xff]
    %v543 = vld [vmem:[#allocation5 + $0xc30] sm:$0xff]
    %v544 = vld [vmem:[#allocation5 + $0xc38] sm:$0xff]
    %v545 = vld [vmem:[#allocation5 + $0xc40] sm:$0xff]
    %v546 = vld [vmem:[#allocation5 + $0xc48] sm:$0xff]
    %v547 = vld [vmem:[#allocation5 + $0xc50] sm:$0xff]
    %v548 = vld [vmem:[#allocation5 + $0xc58] sm:$0xff]
    %v549 = vld [vmem:[#allocation5 + $0xc60] sm:$0xff]
    %v550 = vld [vmem:[#allocation5 + $0xc68] sm:$0xff]
    %v551 = vld [vmem:[#allocation5 + $0xc70] sm:$0xff]
    %v552 = vld [vmem:[#allocation5 + $0xc78] sm:$0xff]
    %v553 = vld [vmem:[#allocation5 + $0xc80] sm:$0xff]
    %v554 = vld [vmem:[#allocation5 + $0xc88] sm:$0xff]
    %v555 = vld [vmem:[#allocation5 + $0xc90] sm:$0xff]
    %v556 = vld [vmem:[#allocation5 + $0xc98] sm:$0xff]
    %v557 = vld [vmem:[#allocation5 + $0xca0] sm:$0xff]
    %v558 = vld [vmem:[#allocation5 + $0xca8] sm:$0xff]
    %v559 = vld [vmem:[#allocation5 + $0xcb0] sm:$0xff]
    %v560 = vld [vmem:[#allocation5 + $0xcb8] sm:$0xff]
    %v561 = vld [vmem:[#allocation5 + $0xcc0] sm:$0xff]
    %v562 = vld [vmem:[#allocation5 + $0xcc8] sm:$0xff]
    %v563 = vld [vmem:[#allocation5 + $0xcd0] sm:$0xff]
    %v564 = vld [vmem:[#allocation5 + $0xcd8] sm:$0xff]
    %v565 = vld [vmem:[#allocation5 + $0xce0] sm:$0xff]
    %v566 = vld [vmem:[#allocation5 + $0xce8] sm:$0xff]
    %v567 = vld [vmem:[#allocation5 + $0xcf0] sm:$0xff]
    %v568 = vld [vmem:[#allocation5 + $0xcf8] sm:$0xff]
    %v569 = vld [vmem:[#allocation5 + $0xd00] sm:$0xff]
    %v570 = vld [vmem:[#allocation5 + $0xd08] sm:$0xff]
    %v571 = vld [vmem:[#allocation5 + $0xd10] sm:$0xff]
    %v572 = vld [vmem:[#allocation5 + $0xd18] sm:$0xff]
    %v573 = vld [vmem:[#allocation5 + $0xd20] sm:$0xff]
    %v574 = vld [vmem:[#allocation5 + $0xd28] sm:$0xff]
    %v575 = vld [vmem:[#allocation5 + $0xd30] sm:$0xff]
    %v576 = vld [vmem:[#allocation5 + $0xd38] sm:$0xff]
    %v577 = vld [vmem:[#allocation5 + $0xd40] sm:$0xff]
    %v578 = vld [vmem:[#allocation5 + $0xd48] sm:$0xff]
    %v579 = vld [vmem:[#allocation5 + $0xd50] sm:$0xff]
    %v580 = vld [vmem:[#allocation5 + $0xd58] sm:$0xff]
    %v581 = vld [vmem:[#allocation5 + $0xd60] sm:$0xff]
    %v582 = vld [vmem:[#allocation5 + $0xd68] sm:$0xff]
    %v583 = vld [vmem:[#allocation5 + $0xd70] sm:$0xff]
    %v584 = vld [vmem:[#allocation5 + $0xd78] sm:$0xff]
    %v585 = vld [vmem:[#allocation5 + $0xd80] sm:$0xff]
    %v586 = vld [vmem:[#allocation5 + $0xd88] sm:$0xff]
    %v587 = vld [vmem:[#allocation5 + $0xd90] sm:$0xff]
    %v588 = vld [vmem:[#allocation5 + $0xd98] sm:$0xff]
    %v589 = vld [vmem:[#allocation5 + $0xda0] sm:$0xff]
    %v590 = vld [vmem:[#allocation5 + $0xda8] sm:$0xff]
    %v591 = vld [vmem:[#allocation5 + $0xdb0] sm:$0xff]
    %v592 = vld [vmem:[#allocation5 + $0xdb8] sm:$0xff]
    %v593 = vld [vmem:[#allocation5 + $0xdc0] sm:$0xff]
    %v594 = vld [vmem:[#allocation5 + $0xdc8] sm:$0xff]
    %v595 = vld [vmem:[#allocation5 + $0xdd0] sm:$0xff]
    %v596 = vld [vmem:[#allocation5 + $0xdd8] sm:$0xff]
    %v597 = vld [vmem:[#allocation5 + $0xde0] sm:$0xff]
    %v598 = vld [vmem:[#allocation5 + $0xde8] sm:$0xff]
    %v599 = vld [vmem:[#allocation5 + $0xdf0] sm:$0xff]
    %v600 = vld [vmem:[#allocation5 + $0xdf8] sm:$0xff]
    %v601 = vld [vmem:[#allocation5 + $0xe00] sm:$0xff]
    %v602 = vld [vmem:[#allocation5 + $0xe08] sm:$0xff]
    %v603 = vld [vmem:[#allocation5 + $0xe10] sm:$0xff]
    %v604 = vld [vmem:[#allocation5 + $0xe18] sm:$0xff]
    %v605 = vld [vmem:[#allocation5 + $0xe20] sm:$0xff]
    %v606 = vld [vmem:[#allocation5 + $0xe28] sm:$0xff]
    %v607 = vld [vmem:[#allocation5 + $0xe30] sm:$0xff]
    %v608 = vld [vmem:[#allocation5 + $0xe38] sm:$0xff]
    %v609 = vld [vmem:[#allocation5 + $0xe40] sm:$0xff]
    %v610 = vld [vmem:[#allocation5 + $0xe48] sm:$0xff]
    %v611 = vld [vmem:[#allocation5 + $0xe50] sm:$0xff]
    %v612 = vld [vmem:[#allocation5 + $0xe58] sm:$0xff]
    %v613 = vld [vmem:[#allocation5 + $0xe60] sm:$0xff]
    %v614 = vld [vmem:[#allocation5 + $0xe68] sm:$0xff]
    %v615 = vld [vmem:[#allocation5 + $0xe70] sm:$0xff]
    %v616 = vld [vmem:[#allocation5 + $0xe78] sm:$0xff]
    %v617 = vld [vmem:[#allocation5 + $0xe80] sm:$0xff]
    %v618 = vld [vmem:[#allocation5 + $0xe88] sm:$0xff]
    %v619 = vld [vmem:[#allocation5 + $0xe90] sm:$0xff]
    %v620 = vld [vmem:[#allocation5 + $0xe98] sm:$0xff]
    %v621 = vld [vmem:[#allocation5 + $0xea0] sm:$0xff]
    %v622 = vld [vmem:[#allocation5 + $0xea8] sm:$0xff]
    %v623 = vld [vmem:[#allocation5 + $0xeb0] sm:$0xff]
    %v624 = vld [vmem:[#allocation5 + $0xeb8] sm:$0xff]
    %v625 = vld [vmem:[#allocation5 + $0xec0] sm:$0xff]
    %v626 = vld [vmem:[#allocation5 + $0xec8] sm:$0xff]
    %v627 = vld [vmem:[#allocation5 + $0xed0] sm:$0xff]
    %v628 = vld [vmem:[#allocation5 + $0xed8] sm:$0xff]
    %v629 = vld [vmem:[#allocation5 + $0xee0] sm:$0xff]
    %v630 = vld [vmem:[#allocation5 + $0xee8] sm:$0xff]
    %v631 = vld [vmem:[#allocation5 + $0xef0] sm:$0xff]
    %v632 = vld [vmem:[#allocation5 + $0xef8] sm:$0xff]
    %v633 = vld [vmem:[#allocation5 + $0xf00] sm:$0xff]
    %v634 = vld [vmem:[#allocation5 + $0xf08] sm:$0xff]
    %v635 = vld [vmem:[#allocation5 + $0xf10] sm:$0xff]
    %v636 = vld [vmem:[#allocation5 + $0xf18] sm:$0xff]
    %v637 = vld [vmem:[#allocation5 + $0xf20] sm:$0xff]
    %v638 = vld [vmem:[#allocation5 + $0xf28] sm:$0xff]
    %v639 = vld [vmem:[#allocation5 + $0xf30] sm:$0xff]
    %v640 = vld [vmem:[#allocation5 + $0xf38] sm:$0xff]
    %v641 = vld [vmem:[#allocation5 + $0xf40] sm:$0xff]
    %v642 = vld [vmem:[#allocation5 + $0xf48] sm:$0xff]
    %v643 = vld [vmem:[#allocation5 + $0xf50] sm:$0xff]
    %v644 = vld [vmem:[#allocation5 + $0xf58] sm:$0xff]
    %v645 = vld [vmem:[#allocation5 + $0xf60] sm:$0xff]
    %v646 = vld [vmem:[#allocation5 + $0xf68] sm:$0xff]
    %v647 = vld [vmem:[#allocation5 + $0xf70] sm:$0xff]
    %v648 = vld [vmem:[#allocation5 + $0xf78] sm:$0xff]
    %v649 = vld [vmem:[#allocation5 + $0xf80] sm:$0xff]
    %v650 = vld [vmem:[#allocation5 + $0xf88] sm:$0xff]
    %v651 = vld [vmem:[#allocation5 + $0xf90] sm:$0xff]
    %v652 = vld [vmem:[#allocation5 + $0xf98] sm:$0xff]
    %v653 = vld [vmem:[#allocation5 + $0xfa0] sm:$0xff]
    %v654 = vld [vmem:[#allocation5 + $0xfa8] sm:$0xff]
    %v655 = vld [vmem:[#allocation5 + $0xfb0] sm:$0xff]
    %v656 = vld [vmem:[#allocation5 + $0xfb8] sm:$0xff]
    %v657 = vld [vmem:[#allocation5 + $0xfc0] sm:$0xff]
    %v658 = vld [vmem:[#allocation5 + $0xfc8] sm:$0xff]
    %v659 = vld [vmem:[#allocation5 + $0xfd0] sm:$0xff]
    %v660 = vld [vmem:[#allocation5 + $0xfd8] sm:$0xff]
    %v661 = vld [vmem:[#allocation5 + $0xfe0] sm:$0xff]
    %v662 = vld [vmem:[#allocation5 + $0xfe8] sm:$0xff]
    %v663 = vld [vmem:[#allocation5 + $0xff0] sm:$0xff]
    %v664 = vld [vmem:[#allocation5 + $0xff8] sm:$0xff]
    %v665 = vld [vmem:[#allocation5 + $0x1000] sm:$0xff]
    %v666 = vld [vmem:[#allocation5 + $0x1008] sm:$0xff]
    %v667 = vld [vmem:[#allocation5 + $0x1010] sm:$0xff]
    %v668 = vld [vmem:[#allocation5 + $0x1018] sm:$0xff]
    %v669 = vld [vmem:[#allocation5 + $0x1020] sm:$0xff]
    %v670 = vld [vmem:[#allocation5 + $0x1028] sm:$0xff]
    %v671 = vld [vmem:[#allocation5 + $0x1030] sm:$0xff]
    %v672 = vld [vmem:[#allocation5 + $0x1038] sm:$0xff]
    %v673 = vld [vmem:[#allocation5 + $0x1040] sm:$0xff]
    %v674 = vld [vmem:[#allocation5 + $0x1048] sm:$0xff]
    %v675 = vld [vmem:[#allocation5 + $0x1050] sm:$0xff]
    %v676 = vld [vmem:[#allocation5 + $0x1058] sm:$0xff]
    %v677 = vld [vmem:[#allocation5 + $0x1060] sm:$0xff]
    %v678 = vld [vmem:[#allocation5 + $0x1068] sm:$0xff]
    %v679 = vld [vmem:[#allocation5 + $0x1070] sm:$0xff]
    %v680 = vld [vmem:[#allocation5 + $0x1078] sm:$0xff]
    %v681 = vld [vmem:[#allocation5 + $0x1080] sm:$0xff]
    %v682 = vld [vmem:[#allocation5 + $0x1088] sm:$0xff]
    %v683 = vld [vmem:[#allocation5 + $0x1090] sm:$0xff]
    %v684 = vld [vmem:[#allocation5 + $0x1098] sm:$0xff]
    %v685 = vld [vmem:[#allocation5 + $0x10a0] sm:$0xff]
    %v686 = vld [vmem:[#allocation5 + $0x10a8] sm:$0xff]
    %v687 = vld [vmem:[#allocation5 + $0x10b0] sm:$0xff]
    %v688 = vld [vmem:[#allocation5 + $0x10b8] sm:$0xff]
    %v689 = vld [vmem:[#allocation5 + $0x10c0] sm:$0xff]
    %v690 = vld [vmem:[#allocation5 + $0x10c8] sm:$0xff]
    %v691 = vld [vmem:[#allocation5 + $0x10d0] sm:$0xff]
    %v692 = vld [vmem:[#allocation5 + $0x10d8] sm:$0xff]
    %v693 = vld [vmem:[#allocation5 + $0x10e0] sm:$0xff]
    %v694 = vld [vmem:[#allocation5 + $0x10e8] sm:$0xff]
    %v695 = vld [vmem:[#allocation5 + $0x10f0] sm:$0xff]
    %v696 = vld [vmem:[#allocation5 + $0x10f8] sm:$0xff]
    %v697 = vld [vmem:[#allocation5 + $0x1100] sm:$0xff]
    %v698 = vld [vmem:[#allocation5 + $0x1108] sm:$0xff]
    %v699 = vld [vmem:[#allocation5 + $0x1110] sm:$0xff]
    %v700 = vld [vmem:[#allocation5 + $0x1118] sm:$0xff]
    %v701 = vld [vmem:[#allocation5 + $0x1120] sm:$0xff]
    %v702 = vld [vmem:[#allocation5 + $0x1128] sm:$0xff]
    %v703 = vld [vmem:[#allocation5 + $0x1130] sm:$0xff]
    %v704 = vld [vmem:[#allocation5 + $0x1138] sm:$0xff]
    %v705 = vld [vmem:[#allocation5 + $0x1140] sm:$0xff]
    %v706 = vld [vmem:[#allocation5 + $0x1148] sm:$0xff]
    %v707 = vld [vmem:[#allocation5 + $0x1150] sm:$0xff]
    %v708 = vld [vmem:[#allocation5 + $0x1158] sm:$0xff]
    %v709 = vld [vmem:[#allocation5 + $0x1160] sm:$0xff]
    %v710 = vld [vmem:[#allocation5 + $0x1168] sm:$0xff]
    %v711 = vld [vmem:[#allocation5 + $0x1170] sm:$0xff]
    %v712 = vld [vmem:[#allocation5 + $0x1178] sm:$0xff]
    %v713 = vld [vmem:[#allocation5 + $0x1180] sm:$0xff]
    %v714 = vld [vmem:[#allocation5 + $0x1188] sm:$0xff]
    %v715 = vld [vmem:[#allocation5 + $0x1190] sm:$0xff]
    %v716 = vld [vmem:[#allocation5 + $0x1198] sm:$0xff]
    %v717 = vld [vmem:[#allocation5 + $0x11a0] sm:$0xff]
    %v718 = vld [vmem:[#allocation5 + $0x11a8] sm:$0xff]
    %v719 = vld [vmem:[#allocation5 + $0x11b0] sm:$0xff]
    %v720 = vld [vmem:[#allocation5 + $0x11b8] sm:$0xff]
    %v721 = vld [vmem:[#allocation5 + $0x11c0] sm:$0xff]
    %v722 = vld [vmem:[#allocation5 + $0x11c8] sm:$0xff]
    %v723 = vld [vmem:[#allocation5 + $0x11d0] sm:$0xff]
    %v724 = vld [vmem:[#allocation5 + $0x11d8] sm:$0xff]
    %v725 = vld [vmem:[#allocation5 + $0x11e0] sm:$0xff]
    %v726 = vld [vmem:[#allocation5 + $0x11e8] sm:$0xff]
    %v727 = vld [vmem:[#allocation5 + $0x11f0] sm:$0xff]
    %v728 = vld [vmem:[#allocation5 + $0x11f8] sm:$0xff]
    %v729 = vld [vmem:[#allocation5 + $0x1200] sm:$0xff]
    %v730 = vld [vmem:[#allocation5 + $0x1208] sm:$0xff]
    %v731 = vld [vmem:[#allocation5 + $0x1210] sm:$0xff]
    %v732 = vld [vmem:[#allocation5 + $0x1218] sm:$0xff]
    %v733 = vld [vmem:[#allocation5 + $0x1220] sm:$0xff]
    %v734 = vld [vmem:[#allocation5 + $0x1228] sm:$0xff]
    %v735 = vld [vmem:[#allocation5 + $0x1230] sm:$0xff]
    %v736 = vld [vmem:[#allocation5 + $0x1238] sm:$0xff]
    %v737 = vld [vmem:[#allocation5 + $0x1240] sm:$0xff]
    %v738 = vld [vmem:[#allocation5 + $0x1248] sm:$0xff]
    %v739 = vld [vmem:[#allocation5 + $0x1250] sm:$0xff]
    %v740 = vld [vmem:[#allocation5 + $0x1258] sm:$0xff]
    %v741 = vld [vmem:[#allocation5 + $0x1260] sm:$0xff]
    %v742 = vld [vmem:[#allocation5 + $0x1268] sm:$0xff]
    %v743 = vld [vmem:[#allocation5 + $0x1270] sm:$0xff]
    %v744 = vld [vmem:[#allocation5 + $0x1278] sm:$0xff]
    %v745 = vld [vmem:[#allocation5 + $0x1280] sm:$0xff]
    %v746 = vld [vmem:[#allocation5 + $0x1288] sm:$0xff]
    %v747 = vld [vmem:[#allocation5 + $0x1290] sm:$0xff]
    %v748 = vld [vmem:[#allocation5 + $0x1298] sm:$0xff]
    %v749 = vld [vmem:[#allocation5 + $0x12a0] sm:$0xff]
    %v750 = vld [vmem:[#allocation5 + $0x12a8] sm:$0xff]
    %v751 = vld [vmem:[#allocation5 + $0x12b0] sm:$0xff]
    %v752 = vld [vmem:[#allocation5 + $0x12b8] sm:$0xff]
    %v753 = vld [vmem:[#allocation5 + $0x12c0] sm:$0xff]
    %v754 = vld [vmem:[#allocation5 + $0x12c8] sm:$0xff]
    %v755 = vld [vmem:[#allocation5 + $0x12d0] sm:$0xff]
    %v756 = vld [vmem:[#allocation5 + $0x12d8] sm:$0xff]
    %v757 = vld [vmem:[#allocation5 + $0x12e0] sm:$0xff]
    %v758 = vld [vmem:[#allocation5 + $0x12e8] sm:$0xff]
    %v759 = vld [vmem:[#allocation5 + $0x12f0] sm:$0xff]
    %v760 = vld [vmem:[#allocation5 + $0x12f8] sm:$0xff]
    %v761 = vld [vmem:[#allocation5 + $0x1300] sm:$0xff]
    %v762 = vld [vmem:[#allocation5 + $0x1308] sm:$0xff]
    %v763 = vld [vmem:[#allocation5 + $0x1310] sm:$0xff]
    %v764 = vld [vmem:[#allocation5 + $0x1318] sm:$0xff]
    %v765 = vld [vmem:[#allocation5 + $0x1320] sm:$0xff]
    %v766 = vld [vmem:[#allocation5 + $0x1328] sm:$0xff]
    %v767 = vld [vmem:[#allocation5 + $0x1330] sm:$0xff]
    %v768 = vld [vmem:[#allocation5 + $0x1338] sm:$0xff]
    %v769 = vld [vmem:[#allocation5 + $0x1340] sm:$0xff]
    %v770 = vld [vmem:[#allocation5 + $0x1348] sm:$0xff]
    %v771 = vld [vmem:[#allocation5 + $0x1350] sm:$0xff]
    %v772 = vld [vmem:[#allocation5 + $0x1358] sm:$0xff]
    %v773 = vld [vmem:[#allocation5 + $0x1360] sm:$0xff]
    %v774 = vld [vmem:[#allocation5 + $0x1368] sm:$0xff]
    %v775 = vld [vmem:[#allocation5 + $0x1370] sm:$0xff]
    %v776 = vld [vmem:[#allocation5 + $0x1378] sm:$0xff]
    %v777 = vld [vmem:[#allocation5 + $0x1380] sm:$0xff]
    %v778 = vld [vmem:[#allocation5 + $0x1388] sm:$0xff]
    %v779 = vld [vmem:[#allocation5 + $0x1390] sm:$0xff]
    %v780 = vld [vmem:[#allocation5 + $0x1398] sm:$0xff]
    %v781 = vld [vmem:[#allocation5 + $0x13a0] sm:$0xff]
    %v782 = vld [vmem:[#allocation5 + $0x13a8] sm:$0xff]
    %v783 = vld [vmem:[#allocation5 + $0x13b0] sm:$0xff]
    %v784 = vld [vmem:[#allocation5 + $0x13b8] sm:$0xff]
    %v785 = vld [vmem:[#allocation5 + $0x13c0] sm:$0xff]
    %v786 = vld [vmem:[#allocation5 + $0x13c8] sm:$0xff]
    %v787 = vld [vmem:[#allocation5 + $0x13d0] sm:$0xff]
    %v788 = vld [vmem:[#allocation5 + $0x13d8] sm:$0xff]
    %v789 = vld [vmem:[#allocation5 + $0x13e0] sm:$0xff]
    %v790 = vld [vmem:[#allocation5 + $0x13e8] sm:$0xff]
    %v791 = vld [vmem:[#allocation5 + $0x13f0] sm:$0xff]
    %v792 = vld [vmem:[#allocation5 + $0x13f8] sm:$0xff]
    %v793 = vld [vmem:[#allocation5 + $0x1400] sm:$0xff]
    %v794 = vld [vmem:[#allocation5 + $0x1408] sm:$0xff]
    %v795 = vld [vmem:[#allocation5 + $0x1410] sm:$0xff]
    %v796 = vld [vmem:[#allocation5 + $0x1418] sm:$0xff]
    %v797 = vld [vmem:[#allocation5 + $0x1420] sm:$0xff]
    %v798 = vld [vmem:[#allocation5 + $0x1428] sm:$0xff]
    %v799 = vld [vmem:[#allocation5 + $0x1430] sm:$0xff]
    %v800 = vld [vmem:[#allocation5 + $0x1438] sm:$0xff]
    %v801 = vld [vmem:[#allocation5 + $0x1440] sm:$0xff]
    %v802 = vld [vmem:[#allocation5 + $0x1448] sm:$0xff]
    %v803 = vld [vmem:[#allocation5 + $0x1450] sm:$0xff]
    %v804 = vld [vmem:[#allocation5 + $0x1458] sm:$0xff]
    %v805 = vld [vmem:[#allocation5 + $0x1460] sm:$0xff]
    %v806 = vld [vmem:[#allocation5 + $0x1468] sm:$0xff]
    %v807 = vld [vmem:[#allocation5 + $0x1470] sm:$0xff]
    %v808 = vld [vmem:[#allocation5 + $0x1478] sm:$0xff]
    %v809 = vld [vmem:[#allocation5 + $0x1480] sm:$0xff]
    %v810 = vld [vmem:[#allocation5 + $0x1488] sm:$0xff]
    %v811 = vld [vmem:[#allocation5 + $0x1490] sm:$0xff]
    %v812 = vld [vmem:[#allocation5 + $0x1498] sm:$0xff]
    %v813 = vld [vmem:[#allocation5 + $0x14a0] sm:$0xff]
    %v814 = vld [vmem:[#allocation5 + $0x14a8] sm:$0xff]
    %v815 = vld [vmem:[#allocation5 + $0x14b0] sm:$0xff]
    %v816 = vld [vmem:[#allocation5 + $0x14b8] sm:$0xff]
    %v817 = vld [vmem:[#allocation5 + $0x14c0] sm:$0xff]
    %v818 = vld [vmem:[#allocation5 + $0x14c8] sm:$0xff]
    %v819 = vld [vmem:[#allocation5 + $0x14d0] sm:$0xff]
    %v820 = vld [vmem:[#allocation5 + $0x14d8] sm:$0xff]
    %v821 = vld [vmem:[#allocation5 + $0x14e0] sm:$0xff]
    %v822 = vld [vmem:[#allocation5 + $0x14e8] sm:$0xff]
    %v823 = vld [vmem:[#allocation5 + $0x14f0] sm:$0xff]
    %v824 = vld [vmem:[#allocation5 + $0x14f8] sm:$0xff]
    %v825 = vld [vmem:[#allocation5 + $0x1500] sm:$0xff]
    %v826 = vld [vmem:[#allocation5 + $0x1508] sm:$0xff]
    %v827 = vld [vmem:[#allocation5 + $0x1510] sm:$0xff]
    %v828 = vld [vmem:[#allocation5 + $0x1518] sm:$0xff]
    %v829 = vld [vmem:[#allocation5 + $0x1520] sm:$0xff]
    %v830 = vld [vmem:[#allocation5 + $0x1528] sm:$0xff]
    %v831 = vld [vmem:[#allocation5 + $0x1530] sm:$0xff]
    %v832 = vld [vmem:[#allocation5 + $0x1538] sm:$0xff]
    %v833 = vld [vmem:[#allocation5 + $0x1540] sm:$0xff]
    %v834 = vld [vmem:[#allocation5 + $0x1548] sm:$0xff]
    %v835 = vld [vmem:[#allocation5 + $0x1550] sm:$0xff]
    %v836 = vld [vmem:[#allocation5 + $0x1558] sm:$0xff]
    %v837 = vld [vmem:[#allocation5 + $0x1560] sm:$0xff]
    %v838 = vld [vmem:[#allocation5 + $0x1568] sm:$0xff]
    %v839 = vld [vmem:[#allocation5 + $0x1570] sm:$0xff]
    %v840 = vld [vmem:[#allocation5 + $0x1578] sm:$0xff]
    %v841 = vld [vmem:[#allocation5 + $0x1580] sm:$0xff]
    %v842 = vld [vmem:[#allocation5 + $0x1588] sm:$0xff]
    %v843 = vld [vmem:[#allocation5 + $0x1590] sm:$0xff]
    %v844 = vld [vmem:[#allocation5 + $0x1598] sm:$0xff]
    %v845 = vld [vmem:[#allocation5 + $0x15a0] sm:$0xff]
    %v846 = vld [vmem:[#allocation5 + $0x15a8] sm:$0xff]
    %v847 = vld [vmem:[#allocation5 + $0x15b0] sm:$0xff]
    %v848 = vld [vmem:[#allocation5 + $0x15b8] sm:$0xff]
    %v849 = vld [vmem:[#allocation5 + $0x15c0] sm:$0xff]
    %v850 = vld [vmem:[#allocation5 + $0x15c8] sm:$0xff]
    %v851 = vld [vmem:[#allocation5 + $0x15d0] sm:$0xff]
    %v852 = vld [vmem:[#allocation5 + $0x15d8] sm:$0xff]
    %v853 = vld [vmem:[#allocation5 + $0x15e0] sm:$0xff]
    %v854 = vld [vmem:[#allocation5 + $0x15e8] sm:$0xff]
    %v855 = vld [vmem:[#allocation5 + $0x15f0] sm:$0xff]
    %v856 = vld [vmem:[#allocation5 + $0x15f8] sm:$0xff]
    %v857 = vld [vmem:[#allocation5 + $0x1600] sm:$0xff]
    %v858 = vld [vmem:[#allocation5 + $0x1608] sm:$0xff]
    %v859 = vld [vmem:[#allocation5 + $0x1610] sm:$0xff]
    %v860 = vld [vmem:[#allocation5 + $0x1618] sm:$0xff]
    %v861 = vld [vmem:[#allocation5 + $0x1620] sm:$0xff]
    %v862 = vld [vmem:[#allocation5 + $0x1628] sm:$0xff]
    %v863 = vld [vmem:[#allocation5 + $0x1630] sm:$0xff]
    %v864 = vld [vmem:[#allocation5 + $0x1638] sm:$0xff]
    %v865 = vld [vmem:[#allocation5 + $0x1640] sm:$0xff]
    %v866 = vld [vmem:[#allocation5 + $0x1648] sm:$0xff]
    %v867 = vld [vmem:[#allocation5 + $0x1650] sm:$0xff]
    %v868 = vld [vmem:[#allocation5 + $0x1658] sm:$0xff]
    %v869 = vld [vmem:[#allocation5 + $0x1660] sm:$0xff]
    %v870 = vld [vmem:[#allocation5 + $0x1668] sm:$0xff]
    %v871 = vld [vmem:[#allocation5 + $0x1670] sm:$0xff]
    %v872 = vld [vmem:[#allocation5 + $0x1678] sm:$0xff]
    %v873 = vld [vmem:[#allocation5 + $0x1680] sm:$0xff]
    %v874 = vld [vmem:[#allocation5 + $0x1688] sm:$0xff]
    %v875 = vld [vmem:[#allocation5 + $0x1690] sm:$0xff]
    %v876 = vld [vmem:[#allocation5 + $0x1698] sm:$0xff]
    %v877 = vld [vmem:[#allocation5 + $0x16a0] sm:$0xff]
    %v878 = vld [vmem:[#allocation5 + $0x16a8] sm:$0xff]
    %v879 = vld [vmem:[#allocation5 + $0x16b0] sm:$0xff]
    %v880 = vld [vmem:[#allocation5 + $0x16b8] sm:$0xff]
    %v881 = vld [vmem:[#allocation5 + $0x16c0] sm:$0xff]
    %v882 = vld [vmem:[#allocation5 + $0x16c8] sm:$0xff]
    %v883 = vld [vmem:[#allocation5 + $0x16d0] sm:$0xff]
    %v884 = vld [vmem:[#allocation5 + $0x16d8] sm:$0xff]
    %v885 = vld [vmem:[#allocation5 + $0x16e0] sm:$0xff]
    %v886 = vld [vmem:[#allocation5 + $0x16e8] sm:$0xff]
    %v887 = vld [vmem:[#allocation5 + $0x16f0] sm:$0xff]
    %v888 = vld [vmem:[#allocation5 + $0x16f8] sm:$0xff]
    %v889 = vld [vmem:[#allocation5 + $0x1700] sm:$0xff]
    %v890 = vld [vmem:[#allocation5 + $0x1708] sm:$0xff]
    %v891 = vld [vmem:[#allocation5 + $0x1710] sm:$0xff]
    %v892 = vld [vmem:[#allocation5 + $0x1718] sm:$0xff]
    %v893 = vld [vmem:[#allocation5 + $0x1720] sm:$0xff]
    %v894 = vld [vmem:[#allocation5 + $0x1728] sm:$0xff]
    %v895 = vld [vmem:[#allocation5 + $0x1730] sm:$0xff]
    %v896 = vld [vmem:[#allocation5 + $0x1738] sm:$0xff]
    %v897 = vld [vmem:[#allocation5 + $0x1740] sm:$0xff]
    %v898 = vld [vmem:[#allocation5 + $0x1748] sm:$0xff]
    %v899 = vld [vmem:[#allocation5 + $0x1750] sm:$0xff]
    %v900 = vld [vmem:[#allocation5 + $0x1758] sm:$0xff]
    %v901 = vld [vmem:[#allocation5 + $0x1760] sm:$0xff]
    %v902 = vld [vmem:[#allocation5 + $0x1768] sm:$0xff]
    %v903 = vld [vmem:[#allocation5 + $0x1770] sm:$0xff]
    %v904 = vld [vmem:[#allocation5 + $0x1778] sm:$0xff]
    %v905 = vld [vmem:[#allocation5 + $0x1780] sm:$0xff]
    %v906 = vld [vmem:[#allocation5 + $0x1788] sm:$0xff]
    %v907 = vld [vmem:[#allocation5 + $0x1790] sm:$0xff]
    %v908 = vld [vmem:[#allocation5 + $0x1798] sm:$0xff]
    %v909 = vld [vmem:[#allocation5 + $0x17a0] sm:$0xff]
    %v910 = vld [vmem:[#allocation5 + $0x17a8] sm:$0xff]
    %v911 = vld [vmem:[#allocation5 + $0x17b0] sm:$0xff]
    %v912 = vld [vmem:[#allocation5 + $0x17b8] sm:$0xff]
    %v913 = vld [vmem:[#allocation5 + $0x17c0] sm:$0xff]
    %v914 = vld [vmem:[#allocation5 + $0x17c8] sm:$0xff]
    %v915 = vld [vmem:[#allocation5 + $0x17d0] sm:$0xff]
    %v916 = vld [vmem:[#allocation5 + $0x17d8] sm:$0xff]
    %v917 = vld [vmem:[#allocation5 + $0x17e0] sm:$0xff]
    %v918 = vld [vmem:[#allocation5 + $0x17e8] sm:$0xff]
    %v919 = vld [vmem:[#allocation5 + $0x17f0] sm:$0xff]
    %v920 = vld [vmem:[#allocation5 + $0x17f8] sm:$0xff]
    %v921 = vld [vmem:[#allocation5 + $0x1800] sm:$0xff]
    %v922 = vld [vmem:[#allocation5 + $0x1808] sm:$0xff]
    %v923 = vld [vmem:[#allocation5 + $0x1810] sm:$0xff]
    %v924 = vld [vmem:[#allocation5 + $0x1818] sm:$0xff]
    %v925 = vld [vmem:[#allocation5 + $0x1820] sm:$0xff]
    %v926 = vld [vmem:[#allocation5 + $0x1828] sm:$0xff]
    %v927 = vld [vmem:[#allocation5 + $0x1830] sm:$0xff]
    %v928 = vld [vmem:[#allocation5 + $0x1838] sm:$0xff]
    %v929 = vld [vmem:[#allocation5 + $0x1840] sm:$0xff]
    %v930 = vld [vmem:[#allocation5 + $0x1848] sm:$0xff]
    %v931 = vld [vmem:[#allocation5 + $0x1850] sm:$0xff]
    %v932 = vld [vmem:[#allocation5 + $0x1858] sm:$0xff]
    %v933 = vld [vmem:[#allocation5 + $0x1860] sm:$0xff]
    %v934 = vld [vmem:[#allocation5 + $0x1868] sm:$0xff]
    %v935 = vld [vmem:[#allocation5 + $0x1870] sm:$0xff]
    %v936 = vld [vmem:[#allocation5 + $0x1878] sm:$0xff]
    %v937 = vld [vmem:[#allocation5 + $0x1880] sm:$0xff]
    %v938 = vld [vmem:[#allocation5 + $0x1888] sm:$0xff]
    %v939 = vld [vmem:[#allocation5 + $0x1890] sm:$0xff]
    %v940 = vld [vmem:[#allocation5 + $0x1898] sm:$0xff]
    %v941 = vld [vmem:[#allocation5 + $0x18a0] sm:$0xff]
    %v942 = vld [vmem:[#allocation5 + $0x18a8] sm:$0xff]
    %v943 = vld [vmem:[#allocation5 + $0x18b0] sm:$0xff]
    %v944 = vld [vmem:[#allocation5 + $0x18b8] sm:$0xff]
    %v945 = vld [vmem:[#allocation5 + $0x18c0] sm:$0xff]
    %v946 = vld [vmem:[#allocation5 + $0x18c8] sm:$0xff]
    %v947 = vld [vmem:[#allocation5 + $0x18d0] sm:$0xff]
    %v948 = vld [vmem:[#allocation5 + $0x18d8] sm:$0xff]
    %v949 = vld [vmem:[#allocation5 + $0x18e0] sm:$0xff]
    %v950 = vld [vmem:[#allocation5 + $0x18e8] sm:$0xff]
    %v951 = vld [vmem:[#allocation5 + $0x18f0] sm:$0xff]
    %v952 = vld [vmem:[#allocation5 + $0x18f8] sm:$0xff]
    %v953 = vld [vmem:[#allocation5 + $0x1900] sm:$0xff]
    %v954 = vld [vmem:[#allocation5 + $0x1908] sm:$0xff]
    %v955 = vld [vmem:[#allocation5 + $0x1910] sm:$0xff]
    %v956 = vld [vmem:[#allocation5 + $0x1918] sm:$0xff]
    %v957 = vld [vmem:[#allocation5 + $0x1920] sm:$0xff]
    %v958 = vld [vmem:[#allocation5 + $0x1928] sm:$0xff]
    %v959 = vld [vmem:[#allocation5 + $0x1930] sm:$0xff]
    %v960 = vld [vmem:[#allocation5 + $0x1938] sm:$0xff]
    %v961 = vld [vmem:[#allocation5 + $0x1940] sm:$0xff]
    %v962 = vld [vmem:[#allocation5 + $0x1948] sm:$0xff]
    %v963 = vld [vmem:[#allocation5 + $0x1950] sm:$0xff]
    %v964 = vld [vmem:[#allocation5 + $0x1958] sm:$0xff]
    %v965 = vld [vmem:[#allocation5 + $0x1960] sm:$0xff]
    %v966 = vld [vmem:[#allocation5 + $0x1968] sm:$0xff]
    %v967 = vld [vmem:[#allocation5 + $0x1970] sm:$0xff]
    %v968 = vld [vmem:[#allocation5 + $0x1978] sm:$0xff]
    %v969 = vld [vmem:[#allocation5 + $0x1980] sm:$0xff]
    %v970 = vld [vmem:[#allocation5 + $0x1988] sm:$0xff]
    %v971 = vld [vmem:[#allocation5 + $0x1990] sm:$0xff]
    %v972 = vld [vmem:[#allocation5 + $0x1998] sm:$0xff]
    %v973 = vld [vmem:[#allocation5 + $0x19a0] sm:$0xff]
    %v974 = vld [vmem:[#allocation5 + $0x19a8] sm:$0xff]
    %v975 = vld [vmem:[#allocation5 + $0x19b0] sm:$0xff]
    %v976 = vld [vmem:[#allocation5 + $0x19b8] sm:$0xff]
    %v977 = vld [vmem:[#allocation5 + $0x19c0] sm:$0xff]
    %v978 = vld [vmem:[#allocation5 + $0x19c8] sm:$0xff]
    %v979 = vld [vmem:[#allocation5 + $0x19d0] sm:$0xff]
    %v980 = vld [vmem:[#allocation5 + $0x19d8] sm:$0xff]
    %v981 = vld [vmem:[#allocation5 + $0x19e0] sm:$0xff]
    %v982 = vld [vmem:[#allocation5 + $0x19e8] sm:$0xff]
    %v983 = vld [vmem:[#allocation5 + $0x19f0] sm:$0xff]
    %v984 = vld [vmem:[#allocation5 + $0x19f8] sm:$0xff]
    %v985 = vld [vmem:[#allocation5 + $0x1a00] sm:$0xff]
    %v986 = vld [vmem:[#allocation5 + $0x1a08] sm:$0xff]
    %v987 = vld [vmem:[#allocation5 + $0x1a10] sm:$0xff]
    %v988 = vld [vmem:[#allocation5 + $0x1a18] sm:$0xff]
    %v989 = vld [vmem:[#allocation5 + $0x1a20] sm:$0xff]
    %v990 = vld [vmem:[#allocation5 + $0x1a28] sm:$0xff]
    %v991 = vld [vmem:[#allocation5 + $0x1a30] sm:$0xff]
    %v992 = vld [vmem:[#allocation5 + $0x1a38] sm:$0xff]
    %v993 = vld [vmem:[#allocation5 + $0x1a40] sm:$0xff]
    %v994 = vld [vmem:[#allocation5 + $0x1a48] sm:$0xff]
    %v995 = vld [vmem:[#allocation5 + $0x1a50] sm:$0xff]
    %v996 = vld [vmem:[#allocation5 + $0x1a58] sm:$0xff]
    %v997 = vld [vmem:[#allocation5 + $0x1a60] sm:$0xff]
    %v998 = vld [vmem:[#allocation5 + $0x1a68] sm:$0xff]
    %v999 = vld [vmem:[#allocation5 + $0x1a70] sm:$0xff]
    %v1000 = vld [vmem:[#allocation5 + $0x1a78] sm:$0xff]
    %v1001 = vld [vmem:[#allocation5 + $0x1a80] sm:$0xff]
    %v1002 = vld [vmem:[#allocation5 + $0x1a88] sm:$0xff]
    %v1003 = vld [vmem:[#allocation5 + $0x1a90] sm:$0xff]
    %v1004 = vld [vmem:[#allocation5 + $0x1a98] sm:$0xff]
    %v1005 = vld [vmem:[#allocation5 + $0x1aa0] sm:$0xff]
    %v1006 = vld [vmem:[#allocation5 + $0x1aa8] sm:$0xff]
    %v1007 = vld [vmem:[#allocation5 + $0x1ab0] sm:$0xff]
    %v1008 = vld [vmem:[#allocation5 + $0x1ab8] sm:$0xff]
    %v1009 = vld [vmem:[#allocation5 + $0x1ac0] sm:$0xff]
    %v1010 = vld [vmem:[#allocation5 + $0x1ac8] sm:$0xff]
    %v1011 = vld [vmem:[#allocation5 + $0x1ad0] sm:$0xff]
    %v1012 = vld [vmem:[#allocation5 + $0x1ad8] sm:$0xff]
    %v1013 = vld [vmem:[#allocation5 + $0x1ae0] sm:$0xff]
    %v1014 = vld [vmem:[#allocation5 + $0x1ae8] sm:$0xff]
    %v1015 = vld [vmem:[#allocation5 + $0x1af0] sm:$0xff]
    %v1016 = vld [vmem:[#allocation5 + $0x1af8] sm:$0xff]
    %v1017 = vld [vmem:[#allocation5 + $0x1b00] sm:$0xff]
    %v1018 = vld [vmem:[#allocation5 + $0x1b08] sm:$0xff]
    %v1019 = vld [vmem:[#allocation5 + $0x1b10] sm:$0xff]
    %v1020 = vld [vmem:[#allocation5 + $0x1b18] sm:$0xff]
    %v1021 = vld [vmem:[#allocation5 + $0x1b20] sm:$0xff]
    %v1022 = vld [vmem:[#allocation5 + $0x1b28] sm:$0xff]
    %v1023 = vld [vmem:[#allocation5 + $0x1b30] sm:$0xff]
    %v1024 = vld [vmem:[#allocation5 + $0x1b38] sm:$0xff]
    %v1025 = vld [vmem:[#allocation5 + $0x1b40] sm:$0xff]
    %v1026 = vld [vmem:[#allocation5 + $0x1b48] sm:$0xff]
    %v1027 = vld [vmem:[#allocation5 + $0x1b50] sm:$0xff]
    %v1028 = vld [vmem:[#allocation5 + $0x1b58] sm:$0xff]
    %v1029 = vld [vmem:[#allocation5 + $0x1b60] sm:$0xff]
    %v1030 = vld [vmem:[#allocation5 + $0x1b68] sm:$0xff]
    %v1031 = vld [vmem:[#allocation5 + $0x1b70] sm:$0xff]
    %v1032 = vld [vmem:[#allocation5 + $0x1b78] sm:$0xff]
    %v1033 = vld [vmem:[#allocation5 + $0x1b80] sm:$0xff]
    %v1034 = vld [vmem:[#allocation5 + $0x1b88] sm:$0xff]
    %v1035 = vld [vmem:[#allocation5 + $0x1b90] sm:$0xff]
    %v1036 = vld [vmem:[#allocation5 + $0x1b98] sm:$0xff]
    %v1037 = vld [vmem:[#allocation5 + $0x1ba0] sm:$0xff]
    %v1038 = vld [vmem:[#allocation5 + $0x1ba8] sm:$0xff]
    %v1039 = vld [vmem:[#allocation5 + $0x1bb0] sm:$0xff]
    %v1040 = vld [vmem:[#allocation5 + $0x1bb8] sm:$0xff]
    %v1041 = vld [vmem:[#allocation5 + $0x1bc0] sm:$0xff]
    %v1042 = vld [vmem:[#allocation5 + $0x1bc8] sm:$0xff]
    %v1043 = vld [vmem:[#allocation5 + $0x1bd0] sm:$0xff]
    %v1044 = vld [vmem:[#allocation5 + $0x1bd8] sm:$0xff]
    %v1045 = vld [vmem:[#allocation5 + $0x1be0] sm:$0xff]
    %v1046 = vld [vmem:[#allocation5 + $0x1be8] sm:$0xff]
    %v1047 = vld [vmem:[#allocation5 + $0x1bf0] sm:$0xff]
    %v1048 = vld [vmem:[#allocation5 + $0x1bf8] sm:$0xff]
    %v1049 = vld [vmem:[#allocation5 + $0x1c00] sm:$0xff]
    %v1050 = vld [vmem:[#allocation5 + $0x1c08] sm:$0xff]
    %v1051 = vld [vmem:[#allocation5 + $0x1c10] sm:$0xff]
    %v1052 = vld [vmem:[#allocation5 + $0x1c18] sm:$0xff]
    %v1053 = vld [vmem:[#allocation5 + $0x1c20] sm:$0xff]
    %v1054 = vld [vmem:[#allocation5 + $0x1c28] sm:$0xff]
    %v1055 = vld [vmem:[#allocation5 + $0x1c30] sm:$0xff]
    %v1056 = vld [vmem:[#allocation5 + $0x1c38] sm:$0xff]
    %v1057 = vld [vmem:[#allocation5 + $0x1c40] sm:$0xff]
    %v1058 = vld [vmem:[#allocation5 + $0x1c48] sm:$0xff]
    %v1059 = vld [vmem:[#allocation5 + $0x1c50] sm:$0xff]
    %v1060 = vld [vmem:[#allocation5 + $0x1c58] sm:$0xff]
    %v1061 = vld [vmem:[#allocation5 + $0x1c60] sm:$0xff]
    %v1062 = vld [vmem:[#allocation5 + $0x1c68] sm:$0xff]
    %v1063 = vld [vmem:[#allocation5 + $0x1c70] sm:$0xff]
    %v1064 = vld [vmem:[#allocation5 + $0x1c78] sm:$0xff]
    %v1065 = vld [vmem:[#allocation5 + $0x1c80] sm:$0xff]
    %v1066 = vld [vmem:[#allocation5 + $0x1c88] sm:$0xff]
    %v1067 = vld [vmem:[#allocation5 + $0x1c90] sm:$0xff]
    %v1068 = vld [vmem:[#allocation5 + $0x1c98] sm:$0xff]
    %v1069 = vld [vmem:[#allocation5 + $0x1ca0] sm:$0xff]
    %v1070 = vld [vmem:[#allocation5 + $0x1ca8] sm:$0xff]
    %v1071 = vld [vmem:[#allocation5 + $0x1cb0] sm:$0xff]
    %v1072 = vld [vmem:[#allocation5 + $0x1cb8] sm:$0xff]
    %v1073 = vld [vmem:[#allocation5 + $0x1cc0] sm:$0xff]
    %v1074 = vld [vmem:[#allocation5 + $0x1cc8] sm:$0xff]
    %v1075 = vld [vmem:[#allocation5 + $0x1cd0] sm:$0xff]
    %v1076 = vld [vmem:[#allocation5 + $0x1cd8] sm:$0xff]
    %v1077 = vld [vmem:[#allocation5 + $0x1ce0] sm:$0xff]
    %v1078 = vld [vmem:[#allocation5 + $0x1ce8] sm:$0xff]
    %v1079 = vld [vmem:[#allocation5 + $0x1cf0] sm:$0xff]
    %v1080 = vld [vmem:[#allocation5 + $0x1cf8] sm:$0xff]
    %v1081 = vld [vmem:[#allocation5 + $0x1d00] sm:$0xff]
    %v1082 = vld [vmem:[#allocation5 + $0x1d08] sm:$0xff]
    %v1083 = vld [vmem:[#allocation5 + $0x1d10] sm:$0xff]
    %v1084 = vld [vmem:[#allocation5 + $0x1d18] sm:$0xff]
    %v1085 = vld [vmem:[#allocation5 + $0x1d20] sm:$0xff]
    %v1086 = vld [vmem:[#allocation5 + $0x1d28] sm:$0xff]
    %v1087 = vld [vmem:[#allocation5 + $0x1d30] sm:$0xff]
    %v1088 = vld [vmem:[#allocation5 + $0x1d38] sm:$0xff]
    %v1089 = vld [vmem:[#allocation5 + $0x1d40] sm:$0xff]
    %v1090 = vld [vmem:[#allocation5 + $0x1d48] sm:$0xff]
    %v1091 = vld [vmem:[#allocation5 + $0x1d50] sm:$0xff]
    %v1092 = vld [vmem:[#allocation5 + $0x1d58] sm:$0xff]
    %v1093 = vld [vmem:[#allocation5 + $0x1d60] sm:$0xff]
    %v1094 = vld [vmem:[#allocation5 + $0x1d68] sm:$0xff]
    %v1095 = vld [vmem:[#allocation5 + $0x1d70] sm:$0xff]
    %v1096 = vld [vmem:[#allocation5 + $0x1d78] sm:$0xff]
    %v1097 = vld [vmem:[#allocation5 + $0x1d80] sm:$0xff]
    %v1098 = vld [vmem:[#allocation5 + $0x1d88] sm:$0xff]
    %v1099 = vld [vmem:[#allocation5 + $0x1d90] sm:$0xff]
    %v1100 = vld [vmem:[#allocation5 + $0x1d98] sm:$0xff]
    %v1101 = vld [vmem:[#allocation5 + $0x1da0] sm:$0xff]
    %v1102 = vld [vmem:[#allocation5 + $0x1da8] sm:$0xff]
    %v1103 = vld [vmem:[#allocation5 + $0x1db0] sm:$0xff]
    %v1104 = vld [vmem:[#allocation5 + $0x1db8] sm:$0xff]
    %v1105 = vld [vmem:[#allocation5 + $0x1dc0] sm:$0xff]
    %v1106 = vld [vmem:[#allocation5 + $0x1dc8] sm:$0xff]
    %v1107 = vld [vmem:[#allocation5 + $0x1dd0] sm:$0xff]
    %v1108 = vld [vmem:[#allocation5 + $0x1dd8] sm:$0xff]
    %v1109 = vld [vmem:[#allocation5 + $0x1de0] sm:$0xff]
    %v1110 = vld [vmem:[#allocation5 + $0x1de8] sm:$0xff]
    %v1111 = vld [vmem:[#allocation5 + $0x1df0] sm:$0xff]
    %v1112 = vld [vmem:[#allocation5 + $0x1df8] sm:$0xff]
    %v1113 = vld [vmem:[#allocation5 + $0x1e00] sm:$0xff]
    %v1114 = vld [vmem:[#allocation5 + $0x1e08] sm:$0xff]
    %v1115 = vld [vmem:[#allocation5 + $0x1e10] sm:$0xff]
    %v1116 = vld [vmem:[#allocation5 + $0x1e18] sm:$0xff]
    %v1117 = vld [vmem:[#allocation5 + $0x1e20] sm:$0xff]
    %v1118 = vld [vmem:[#allocation5 + $0x1e28] sm:$0xff]
    %v1119 = vld [vmem:[#allocation5 + $0x1e30] sm:$0xff]
    %v1120 = vld [vmem:[#allocation5 + $0x1e38] sm:$0xff]
    %v1121 = vld [vmem:[#allocation5 + $0x1e40] sm:$0xff]
    %v1122 = vld [vmem:[#allocation5 + $0x1e48] sm:$0xff]
    %v1123 = vld [vmem:[#allocation5 + $0x1e50] sm:$0xff]
    %v1124 = vld [vmem:[#allocation5 + $0x1e58] sm:$0xff]
    %v1125 = vld [vmem:[#allocation5 + $0x1e60] sm:$0xff]
    %v1126 = vld [vmem:[#allocation5 + $0x1e68] sm:$0xff]
    %v1127 = vld [vmem:[#allocation5 + $0x1e70] sm:$0xff]
    %v1128 = vld [vmem:[#allocation5 + $0x1e78] sm:$0xff]
    %v1129 = vld [vmem:[#allocation5 + $0x1e80] sm:$0xff]
    %v1130 = vld [vmem:[#allocation5 + $0x1e88] sm:$0xff]
    %v1131 = vld [vmem:[#allocation5 + $0x1e90] sm:$0xff]
    %v1132 = vld [vmem:[#allocation5 + $0x1e98] sm:$0xff]
    %v1133 = vld [vmem:[#allocation5 + $0x1ea0] sm:$0xff]
    %v1134 = vld [vmem:[#allocation5 + $0x1ea8] sm:$0xff]
    %v1135 = vld [vmem:[#allocation5 + $0x1eb0] sm:$0xff]
    %v1136 = vld [vmem:[#allocation5 + $0x1eb8] sm:$0xff]
    %v1137 = vld [vmem:[#allocation5 + $0x1ec0] sm:$0xff]
    %v1138 = vld [vmem:[#allocation5 + $0x1ec8] sm:$0xff]
    %v1139 = vld [vmem:[#allocation5 + $0x1ed0] sm:$0xff]
    %v1140 = vld [vmem:[#allocation5 + $0x1ed8] sm:$0xff]
    %v1141 = vld [vmem:[#allocation5 + $0x1ee0] sm:$0xff]
    %v1142 = vld [vmem:[#allocation5 + $0x1ee8] sm:$0xff]
    %v1143 = vld [vmem:[#allocation5 + $0x1ef0] sm:$0xff]
    %v1144 = vld [vmem:[#allocation5 + $0x1ef8] sm:$0xff]
    %v1145 = vld [vmem:[#allocation7] sm:$0xff]
    %v2138 = vunpack.c.l.b16 %v153
    %v2139 = vunpack.c.h.b16 %v153
    %v2140 = vunpack.c.l.b16 %v154
    %v2141 = vunpack.c.h.b16 %v154
    %v2142 = vunpack.c.l.b16 %v155
    %v2143 = vunpack.c.h.b16 %v155
    %v2144 = vunpack.c.l.b16 %v156
    %v2145 = vunpack.c.h.b16 %v156
    %v2146 = vunpack.c.l.b16 %v157
    %v2147 = vunpack.c.h.b16 %v157
    %v2148 = vunpack.c.l.b16 %v158
    %v2149 = vunpack.c.h.b16 %v158
    %v2150 = vunpack.c.l.b16 %v159
    %v2151 = vunpack.c.h.b16 %v159
    %v2152 = vunpack.c.l.b16 %v160
    %v2153 = vunpack.c.h.b16 %v160
    %v2154 = vunpack.c.l.b16 %v161
    %v2155 = vunpack.c.h.b16 %v161
    %v2156 = vunpack.c.l.b16 %v162
    %v2157 = vunpack.c.h.b16 %v162
    %v2158 = vunpack.c.l.b16 %v163
    %v2159 = vunpack.c.h.b16 %v163
    %v2160 = vunpack.c.l.b16 %v164
    %v2161 = vunpack.c.h.b16 %v164
    %v2162 = vunpack.c.l.b16 %v165
    %v2163 = vunpack.c.h.b16 %v165
    %v2164 = vunpack.c.l.b16 %v166
    %v2165 = vunpack.c.h.b16 %v166
    %v2166 = vunpack.c.l.b16 %v167
    %v2167 = vunpack.c.h.b16 %v167
    %v2168 = vunpack.c.l.b16 %v168
    %v2169 = vunpack.c.h.b16 %v168
    %v2170 = vunpack.c.l.b16 %v169
    %v2171 = vunpack.c.h.b16 %v169
    %v2172 = vunpack.c.l.b16 %v170
    %v2173 = vunpack.c.h.b16 %v170
    %v2174 = vunpack.c.l.b16 %v171
    %v2175 = vunpack.c.h.b16 %v171
    %v2176 = vunpack.c.l.b16 %v172
    %v2177 = vunpack.c.h.b16 %v172
    %v2178 = vunpack.c.l.b16 %v173
    %v2179 = vunpack.c.h.b16 %v173
    %v2180 = vunpack.c.l.b16 %v174
    %v2181 = vunpack.c.h.b16 %v174
    %v2182 = vunpack.c.l.b16 %v175
    %v2183 = vunpack.c.h.b16 %v175
    %v2184 = vunpack.c.l.b16 %v176
    %v2185 = vunpack.c.h.b16 %v176
    %v2186 = vunpack.c.l.b16 %v177
    %v2187 = vunpack.c.h.b16 %v177
    %v2188 = vunpack.c.l.b16 %v178
    %v2189 = vunpack.c.h.b16 %v178
    %v2190 = vunpack.c.l.b16 %v179
    %v2191 = vunpack.c.h.b16 %v179
    %v2192 = vunpack.c.l.b16 %v180
    %v2193 = vunpack.c.h.b16 %v180
    %v2194 = vunpack.c.l.b16 %v181
    %v2195 = vunpack.c.h.b16 %v181
    %v2196 = vunpack.c.l.b16 %v182
    %v2197 = vunpack.c.h.b16 %v182
    %v2198 = vunpack.c.l.b16 %v183
    %v2199 = vunpack.c.h.b16 %v183
    %v2200 = vunpack.c.l.b16 %v184
    %v2201 = vunpack.c.h.b16 %v184
    %v2202 = vunpack.c.l.b16 %v185
    %v2203 = vunpack.c.h.b16 %v185
    %v2204 = vunpack.c.l.b16 %v186
    %v2205 = vunpack.c.h.b16 %v186
    %v2206 = vunpack.c.l.b16 %v187
    %v2207 = vunpack.c.h.b16 %v187
    %v2208 = vunpack.c.l.b16 %v188
    %v2209 = vunpack.c.h.b16 %v188
    %v2210 = vunpack.c.l.b16 %v189
    %v2211 = vunpack.c.h.b16 %v189
    %v2212 = vunpack.c.l.b16 %v190
    %v2213 = vunpack.c.h.b16 %v190
    %v2214 = vunpack.c.l.b16 %v191
    %v2215 = vunpack.c.h.b16 %v191
    %v2216 = vunpack.c.l.b16 %v192
    %v2217 = vunpack.c.h.b16 %v192
    %v2218 = vunpack.c.l.b16 %v193
    %v2219 = vunpack.c.h.b16 %v193
    %v2220 = vunpack.c.l.b16 %v194
    %v2221 = vunpack.c.h.b16 %v194
    %v2222 = vunpack.c.l.b16 %v195
    %v2223 = vunpack.c.h.b16 %v195
    %v2224 = vunpack.c.l.b16 %v196
    %v2225 = vunpack.c.h.b16 %v196
    %v2226 = vunpack.c.l.b16 %v197
    %v2227 = vunpack.c.h.b16 %v197
    %v2228 = vunpack.c.l.b16 %v198
    %v2229 = vunpack.c.h.b16 %v198
    %v2230 = vunpack.c.l.b16 %v199
    %v2231 = vunpack.c.h.b16 %v199
    %v2232 = vunpack.c.l.b16 %v200
    %v2233 = vunpack.c.h.b16 %v200
    %v2234 = vunpack.c.l.b16 %v201
    %v2235 = vunpack.c.h.b16 %v201
    %v2236 = vunpack.c.l.b16 %v202
    %v2237 = vunpack.c.h.b16 %v202
    %v2238 = vunpack.c.l.b16 %v203
    %v2239 = vunpack.c.h.b16 %v203
    %v2240 = vunpack.c.l.b16 %v204
    %v2241 = vunpack.c.h.b16 %v204
    %v2242 = vunpack.c.l.b16 %v205
    %v2243 = vunpack.c.h.b16 %v205
    %v2244 = vunpack.c.l.b16 %v206
    %v2245 = vunpack.c.h.b16 %v206
    %v2246 = vunpack.c.l.b16 %v207
    %v2247 = vunpack.c.h.b16 %v207
    %v2248 = vunpack.c.l.b16 %v208
    %v2249 = vunpack.c.h.b16 %v208
    %v2250 = vunpack.c.l.b16 %v209
    %v2251 = vunpack.c.h.b16 %v209
    %v2252 = vunpack.c.l.b16 %v210
    %v2253 = vunpack.c.h.b16 %v210
    %v2254 = vunpack.c.l.b16 %v211
    %v2255 = vunpack.c.h.b16 %v211
    %v2256 = vunpack.c.l.b16 %v212
    %v2257 = vunpack.c.h.b16 %v212
    %v2258 = vunpack.c.l.b16 %v213
    %v2259 = vunpack.c.h.b16 %v213
    %v2260 = vunpack.c.l.b16 %v214
    %v2261 = vunpack.c.h.b16 %v214
    %v2262 = vunpack.c.l.b16 %v215
    %v2263 = vunpack.c.h.b16 %v215
    %v2264 = vunpack.c.l.b16 %v216
    %v2265 = vunpack.c.h.b16 %v216
    %v2266 = vunpack.c.l.b16 %v217
    %v2267 = vunpack.c.h.b16 %v217
    %v2268 = vunpack.c.l.b16 %v218
    %v2269 = vunpack.c.h.b16 %v218
    %v2270 = vunpack.c.l.b16 %v219
    %v2271 = vunpack.c.h.b16 %v219
    %v2272 = vunpack.c.l.b16 %v220
    %v2273 = vunpack.c.h.b16 %v220
    %v2274 = vunpack.c.l.b16 %v221
    %v2275 = vunpack.c.h.b16 %v221
    %v2276 = vunpack.c.l.b16 %v222
    %v2277 = vunpack.c.h.b16 %v222
    %v2278 = vunpack.c.l.b16 %v223
    %v2279 = vunpack.c.h.b16 %v223
    %v2280 = vunpack.c.l.b16 %v224
    %v2281 = vunpack.c.h.b16 %v224
    %v2282 = vunpack.c.l.b16 %v225
    %v2283 = vunpack.c.h.b16 %v225
    %v2284 = vunpack.c.l.b16 %v226
    %v2285 = vunpack.c.h.b16 %v226
    %v2286 = vunpack.c.l.b16 %v227
    %v2287 = vunpack.c.h.b16 %v227
    %v2288 = vunpack.c.l.b16 %v228
    %v2289 = vunpack.c.h.b16 %v228
    %v2290 = vunpack.c.l.b16 %v229
    %v2291 = vunpack.c.h.b16 %v229
    %v2292 = vunpack.c.l.b16 %v230
    %v2293 = vunpack.c.h.b16 %v230
    %v2294 = vunpack.c.l.b16 %v231
    %v2295 = vunpack.c.h.b16 %v231
    %v2296 = vunpack.c.l.b16 %v232
    %v2297 = vunpack.c.h.b16 %v232
    %v2298 = vunpack.c.l.b16 %v233
    %v2299 = vunpack.c.h.b16 %v233
    %v2300 = vunpack.c.l.b16 %v234
    %v2301 = vunpack.c.h.b16 %v234
    %v2302 = vunpack.c.l.b16 %v235
    %v2303 = vunpack.c.h.b16 %v235
    %v2304 = vunpack.c.l.b16 %v236
    %v2305 = vunpack.c.h.b16 %v236
    %v2306 = vunpack.c.l.b16 %v237
    %v2307 = vunpack.c.h.b16 %v237
    %v2308 = vunpack.c.l.b16 %v238
    %v2309 = vunpack.c.h.b16 %v238
    %v2310 = vunpack.c.l.b16 %v239
    %v2311 = vunpack.c.h.b16 %v239
    %v2312 = vunpack.c.l.b16 %v240
    %v2313 = vunpack.c.h.b16 %v240
    %v2314 = vunpack.c.l.b16 %v241
    %v2315 = vunpack.c.h.b16 %v241
    %v2316 = vunpack.c.l.b16 %v242
    %v2317 = vunpack.c.h.b16 %v242
    %v2318 = vunpack.c.l.b16 %v243
    %v2319 = vunpack.c.h.b16 %v243
    %v2320 = vunpack.c.l.b16 %v244
    %v2321 = vunpack.c.h.b16 %v244
    %v2322 = vunpack.c.l.b16 %v245
    %v2323 = vunpack.c.h.b16 %v245
    %v2324 = vunpack.c.l.b16 %v246
    %v2325 = vunpack.c.h.b16 %v246
    %v2326 = vunpack.c.l.b16 %v247
    %v2327 = vunpack.c.h.b16 %v247
    %v2328 = vunpack.c.l.b16 %v248
    %v2329 = vunpack.c.h.b16 %v248
    %v2330 = vunpack.c.l.b16 %v249
    %v2331 = vunpack.c.h.b16 %v249
    %v2332 = vunpack.c.l.b16 %v250
    %v2333 = vunpack.c.h.b16 %v250
    %v2334 = vunpack.c.l.b16 %v251
    %v2335 = vunpack.c.h.b16 %v251
    %v2336 = vunpack.c.l.b16 %v252
    %v2337 = vunpack.c.h.b16 %v252
    %v2338 = vunpack.c.l.b16 %v253
    %v2339 = vunpack.c.h.b16 %v253
    %v2340 = vunpack.c.l.b16 %v254
    %v2341 = vunpack.c.h.b16 %v254
    %v2342 = vunpack.c.l.b16 %v255
    %v2343 = vunpack.c.h.b16 %v255
    %v2344 = vunpack.c.l.b16 %v256
    %v2345 = vunpack.c.h.b16 %v256
    %v2346 = vunpack.c.l.b16 %v257
    %v2347 = vunpack.c.h.b16 %v257
    %v2348 = vunpack.c.l.b16 %v258
    %v2349 = vunpack.c.h.b16 %v258
    %v2350 = vunpack.c.l.b16 %v259
    %v2351 = vunpack.c.h.b16 %v259
    %v2352 = vunpack.c.l.b16 %v260
    %v2353 = vunpack.c.h.b16 %v260
    %v2354 = vunpack.c.l.b16 %v261
    %v2355 = vunpack.c.h.b16 %v261
    %v2356 = vunpack.c.l.b16 %v262
    %v2357 = vunpack.c.h.b16 %v262
    %v2358 = vunpack.c.l.b16 %v263
    %v2359 = vunpack.c.h.b16 %v263
    %v2360 = vunpack.c.l.b16 %v264
    %v2361 = vunpack.c.h.b16 %v264
    %v2362 = vunpack.c.l.b16 %v265
    %v2363 = vunpack.c.h.b16 %v265
    %v2364 = vunpack.c.l.b16 %v266
    %v2365 = vunpack.c.h.b16 %v266
    %v2366 = vunpack.c.l.b16 %v267
    %v2367 = vunpack.c.h.b16 %v267
    %v2368 = vunpack.c.l.b16 %v268
    %v2369 = vunpack.c.h.b16 %v268
    %v2370 = vunpack.c.l.b16 %v269
    %v2371 = vunpack.c.h.b16 %v269
    %v2372 = vunpack.c.l.b16 %v270
    %v2373 = vunpack.c.h.b16 %v270
    %v2374 = vunpack.c.l.b16 %v271
    %v2375 = vunpack.c.h.b16 %v271
    %v2376 = vunpack.c.l.b16 %v272
    %v2377 = vunpack.c.h.b16 %v272
    %v2378 = vunpack.c.l.b16 %v273
    %v2379 = vunpack.c.h.b16 %v273
    %v2380 = vunpack.c.l.b16 %v274
    %v2381 = vunpack.c.h.b16 %v274
    %v2382 = vunpack.c.l.b16 %v275
    %v2383 = vunpack.c.h.b16 %v275
    %v2384 = vunpack.c.l.b16 %v276
    %v2385 = vunpack.c.h.b16 %v276
    %v2386 = vunpack.c.l.b16 %v277
    %v2387 = vunpack.c.h.b16 %v277
    %v2388 = vunpack.c.l.b16 %v278
    %v2389 = vunpack.c.h.b16 %v278
    %v2390 = vunpack.c.l.b16 %v279
    %v2391 = vunpack.c.h.b16 %v279
    %v2392 = vunpack.c.l.b16 %v280
    %v2393 = vunpack.c.h.b16 %v280
    %v2394 = vunpack.c.l.b16 %v281
    %v2395 = vunpack.c.h.b16 %v281
    %v2396 = vunpack.c.l.b16 %v282
    %v2397 = vunpack.c.h.b16 %v282
    %v2398 = vunpack.c.l.b16 %v283
    %v2399 = vunpack.c.h.b16 %v283
    %v2400 = vunpack.c.l.b16 %v284
    %v2401 = vunpack.c.h.b16 %v284
    %v2402 = vunpack.c.l.b16 %v285
    %v2403 = vunpack.c.h.b16 %v285
    %v2404 = vunpack.c.l.b16 %v286
    %v2405 = vunpack.c.h.b16 %v286
    %v2406 = vunpack.c.l.b16 %v287
    %v2407 = vunpack.c.h.b16 %v287
    %v2408 = vunpack.c.l.b16 %v288
    %v2409 = vunpack.c.h.b16 %v288
    %v2410 = vunpack.c.l.b16 %v289
    %v2411 = vunpack.c.h.b16 %v289
    %v2412 = vunpack.c.l.b16 %v290
    %v2413 = vunpack.c.h.b16 %v290
    %v2414 = vunpack.c.l.b16 %v291
    %v2415 = vunpack.c.h.b16 %v291
    %v2416 = vunpack.c.l.b16 %v292
    %v2417 = vunpack.c.h.b16 %v292
    %v2418 = vunpack.c.l.b16 %v293
    %v2419 = vunpack.c.h.b16 %v293
    %v2420 = vunpack.c.l.b16 %v294
    %v2421 = vunpack.c.h.b16 %v294
    %v2422 = vunpack.c.l.b16 %v295
    %v2423 = vunpack.c.h.b16 %v295
    %v2424 = vunpack.c.l.b16 %v296
    %v2425 = vunpack.c.h.b16 %v296
    %v2426 = vunpack.c.l.b16 %v297
    %v2427 = vunpack.c.h.b16 %v297
    %v2428 = vunpack.c.l.b16 %v298
    %v2429 = vunpack.c.h.b16 %v298
    %v2430 = vunpack.c.l.b16 %v299
    %v2431 = vunpack.c.h.b16 %v299
    %v2432 = vunpack.c.l.b16 %v300
    %v2433 = vunpack.c.h.b16 %v300
    %v2434 = vunpack.c.l.b16 %v301
    %v2435 = vunpack.c.h.b16 %v301
    %v2436 = vunpack.c.l.b16 %v302
    %v2437 = vunpack.c.h.b16 %v302
    %v2438 = vunpack.c.l.b16 %v303
    %v2439 = vunpack.c.h.b16 %v303
    %v2440 = vunpack.c.l.b16 %v304
    %v2441 = vunpack.c.h.b16 %v304
    %v2442 = vunpack.c.l.b16 %v305
    %v2443 = vunpack.c.h.b16 %v305
    %v2444 = vunpack.c.l.b16 %v306
    %v2445 = vunpack.c.h.b16 %v306
    %v2446 = vunpack.c.l.b16 %v307
    %v2447 = vunpack.c.h.b16 %v307
    %v2448 = vunpack.c.l.b16 %v308
    %v2449 = vunpack.c.h.b16 %v308
    %v2450 = vunpack.c.l.b16 %v309
    %v2451 = vunpack.c.h.b16 %v309
    %v2452 = vunpack.c.l.b16 %v310
    %v2453 = vunpack.c.h.b16 %v310
    %v2454 = vunpack.c.l.b16 %v311
    %v2455 = vunpack.c.h.b16 %v311
    %v2456 = vunpack.c.l.b16 %v312
    %v2457 = vunpack.c.h.b16 %v312
    %v2458 = vunpack.c.l.b16 %v313
    %v2459 = vunpack.c.h.b16 %v313
    %v2460 = vunpack.c.l.b16 %v314
    %v2461 = vunpack.c.h.b16 %v314
    %v2462 = vunpack.c.l.b16 %v315
    %v2463 = vunpack.c.h.b16 %v315
    %v2464 = vunpack.c.l.b16 %v316
    %v2465 = vunpack.c.h.b16 %v316
    %v2466 = vunpack.c.l.b16 %v317
    %v2467 = vunpack.c.h.b16 %v317
    %v2468 = vunpack.c.l.b16 %v318
    %v2469 = vunpack.c.h.b16 %v318
    %v2470 = vunpack.c.l.b16 %v319
    %v2471 = vunpack.c.h.b16 %v319
    %v2472 = vunpack.c.l.b16 %v320
    %v2473 = vunpack.c.h.b16 %v320
    %v2474 = vunpack.c.l.b16 %v321
    %v2475 = vunpack.c.h.b16 %v321
    %v2476 = vunpack.c.l.b16 %v322
    %v2477 = vunpack.c.h.b16 %v322
    %v2478 = vunpack.c.l.b16 %v323
    %v2479 = vunpack.c.h.b16 %v323
    %v2480 = vunpack.c.l.b16 %v324
    %v2481 = vunpack.c.h.b16 %v324
    %v2482 = vunpack.c.l.b16 %v325
    %v2483 = vunpack.c.h.b16 %v325
    %v2484 = vunpack.c.l.b16 %v326
    %v2485 = vunpack.c.h.b16 %v326
    %v2486 = vunpack.c.l.b16 %v327
    %v2487 = vunpack.c.h.b16 %v327
    %v2488 = vunpack.c.l.b16 %v328
    %v2489 = vunpack.c.h.b16 %v328
    %v2490 = vunpack.c.l.b16 %v329
    %v2491 = vunpack.c.h.b16 %v329
    %v2492 = vunpack.c.l.b16 %v330
    %v2493 = vunpack.c.h.b16 %v330
    %v2494 = vunpack.c.l.b16 %v331
    %v2495 = vunpack.c.h.b16 %v331
    %v2496 = vunpack.c.l.b16 %v332
    %v2497 = vunpack.c.h.b16 %v332
    %v2498 = vunpack.c.l.b16 %v333
    %v2499 = vunpack.c.h.b16 %v333
    %v2500 = vunpack.c.l.b16 %v334
    %v2501 = vunpack.c.h.b16 %v334
    %v2502 = vunpack.c.l.b16 %v335
    %v2503 = vunpack.c.h.b16 %v335
    %v2504 = vunpack.c.l.b16 %v336
    %v2505 = vunpack.c.h.b16 %v336
    %v2506 = vunpack.c.l.b16 %v337
    %v2507 = vunpack.c.h.b16 %v337
    %v2508 = vunpack.c.l.b16 %v338
    %v2509 = vunpack.c.h.b16 %v338
    %v2510 = vunpack.c.l.b16 %v339
    %v2511 = vunpack.c.h.b16 %v339
    %v2512 = vunpack.c.l.b16 %v340
    %v2513 = vunpack.c.h.b16 %v340
    %v2514 = vunpack.c.l.b16 %v341
    %v2515 = vunpack.c.h.b16 %v341
    %v2516 = vunpack.c.l.b16 %v342
    %v2517 = vunpack.c.h.b16 %v342
    %v2518 = vunpack.c.l.b16 %v343
    %v2519 = vunpack.c.h.b16 %v343
    %v2520 = vunpack.c.l.b16 %v344
    %v2521 = vunpack.c.h.b16 %v344
    %v2522 = vunpack.c.l.b16 %v345
    %v2523 = vunpack.c.h.b16 %v345
    %v2524 = vunpack.c.l.b16 %v346
    %v2525 = vunpack.c.h.b16 %v346
    %v2526 = vunpack.c.l.b16 %v347
    %v2527 = vunpack.c.h.b16 %v347
    %v2528 = vunpack.c.l.b16 %v348
    %v2529 = vunpack.c.h.b16 %v348
    %v2530 = vunpack.c.l.b16 %v349
    %v2531 = vunpack.c.h.b16 %v349
    %v2532 = vunpack.c.l.b16 %v350
    %v2533 = vunpack.c.h.b16 %v350
    %v2534 = vunpack.c.l.b16 %v351
    %v2535 = vunpack.c.h.b16 %v351
    %v2536 = vunpack.c.l.b16 %v352
    %v2537 = vunpack.c.h.b16 %v352
    %v2538 = vunpack.c.l.b16 %v353
    %v2539 = vunpack.c.h.b16 %v353
    %v2540 = vunpack.c.l.b16 %v354
    %v2541 = vunpack.c.h.b16 %v354
    %v2542 = vunpack.c.l.b16 %v355
    %v2543 = vunpack.c.h.b16 %v355
    %v2544 = vunpack.c.l.b16 %v356
    %v2545 = vunpack.c.h.b16 %v356
    %v2546 = vunpack.c.l.b16 %v357
    %v2547 = vunpack.c.h.b16 %v357
    %v2548 = vunpack.c.l.b16 %v358
    %v2549 = vunpack.c.h.b16 %v358
    %v2550 = vunpack.c.l.b16 %v359
    %v2551 = vunpack.c.h.b16 %v359
    %v2552 = vunpack.c.l.b16 %v360
    %v2553 = vunpack.c.h.b16 %v360
    %v2554 = vunpack.c.l.b16 %v361
    %v2555 = vunpack.c.h.b16 %v361
    %v2556 = vunpack.c.l.b16 %v362
    %v2557 = vunpack.c.h.b16 %v362
    %v2558 = vunpack.c.l.b16 %v363
    %v2559 = vunpack.c.h.b16 %v363
    %v2560 = vunpack.c.l.b16 %v364
    %v2561 = vunpack.c.h.b16 %v364
    %v2562 = vunpack.c.l.b16 %v365
    %v2563 = vunpack.c.h.b16 %v365
    %v2564 = vunpack.c.l.b16 %v366
    %v2565 = vunpack.c.h.b16 %v366
    %v2566 = vunpack.c.l.b16 %v367
    %v2567 = vunpack.c.h.b16 %v367
    %v2568 = vunpack.c.l.b16 %v368
    %v2569 = vunpack.c.h.b16 %v368
    %v2570 = vunpack.c.l.b16 %v369
    %v2571 = vunpack.c.h.b16 %v369
    %v2572 = vunpack.c.l.b16 %v370
    %v2573 = vunpack.c.h.b16 %v370
    %v2574 = vunpack.c.l.b16 %v371
    %v2575 = vunpack.c.h.b16 %v371
    %v2576 = vunpack.c.l.b16 %v372
    %v2577 = vunpack.c.h.b16 %v372
    %v2578 = vunpack.c.l.b16 %v373
    %v2579 = vunpack.c.h.b16 %v373
    %v2580 = vunpack.c.l.b16 %v374
    %v2581 = vunpack.c.h.b16 %v374
    %v2582 = vunpack.c.l.b16 %v375
    %v2583 = vunpack.c.h.b16 %v375
    %v2584 = vunpack.c.l.b16 %v376
    %v2585 = vunpack.c.h.b16 %v376
    %v2586 = vunpack.c.l.b16 %v377
    %v2587 = vunpack.c.h.b16 %v377
    %v2588 = vunpack.c.l.b16 %v378
    %v2589 = vunpack.c.h.b16 %v378
    %v2590 = vunpack.c.l.b16 %v379
    %v2591 = vunpack.c.h.b16 %v379
    %v2592 = vunpack.c.l.b16 %v380
    %v2593 = vunpack.c.h.b16 %v380
    %v2594 = vunpack.c.l.b16 %v381
    %v2595 = vunpack.c.h.b16 %v381
    %v2596 = vunpack.c.l.b16 %v382
    %v2597 = vunpack.c.h.b16 %v382
    %v2598 = vunpack.c.l.b16 %v383
    %v2599 = vunpack.c.h.b16 %v383
    %v2600 = vunpack.c.l.b16 %v384
    %v2601 = vunpack.c.h.b16 %v384
    %v2602 = vunpack.c.l.b16 %v385
    %v2603 = vunpack.c.h.b16 %v385
    %v2604 = vunpack.c.l.b16 %v386
    %v2605 = vunpack.c.h.b16 %v386
    %v2606 = vunpack.c.l.b16 %v387
    %v2607 = vunpack.c.h.b16 %v387
    %v2608 = vunpack.c.l.b16 %v388
    %v2609 = vunpack.c.h.b16 %v388
    %v2610 = vunpack.c.l.b16 %v389
    %v2611 = vunpack.c.h.b16 %v389
    %v2612 = vunpack.c.l.b16 %v390
    %v2613 = vunpack.c.h.b16 %v390
    %v2614 = vunpack.c.l.b16 %v391
    %v2615 = vunpack.c.h.b16 %v391
    %v2616 = vunpack.c.l.b16 %v392
    %v2617 = vunpack.c.h.b16 %v392
    %v2618 = vunpack.c.l.b16 %v393
    %v2619 = vunpack.c.h.b16 %v393
    %v2620 = vunpack.c.l.b16 %v394
    %v2621 = vunpack.c.h.b16 %v394
    %v2622 = vunpack.c.l.b16 %v395
    %v2623 = vunpack.c.h.b16 %v395
    %v2624 = vunpack.c.l.b16 %v396
    %v2625 = vunpack.c.h.b16 %v396
    %v2626 = vunpack.c.l.b16 %v397
    %v2627 = vunpack.c.h.b16 %v397
    %v2628 = vunpack.c.l.b16 %v398
    %v2629 = vunpack.c.h.b16 %v398
    %v2630 = vunpack.c.l.b16 %v399
    %v2631 = vunpack.c.h.b16 %v399
    %v2632 = vunpack.c.l.b16 %v400
    %v2633 = vunpack.c.h.b16 %v400
    %v2634 = vunpack.c.l.b16 %v401
    %v2635 = vunpack.c.h.b16 %v401
    %v2636 = vunpack.c.l.b16 %v402
    %v2637 = vunpack.c.h.b16 %v402
    %v2638 = vunpack.c.l.b16 %v403
    %v2639 = vunpack.c.h.b16 %v403
    %v2640 = vunpack.c.l.b16 %v404
    %v2641 = vunpack.c.h.b16 %v404
    %v2642 = vunpack.c.l.b16 %v405
    %v2643 = vunpack.c.h.b16 %v405
    %v2644 = vunpack.c.l.b16 %v406
    %v2645 = vunpack.c.h.b16 %v406
    %v2646 = vunpack.c.l.b16 %v407
    %v2647 = vunpack.c.h.b16 %v407
    %v2648 = vunpack.c.l.b16 %v408
    %v2649 = vunpack.c.h.b16 %v408
    %v2650 = vunpack.c.l.b16 %v409
    %v2651 = vunpack.c.h.b16 %v409
    %v2652 = vunpack.c.l.b16 %v410
    %v2653 = vunpack.c.h.b16 %v410
    %v2654 = vunpack.c.l.b16 %v411
    %v2655 = vunpack.c.h.b16 %v411
    %v2656 = vunpack.c.l.b16 %v412
    %v2657 = vunpack.c.h.b16 %v412
    %v2658 = vunpack.c.l.b16 %v413
    %v2659 = vunpack.c.h.b16 %v413
    %v2660 = vunpack.c.l.b16 %v414
    %v2661 = vunpack.c.h.b16 %v414
    %v2662 = vunpack.c.l.b16 %v415
    %v2663 = vunpack.c.h.b16 %v415
    %v2664 = vunpack.c.l.b16 %v416
    %v2665 = vunpack.c.h.b16 %v416
    %v2666 = vunpack.c.l.b16 %v417
    %v2667 = vunpack.c.h.b16 %v417
    %v2668 = vunpack.c.l.b16 %v418
    %v2669 = vunpack.c.h.b16 %v418
    %v2670 = vunpack.c.l.b16 %v419
    %v2671 = vunpack.c.h.b16 %v419
    %v2672 = vunpack.c.l.b16 %v420
    %v2673 = vunpack.c.h.b16 %v420
    %v2674 = vunpack.c.l.b16 %v421
    %v2675 = vunpack.c.h.b16 %v421
    %v2676 = vunpack.c.l.b16 %v422
    %v2677 = vunpack.c.h.b16 %v422
    %v2678 = vunpack.c.l.b16 %v423
    %v2679 = vunpack.c.h.b16 %v423
    %v2680 = vunpack.c.l.b16 %v424
    %v2681 = vunpack.c.h.b16 %v424
    %v2682 = vunpack.c.l.b16 %v425
    %v2683 = vunpack.c.h.b16 %v425
    %v2684 = vunpack.c.l.b16 %v426
    %v2685 = vunpack.c.h.b16 %v426
    %v2686 = vunpack.c.l.b16 %v427
    %v2687 = vunpack.c.h.b16 %v427
    %v2688 = vunpack.c.l.b16 %v428
    %v2689 = vunpack.c.h.b16 %v428
    %v2690 = vunpack.c.l.b16 %v429
    %v2691 = vunpack.c.h.b16 %v429
    %v2692 = vunpack.c.l.b16 %v430
    %v2693 = vunpack.c.h.b16 %v430
    %v2694 = vunpack.c.l.b16 %v431
    %v2695 = vunpack.c.h.b16 %v431
    %v2696 = vunpack.c.l.b16 %v432
    %v2697 = vunpack.c.h.b16 %v432
    %v2698 = vunpack.c.l.b16 %v433
    %v2699 = vunpack.c.h.b16 %v433
    %v2700 = vunpack.c.l.b16 %v434
    %v2701 = vunpack.c.h.b16 %v434
    %v2702 = vunpack.c.l.b16 %v435
    %v2703 = vunpack.c.h.b16 %v435
    %v2704 = vunpack.c.l.b16 %v436
    %v2705 = vunpack.c.h.b16 %v436
    %v2706 = vunpack.c.l.b16 %v437
    %v2707 = vunpack.c.h.b16 %v437
    %v2708 = vunpack.c.l.b16 %v438
    %v2709 = vunpack.c.h.b16 %v438
    %v2710 = vunpack.c.l.b16 %v439
    %v2711 = vunpack.c.h.b16 %v439
    %v2712 = vunpack.c.l.b16 %v440
    %v2713 = vunpack.c.h.b16 %v440
    %v2714 = vunpack.c.l.b16 %v441
    %v2715 = vunpack.c.h.b16 %v441
    %v2716 = vunpack.c.l.b16 %v442
    %v2717 = vunpack.c.h.b16 %v442
    %v2718 = vunpack.c.l.b16 %v443
    %v2719 = vunpack.c.h.b16 %v443
    %v2720 = vunpack.c.l.b16 %v444
    %v2721 = vunpack.c.h.b16 %v444
    %v2722 = vunpack.c.l.b16 %v445
    %v2723 = vunpack.c.h.b16 %v445
    %v2724 = vunpack.c.l.b16 %v446
    %v2725 = vunpack.c.h.b16 %v446
    %v2726 = vunpack.c.l.b16 %v447
    %v2727 = vunpack.c.h.b16 %v447
    %v2728 = vunpack.c.l.b16 %v448
    %v2729 = vunpack.c.h.b16 %v448
    %v2730 = vunpack.c.l.b16 %v449
    %v2731 = vunpack.c.h.b16 %v449
    %v2732 = vunpack.c.l.b16 %v450
    %v2733 = vunpack.c.h.b16 %v450
    %v2734 = vunpack.c.l.b16 %v451
    %v2735 = vunpack.c.h.b16 %v451
    %v2736 = vunpack.c.l.b16 %v452
    %v2737 = vunpack.c.h.b16 %v452
    %v2738 = vunpack.c.l.b16 %v453
    %v2739 = vunpack.c.h.b16 %v453
    %v2740 = vunpack.c.l.b16 %v454
    %v2741 = vunpack.c.h.b16 %v454
    %v2742 = vunpack.c.l.b16 %v455
    %v2743 = vunpack.c.h.b16 %v455
    %v2744 = vunpack.c.l.b16 %v456
    %v2745 = vunpack.c.h.b16 %v456
    %v2746 = vunpack.c.l.b16 %v457
    %v2747 = vunpack.c.h.b16 %v457
    %v2748 = vunpack.c.l.b16 %v458
    %v2749 = vunpack.c.h.b16 %v458
    %v2750 = vunpack.c.l.b16 %v459
    %v2751 = vunpack.c.h.b16 %v459
    %v2752 = vunpack.c.l.b16 %v460
    %v2753 = vunpack.c.h.b16 %v460
    %v2754 = vunpack.c.l.b16 %v461
    %v2755 = vunpack.c.h.b16 %v461
    %v2756 = vunpack.c.l.b16 %v462
    %v2757 = vunpack.c.h.b16 %v462
    %v2758 = vunpack.c.l.b16 %v463
    %v2759 = vunpack.c.h.b16 %v463
    %v2760 = vunpack.c.l.b16 %v464
    %v2761 = vunpack.c.h.b16 %v464
    %v2762 = vunpack.c.l.b16 %v465
    %v2763 = vunpack.c.h.b16 %v465
    %v2764 = vunpack.c.l.b16 %v466
    %v2765 = vunpack.c.h.b16 %v466
    %v2766 = vunpack.c.l.b16 %v467
    %v2767 = vunpack.c.h.b16 %v467
    %v2768 = vunpack.c.l.b16 %v468
    %v2769 = vunpack.c.h.b16 %v468
    %v2770 = vunpack.c.l.b16 %v469
    %v2771 = vunpack.c.h.b16 %v469
    %v2772 = vunpack.c.l.b16 %v470
    %v2773 = vunpack.c.h.b16 %v470
    %v2774 = vunpack.c.l.b16 %v471
    %v2775 = vunpack.c.h.b16 %v471
    %v2776 = vunpack.c.l.b16 %v472
    %v2777 = vunpack.c.h.b16 %v472
    %v2778 = vunpack.c.l.b16 %v473
    %v2779 = vunpack.c.h.b16 %v473
    %v2780 = vunpack.c.l.b16 %v474
    %v2781 = vunpack.c.h.b16 %v474
    %v2782 = vunpack.c.l.b16 %v475
    %v2783 = vunpack.c.h.b16 %v475
    %v2784 = vunpack.c.l.b16 %v476
    %v2785 = vunpack.c.h.b16 %v476
    %v2786 = vunpack.c.l.b16 %v477
    %v2787 = vunpack.c.h.b16 %v477
    %v2788 = vunpack.c.l.b16 %v478
    %v2789 = vunpack.c.h.b16 %v478
    %v2790 = vunpack.c.l.b16 %v479
    %v2791 = vunpack.c.h.b16 %v479
    %v2792 = vunpack.c.l.b16 %v480
    %v2793 = vunpack.c.h.b16 %v480
    %v2794 = vunpack.c.l.b16 %v481
    %v2795 = vunpack.c.h.b16 %v481
    %v2796 = vunpack.c.l.b16 %v482
    %v2797 = vunpack.c.h.b16 %v482
    %v2798 = vunpack.c.l.b16 %v483
    %v2799 = vunpack.c.h.b16 %v483
    %v2800 = vunpack.c.l.b16 %v484
    %v2801 = vunpack.c.h.b16 %v484
    %v2802 = vunpack.c.l.b16 %v485
    %v2803 = vunpack.c.h.b16 %v485
    %v2804 = vunpack.c.l.b16 %v486
    %v2805 = vunpack.c.h.b16 %v486
    %v2806 = vunpack.c.l.b16 %v487
    %v2807 = vunpack.c.h.b16 %v487
    %v2808 = vunpack.c.l.b16 %v488
    %v2809 = vunpack.c.h.b16 %v488
    %v2810 = vunpack.c.l.b16 %v489
    %v2811 = vunpack.c.h.b16 %v489
    %v2812 = vunpack.c.l.b16 %v490
    %v2813 = vunpack.c.h.b16 %v490
    %v2814 = vunpack.c.l.b16 %v491
    %v2815 = vunpack.c.h.b16 %v491
    %v2816 = vunpack.c.l.b16 %v492
    %v2817 = vunpack.c.h.b16 %v492
    %v2818 = vunpack.c.l.b16 %v493
    %v2819 = vunpack.c.h.b16 %v493
    %v2820 = vunpack.c.l.b16 %v494
    %v2821 = vunpack.c.h.b16 %v494
    %v2822 = vunpack.c.l.b16 %v495
    %v2823 = vunpack.c.h.b16 %v495
    %v2824 = vunpack.c.l.b16 %v496
    %v2825 = vunpack.c.h.b16 %v496
    %v2826 = vunpack.c.l.b16 %v497
    %v2827 = vunpack.c.h.b16 %v497
    %v2828 = vunpack.c.l.b16 %v498
    %v2829 = vunpack.c.h.b16 %v498
    %v2830 = vunpack.c.l.b16 %v499
    %v2831 = vunpack.c.h.b16 %v499
    %v2832 = vunpack.c.l.b16 %v500
    %v2833 = vunpack.c.h.b16 %v500
    %v2834 = vunpack.c.l.b16 %v501
    %v2835 = vunpack.c.h.b16 %v501
    %v2836 = vunpack.c.l.b16 %v502
    %v2837 = vunpack.c.h.b16 %v502
    %v2838 = vunpack.c.l.b16 %v503
    %v2839 = vunpack.c.h.b16 %v503
    %v2840 = vunpack.c.l.b16 %v504
    %v2841 = vunpack.c.h.b16 %v504
    %v2842 = vunpack.c.l.b16 %v505
    %v2843 = vunpack.c.h.b16 %v505
    %v2844 = vunpack.c.l.b16 %v506
    %v2845 = vunpack.c.h.b16 %v506
    %v2846 = vunpack.c.l.b16 %v507
    %v2847 = vunpack.c.h.b16 %v507
    %v2848 = vunpack.c.l.b16 %v508
    %v2849 = vunpack.c.h.b16 %v508
    %v2850 = vunpack.c.l.b16 %v509
    %v2851 = vunpack.c.h.b16 %v509
    %v2852 = vunpack.c.l.b16 %v510
    %v2853 = vunpack.c.h.b16 %v510
    %v2854 = vunpack.c.l.b16 %v511
    %v2855 = vunpack.c.h.b16 %v511
    %v2856 = vunpack.c.l.b16 %v512
    %v2857 = vunpack.c.h.b16 %v512
    %v2858 = vunpack.c.l.b16 %v513
    %v2859 = vunpack.c.h.b16 %v513
    %v2860 = vunpack.c.l.b16 %v514
    %v2861 = vunpack.c.h.b16 %v514
    %v2862 = vunpack.c.l.b16 %v515
    %v2863 = vunpack.c.h.b16 %v515
    %v2864 = vunpack.c.l.b16 %v516
    %v2865 = vunpack.c.h.b16 %v516
    %v2866 = vunpack.c.l.b16 %v517
    %v2867 = vunpack.c.h.b16 %v517
    %v2868 = vunpack.c.l.b16 %v518
    %v2869 = vunpack.c.h.b16 %v518
    %v2870 = vunpack.c.l.b16 %v519
    %v2871 = vunpack.c.h.b16 %v519
    %v2872 = vunpack.c.l.b16 %v520
    %v2873 = vunpack.c.h.b16 %v520
    %v2874 = vunpack.c.l.b16 %v521
    %v2875 = vunpack.c.h.b16 %v521
    %v2876 = vunpack.c.l.b16 %v522
    %v2877 = vunpack.c.h.b16 %v522
    %v2878 = vunpack.c.l.b16 %v523
    %v2879 = vunpack.c.h.b16 %v523
    %v2880 = vunpack.c.l.b16 %v524
    %v2881 = vunpack.c.h.b16 %v524
    %v2882 = vunpack.c.l.b16 %v525
    %v2883 = vunpack.c.h.b16 %v525
    %v2884 = vunpack.c.l.b16 %v526
    %v2885 = vunpack.c.h.b16 %v526
    %v2886 = vunpack.c.l.b16 %v527
    %v2887 = vunpack.c.h.b16 %v527
    %v2888 = vunpack.c.l.b16 %v528
    %v2889 = vunpack.c.h.b16 %v528
    %v2890 = vunpack.c.l.b16 %v529
    %v2891 = vunpack.c.h.b16 %v529
    %v2892 = vunpack.c.l.b16 %v530
    %v2893 = vunpack.c.h.b16 %v530
    %v2894 = vunpack.c.l.b16 %v531
    %v2895 = vunpack.c.h.b16 %v531
    %v2896 = vunpack.c.l.b16 %v532
    %v2897 = vunpack.c.h.b16 %v532
    %v2898 = vunpack.c.l.b16 %v533
    %v2899 = vunpack.c.h.b16 %v533
    %v2900 = vunpack.c.l.b16 %v534
    %v2901 = vunpack.c.h.b16 %v534
    %v2902 = vunpack.c.l.b16 %v535
    %v2903 = vunpack.c.h.b16 %v535
    %v2904 = vunpack.c.l.b16 %v536
    %v2905 = vunpack.c.h.b16 %v536
    %v2906 = vunpack.c.l.b16 %v537
    %v2907 = vunpack.c.h.b16 %v537
    %v2908 = vunpack.c.l.b16 %v538
    %v2909 = vunpack.c.h.b16 %v538
    %v2910 = vunpack.c.l.b16 %v539
    %v2911 = vunpack.c.h.b16 %v539
    %v2912 = vunpack.c.l.b16 %v540
    %v2913 = vunpack.c.h.b16 %v540
    %v2914 = vunpack.c.l.b16 %v541
    %v2915 = vunpack.c.h.b16 %v541
    %v2916 = vunpack.c.l.b16 %v542
    %v2917 = vunpack.c.h.b16 %v542
    %v2918 = vunpack.c.l.b16 %v543
    %v2919 = vunpack.c.h.b16 %v543
    %v2920 = vunpack.c.l.b16 %v544
    %v2921 = vunpack.c.h.b16 %v544
    %v2922 = vunpack.c.l.b16 %v545
    %v2923 = vunpack.c.h.b16 %v545
    %v2924 = vunpack.c.l.b16 %v546
    %v2925 = vunpack.c.h.b16 %v546
    %v2926 = vunpack.c.l.b16 %v547
    %v2927 = vunpack.c.h.b16 %v547
    %v2928 = vunpack.c.l.b16 %v548
    %v2929 = vunpack.c.h.b16 %v548
    %v2930 = vunpack.c.l.b16 %v549
    %v2931 = vunpack.c.h.b16 %v549
    %v2932 = vunpack.c.l.b16 %v550
    %v2933 = vunpack.c.h.b16 %v550
    %v2934 = vunpack.c.l.b16 %v551
    %v2935 = vunpack.c.h.b16 %v551
    %v2936 = vunpack.c.l.b16 %v552
    %v2937 = vunpack.c.h.b16 %v552
    %v2938 = vunpack.c.l.b16 %v553
    %v2939 = vunpack.c.h.b16 %v553
    %v2940 = vunpack.c.l.b16 %v554
    %v2941 = vunpack.c.h.b16 %v554
    %v2942 = vunpack.c.l.b16 %v555
    %v2943 = vunpack.c.h.b16 %v555
    %v2944 = vunpack.c.l.b16 %v556
    %v2945 = vunpack.c.h.b16 %v556
    %v2946 = vunpack.c.l.b16 %v557
    %v2947 = vunpack.c.h.b16 %v557
    %v2948 = vunpack.c.l.b16 %v558
    %v2949 = vunpack.c.h.b16 %v558
    %v2950 = vunpack.c.l.b16 %v559
    %v2951 = vunpack.c.h.b16 %v559
    %v2952 = vunpack.c.l.b16 %v560
    %v2953 = vunpack.c.h.b16 %v560
    %v2954 = vunpack.c.l.b16 %v561
    %v2955 = vunpack.c.h.b16 %v561
    %v2956 = vunpack.c.l.b16 %v562
    %v2957 = vunpack.c.h.b16 %v562
    %v2958 = vunpack.c.l.b16 %v563
    %v2959 = vunpack.c.h.b16 %v563
    %v2960 = vunpack.c.l.b16 %v564
    %v2961 = vunpack.c.h.b16 %v564
    %v2962 = vunpack.c.l.b16 %v565
    %v2963 = vunpack.c.h.b16 %v565
    %v2964 = vunpack.c.l.b16 %v566
    %v2965 = vunpack.c.h.b16 %v566
    %v2966 = vunpack.c.l.b16 %v567
    %v2967 = vunpack.c.h.b16 %v567
    %v2968 = vunpack.c.l.b16 %v568
    %v2969 = vunpack.c.h.b16 %v568
    %v2970 = vunpack.c.l.b16 %v569
    %v2971 = vunpack.c.h.b16 %v569
    %v2972 = vunpack.c.l.b16 %v570
    %v2973 = vunpack.c.h.b16 %v570
    %v2974 = vunpack.c.l.b16 %v571
    %v2975 = vunpack.c.h.b16 %v571
    %v2976 = vunpack.c.l.b16 %v572
    %v2977 = vunpack.c.h.b16 %v572
    %v2978 = vunpack.c.l.b16 %v573
    %v2979 = vunpack.c.h.b16 %v573
    %v2980 = vunpack.c.l.b16 %v574
    %v2981 = vunpack.c.h.b16 %v574
    %v2982 = vunpack.c.l.b16 %v575
    %v2983 = vunpack.c.h.b16 %v575
    %v2984 = vunpack.c.l.b16 %v576
    %v2985 = vunpack.c.h.b16 %v576
    %v2986 = vunpack.c.l.b16 %v577
    %v2987 = vunpack.c.h.b16 %v577
    %v2988 = vunpack.c.l.b16 %v578
    %v2989 = vunpack.c.h.b16 %v578
    %v2990 = vunpack.c.l.b16 %v579
    %v2991 = vunpack.c.h.b16 %v579
    %v2992 = vunpack.c.l.b16 %v580
    %v2993 = vunpack.c.h.b16 %v580
    %v2994 = vunpack.c.l.b16 %v581
    %v2995 = vunpack.c.h.b16 %v581
    %v2996 = vunpack.c.l.b16 %v582
    %v2997 = vunpack.c.h.b16 %v582
    %v2998 = vunpack.c.l.b16 %v583
    %v2999 = vunpack.c.h.b16 %v583
    %v3000 = vunpack.c.l.b16 %v584
    %v3001 = vunpack.c.h.b16 %v584
    %v3002 = vunpack.c.l.b16 %v585
    %v3003 = vunpack.c.h.b16 %v585
    %v3004 = vunpack.c.l.b16 %v586
    %v3005 = vunpack.c.h.b16 %v586
    %v3006 = vunpack.c.l.b16 %v587
    %v3007 = vunpack.c.h.b16 %v587
    %v3008 = vunpack.c.l.b16 %v588
    %v3009 = vunpack.c.h.b16 %v588
    %v3010 = vunpack.c.l.b16 %v589
    %v3011 = vunpack.c.h.b16 %v589
    %v3012 = vunpack.c.l.b16 %v590
    %v3013 = vunpack.c.h.b16 %v590
    %v3014 = vunpack.c.l.b16 %v591
    %v3015 = vunpack.c.h.b16 %v591
    %v3016 = vunpack.c.l.b16 %v592
    %v3017 = vunpack.c.h.b16 %v592
    %v3018 = vunpack.c.l.b16 %v593
    %v3019 = vunpack.c.h.b16 %v593
    %v3020 = vunpack.c.l.b16 %v594
    %v3021 = vunpack.c.h.b16 %v594
    %v3022 = vunpack.c.l.b16 %v595
    %v3023 = vunpack.c.h.b16 %v595
    %v3024 = vunpack.c.l.b16 %v596
    %v3025 = vunpack.c.h.b16 %v596
    %v3026 = vunpack.c.l.b16 %v597
    %v3027 = vunpack.c.h.b16 %v597
    %v3028 = vunpack.c.l.b16 %v598
    %v3029 = vunpack.c.h.b16 %v598
    %v3030 = vunpack.c.l.b16 %v599
    %v3031 = vunpack.c.h.b16 %v599
    %v3032 = vunpack.c.l.b16 %v600
    %v3033 = vunpack.c.h.b16 %v600
    %v3034 = vunpack.c.l.b16 %v601
    %v3035 = vunpack.c.h.b16 %v601
    %v3036 = vunpack.c.l.b16 %v602
    %v3037 = vunpack.c.h.b16 %v602
    %v3038 = vunpack.c.l.b16 %v603
    %v3039 = vunpack.c.h.b16 %v603
    %v3040 = vunpack.c.l.b16 %v604
    %v3041 = vunpack.c.h.b16 %v604
    %v3042 = vunpack.c.l.b16 %v605
    %v3043 = vunpack.c.h.b16 %v605
    %v3044 = vunpack.c.l.b16 %v606
    %v3045 = vunpack.c.h.b16 %v606
    %v3046 = vunpack.c.l.b16 %v607
    %v3047 = vunpack.c.h.b16 %v607
    %v3048 = vunpack.c.l.b16 %v608
    %v3049 = vunpack.c.h.b16 %v608
    %v3050 = vunpack.c.l.b16 %v609
    %v3051 = vunpack.c.h.b16 %v609
    %v3052 = vunpack.c.l.b16 %v610
    %v3053 = vunpack.c.h.b16 %v610
    %v3054 = vunpack.c.l.b16 %v611
    %v3055 = vunpack.c.h.b16 %v611
    %v3056 = vunpack.c.l.b16 %v612
    %v3057 = vunpack.c.h.b16 %v612
    %v3058 = vunpack.c.l.b16 %v613
    %v3059 = vunpack.c.h.b16 %v613
    %v3060 = vunpack.c.l.b16 %v614
    %v3061 = vunpack.c.h.b16 %v614
    %v3062 = vunpack.c.l.b16 %v615
    %v3063 = vunpack.c.h.b16 %v615
    %v3064 = vunpack.c.l.b16 %v616
    %v3065 = vunpack.c.h.b16 %v616
    %v3066 = vunpack.c.l.b16 %v617
    %v3067 = vunpack.c.h.b16 %v617
    %v3068 = vunpack.c.l.b16 %v618
    %v3069 = vunpack.c.h.b16 %v618
    %v3070 = vunpack.c.l.b16 %v619
    %v3071 = vunpack.c.h.b16 %v619
    %v3072 = vunpack.c.l.b16 %v620
    %v3073 = vunpack.c.h.b16 %v620
    %v3074 = vunpack.c.l.b16 %v621
    %v3075 = vunpack.c.h.b16 %v621
    %v3076 = vunpack.c.l.b16 %v622
    %v3077 = vunpack.c.h.b16 %v622
    %v3078 = vunpack.c.l.b16 %v623
    %v3079 = vunpack.c.h.b16 %v623
    %v3080 = vunpack.c.l.b16 %v624
    %v3081 = vunpack.c.h.b16 %v624
    %v3082 = vunpack.c.l.b16 %v625
    %v3083 = vunpack.c.h.b16 %v625
    %v3084 = vunpack.c.l.b16 %v626
    %v3085 = vunpack.c.h.b16 %v626
    %v3086 = vunpack.c.l.b16 %v627
    %v3087 = vunpack.c.h.b16 %v627
    %v3088 = vunpack.c.l.b16 %v628
    %v3089 = vunpack.c.h.b16 %v628
    %v3090 = vunpack.c.l.b16 %v629
    %v3091 = vunpack.c.h.b16 %v629
    %v3092 = vunpack.c.l.b16 %v630
    %v3093 = vunpack.c.h.b16 %v630
    %v3094 = vunpack.c.l.b16 %v631
    %v3095 = vunpack.c.h.b16 %v631
    %v3096 = vunpack.c.l.b16 %v632
    %v3097 = vunpack.c.h.b16 %v632
    %v3098 = vunpack.c.l.b16 %v633
    %v3099 = vunpack.c.h.b16 %v633
    %v3100 = vunpack.c.l.b16 %v634
    %v3101 = vunpack.c.h.b16 %v634
    %v3102 = vunpack.c.l.b16 %v635
    %v3103 = vunpack.c.h.b16 %v635
    %v3104 = vunpack.c.l.b16 %v636
    %v3105 = vunpack.c.h.b16 %v636
    %v3106 = vunpack.c.l.b16 %v637
    %v3107 = vunpack.c.h.b16 %v637
    %v3108 = vunpack.c.l.b16 %v638
    %v3109 = vunpack.c.h.b16 %v638
    %v3110 = vunpack.c.l.b16 %v639
    %v3111 = vunpack.c.h.b16 %v639
    %v3112 = vunpack.c.l.b16 %v640
    %v3113 = vunpack.c.h.b16 %v640
    %v3114 = vunpack.c.l.b16 %v641
    %v3115 = vunpack.c.h.b16 %v641
    %v3116 = vunpack.c.l.b16 %v642
    %v3117 = vunpack.c.h.b16 %v642
    %v3118 = vunpack.c.l.b16 %v643
    %v3119 = vunpack.c.h.b16 %v643
    %v3120 = vunpack.c.l.b16 %v644
    %v3121 = vunpack.c.h.b16 %v644
    %v3122 = vunpack.c.l.b16 %v645
    %v3123 = vunpack.c.h.b16 %v645
    %v3124 = vunpack.c.l.b16 %v646
    %v3125 = vunpack.c.h.b16 %v646
    %v3126 = vunpack.c.l.b16 %v647
    %v3127 = vunpack.c.h.b16 %v647
    %v3128 = vunpack.c.l.b16 %v648
    %v3129 = vunpack.c.h.b16 %v648
    %v3130 = vunpack.c.l.b16 %v649
    %v3131 = vunpack.c.h.b16 %v649
    %v3132 = vunpack.c.l.b16 %v650
    %v3133 = vunpack.c.h.b16 %v650
    %v3134 = vunpack.c.l.b16 %v651
    %v3135 = vunpack.c.h.b16 %v651
    %v3136 = vunpack.c.l.b16 %v652
    %v3137 = vunpack.c.h.b16 %v652
    %v3138 = vunpack.c.l.b16 %v653
    %v3139 = vunpack.c.h.b16 %v653
    %v3140 = vunpack.c.l.b16 %v654
    %v3141 = vunpack.c.h.b16 %v654
    %v3142 = vunpack.c.l.b16 %v655
    %v3143 = vunpack.c.h.b16 %v655
    %v3144 = vunpack.c.l.b16 %v656
    %v3145 = vunpack.c.h.b16 %v656
    %v3146 = vunpack.c.l.b16 %v657
    %v3147 = vunpack.c.h.b16 %v657
    %v3148 = vunpack.c.l.b16 %v658
    %v3149 = vunpack.c.h.b16 %v658
    %v3150 = vunpack.c.l.b16 %v659
    %v3151 = vunpack.c.h.b16 %v659
    %v3152 = vunpack.c.l.b16 %v660
    %v3153 = vunpack.c.h.b16 %v660
    %v3154 = vunpack.c.l.b16 %v661
    %v3155 = vunpack.c.h.b16 %v661
    %v3156 = vunpack.c.l.b16 %v662
    %v3157 = vunpack.c.h.b16 %v662
    %v3158 = vunpack.c.l.b16 %v663
    %v3159 = vunpack.c.h.b16 %v663
    %v3160 = vunpack.c.l.b16 %v664
    %v3161 = vunpack.c.h.b16 %v664
    %v3162 = vunpack.c.l.b16 %v665
    %v3163 = vunpack.c.h.b16 %v665
    %v3164 = vunpack.c.l.b16 %v666
    %v3165 = vunpack.c.h.b16 %v666
    %v3166 = vunpack.c.l.b16 %v667
    %v3167 = vunpack.c.h.b16 %v667
    %v3168 = vunpack.c.l.b16 %v668
    %v3169 = vunpack.c.h.b16 %v668
    %v3170 = vunpack.c.l.b16 %v669
    %v3171 = vunpack.c.h.b16 %v669
    %v3172 = vunpack.c.l.b16 %v670
    %v3173 = vunpack.c.h.b16 %v670
    %v3174 = vunpack.c.l.b16 %v671
    %v3175 = vunpack.c.h.b16 %v671
    %v3176 = vunpack.c.l.b16 %v672
    %v3177 = vunpack.c.h.b16 %v672
    %v3178 = vunpack.c.l.b16 %v673
    %v3179 = vunpack.c.h.b16 %v673
    %v3180 = vunpack.c.l.b16 %v674
    %v3181 = vunpack.c.h.b16 %v674
    %v3182 = vunpack.c.l.b16 %v675
    %v3183 = vunpack.c.h.b16 %v675
    %v3184 = vunpack.c.l.b16 %v676
    %v3185 = vunpack.c.h.b16 %v676
    %v3186 = vunpack.c.l.b16 %v677
    %v3187 = vunpack.c.h.b16 %v677
    %v3188 = vunpack.c.l.b16 %v678
    %v3189 = vunpack.c.h.b16 %v678
    %v3190 = vunpack.c.l.b16 %v679
    %v3191 = vunpack.c.h.b16 %v679
    %v3192 = vunpack.c.l.b16 %v680
    %v3193 = vunpack.c.h.b16 %v680
    %v3194 = vunpack.c.l.b16 %v681
    %v3195 = vunpack.c.h.b16 %v681
    %v3196 = vunpack.c.l.b16 %v682
    %v3197 = vunpack.c.h.b16 %v682
    %v3198 = vunpack.c.l.b16 %v683
    %v3199 = vunpack.c.h.b16 %v683
    %v3200 = vunpack.c.l.b16 %v684
    %v3201 = vunpack.c.h.b16 %v684
    %v3202 = vunpack.c.l.b16 %v685
    %v3203 = vunpack.c.h.b16 %v685
    %v3204 = vunpack.c.l.b16 %v686
    %v3205 = vunpack.c.h.b16 %v686
    %v3206 = vunpack.c.l.b16 %v687
    %v3207 = vunpack.c.h.b16 %v687
    %v3208 = vunpack.c.l.b16 %v688
    %v3209 = vunpack.c.h.b16 %v688
    %v3210 = vunpack.c.l.b16 %v689
    %v3211 = vunpack.c.h.b16 %v689
    %v3212 = vunpack.c.l.b16 %v690
    %v3213 = vunpack.c.h.b16 %v690
    %v3214 = vunpack.c.l.b16 %v691
    %v3215 = vunpack.c.h.b16 %v691
    %v3216 = vunpack.c.l.b16 %v692
    %v3217 = vunpack.c.h.b16 %v692
    %v3218 = vunpack.c.l.b16 %v693
    %v3219 = vunpack.c.h.b16 %v693
    %v3220 = vunpack.c.l.b16 %v694
    %v3221 = vunpack.c.h.b16 %v694
    %v3222 = vunpack.c.l.b16 %v695
    %v3223 = vunpack.c.h.b16 %v695
    %v3224 = vunpack.c.l.b16 %v696
    %v3225 = vunpack.c.h.b16 %v696
    %v3226 = vunpack.c.l.b16 %v697
    %v3227 = vunpack.c.h.b16 %v697
    %v3228 = vunpack.c.l.b16 %v698
    %v3229 = vunpack.c.h.b16 %v698
    %v3230 = vunpack.c.l.b16 %v699
    %v3231 = vunpack.c.h.b16 %v699
    %v3232 = vunpack.c.l.b16 %v700
    %v3233 = vunpack.c.h.b16 %v700
    %v3234 = vunpack.c.l.b16 %v701
    %v3235 = vunpack.c.h.b16 %v701
    %v3236 = vunpack.c.l.b16 %v702
    %v3237 = vunpack.c.h.b16 %v702
    %v3238 = vunpack.c.l.b16 %v703
    %v3239 = vunpack.c.h.b16 %v703
    %v3240 = vunpack.c.l.b16 %v704
    %v3241 = vunpack.c.h.b16 %v704
    %v3242 = vunpack.c.l.b16 %v705
    %v3243 = vunpack.c.h.b16 %v705
    %v3244 = vunpack.c.l.b16 %v706
    %v3245 = vunpack.c.h.b16 %v706
    %v3246 = vunpack.c.l.b16 %v707
    %v3247 = vunpack.c.h.b16 %v707
    %v3248 = vunpack.c.l.b16 %v708
    %v3249 = vunpack.c.h.b16 %v708
    %v3250 = vunpack.c.l.b16 %v709
    %v3251 = vunpack.c.h.b16 %v709
    %v3252 = vunpack.c.l.b16 %v710
    %v3253 = vunpack.c.h.b16 %v710
    %v3254 = vunpack.c.l.b16 %v711
    %v3255 = vunpack.c.h.b16 %v711
    %v3256 = vunpack.c.l.b16 %v712
    %v3257 = vunpack.c.h.b16 %v712
    %v3258 = vunpack.c.l.b16 %v713
    %v3259 = vunpack.c.h.b16 %v713
    %v3260 = vunpack.c.l.b16 %v714
    %v3261 = vunpack.c.h.b16 %v714
    %v3262 = vunpack.c.l.b16 %v715
    %v3263 = vunpack.c.h.b16 %v715
    %v3264 = vunpack.c.l.b16 %v716
    %v3265 = vunpack.c.h.b16 %v716
    %v3266 = vunpack.c.l.b16 %v717
    %v3267 = vunpack.c.h.b16 %v717
    %v3268 = vunpack.c.l.b16 %v718
    %v3269 = vunpack.c.h.b16 %v718
    %v3270 = vunpack.c.l.b16 %v719
    %v3271 = vunpack.c.h.b16 %v719
    %v3272 = vunpack.c.l.b16 %v720
    %v3273 = vunpack.c.h.b16 %v720
    %v3274 = vunpack.c.l.b16 %v721
    %v3275 = vunpack.c.h.b16 %v721
    %v3276 = vunpack.c.l.b16 %v722
    %v3277 = vunpack.c.h.b16 %v722
    %v3278 = vunpack.c.l.b16 %v723
    %v3279 = vunpack.c.h.b16 %v723
    %v3280 = vunpack.c.l.b16 %v724
    %v3281 = vunpack.c.h.b16 %v724
    %v3282 = vunpack.c.l.b16 %v725
    %v3283 = vunpack.c.h.b16 %v725
    %v3284 = vunpack.c.l.b16 %v726
    %v3285 = vunpack.c.h.b16 %v726
    %v3286 = vunpack.c.l.b16 %v727
    %v3287 = vunpack.c.h.b16 %v727
    %v3288 = vunpack.c.l.b16 %v728
    %v3289 = vunpack.c.h.b16 %v728
    %v3290 = vunpack.c.l.b16 %v729
    %v3291 = vunpack.c.h.b16 %v729
    %v3292 = vunpack.c.l.b16 %v730
    %v3293 = vunpack.c.h.b16 %v730
    %v3294 = vunpack.c.l.b16 %v731
    %v3295 = vunpack.c.h.b16 %v731
    %v3296 = vunpack.c.l.b16 %v732
    %v3297 = vunpack.c.h.b16 %v732
    %v3298 = vunpack.c.l.b16 %v733
    %v3299 = vunpack.c.h.b16 %v733
    %v3300 = vunpack.c.l.b16 %v734
    %v3301 = vunpack.c.h.b16 %v734
    %v3302 = vunpack.c.l.b16 %v735
    %v3303 = vunpack.c.h.b16 %v735
    %v3304 = vunpack.c.l.b16 %v736
    %v3305 = vunpack.c.h.b16 %v736
    %v3306 = vunpack.c.l.b16 %v737
    %v3307 = vunpack.c.h.b16 %v737
    %v3308 = vunpack.c.l.b16 %v738
    %v3309 = vunpack.c.h.b16 %v738
    %v3310 = vunpack.c.l.b16 %v739
    %v3311 = vunpack.c.h.b16 %v739
    %v3312 = vunpack.c.l.b16 %v740
    %v3313 = vunpack.c.h.b16 %v740
    %v3314 = vunpack.c.l.b16 %v741
    %v3315 = vunpack.c.h.b16 %v741
    %v3316 = vunpack.c.l.b16 %v742
    %v3317 = vunpack.c.h.b16 %v742
    %v3318 = vunpack.c.l.b16 %v743
    %v3319 = vunpack.c.h.b16 %v743
    %v3320 = vunpack.c.l.b16 %v744
    %v3321 = vunpack.c.h.b16 %v744
    %v3322 = vunpack.c.l.b16 %v745
    %v3323 = vunpack.c.h.b16 %v745
    %v3324 = vunpack.c.l.b16 %v746
    %v3325 = vunpack.c.h.b16 %v746
    %v3326 = vunpack.c.l.b16 %v747
    %v3327 = vunpack.c.h.b16 %v747
    %v3328 = vunpack.c.l.b16 %v748
    %v3329 = vunpack.c.h.b16 %v748
    %v3330 = vunpack.c.l.b16 %v749
    %v3331 = vunpack.c.h.b16 %v749
    %v3332 = vunpack.c.l.b16 %v750
    %v3333 = vunpack.c.h.b16 %v750
    %v3334 = vunpack.c.l.b16 %v751
    %v3335 = vunpack.c.h.b16 %v751
    %v3336 = vunpack.c.l.b16 %v752
    %v3337 = vunpack.c.h.b16 %v752
    %v3338 = vunpack.c.l.b16 %v753
    %v3339 = vunpack.c.h.b16 %v753
    %v3340 = vunpack.c.l.b16 %v754
    %v3341 = vunpack.c.h.b16 %v754
    %v3342 = vunpack.c.l.b16 %v755
    %v3343 = vunpack.c.h.b16 %v755
    %v3344 = vunpack.c.l.b16 %v756
    %v3345 = vunpack.c.h.b16 %v756
    %v3346 = vunpack.c.l.b16 %v757
    %v3347 = vunpack.c.h.b16 %v757
    %v3348 = vunpack.c.l.b16 %v758
    %v3349 = vunpack.c.h.b16 %v758
    %v3350 = vunpack.c.l.b16 %v759
    %v3351 = vunpack.c.h.b16 %v759
    %v3352 = vunpack.c.l.b16 %v760
    %v3353 = vunpack.c.h.b16 %v760
    %v3354 = vunpack.c.l.b16 %v761
    %v3355 = vunpack.c.h.b16 %v761
    %v3356 = vunpack.c.l.b16 %v762
    %v3357 = vunpack.c.h.b16 %v762
    %v3358 = vunpack.c.l.b16 %v763
    %v3359 = vunpack.c.h.b16 %v763
    %v3360 = vunpack.c.l.b16 %v764
    %v3361 = vunpack.c.h.b16 %v764
    %v3362 = vunpack.c.l.b16 %v765
    %v3363 = vunpack.c.h.b16 %v765
    %v3364 = vunpack.c.l.b16 %v766
    %v3365 = vunpack.c.h.b16 %v766
    %v3366 = vunpack.c.l.b16 %v767
    %v3367 = vunpack.c.h.b16 %v767
    %v3368 = vunpack.c.l.b16 %v768
    %v3369 = vunpack.c.h.b16 %v768
    %v3370 = vunpack.c.l.b16 %v769
    %v3371 = vunpack.c.h.b16 %v769
    %v3372 = vunpack.c.l.b16 %v770
    %v3373 = vunpack.c.h.b16 %v770
    %v3374 = vunpack.c.l.b16 %v771
    %v3375 = vunpack.c.h.b16 %v771
    %v3376 = vunpack.c.l.b16 %v772
    %v3377 = vunpack.c.h.b16 %v772
    %v3378 = vunpack.c.l.b16 %v773
    %v3379 = vunpack.c.h.b16 %v773
    %v3380 = vunpack.c.l.b16 %v774
    %v3381 = vunpack.c.h.b16 %v774
    %v3382 = vunpack.c.l.b16 %v775
    %v3383 = vunpack.c.h.b16 %v775
    %v3384 = vunpack.c.l.b16 %v776
    %v3385 = vunpack.c.h.b16 %v776
    %v3386 = vunpack.c.l.b16 %v777
    %v3387 = vunpack.c.h.b16 %v777
    %v3388 = vunpack.c.l.b16 %v778
    %v3389 = vunpack.c.h.b16 %v778
    %v3390 = vunpack.c.l.b16 %v779
    %v3391 = vunpack.c.h.b16 %v779
    %v3392 = vunpack.c.l.b16 %v780
    %v3393 = vunpack.c.h.b16 %v780
    %v3394 = vunpack.c.l.b16 %v781
    %v3395 = vunpack.c.h.b16 %v781
    %v3396 = vunpack.c.l.b16 %v782
    %v3397 = vunpack.c.h.b16 %v782
    %v3398 = vunpack.c.l.b16 %v783
    %v3399 = vunpack.c.h.b16 %v783
    %v3400 = vunpack.c.l.b16 %v784
    %v3401 = vunpack.c.h.b16 %v784
    %v3402 = vunpack.c.l.b16 %v785
    %v3403 = vunpack.c.h.b16 %v785
    %v3404 = vunpack.c.l.b16 %v786
    %v3405 = vunpack.c.h.b16 %v786
    %v3406 = vunpack.c.l.b16 %v787
    %v3407 = vunpack.c.h.b16 %v787
    %v3408 = vunpack.c.l.b16 %v788
    %v3409 = vunpack.c.h.b16 %v788
    %v3410 = vunpack.c.l.b16 %v789
    %v3411 = vunpack.c.h.b16 %v789
    %v3412 = vunpack.c.l.b16 %v790
    %v3413 = vunpack.c.h.b16 %v790
    %v3414 = vunpack.c.l.b16 %v791
    %v3415 = vunpack.c.h.b16 %v791
    %v3416 = vunpack.c.l.b16 %v792
    %v3417 = vunpack.c.h.b16 %v792
    %v3418 = vunpack.c.l.b16 %v793
    %v3419 = vunpack.c.h.b16 %v793
    %v3420 = vunpack.c.l.b16 %v794
    %v3421 = vunpack.c.h.b16 %v794
    %v3422 = vunpack.c.l.b16 %v795
    %v3423 = vunpack.c.h.b16 %v795
    %v3424 = vunpack.c.l.b16 %v796
    %v3425 = vunpack.c.h.b16 %v796
    %v3426 = vunpack.c.l.b16 %v797
    %v3427 = vunpack.c.h.b16 %v797
    %v3428 = vunpack.c.l.b16 %v798
    %v3429 = vunpack.c.h.b16 %v798
    %v3430 = vunpack.c.l.b16 %v799
    %v3431 = vunpack.c.h.b16 %v799
    %v3432 = vunpack.c.l.b16 %v800
    %v3433 = vunpack.c.h.b16 %v800
    %v3434 = vunpack.c.l.b16 %v801
    %v3435 = vunpack.c.h.b16 %v801
    %v3436 = vunpack.c.l.b16 %v802
    %v3437 = vunpack.c.h.b16 %v802
    %v3438 = vunpack.c.l.b16 %v803
    %v3439 = vunpack.c.h.b16 %v803
    %v3440 = vunpack.c.l.b16 %v804
    %v3441 = vunpack.c.h.b16 %v804
    %v3442 = vunpack.c.l.b16 %v805
    %v3443 = vunpack.c.h.b16 %v805
    %v3444 = vunpack.c.l.b16 %v806
    %v3445 = vunpack.c.h.b16 %v806
    %v3446 = vunpack.c.l.b16 %v807
    %v3447 = vunpack.c.h.b16 %v807
    %v3448 = vunpack.c.l.b16 %v808
    %v3449 = vunpack.c.h.b16 %v808
    %v3450 = vunpack.c.l.b16 %v809
    %v3451 = vunpack.c.h.b16 %v809
    %v3452 = vunpack.c.l.b16 %v810
    %v3453 = vunpack.c.h.b16 %v810
    %v3454 = vunpack.c.l.b16 %v811
    %v3455 = vunpack.c.h.b16 %v811
    %v3456 = vunpack.c.l.b16 %v812
    %v3457 = vunpack.c.h.b16 %v812
    %v3458 = vunpack.c.l.b16 %v813
    %v3459 = vunpack.c.h.b16 %v813
    %v3460 = vunpack.c.l.b16 %v814
    %v3461 = vunpack.c.h.b16 %v814
    %v3462 = vunpack.c.l.b16 %v815
    %v3463 = vunpack.c.h.b16 %v815
    %v3464 = vunpack.c.l.b16 %v816
    %v3465 = vunpack.c.h.b16 %v816
    %v3466 = vunpack.c.l.b16 %v817
    %v3467 = vunpack.c.h.b16 %v817
    %v3468 = vunpack.c.l.b16 %v818
    %v3469 = vunpack.c.h.b16 %v818
    %v3470 = vunpack.c.l.b16 %v819
    %v3471 = vunpack.c.h.b16 %v819
    %v3472 = vunpack.c.l.b16 %v820
    %v3473 = vunpack.c.h.b16 %v820
    %v3474 = vunpack.c.l.b16 %v821
    %v3475 = vunpack.c.h.b16 %v821
    %v3476 = vunpack.c.l.b16 %v822
    %v3477 = vunpack.c.h.b16 %v822
    %v3478 = vunpack.c.l.b16 %v823
    %v3479 = vunpack.c.h.b16 %v823
    %v3480 = vunpack.c.l.b16 %v824
    %v3481 = vunpack.c.h.b16 %v824
    %v3482 = vunpack.c.l.b16 %v825
    %v3483 = vunpack.c.h.b16 %v825
    %v3484 = vunpack.c.l.b16 %v826
    %v3485 = vunpack.c.h.b16 %v826
    %v3486 = vunpack.c.l.b16 %v827
    %v3487 = vunpack.c.h.b16 %v827
    %v3488 = vunpack.c.l.b16 %v828
    %v3489 = vunpack.c.h.b16 %v828
    %v3490 = vunpack.c.l.b16 %v829
    %v3491 = vunpack.c.h.b16 %v829
    %v3492 = vunpack.c.l.b16 %v830
    %v3493 = vunpack.c.h.b16 %v830
    %v3494 = vunpack.c.l.b16 %v831
    %v3495 = vunpack.c.h.b16 %v831
    %v3496 = vunpack.c.l.b16 %v832
    %v3497 = vunpack.c.h.b16 %v832
    %v3498 = vunpack.c.l.b16 %v833
    %v3499 = vunpack.c.h.b16 %v833
    %v3500 = vunpack.c.l.b16 %v834
    %v3501 = vunpack.c.h.b16 %v834
    %v3502 = vunpack.c.l.b16 %v835
    %v3503 = vunpack.c.h.b16 %v835
    %v3504 = vunpack.c.l.b16 %v836
    %v3505 = vunpack.c.h.b16 %v836
    %v3506 = vunpack.c.l.b16 %v837
    %v3507 = vunpack.c.h.b16 %v837
    %v3508 = vunpack.c.l.b16 %v838
    %v3509 = vunpack.c.h.b16 %v838
    %v3510 = vunpack.c.l.b16 %v839
    %v3511 = vunpack.c.h.b16 %v839
    %v3512 = vunpack.c.l.b16 %v840
    %v3513 = vunpack.c.h.b16 %v840
    %v3514 = vunpack.c.l.b16 %v841
    %v3515 = vunpack.c.h.b16 %v841
    %v3516 = vunpack.c.l.b16 %v842
    %v3517 = vunpack.c.h.b16 %v842
    %v3518 = vunpack.c.l.b16 %v843
    %v3519 = vunpack.c.h.b16 %v843
    %v3520 = vunpack.c.l.b16 %v844
    %v3521 = vunpack.c.h.b16 %v844
    %v3522 = vunpack.c.l.b16 %v845
    %v3523 = vunpack.c.h.b16 %v845
    %v3524 = vunpack.c.l.b16 %v846
    %v3525 = vunpack.c.h.b16 %v846
    %v3526 = vunpack.c.l.b16 %v847
    %v3527 = vunpack.c.h.b16 %v847
    %v3528 = vunpack.c.l.b16 %v848
    %v3529 = vunpack.c.h.b16 %v848
    %v3530 = vunpack.c.l.b16 %v849
    %v3531 = vunpack.c.h.b16 %v849
    %v3532 = vunpack.c.l.b16 %v850
    %v3533 = vunpack.c.h.b16 %v850
    %v3534 = vunpack.c.l.b16 %v851
    %v3535 = vunpack.c.h.b16 %v851
    %v3536 = vunpack.c.l.b16 %v852
    %v3537 = vunpack.c.h.b16 %v852
    %v3538 = vunpack.c.l.b16 %v853
    %v3539 = vunpack.c.h.b16 %v853
    %v3540 = vunpack.c.l.b16 %v854
    %v3541 = vunpack.c.h.b16 %v854
    %v3542 = vunpack.c.l.b16 %v855
    %v3543 = vunpack.c.h.b16 %v855
    %v3544 = vunpack.c.l.b16 %v856
    %v3545 = vunpack.c.h.b16 %v856
    %v3546 = vunpack.c.l.b16 %v857
    %v3547 = vunpack.c.h.b16 %v857
    %v3548 = vunpack.c.l.b16 %v858
    %v3549 = vunpack.c.h.b16 %v858
    %v3550 = vunpack.c.l.b16 %v859
    %v3551 = vunpack.c.h.b16 %v859
    %v3552 = vunpack.c.l.b16 %v860
    %v3553 = vunpack.c.h.b16 %v860
    %v3554 = vunpack.c.l.b16 %v861
    %v3555 = vunpack.c.h.b16 %v861
    %v3556 = vunpack.c.l.b16 %v862
    %v3557 = vunpack.c.h.b16 %v862
    %v3558 = vunpack.c.l.b16 %v863
    %v3559 = vunpack.c.h.b16 %v863
    %v3560 = vunpack.c.l.b16 %v864
    %v3561 = vunpack.c.h.b16 %v864
    %v3562 = vunpack.c.l.b16 %v865
    %v3563 = vunpack.c.h.b16 %v865
    %v3564 = vunpack.c.l.b16 %v866
    %v3565 = vunpack.c.h.b16 %v866
    %v3566 = vunpack.c.l.b16 %v867
    %v3567 = vunpack.c.h.b16 %v867
    %v3568 = vunpack.c.l.b16 %v868
    %v3569 = vunpack.c.h.b16 %v868
    %v3570 = vunpack.c.l.b16 %v869
    %v3571 = vunpack.c.h.b16 %v869
    %v3572 = vunpack.c.l.b16 %v870
    %v3573 = vunpack.c.h.b16 %v870
    %v3574 = vunpack.c.l.b16 %v871
    %v3575 = vunpack.c.h.b16 %v871
    %v3576 = vunpack.c.l.b16 %v872
    %v3577 = vunpack.c.h.b16 %v872
    %v3578 = vunpack.c.l.b16 %v873
    %v3579 = vunpack.c.h.b16 %v873
    %v3580 = vunpack.c.l.b16 %v874
    %v3581 = vunpack.c.h.b16 %v874
    %v3582 = vunpack.c.l.b16 %v875
    %v3583 = vunpack.c.h.b16 %v875
    %v3584 = vunpack.c.l.b16 %v876
    %v3585 = vunpack.c.h.b16 %v876
    %v3586 = vunpack.c.l.b16 %v877
    %v3587 = vunpack.c.h.b16 %v877
    %v3588 = vunpack.c.l.b16 %v878
    %v3589 = vunpack.c.h.b16 %v878
    %v3590 = vunpack.c.l.b16 %v879
    %v3591 = vunpack.c.h.b16 %v879
    %v3592 = vunpack.c.l.b16 %v880
    %v3593 = vunpack.c.h.b16 %v880
    %v3594 = vunpack.c.l.b16 %v881
    %v3595 = vunpack.c.h.b16 %v881
    %v3596 = vunpack.c.l.b16 %v882
    %v3597 = vunpack.c.h.b16 %v882
    %v3598 = vunpack.c.l.b16 %v883
    %v3599 = vunpack.c.h.b16 %v883
    %v3600 = vunpack.c.l.b16 %v884
    %v3601 = vunpack.c.h.b16 %v884
    %v3602 = vunpack.c.l.b16 %v885
    %v3603 = vunpack.c.h.b16 %v885
    %v3604 = vunpack.c.l.b16 %v886
    %v3605 = vunpack.c.h.b16 %v886
    %v3606 = vunpack.c.l.b16 %v887
    %v3607 = vunpack.c.h.b16 %v887
    %v3608 = vunpack.c.l.b16 %v888
    %v3609 = vunpack.c.h.b16 %v888
    %v3610 = vunpack.c.l.b16 %v889
    %v3611 = vunpack.c.h.b16 %v889
    %v3612 = vunpack.c.l.b16 %v890
    %v3613 = vunpack.c.h.b16 %v890
    %v3614 = vunpack.c.l.b16 %v891
    %v3615 = vunpack.c.h.b16 %v891
    %v3616 = vunpack.c.l.b16 %v892
    %v3617 = vunpack.c.h.b16 %v892
    %v3618 = vunpack.c.l.b16 %v893
    %v3619 = vunpack.c.h.b16 %v893
    %v3620 = vunpack.c.l.b16 %v894
    %v3621 = vunpack.c.h.b16 %v894
    %v3622 = vunpack.c.l.b16 %v895
    %v3623 = vunpack.c.h.b16 %v895
    %v3624 = vunpack.c.l.b16 %v896
    %v3625 = vunpack.c.h.b16 %v896
    %v3626 = vunpack.c.l.b16 %v897
    %v3627 = vunpack.c.h.b16 %v897
    %v3628 = vunpack.c.l.b16 %v898
    %v3629 = vunpack.c.h.b16 %v898
    %v3630 = vunpack.c.l.b16 %v899
    %v3631 = vunpack.c.h.b16 %v899
    %v3632 = vunpack.c.l.b16 %v900
    %v3633 = vunpack.c.h.b16 %v900
    %v3634 = vunpack.c.l.b16 %v901
    %v3635 = vunpack.c.h.b16 %v901
    %v3636 = vunpack.c.l.b16 %v902
    %v3637 = vunpack.c.h.b16 %v902
    %v3638 = vunpack.c.l.b16 %v903
    %v3639 = vunpack.c.h.b16 %v903
    %v3640 = vunpack.c.l.b16 %v904
    %v3641 = vunpack.c.h.b16 %v904
    %v3642 = vunpack.c.l.b16 %v905
    %v3643 = vunpack.c.h.b16 %v905
    %v3644 = vunpack.c.l.b16 %v906
    %v3645 = vunpack.c.h.b16 %v906
    %v3646 = vunpack.c.l.b16 %v907
    %v3647 = vunpack.c.h.b16 %v907
    %v3648 = vunpack.c.l.b16 %v908
    %v3649 = vunpack.c.h.b16 %v908
    %v3650 = vunpack.c.l.b16 %v909
    %v3651 = vunpack.c.h.b16 %v909
    %v3652 = vunpack.c.l.b16 %v910
    %v3653 = vunpack.c.h.b16 %v910
    %v3654 = vunpack.c.l.b16 %v911
    %v3655 = vunpack.c.h.b16 %v911
    %v3656 = vunpack.c.l.b16 %v912
    %v3657 = vunpack.c.h.b16 %v912
    %v3658 = vunpack.c.l.b16 %v913
    %v3659 = vunpack.c.h.b16 %v913
    %v3660 = vunpack.c.l.b16 %v914
    %v3661 = vunpack.c.h.b16 %v914
    %v3662 = vunpack.c.l.b16 %v915
    %v3663 = vunpack.c.h.b16 %v915
    %v3664 = vunpack.c.l.b16 %v916
    %v3665 = vunpack.c.h.b16 %v916
    %v3666 = vunpack.c.l.b16 %v917
    %v3667 = vunpack.c.h.b16 %v917
    %v3668 = vunpack.c.l.b16 %v918
    %v3669 = vunpack.c.h.b16 %v918
    %v3670 = vunpack.c.l.b16 %v919
    %v3671 = vunpack.c.h.b16 %v919
    %v3672 = vunpack.c.l.b16 %v920
    %v3673 = vunpack.c.h.b16 %v920
    %v3674 = vunpack.c.l.b16 %v921
    %v3675 = vunpack.c.h.b16 %v921
    %v3676 = vunpack.c.l.b16 %v922
    %v3677 = vunpack.c.h.b16 %v922
    %v3678 = vunpack.c.l.b16 %v923
    %v3679 = vunpack.c.h.b16 %v923
    %v3680 = vunpack.c.l.b16 %v924
    %v3681 = vunpack.c.h.b16 %v924
    %v3682 = vunpack.c.l.b16 %v925
    %v3683 = vunpack.c.h.b16 %v925
    %v3684 = vunpack.c.l.b16 %v926
    %v3685 = vunpack.c.h.b16 %v926
    %v3686 = vunpack.c.l.b16 %v927
    %v3687 = vunpack.c.h.b16 %v927
    %v3688 = vunpack.c.l.b16 %v928
    %v3689 = vunpack.c.h.b16 %v928
    %v3690 = vunpack.c.l.b16 %v929
    %v3691 = vunpack.c.h.b16 %v929
    %v3692 = vunpack.c.l.b16 %v930
    %v3693 = vunpack.c.h.b16 %v930
    %v3694 = vunpack.c.l.b16 %v931
    %v3695 = vunpack.c.h.b16 %v931
    %v3696 = vunpack.c.l.b16 %v932
    %v3697 = vunpack.c.h.b16 %v932
    %v3698 = vunpack.c.l.b16 %v933
    %v3699 = vunpack.c.h.b16 %v933
    %v3700 = vunpack.c.l.b16 %v934
    %v3701 = vunpack.c.h.b16 %v934
    %v3702 = vunpack.c.l.b16 %v935
    %v3703 = vunpack.c.h.b16 %v935
    %v3704 = vunpack.c.l.b16 %v936
    %v3705 = vunpack.c.h.b16 %v936
    %v3706 = vunpack.c.l.b16 %v937
    %v3707 = vunpack.c.h.b16 %v937
    %v3708 = vunpack.c.l.b16 %v938
    %v3709 = vunpack.c.h.b16 %v938
    %v3710 = vunpack.c.l.b16 %v939
    %v3711 = vunpack.c.h.b16 %v939
    %v3712 = vunpack.c.l.b16 %v940
    %v3713 = vunpack.c.h.b16 %v940
    %v3714 = vunpack.c.l.b16 %v941
    %v3715 = vunpack.c.h.b16 %v941
    %v3716 = vunpack.c.l.b16 %v942
    %v3717 = vunpack.c.h.b16 %v942
    %v3718 = vunpack.c.l.b16 %v943
    %v3719 = vunpack.c.h.b16 %v943
    %v3720 = vunpack.c.l.b16 %v944
    %v3721 = vunpack.c.h.b16 %v944
    %v3722 = vunpack.c.l.b16 %v945
    %v3723 = vunpack.c.h.b16 %v945
    %v3724 = vunpack.c.l.b16 %v946
    %v3725 = vunpack.c.h.b16 %v946
    %v3726 = vunpack.c.l.b16 %v947
    %v3727 = vunpack.c.h.b16 %v947
    %v3728 = vunpack.c.l.b16 %v948
    %v3729 = vunpack.c.h.b16 %v948
    %v3730 = vunpack.c.l.b16 %v949
    %v3731 = vunpack.c.h.b16 %v949
    %v3732 = vunpack.c.l.b16 %v950
    %v3733 = vunpack.c.h.b16 %v950
    %v3734 = vunpack.c.l.b16 %v951
    %v3735 = vunpack.c.h.b16 %v951
    %v3736 = vunpack.c.l.b16 %v952
    %v3737 = vunpack.c.h.b16 %v952
    %v3738 = vunpack.c.l.b16 %v953
    %v3739 = vunpack.c.h.b16 %v953
    %v3740 = vunpack.c.l.b16 %v954
    %v3741 = vunpack.c.h.b16 %v954
    %v3742 = vunpack.c.l.b16 %v955
    %v3743 = vunpack.c.h.b16 %v955
    %v3744 = vunpack.c.l.b16 %v956
    %v3745 = vunpack.c.h.b16 %v956
    %v3746 = vunpack.c.l.b16 %v957
    %v3747 = vunpack.c.h.b16 %v957
    %v3748 = vunpack.c.l.b16 %v958
    %v3749 = vunpack.c.h.b16 %v958
    %v3750 = vunpack.c.l.b16 %v959
    %v3751 = vunpack.c.h.b16 %v959
    %v3752 = vunpack.c.l.b16 %v960
    %v3753 = vunpack.c.h.b16 %v960
    %v3754 = vunpack.c.l.b16 %v961
    %v3755 = vunpack.c.h.b16 %v961
    %v3756 = vunpack.c.l.b16 %v962
    %v3757 = vunpack.c.h.b16 %v962
    %v3758 = vunpack.c.l.b16 %v963
    %v3759 = vunpack.c.h.b16 %v963
    %v3760 = vunpack.c.l.b16 %v964
    %v3761 = vunpack.c.h.b16 %v964
    %v3762 = vunpack.c.l.b16 %v965
    %v3763 = vunpack.c.h.b16 %v965
    %v3764 = vunpack.c.l.b16 %v966
    %v3765 = vunpack.c.h.b16 %v966
    %v3766 = vunpack.c.l.b16 %v967
    %v3767 = vunpack.c.h.b16 %v967
    %v3768 = vunpack.c.l.b16 %v968
    %v3769 = vunpack.c.h.b16 %v968
    %v3770 = vunpack.c.l.b16 %v969
    %v3771 = vunpack.c.h.b16 %v969
    %v3772 = vunpack.c.l.b16 %v970
    %v3773 = vunpack.c.h.b16 %v970
    %v3774 = vunpack.c.l.b16 %v971
    %v3775 = vunpack.c.h.b16 %v971
    %v3776 = vunpack.c.l.b16 %v972
    %v3777 = vunpack.c.h.b16 %v972
    %v3778 = vunpack.c.l.b16 %v973
    %v3779 = vunpack.c.h.b16 %v973
    %v3780 = vunpack.c.l.b16 %v974
    %v3781 = vunpack.c.h.b16 %v974
    %v3782 = vunpack.c.l.b16 %v975
    %v3783 = vunpack.c.h.b16 %v975
    %v3784 = vunpack.c.l.b16 %v976
    %v3785 = vunpack.c.h.b16 %v976
    %v3786 = vunpack.c.l.b16 %v977
    %v3787 = vunpack.c.h.b16 %v977
    %v3788 = vunpack.c.l.b16 %v978
    %v3789 = vunpack.c.h.b16 %v978
    %v3790 = vunpack.c.l.b16 %v979
    %v3791 = vunpack.c.h.b16 %v979
    %v3792 = vunpack.c.l.b16 %v980
    %v3793 = vunpack.c.h.b16 %v980
    %v3794 = vunpack.c.l.b16 %v981
    %v3795 = vunpack.c.h.b16 %v981
    %v3796 = vunpack.c.l.b16 %v982
    %v3797 = vunpack.c.h.b16 %v982
    %v3798 = vunpack.c.l.b16 %v983
    %v3799 = vunpack.c.h.b16 %v983
    %v3800 = vunpack.c.l.b16 %v984
    %v3801 = vunpack.c.h.b16 %v984
    %v3802 = vunpack.c.l.b16 %v985
    %v3803 = vunpack.c.h.b16 %v985
    %v3804 = vunpack.c.l.b16 %v986
    %v3805 = vunpack.c.h.b16 %v986
    %v3806 = vunpack.c.l.b16 %v987
    %v3807 = vunpack.c.h.b16 %v987
    %v3808 = vunpack.c.l.b16 %v988
    %v3809 = vunpack.c.h.b16 %v988
    %v3810 = vunpack.c.l.b16 %v989
    %v3811 = vunpack.c.h.b16 %v989
    %v3812 = vunpack.c.l.b16 %v990
    %v3813 = vunpack.c.h.b16 %v990
    %v3814 = vunpack.c.l.b16 %v991
    %v3815 = vunpack.c.h.b16 %v991
    %v3816 = vunpack.c.l.b16 %v992
    %v3817 = vunpack.c.h.b16 %v992
    %v3818 = vunpack.c.l.b16 %v993
    %v3819 = vunpack.c.h.b16 %v993
    %v3820 = vunpack.c.l.b16 %v994
    %v3821 = vunpack.c.h.b16 %v994
    %v3822 = vunpack.c.l.b16 %v995
    %v3823 = vunpack.c.h.b16 %v995
    %v3824 = vunpack.c.l.b16 %v996
    %v3825 = vunpack.c.h.b16 %v996
    %v3826 = vunpack.c.l.b16 %v997
    %v3827 = vunpack.c.h.b16 %v997
    %v3828 = vunpack.c.l.b16 %v998
    %v3829 = vunpack.c.h.b16 %v998
    %v3830 = vunpack.c.l.b16 %v999
    %v3831 = vunpack.c.h.b16 %v999
    %v3832 = vunpack.c.l.b16 %v1000
    %v3833 = vunpack.c.h.b16 %v1000
    %v3834 = vunpack.c.l.b16 %v1001
    %v3835 = vunpack.c.h.b16 %v1001
    %v3836 = vunpack.c.l.b16 %v1002
    %v3837 = vunpack.c.h.b16 %v1002
    %v3838 = vunpack.c.l.b16 %v1003
    %v3839 = vunpack.c.h.b16 %v1003
    %v3840 = vunpack.c.l.b16 %v1004
    %v3841 = vunpack.c.h.b16 %v1004
    %v3842 = vunpack.c.l.b16 %v1005
    %v3843 = vunpack.c.h.b16 %v1005
    %v3844 = vunpack.c.l.b16 %v1006
    %v3845 = vunpack.c.h.b16 %v1006
    %v3846 = vunpack.c.l.b16 %v1007
    %v3847 = vunpack.c.h.b16 %v1007
    %v3848 = vunpack.c.l.b16 %v1008
    %v3849 = vunpack.c.h.b16 %v1008
    %v3850 = vunpack.c.l.b16 %v1009
    %v3851 = vunpack.c.h.b16 %v1009
    %v3852 = vunpack.c.l.b16 %v1010
    %v3853 = vunpack.c.h.b16 %v1010
    %v3854 = vunpack.c.l.b16 %v1011
    %v3855 = vunpack.c.h.b16 %v1011
    %v3856 = vunpack.c.l.b16 %v1012
    %v3857 = vunpack.c.h.b16 %v1012
    %v3858 = vunpack.c.l.b16 %v1013
    %v3859 = vunpack.c.h.b16 %v1013
    %v3860 = vunpack.c.l.b16 %v1014
    %v3861 = vunpack.c.h.b16 %v1014
    %v3862 = vunpack.c.l.b16 %v1015
    %v3863 = vunpack.c.h.b16 %v1015
    %v3864 = vunpack.c.l.b16 %v1016
    %v3865 = vunpack.c.h.b16 %v1016
    %v3866 = vunpack.c.l.b16 %v1017
    %v3867 = vunpack.c.h.b16 %v1017
    %v3868 = vunpack.c.l.b16 %v1018
    %v3869 = vunpack.c.h.b16 %v1018
    %v3870 = vunpack.c.l.b16 %v1019
    %v3871 = vunpack.c.h.b16 %v1019
    %v3872 = vunpack.c.l.b16 %v1020
    %v3873 = vunpack.c.h.b16 %v1020
    %v3874 = vunpack.c.l.b16 %v1021
    %v3875 = vunpack.c.h.b16 %v1021
    %v3876 = vunpack.c.l.b16 %v1022
    %v3877 = vunpack.c.h.b16 %v1022
    %v3878 = vunpack.c.l.b16 %v1023
    %v3879 = vunpack.c.h.b16 %v1023
    %v3880 = vunpack.c.l.b16 %v1024
    %v3881 = vunpack.c.h.b16 %v1024
    %v3882 = vunpack.c.l.b16 %v1025
    %v3883 = vunpack.c.h.b16 %v1025
    %v3884 = vunpack.c.l.b16 %v1026
    %v3885 = vunpack.c.h.b16 %v1026
    %v3886 = vunpack.c.l.b16 %v1027
    %v3887 = vunpack.c.h.b16 %v1027
    %v3888 = vunpack.c.l.b16 %v1028
    %v3889 = vunpack.c.h.b16 %v1028
    %v3890 = vunpack.c.l.b16 %v1029
    %v3891 = vunpack.c.h.b16 %v1029
    %v3892 = vunpack.c.l.b16 %v1030
    %v3893 = vunpack.c.h.b16 %v1030
    %v3894 = vunpack.c.l.b16 %v1031
    %v3895 = vunpack.c.h.b16 %v1031
    %v3896 = vunpack.c.l.b16 %v1032
    %v3897 = vunpack.c.h.b16 %v1032
    %v3898 = vunpack.c.l.b16 %v1033
    %v3899 = vunpack.c.h.b16 %v1033
    %v3900 = vunpack.c.l.b16 %v1034
    %v3901 = vunpack.c.h.b16 %v1034
    %v3902 = vunpack.c.l.b16 %v1035
    %v3903 = vunpack.c.h.b16 %v1035
    %v3904 = vunpack.c.l.b16 %v1036
    %v3905 = vunpack.c.h.b16 %v1036
    %v3906 = vunpack.c.l.b16 %v1037
    %v3907 = vunpack.c.h.b16 %v1037
    %v3908 = vunpack.c.l.b16 %v1038
    %v3909 = vunpack.c.h.b16 %v1038
    %v3910 = vunpack.c.l.b16 %v1039
    %v3911 = vunpack.c.h.b16 %v1039
    %v3912 = vunpack.c.l.b16 %v1040
    %v3913 = vunpack.c.h.b16 %v1040
    %v3914 = vunpack.c.l.b16 %v1041
    %v3915 = vunpack.c.h.b16 %v1041
    %v3916 = vunpack.c.l.b16 %v1042
    %v3917 = vunpack.c.h.b16 %v1042
    %v3918 = vunpack.c.l.b16 %v1043
    %v3919 = vunpack.c.h.b16 %v1043
    %v3920 = vunpack.c.l.b16 %v1044
    %v3921 = vunpack.c.h.b16 %v1044
    %v3922 = vunpack.c.l.b16 %v1045
    %v3923 = vunpack.c.h.b16 %v1045
    %v3924 = vunpack.c.l.b16 %v1046
    %v3925 = vunpack.c.h.b16 %v1046
    %v3926 = vunpack.c.l.b16 %v1047
    %v3927 = vunpack.c.h.b16 %v1047
    %v3928 = vunpack.c.l.b16 %v1048
    %v3929 = vunpack.c.h.b16 %v1048
    %v3930 = vunpack.c.l.b16 %v1049
    %v3931 = vunpack.c.h.b16 %v1049
    %v3932 = vunpack.c.l.b16 %v1050
    %v3933 = vunpack.c.h.b16 %v1050
    %v3934 = vunpack.c.l.b16 %v1051
    %v3935 = vunpack.c.h.b16 %v1051
    %v3936 = vunpack.c.l.b16 %v1052
    %v3937 = vunpack.c.h.b16 %v1052
    %v3938 = vunpack.c.l.b16 %v1053
    %v3939 = vunpack.c.h.b16 %v1053
    %v3940 = vunpack.c.l.b16 %v1054
    %v3941 = vunpack.c.h.b16 %v1054
    %v3942 = vunpack.c.l.b16 %v1055
    %v3943 = vunpack.c.h.b16 %v1055
    %v3944 = vunpack.c.l.b16 %v1056
    %v3945 = vunpack.c.h.b16 %v1056
    %v3946 = vunpack.c.l.b16 %v1057
    %v3947 = vunpack.c.h.b16 %v1057
    %v3948 = vunpack.c.l.b16 %v1058
    %v3949 = vunpack.c.h.b16 %v1058
    %v3950 = vunpack.c.l.b16 %v1059
    %v3951 = vunpack.c.h.b16 %v1059
    %v3952 = vunpack.c.l.b16 %v1060
    %v3953 = vunpack.c.h.b16 %v1060
    %v3954 = vunpack.c.l.b16 %v1061
    %v3955 = vunpack.c.h.b16 %v1061
    %v3956 = vunpack.c.l.b16 %v1062
    %v3957 = vunpack.c.h.b16 %v1062
    %v3958 = vunpack.c.l.b16 %v1063
    %v3959 = vunpack.c.h.b16 %v1063
    %v3960 = vunpack.c.l.b16 %v1064
    %v3961 = vunpack.c.h.b16 %v1064
    %v3962 = vunpack.c.l.b16 %v1065
    %v3963 = vunpack.c.h.b16 %v1065
    %v3964 = vunpack.c.l.b16 %v1066
    %v3965 = vunpack.c.h.b16 %v1066
    %v3966 = vunpack.c.l.b16 %v1067
    %v3967 = vunpack.c.h.b16 %v1067
    %v3968 = vunpack.c.l.b16 %v1068
    %v3969 = vunpack.c.h.b16 %v1068
    %v3970 = vunpack.c.l.b16 %v1069
    %v3971 = vunpack.c.h.b16 %v1069
    %v3972 = vunpack.c.l.b16 %v1070
    %v3973 = vunpack.c.h.b16 %v1070
    %v3974 = vunpack.c.l.b16 %v1071
    %v3975 = vunpack.c.h.b16 %v1071
    %v3976 = vunpack.c.l.b16 %v1072
    %v3977 = vunpack.c.h.b16 %v1072
    %v3978 = vunpack.c.l.b16 %v1073
    %v3979 = vunpack.c.h.b16 %v1073
    %v3980 = vunpack.c.l.b16 %v1074
    %v3981 = vunpack.c.h.b16 %v1074
    %v3982 = vunpack.c.l.b16 %v1075
    %v3983 = vunpack.c.h.b16 %v1075
    %v3984 = vunpack.c.l.b16 %v1076
    %v3985 = vunpack.c.h.b16 %v1076
    %v3986 = vunpack.c.l.b16 %v1077
    %v3987 = vunpack.c.h.b16 %v1077
    %v3988 = vunpack.c.l.b16 %v1078
    %v3989 = vunpack.c.h.b16 %v1078
    %v3990 = vunpack.c.l.b16 %v1079
    %v3991 = vunpack.c.h.b16 %v1079
    %v3992 = vunpack.c.l.b16 %v1080
    %v3993 = vunpack.c.h.b16 %v1080
    %v3994 = vunpack.c.l.b16 %v1081
    %v3995 = vunpack.c.h.b16 %v1081
    %v3996 = vunpack.c.l.b16 %v1082
    %v3997 = vunpack.c.h.b16 %v1082
    %v3998 = vunpack.c.l.b16 %v1083
    %v3999 = vunpack.c.h.b16 %v1083
    %v4000 = vunpack.c.l.b16 %v1084
    %v4001 = vunpack.c.h.b16 %v1084
    %v4002 = vunpack.c.l.b16 %v1085
    %v4003 = vunpack.c.h.b16 %v1085
    %v4004 = vunpack.c.l.b16 %v1086
    %v4005 = vunpack.c.h.b16 %v1086
    %v4006 = vunpack.c.l.b16 %v1087
    %v4007 = vunpack.c.h.b16 %v1087
    %v4008 = vunpack.c.l.b16 %v1088
    %v4009 = vunpack.c.h.b16 %v1088
    %v4010 = vunpack.c.l.b16 %v1089
    %v4011 = vunpack.c.h.b16 %v1089
    %v4012 = vunpack.c.l.b16 %v1090
    %v4013 = vunpack.c.h.b16 %v1090
    %v4014 = vunpack.c.l.b16 %v1091
    %v4015 = vunpack.c.h.b16 %v1091
    %v4016 = vunpack.c.l.b16 %v1092
    %v4017 = vunpack.c.h.b16 %v1092
    %v4018 = vunpack.c.l.b16 %v1093
    %v4019 = vunpack.c.h.b16 %v1093
    %v4020 = vunpack.c.l.b16 %v1094
    %v4021 = vunpack.c.h.b16 %v1094
    %v4022 = vunpack.c.l.b16 %v1095
    %v4023 = vunpack.c.h.b16 %v1095
    %v4024 = vunpack.c.l.b16 %v1096
    %v4025 = vunpack.c.h.b16 %v1096
    %v4026 = vunpack.c.l.b16 %v1097
    %v4027 = vunpack.c.h.b16 %v1097
    %v4028 = vunpack.c.l.b16 %v1098
    %v4029 = vunpack.c.h.b16 %v1098
    %v4030 = vunpack.c.l.b16 %v1099
    %v4031 = vunpack.c.h.b16 %v1099
    %v4032 = vunpack.c.l.b16 %v1100
    %v4033 = vunpack.c.h.b16 %v1100
    %v4034 = vunpack.c.l.b16 %v1101
    %v4035 = vunpack.c.h.b16 %v1101
    %v4036 = vunpack.c.l.b16 %v1102
    %v4037 = vunpack.c.h.b16 %v1102
    %v4038 = vunpack.c.l.b16 %v1103
    %v4039 = vunpack.c.h.b16 %v1103
    %v4040 = vunpack.c.l.b16 %v1104
    %v4041 = vunpack.c.h.b16 %v1104
    %v4042 = vunpack.c.l.b16 %v1105
    %v4043 = vunpack.c.h.b16 %v1105
    %v4044 = vunpack.c.l.b16 %v1106
    %v4045 = vunpack.c.h.b16 %v1106
    %v4046 = vunpack.c.l.b16 %v1107
    %v4047 = vunpack.c.h.b16 %v1107
    %v4048 = vunpack.c.l.b16 %v1108
    %v4049 = vunpack.c.h.b16 %v1108
    %v4050 = vunpack.c.l.b16 %v1109
    %v4051 = vunpack.c.h.b16 %v1109
    %v4052 = vunpack.c.l.b16 %v1110
    %v4053 = vunpack.c.h.b16 %v1110
    %v4054 = vunpack.c.l.b16 %v1111
    %v4055 = vunpack.c.h.b16 %v1111
    %v4056 = vunpack.c.l.b16 %v1112
    %v4057 = vunpack.c.h.b16 %v1112
    %v4058 = vunpack.c.l.b16 %v1113
    %v4059 = vunpack.c.h.b16 %v1113
    %v4060 = vunpack.c.l.b16 %v1114
    %v4061 = vunpack.c.h.b16 %v1114
    %v4062 = vunpack.c.l.b16 %v1115
    %v4063 = vunpack.c.h.b16 %v1115
    %v4064 = vunpack.c.l.b16 %v1116
    %v4065 = vunpack.c.h.b16 %v1116
    %v4066 = vunpack.c.l.b16 %v1117
    %v4067 = vunpack.c.h.b16 %v1117
    %v4068 = vunpack.c.l.b16 %v1118
    %v4069 = vunpack.c.h.b16 %v1118
    %v4070 = vunpack.c.l.b16 %v1119
    %v4071 = vunpack.c.h.b16 %v1119
    %v4072 = vunpack.c.l.b16 %v1120
    %v4073 = vunpack.c.h.b16 %v1120
    %v4074 = vunpack.c.l.b16 %v1121
    %v4075 = vunpack.c.h.b16 %v1121
    %v4076 = vunpack.c.l.b16 %v1122
    %v4077 = vunpack.c.h.b16 %v1122
    %v4078 = vunpack.c.l.b16 %v1123
    %v4079 = vunpack.c.h.b16 %v1123
    %v4080 = vunpack.c.l.b16 %v1124
    %v4081 = vunpack.c.h.b16 %v1124
    %v4082 = vunpack.c.l.b16 %v1125
    %v4083 = vunpack.c.h.b16 %v1125
    %v4084 = vunpack.c.l.b16 %v1126
    %v4085 = vunpack.c.h.b16 %v1126
    %v4086 = vunpack.c.l.b16 %v1127
    %v4087 = vunpack.c.h.b16 %v1127
    %v4088 = vunpack.c.l.b16 %v1128
    %v4089 = vunpack.c.h.b16 %v1128
    %v4090 = vunpack.c.l.b16 %v1129
    %v4091 = vunpack.c.h.b16 %v1129
    %v4092 = vunpack.c.l.b16 %v1130
    %v4093 = vunpack.c.h.b16 %v1130
    %v4094 = vunpack.c.l.b16 %v1131
    %v4095 = vunpack.c.h.b16 %v1131
    %v4096 = vunpack.c.l.b16 %v1132
    %v4097 = vunpack.c.h.b16 %v1132
    %v4098 = vunpack.c.l.b16 %v1133
    %v4099 = vunpack.c.h.b16 %v1133
    %v4100 = vunpack.c.l.b16 %v1134
    %v4101 = vunpack.c.h.b16 %v1134
    %v4102 = vunpack.c.l.b16 %v1135
    %v4103 = vunpack.c.h.b16 %v1135
    %v4104 = vunpack.c.l.b16 %v1136
    %v4105 = vunpack.c.h.b16 %v1136
    %v4106 = vunpack.c.l.b16 %v1137
    %v4107 = vunpack.c.h.b16 %v1137
    %v4108 = vunpack.c.l.b16 %v1138
    %v4109 = vunpack.c.h.b16 %v1138
    %v4110 = vunpack.c.l.b16 %v1139
    %v4111 = vunpack.c.h.b16 %v1139
    %v4112 = vunpack.c.l.b16 %v1140
    %v4113 = vunpack.c.h.b16 %v1140
    %v4114 = vunpack.c.l.b16 %v1141
    %v4115 = vunpack.c.h.b16 %v1141
    %v4116 = vunpack.c.l.b16 %v1142
    %v4117 = vunpack.c.h.b16 %v1142
    %v4118 = vunpack.c.l.b16 %v1143
    %v4119 = vunpack.c.h.b16 %v1143
    %v4120 = vunpack.c.l.b16 %v1144
    %v4121 = vunpack.c.h.b16 %v1144
    %v4122 = vpack.c.b16 %v2146, %v2138
    %v4123 = vpack.c.b16 %v2147, %v2139
    %v4124 = vpack.c.b16 %v2148, %v2140
    %v4125 = vpack.c.b16 %v2149, %v2141
    %v4126 = vpack.c.b16 %v2150, %v2142
    %v4127 = vpack.c.b16 %v2151, %v2143
    %v4128 = vpack.c.b16 %v2152, %v2144
    %v4129 = vpack.c.b16 %v2153, %v2145
    %v4130 = vpack.c.b16 %v2162, %v2154
    %v4131 = vpack.c.b16 %v2163, %v2155
    %v4132 = vpack.c.b16 %v2164, %v2156
    %v4133 = vpack.c.b16 %v2165, %v2157
    %v4134 = vpack.c.b16 %v2166, %v2158
    %v4135 = vpack.c.b16 %v2167, %v2159
    %v4136 = vpack.c.b16 %v2168, %v2160
    %v4137 = vpack.c.b16 %v2169, %v2161
    %v4138 = vpack.c.b16 %v2178, %v2170
    %v4139 = vpack.c.b16 %v2179, %v2171
    %v4140 = vpack.c.b16 %v2180, %v2172
    %v4141 = vpack.c.b16 %v2181, %v2173
    %v4142 = vpack.c.b16 %v2182, %v2174
    %v4143 = vpack.c.b16 %v2183, %v2175
    %v4144 = vpack.c.b16 %v2184, %v2176
    %v4145 = vpack.c.b16 %v2185, %v2177
    %v4146 = vpack.c.b16 %v2194, %v2186
    %v4147 = vpack.c.b16 %v2195, %v2187
    %v4148 = vpack.c.b16 %v2196, %v2188
    %v4149 = vpack.c.b16 %v2197, %v2189
    %v4150 = vpack.c.b16 %v2198, %v2190
    %v4151 = vpack.c.b16 %v2199, %v2191
    %v4152 = vpack.c.b16 %v2200, %v2192
    %v4153 = vpack.c.b16 %v2201, %v2193
    %v4154 = vpack.c.b16 %v2210, %v2202
    %v4155 = vpack.c.b16 %v2211, %v2203
    %v4156 = vpack.c.b16 %v2212, %v2204
    %v4157 = vpack.c.b16 %v2213, %v2205
    %v4158 = vpack.c.b16 %v2214, %v2206
    %v4159 = vpack.c.b16 %v2215, %v2207
    %v4160 = vpack.c.b16 %v2216, %v2208
    %v4161 = vpack.c.b16 %v2217, %v2209
    %v4162 = vpack.c.b16 %v2226, %v2218
    %v4163 = vpack.c.b16 %v2227, %v2219
    %v4164 = vpack.c.b16 %v2228, %v2220
    %v4165 = vpack.c.b16 %v2229, %v2221
    %v4166 = vpack.c.b16 %v2230, %v2222
    %v4167 = vpack.c.b16 %v2231, %v2223
    %v4168 = vpack.c.b16 %v2232, %v2224
    %v4169 = vpack.c.b16 %v2233, %v2225
    %v4170 = vpack.c.b16 %v2242, %v2234
    %v4171 = vpack.c.b16 %v2243, %v2235
    %v4172 = vpack.c.b16 %v2244, %v2236
    %v4173 = vpack.c.b16 %v2245, %v2237
    %v4174 = vpack.c.b16 %v2246, %v2238
    %v4175 = vpack.c.b16 %v2247, %v2239
    %v4176 = vpack.c.b16 %v2248, %v2240
    %v4177 = vpack.c.b16 %v2249, %v2241
    %v4178 = vpack.c.b16 %v2258, %v2250
    %v4179 = vpack.c.b16 %v2259, %v2251
    %v4180 = vpack.c.b16 %v2260, %v2252
    %v4181 = vpack.c.b16 %v2261, %v2253
    %v4182 = vpack.c.b16 %v2262, %v2254
    %v4183 = vpack.c.b16 %v2263, %v2255
    %v4184 = vpack.c.b16 %v2264, %v2256
    %v4185 = vpack.c.b16 %v2265, %v2257
    %v4186 = vpack.c.b16 %v2274, %v2266
    %v4187 = vpack.c.b16 %v2275, %v2267
    %v4188 = vpack.c.b16 %v2276, %v2268
    %v4189 = vpack.c.b16 %v2277, %v2269
    %v4190 = vpack.c.b16 %v2278, %v2270
    %v4191 = vpack.c.b16 %v2279, %v2271
    %v4192 = vpack.c.b16 %v2280, %v2272
    %v4193 = vpack.c.b16 %v2281, %v2273
    %v4194 = vpack.c.b16 %v2290, %v2282
    %v4195 = vpack.c.b16 %v2291, %v2283
    %v4196 = vpack.c.b16 %v2292, %v2284
    %v4197 = vpack.c.b16 %v2293, %v2285
    %v4198 = vpack.c.b16 %v2294, %v2286
    %v4199 = vpack.c.b16 %v2295, %v2287
    %v4200 = vpack.c.b16 %v2296, %v2288
    %v4201 = vpack.c.b16 %v2297, %v2289
    %v4202 = vpack.c.b16 %v2306, %v2298
    %v4203 = vpack.c.b16 %v2307, %v2299
    %v4204 = vpack.c.b16 %v2308, %v2300
    %v4205 = vpack.c.b16 %v2309, %v2301
    %v4206 = vpack.c.b16 %v2310, %v2302
    %v4207 = vpack.c.b16 %v2311, %v2303
    %v4208 = vpack.c.b16 %v2312, %v2304
    %v4209 = vpack.c.b16 %v2313, %v2305
    %v4210 = vpack.c.b16 %v2322, %v2314
    %v4211 = vpack.c.b16 %v2323, %v2315
    %v4212 = vpack.c.b16 %v2324, %v2316
    %v4213 = vpack.c.b16 %v2325, %v2317
    %v4214 = vpack.c.b16 %v2326, %v2318
    %v4215 = vpack.c.b16 %v2327, %v2319
    %v4216 = vpack.c.b16 %v2328, %v2320
    %v4217 = vpack.c.b16 %v2329, %v2321
    %v4218 = vpack.c.b16 %v2338, %v2330
    %v4219 = vpack.c.b16 %v2339, %v2331
    %v4220 = vpack.c.b16 %v2340, %v2332
    %v4221 = vpack.c.b16 %v2341, %v2333
    %v4222 = vpack.c.b16 %v2342, %v2334
    %v4223 = vpack.c.b16 %v2343, %v2335
    %v4224 = vpack.c.b16 %v2344, %v2336
    %v4225 = vpack.c.b16 %v2345, %v2337
    %v4226 = vpack.c.b16 %v2354, %v2346
    %v4227 = vpack.c.b16 %v2355, %v2347
    %v4228 = vpack.c.b16 %v2356, %v2348
    %v4229 = vpack.c.b16 %v2357, %v2349
    %v4230 = vpack.c.b16 %v2358, %v2350
    %v4231 = vpack.c.b16 %v2359, %v2351
    %v4232 = vpack.c.b16 %v2360, %v2352
    %v4233 = vpack.c.b16 %v2361, %v2353
    %v4234 = vpack.c.b16 %v2370, %v2362
    %v4235 = vpack.c.b16 %v2371, %v2363
    %v4236 = vpack.c.b16 %v2372, %v2364
    %v4237 = vpack.c.b16 %v2373, %v2365
    %v4238 = vpack.c.b16 %v2374, %v2366
    %v4239 = vpack.c.b16 %v2375, %v2367
    %v4240 = vpack.c.b16 %v2376, %v2368
    %v4241 = vpack.c.b16 %v2377, %v2369
    %v4242 = vpack.c.b16 %v2386, %v2378
    %v4243 = vpack.c.b16 %v2387, %v2379
    %v4244 = vpack.c.b16 %v2388, %v2380
    %v4245 = vpack.c.b16 %v2389, %v2381
    %v4246 = vpack.c.b16 %v2390, %v2382
    %v4247 = vpack.c.b16 %v2391, %v2383
    %v4248 = vpack.c.b16 %v2392, %v2384
    %v4249 = vpack.c.b16 %v2393, %v2385
    %v4250 = vpack.c.b16 %v2402, %v2394
    %v4251 = vpack.c.b16 %v2403, %v2395
    %v4252 = vpack.c.b16 %v2404, %v2396
    %v4253 = vpack.c.b16 %v2405, %v2397
    %v4254 = vpack.c.b16 %v2406, %v2398
    %v4255 = vpack.c.b16 %v2407, %v2399
    %v4256 = vpack.c.b16 %v2408, %v2400
    %v4257 = vpack.c.b16 %v2409, %v2401
    %v4258 = vpack.c.b16 %v2418, %v2410
    %v4259 = vpack.c.b16 %v2419, %v2411
    %v4260 = vpack.c.b16 %v2420, %v2412
    %v4261 = vpack.c.b16 %v2421, %v2413
    %v4262 = vpack.c.b16 %v2422, %v2414
    %v4263 = vpack.c.b16 %v2423, %v2415
    %v4264 = vpack.c.b16 %v2424, %v2416
    %v4265 = vpack.c.b16 %v2425, %v2417
    %v4266 = vpack.c.b16 %v2434, %v2426
    %v4267 = vpack.c.b16 %v2435, %v2427
    %v4268 = vpack.c.b16 %v2436, %v2428
    %v4269 = vpack.c.b16 %v2437, %v2429
    %v4270 = vpack.c.b16 %v2438, %v2430
    %v4271 = vpack.c.b16 %v2439, %v2431
    %v4272 = vpack.c.b16 %v2440, %v2432
    %v4273 = vpack.c.b16 %v2441, %v2433
    %v4274 = vpack.c.b16 %v2450, %v2442
    %v4275 = vpack.c.b16 %v2451, %v2443
    %v4276 = vpack.c.b16 %v2452, %v2444
    %v4277 = vpack.c.b16 %v2453, %v2445
    %v4278 = vpack.c.b16 %v2454, %v2446
    %v4279 = vpack.c.b16 %v2455, %v2447
    %v4280 = vpack.c.b16 %v2456, %v2448
    %v4281 = vpack.c.b16 %v2457, %v2449
    %v4282 = vpack.c.b16 %v2466, %v2458
    %v4283 = vpack.c.b16 %v2467, %v2459
    %v4284 = vpack.c.b16 %v2468, %v2460
    %v4285 = vpack.c.b16 %v2469, %v2461
    %v4286 = vpack.c.b16 %v2470, %v2462
    %v4287 = vpack.c.b16 %v2471, %v2463
    %v4288 = vpack.c.b16 %v2472, %v2464
    %v4289 = vpack.c.b16 %v2473, %v2465
    %v4290 = vpack.c.b16 %v2482, %v2474
    %v4291 = vpack.c.b16 %v2483, %v2475
    %v4292 = vpack.c.b16 %v2484, %v2476
    %v4293 = vpack.c.b16 %v2485, %v2477
    %v4294 = vpack.c.b16 %v2486, %v2478
    %v4295 = vpack.c.b16 %v2487, %v2479
    %v4296 = vpack.c.b16 %v2488, %v2480
    %v4297 = vpack.c.b16 %v2489, %v2481
    %v4298 = vpack.c.b16 %v2498, %v2490
    %v4299 = vpack.c.b16 %v2499, %v2491
    %v4300 = vpack.c.b16 %v2500, %v2492
    %v4301 = vpack.c.b16 %v2501, %v2493
    %v4302 = vpack.c.b16 %v2502, %v2494
    %v4303 = vpack.c.b16 %v2503, %v2495
    %v4304 = vpack.c.b16 %v2504, %v2496
    %v4305 = vpack.c.b16 %v2505, %v2497
    %v4306 = vpack.c.b16 %v2514, %v2506
    %v4307 = vpack.c.b16 %v2515, %v2507
    %v4308 = vpack.c.b16 %v2516, %v2508
    %v4309 = vpack.c.b16 %v2517, %v2509
    %v4310 = vpack.c.b16 %v2518, %v2510
    %v4311 = vpack.c.b16 %v2519, %v2511
    %v4312 = vpack.c.b16 %v2520, %v2512
    %v4313 = vpack.c.b16 %v2521, %v2513
    %v4314 = vpack.c.b16 %v2530, %v2522
    %v4315 = vpack.c.b16 %v2531, %v2523
    %v4316 = vpack.c.b16 %v2532, %v2524
    %v4317 = vpack.c.b16 %v2533, %v2525
    %v4318 = vpack.c.b16 %v2534, %v2526
    %v4319 = vpack.c.b16 %v2535, %v2527
    %v4320 = vpack.c.b16 %v2536, %v2528
    %v4321 = vpack.c.b16 %v2537, %v2529
    %v4322 = vpack.c.b16 %v2546, %v2538
    %v4323 = vpack.c.b16 %v2547, %v2539
    %v4324 = vpack.c.b16 %v2548, %v2540
    %v4325 = vpack.c.b16 %v2549, %v2541
    %v4326 = vpack.c.b16 %v2550, %v2542
    %v4327 = vpack.c.b16 %v2551, %v2543
    %v4328 = vpack.c.b16 %v2552, %v2544
    %v4329 = vpack.c.b16 %v2553, %v2545
    %v4330 = vpack.c.b16 %v2562, %v2554
    %v4331 = vpack.c.b16 %v2563, %v2555
    %v4332 = vpack.c.b16 %v2564, %v2556
    %v4333 = vpack.c.b16 %v2565, %v2557
    %v4334 = vpack.c.b16 %v2566, %v2558
    %v4335 = vpack.c.b16 %v2567, %v2559
    %v4336 = vpack.c.b16 %v2568, %v2560
    %v4337 = vpack.c.b16 %v2569, %v2561
    %v4338 = vpack.c.b16 %v2578, %v2570
    %v4339 = vpack.c.b16 %v2579, %v2571
    %v4340 = vpack.c.b16 %v2580, %v2572
    %v4341 = vpack.c.b16 %v2581, %v2573
    %v4342 = vpack.c.b16 %v2582, %v2574
    %v4343 = vpack.c.b16 %v2583, %v2575
    %v4344 = vpack.c.b16 %v2584, %v2576
    %v4345 = vpack.c.b16 %v2585, %v2577
    %v4346 = vpack.c.b16 %v2594, %v2586
    %v4347 = vpack.c.b16 %v2595, %v2587
    %v4348 = vpack.c.b16 %v2596, %v2588
    %v4349 = vpack.c.b16 %v2597, %v2589
    %v4350 = vpack.c.b16 %v2598, %v2590
    %v4351 = vpack.c.b16 %v2599, %v2591
    %v4352 = vpack.c.b16 %v2600, %v2592
    %v4353 = vpack.c.b16 %v2601, %v2593
    %v4354 = vpack.c.b16 %v2610, %v2602
    %v4355 = vpack.c.b16 %v2611, %v2603
    %v4356 = vpack.c.b16 %v2612, %v2604
    %v4357 = vpack.c.b16 %v2613, %v2605
    %v4358 = vpack.c.b16 %v2614, %v2606
    %v4359 = vpack.c.b16 %v2615, %v2607
    %v4360 = vpack.c.b16 %v2616, %v2608
    %v4361 = vpack.c.b16 %v2617, %v2609
    %v4362 = vpack.c.b16 %v2626, %v2618
    %v4363 = vpack.c.b16 %v2627, %v2619
    %v4364 = vpack.c.b16 %v2628, %v2620
    %v4365 = vpack.c.b16 %v2629, %v2621
    %v4366 = vpack.c.b16 %v2630, %v2622
    %v4367 = vpack.c.b16 %v2631, %v2623
    %v4368 = vpack.c.b16 %v2632, %v2624
    %v4369 = vpack.c.b16 %v2633, %v2625
    %v4370 = vpack.c.b16 %v2642, %v2634
    %v4371 = vpack.c.b16 %v2643, %v2635
    %v4372 = vpack.c.b16 %v2644, %v2636
    %v4373 = vpack.c.b16 %v2645, %v2637
    %v4374 = vpack.c.b16 %v2646, %v2638
    %v4375 = vpack.c.b16 %v2647, %v2639
    %v4376 = vpack.c.b16 %v2648, %v2640
    %v4377 = vpack.c.b16 %v2649, %v2641
    %v4378 = vpack.c.b16 %v2658, %v2650
    %v4379 = vpack.c.b16 %v2659, %v2651
    %v4380 = vpack.c.b16 %v2660, %v2652
    %v4381 = vpack.c.b16 %v2661, %v2653
    %v4382 = vpack.c.b16 %v2662, %v2654
    %v4383 = vpack.c.b16 %v2663, %v2655
    %v4384 = vpack.c.b16 %v2664, %v2656
    %v4385 = vpack.c.b16 %v2665, %v2657
    %v4386 = vpack.c.b16 %v2674, %v2666
    %v4387 = vpack.c.b16 %v2675, %v2667
    %v4388 = vpack.c.b16 %v2676, %v2668
    %v4389 = vpack.c.b16 %v2677, %v2669
    %v4390 = vpack.c.b16 %v2678, %v2670
    %v4391 = vpack.c.b16 %v2679, %v2671
    %v4392 = vpack.c.b16 %v2680, %v2672
    %v4393 = vpack.c.b16 %v2681, %v2673
    %v4394 = vpack.c.b16 %v2690, %v2682
    %v4395 = vpack.c.b16 %v2691, %v2683
    %v4396 = vpack.c.b16 %v2692, %v2684
    %v4397 = vpack.c.b16 %v2693, %v2685
    %v4398 = vpack.c.b16 %v2694, %v2686
    %v4399 = vpack.c.b16 %v2695, %v2687
    %v4400 = vpack.c.b16 %v2696, %v2688
    %v4401 = vpack.c.b16 %v2697, %v2689
    %v4402 = vpack.c.b16 %v2706, %v2698
    %v4403 = vpack.c.b16 %v2707, %v2699
    %v4404 = vpack.c.b16 %v2708, %v2700
    %v4405 = vpack.c.b16 %v2709, %v2701
    %v4406 = vpack.c.b16 %v2710, %v2702
    %v4407 = vpack.c.b16 %v2711, %v2703
    %v4408 = vpack.c.b16 %v2712, %v2704
    %v4409 = vpack.c.b16 %v2713, %v2705
    %v4410 = vpack.c.b16 %v2722, %v2714
    %v4411 = vpack.c.b16 %v2723, %v2715
    %v4412 = vpack.c.b16 %v2724, %v2716
    %v4413 = vpack.c.b16 %v2725, %v2717
    %v4414 = vpack.c.b16 %v2726, %v2718
    %v4415 = vpack.c.b16 %v2727, %v2719
    %v4416 = vpack.c.b16 %v2728, %v2720
    %v4417 = vpack.c.b16 %v2729, %v2721
    %v4418 = vpack.c.b16 %v2738, %v2730
    %v4419 = vpack.c.b16 %v2739, %v2731
    %v4420 = vpack.c.b16 %v2740, %v2732
    %v4421 = vpack.c.b16 %v2741, %v2733
    %v4422 = vpack.c.b16 %v2742, %v2734
    %v4423 = vpack.c.b16 %v2743, %v2735
    %v4424 = vpack.c.b16 %v2744, %v2736
    %v4425 = vpack.c.b16 %v2745, %v2737
    %v4426 = vpack.c.b16 %v2754, %v2746
    %v4427 = vpack.c.b16 %v2755, %v2747
    %v4428 = vpack.c.b16 %v2756, %v2748
    %v4429 = vpack.c.b16 %v2757, %v2749
    %v4430 = vpack.c.b16 %v2758, %v2750
    %v4431 = vpack.c.b16 %v2759, %v2751
    %v4432 = vpack.c.b16 %v2760, %v2752
    %v4433 = vpack.c.b16 %v2761, %v2753
    %v4434 = vpack.c.b16 %v2770, %v2762
    %v4435 = vpack.c.b16 %v2771, %v2763
    %v4436 = vpack.c.b16 %v2772, %v2764
    %v4437 = vpack.c.b16 %v2773, %v2765
    %v4438 = vpack.c.b16 %v2774, %v2766
    %v4439 = vpack.c.b16 %v2775, %v2767
    %v4440 = vpack.c.b16 %v2776, %v2768
    %v4441 = vpack.c.b16 %v2777, %v2769
    %v4442 = vpack.c.b16 %v2786, %v2778
    %v4443 = vpack.c.b16 %v2787, %v2779
    %v4444 = vpack.c.b16 %v2788, %v2780
    %v4445 = vpack.c.b16 %v2789, %v2781
    %v4446 = vpack.c.b16 %v2790, %v2782
    %v4447 = vpack.c.b16 %v2791, %v2783
    %v4448 = vpack.c.b16 %v2792, %v2784
    %v4449 = vpack.c.b16 %v2793, %v2785
    %v4450 = vpack.c.b16 %v2802, %v2794
    %v4451 = vpack.c.b16 %v2803, %v2795
    %v4452 = vpack.c.b16 %v2804, %v2796
    %v4453 = vpack.c.b16 %v2805, %v2797
    %v4454 = vpack.c.b16 %v2806, %v2798
    %v4455 = vpack.c.b16 %v2807, %v2799
    %v4456 = vpack.c.b16 %v2808, %v2800
    %v4457 = vpack.c.b16 %v2809, %v2801
    %v4458 = vpack.c.b16 %v2818, %v2810
    %v4459 = vpack.c.b16 %v2819, %v2811
    %v4460 = vpack.c.b16 %v2820, %v2812
    %v4461 = vpack.c.b16 %v2821, %v2813
    %v4462 = vpack.c.b16 %v2822, %v2814
    %v4463 = vpack.c.b16 %v2823, %v2815
    %v4464 = vpack.c.b16 %v2824, %v2816
    %v4465 = vpack.c.b16 %v2825, %v2817
    %v4466 = vpack.c.b16 %v2834, %v2826
    %v4467 = vpack.c.b16 %v2835, %v2827
    %v4468 = vpack.c.b16 %v2836, %v2828
    %v4469 = vpack.c.b16 %v2837, %v2829
    %v4470 = vpack.c.b16 %v2838, %v2830
    %v4471 = vpack.c.b16 %v2839, %v2831
    %v4472 = vpack.c.b16 %v2840, %v2832
    %v4473 = vpack.c.b16 %v2841, %v2833
    %v4474 = vpack.c.b16 %v2850, %v2842
    %v4475 = vpack.c.b16 %v2851, %v2843
    %v4476 = vpack.c.b16 %v2852, %v2844
    %v4477 = vpack.c.b16 %v2853, %v2845
    %v4478 = vpack.c.b16 %v2854, %v2846
    %v4479 = vpack.c.b16 %v2855, %v2847
    %v4480 = vpack.c.b16 %v2856, %v2848
    %v4481 = vpack.c.b16 %v2857, %v2849
    %v4482 = vpack.c.b16 %v2866, %v2858
    %v4483 = vpack.c.b16 %v2867, %v2859
    %v4484 = vpack.c.b16 %v2868, %v2860
    %v4485 = vpack.c.b16 %v2869, %v2861
    %v4486 = vpack.c.b16 %v2870, %v2862
    %v4487 = vpack.c.b16 %v2871, %v2863
    %v4488 = vpack.c.b16 %v2872, %v2864
    %v4489 = vpack.c.b16 %v2873, %v2865
    %v4490 = vpack.c.b16 %v2882, %v2874
    %v4491 = vpack.c.b16 %v2883, %v2875
    %v4492 = vpack.c.b16 %v2884, %v2876
    %v4493 = vpack.c.b16 %v2885, %v2877
    %v4494 = vpack.c.b16 %v2886, %v2878
    %v4495 = vpack.c.b16 %v2887, %v2879
    %v4496 = vpack.c.b16 %v2888, %v2880
    %v4497 = vpack.c.b16 %v2889, %v2881
    %v4498 = vpack.c.b16 %v2898, %v2890
    %v4499 = vpack.c.b16 %v2899, %v2891
    %v4500 = vpack.c.b16 %v2900, %v2892
    %v4501 = vpack.c.b16 %v2901, %v2893
    %v4502 = vpack.c.b16 %v2902, %v2894
    %v4503 = vpack.c.b16 %v2903, %v2895
    %v4504 = vpack.c.b16 %v2904, %v2896
    %v4505 = vpack.c.b16 %v2905, %v2897
    %v4506 = vpack.c.b16 %v2914, %v2906
    %v4507 = vpack.c.b16 %v2915, %v2907
    %v4508 = vpack.c.b16 %v2916, %v2908
    %v4509 = vpack.c.b16 %v2917, %v2909
    %v4510 = vpack.c.b16 %v2918, %v2910
    %v4511 = vpack.c.b16 %v2919, %v2911
    %v4512 = vpack.c.b16 %v2920, %v2912
    %v4513 = vpack.c.b16 %v2921, %v2913
    %v4514 = vpack.c.b16 %v2930, %v2922
    %v4515 = vpack.c.b16 %v2931, %v2923
    %v4516 = vpack.c.b16 %v2932, %v2924
    %v4517 = vpack.c.b16 %v2933, %v2925
    %v4518 = vpack.c.b16 %v2934, %v2926
    %v4519 = vpack.c.b16 %v2935, %v2927
    %v4520 = vpack.c.b16 %v2936, %v2928
    %v4521 = vpack.c.b16 %v2937, %v2929
    %v4522 = vpack.c.b16 %v2946, %v2938
    %v4523 = vpack.c.b16 %v2947, %v2939
    %v4524 = vpack.c.b16 %v2948, %v2940
    %v4525 = vpack.c.b16 %v2949, %v2941
    %v4526 = vpack.c.b16 %v2950, %v2942
    %v4527 = vpack.c.b16 %v2951, %v2943
    %v4528 = vpack.c.b16 %v2952, %v2944
    %v4529 = vpack.c.b16 %v2953, %v2945
    %v4530 = vpack.c.b16 %v2962, %v2954
    %v4531 = vpack.c.b16 %v2963, %v2955
    %v4532 = vpack.c.b16 %v2964, %v2956
    %v4533 = vpack.c.b16 %v2965, %v2957
    %v4534 = vpack.c.b16 %v2966, %v2958
    %v4535 = vpack.c.b16 %v2967, %v2959
    %v4536 = vpack.c.b16 %v2968, %v2960
    %v4537 = vpack.c.b16 %v2969, %v2961
    %v4538 = vpack.c.b16 %v2978, %v2970
    %v4539 = vpack.c.b16 %v2979, %v2971
    %v4540 = vpack.c.b16 %v2980, %v2972
    %v4541 = vpack.c.b16 %v2981, %v2973
    %v4542 = vpack.c.b16 %v2982, %v2974
    %v4543 = vpack.c.b16 %v2983, %v2975
    %v4544 = vpack.c.b16 %v2984, %v2976
    %v4545 = vpack.c.b16 %v2985, %v2977
    %v4546 = vpack.c.b16 %v2994, %v2986
    %v4547 = vpack.c.b16 %v2995, %v2987
    %v4548 = vpack.c.b16 %v2996, %v2988
    %v4549 = vpack.c.b16 %v2997, %v2989
    %v4550 = vpack.c.b16 %v2998, %v2990
    %v4551 = vpack.c.b16 %v2999, %v2991
    %v4552 = vpack.c.b16 %v3000, %v2992
    %v4553 = vpack.c.b16 %v3001, %v2993
    %v4554 = vpack.c.b16 %v3010, %v3002
    %v4555 = vpack.c.b16 %v3011, %v3003
    %v4556 = vpack.c.b16 %v3012, %v3004
    %v4557 = vpack.c.b16 %v3013, %v3005
    %v4558 = vpack.c.b16 %v3014, %v3006
    %v4559 = vpack.c.b16 %v3015, %v3007
    %v4560 = vpack.c.b16 %v3016, %v3008
    %v4561 = vpack.c.b16 %v3017, %v3009
    %v4562 = vpack.c.b16 %v3026, %v3018
    %v4563 = vpack.c.b16 %v3027, %v3019
    %v4564 = vpack.c.b16 %v3028, %v3020
    %v4565 = vpack.c.b16 %v3029, %v3021
    %v4566 = vpack.c.b16 %v3030, %v3022
    %v4567 = vpack.c.b16 %v3031, %v3023
    %v4568 = vpack.c.b16 %v3032, %v3024
    %v4569 = vpack.c.b16 %v3033, %v3025
    %v4570 = vpack.c.b16 %v3042, %v3034
    %v4571 = vpack.c.b16 %v3043, %v3035
    %v4572 = vpack.c.b16 %v3044, %v3036
    %v4573 = vpack.c.b16 %v3045, %v3037
    %v4574 = vpack.c.b16 %v3046, %v3038
    %v4575 = vpack.c.b16 %v3047, %v3039
    %v4576 = vpack.c.b16 %v3048, %v3040
    %v4577 = vpack.c.b16 %v3049, %v3041
    %v4578 = vpack.c.b16 %v3058, %v3050
    %v4579 = vpack.c.b16 %v3059, %v3051
    %v4580 = vpack.c.b16 %v3060, %v3052
    %v4581 = vpack.c.b16 %v3061, %v3053
    %v4582 = vpack.c.b16 %v3062, %v3054
    %v4583 = vpack.c.b16 %v3063, %v3055
    %v4584 = vpack.c.b16 %v3064, %v3056
    %v4585 = vpack.c.b16 %v3065, %v3057
    %v4586 = vpack.c.b16 %v3074, %v3066
    %v4587 = vpack.c.b16 %v3075, %v3067
    %v4588 = vpack.c.b16 %v3076, %v3068
    %v4589 = vpack.c.b16 %v3077, %v3069
    %v4590 = vpack.c.b16 %v3078, %v3070
    %v4591 = vpack.c.b16 %v3079, %v3071
    %v4592 = vpack.c.b16 %v3080, %v3072
    %v4593 = vpack.c.b16 %v3081, %v3073
    %v4594 = vpack.c.b16 %v3090, %v3082
    %v4595 = vpack.c.b16 %v3091, %v3083
    %v4596 = vpack.c.b16 %v3092, %v3084
    %v4597 = vpack.c.b16 %v3093, %v3085
    %v4598 = vpack.c.b16 %v3094, %v3086
    %v4599 = vpack.c.b16 %v3095, %v3087
    %v4600 = vpack.c.b16 %v3096, %v3088
    %v4601 = vpack.c.b16 %v3097, %v3089
    %v4602 = vpack.c.b16 %v3106, %v3098
    %v4603 = vpack.c.b16 %v3107, %v3099
    %v4604 = vpack.c.b16 %v3108, %v3100
    %v4605 = vpack.c.b16 %v3109, %v3101
    %v4606 = vpack.c.b16 %v3110, %v3102
    %v4607 = vpack.c.b16 %v3111, %v3103
    %v4608 = vpack.c.b16 %v3112, %v3104
    %v4609 = vpack.c.b16 %v3113, %v3105
    %v4610 = vpack.c.b16 %v3122, %v3114
    %v4611 = vpack.c.b16 %v3123, %v3115
    %v4612 = vpack.c.b16 %v3124, %v3116
    %v4613 = vpack.c.b16 %v3125, %v3117
    %v4614 = vpack.c.b16 %v3126, %v3118
    %v4615 = vpack.c.b16 %v3127, %v3119
    %v4616 = vpack.c.b16 %v3128, %v3120
    %v4617 = vpack.c.b16 %v3129, %v3121
    %v4618 = vpack.c.b16 %v3138, %v3130
    %v4619 = vpack.c.b16 %v3139, %v3131
    %v4620 = vpack.c.b16 %v3140, %v3132
    %v4621 = vpack.c.b16 %v3141, %v3133
    %v4622 = vpack.c.b16 %v3142, %v3134
    %v4623 = vpack.c.b16 %v3143, %v3135
    %v4624 = vpack.c.b16 %v3144, %v3136
    %v4625 = vpack.c.b16 %v3145, %v3137
    %v4626 = vpack.c.b16 %v3154, %v3146
    %v4627 = vpack.c.b16 %v3155, %v3147
    %v4628 = vpack.c.b16 %v3156, %v3148
    %v4629 = vpack.c.b16 %v3157, %v3149
    %v4630 = vpack.c.b16 %v3158, %v3150
    %v4631 = vpack.c.b16 %v3159, %v3151
    %v4632 = vpack.c.b16 %v3160, %v3152
    %v4633 = vpack.c.b16 %v3161, %v3153
    %v4634 = vpack.c.b16 %v3170, %v3162
    %v4635 = vpack.c.b16 %v3171, %v3163
    %v4636 = vpack.c.b16 %v3172, %v3164
    %v4637 = vpack.c.b16 %v3173, %v3165
    %v4638 = vpack.c.b16 %v3174, %v3166
    %v4639 = vpack.c.b16 %v3175, %v3167
    %v4640 = vpack.c.b16 %v3176, %v3168
    %v4641 = vpack.c.b16 %v3177, %v3169
    %v4642 = vpack.c.b16 %v3186, %v3178
    %v4643 = vpack.c.b16 %v3187, %v3179
    %v4644 = vpack.c.b16 %v3188, %v3180
    %v4645 = vpack.c.b16 %v3189, %v3181
    %v4646 = vpack.c.b16 %v3190, %v3182
    %v4647 = vpack.c.b16 %v3191, %v3183
    %v4648 = vpack.c.b16 %v3192, %v3184
    %v4649 = vpack.c.b16 %v3193, %v3185
    %v4650 = vpack.c.b16 %v3202, %v3194
    %v4651 = vpack.c.b16 %v3203, %v3195
    %v4652 = vpack.c.b16 %v3204, %v3196
    %v4653 = vpack.c.b16 %v3205, %v3197
    %v4654 = vpack.c.b16 %v3206, %v3198
    %v4655 = vpack.c.b16 %v3207, %v3199
    %v4656 = vpack.c.b16 %v3208, %v3200
    %v4657 = vpack.c.b16 %v3209, %v3201
    %v4658 = vpack.c.b16 %v3218, %v3210
    %v4659 = vpack.c.b16 %v3219, %v3211
    %v4660 = vpack.c.b16 %v3220, %v3212
    %v4661 = vpack.c.b16 %v3221, %v3213
    %v4662 = vpack.c.b16 %v3222, %v3214
    %v4663 = vpack.c.b16 %v3223, %v3215
    %v4664 = vpack.c.b16 %v3224, %v3216
    %v4665 = vpack.c.b16 %v3225, %v3217
    %v4666 = vpack.c.b16 %v3234, %v3226
    %v4667 = vpack.c.b16 %v3235, %v3227
    %v4668 = vpack.c.b16 %v3236, %v3228
    %v4669 = vpack.c.b16 %v3237, %v3229
    %v4670 = vpack.c.b16 %v3238, %v3230
    %v4671 = vpack.c.b16 %v3239, %v3231
    %v4672 = vpack.c.b16 %v3240, %v3232
    %v4673 = vpack.c.b16 %v3241, %v3233
    %v4674 = vpack.c.b16 %v3250, %v3242
    %v4675 = vpack.c.b16 %v3251, %v3243
    %v4676 = vpack.c.b16 %v3252, %v3244
    %v4677 = vpack.c.b16 %v3253, %v3245
    %v4678 = vpack.c.b16 %v3254, %v3246
    %v4679 = vpack.c.b16 %v3255, %v3247
    %v4680 = vpack.c.b16 %v3256, %v3248
    %v4681 = vpack.c.b16 %v3257, %v3249
    %v4682 = vpack.c.b16 %v3266, %v3258
    %v4683 = vpack.c.b16 %v3267, %v3259
    %v4684 = vpack.c.b16 %v3268, %v3260
    %v4685 = vpack.c.b16 %v3269, %v3261
    %v4686 = vpack.c.b16 %v3270, %v3262
    %v4687 = vpack.c.b16 %v3271, %v3263
    %v4688 = vpack.c.b16 %v3272, %v3264
    %v4689 = vpack.c.b16 %v3273, %v3265
    %v4690 = vpack.c.b16 %v3282, %v3274
    %v4691 = vpack.c.b16 %v3283, %v3275
    %v4692 = vpack.c.b16 %v3284, %v3276
    %v4693 = vpack.c.b16 %v3285, %v3277
    %v4694 = vpack.c.b16 %v3286, %v3278
    %v4695 = vpack.c.b16 %v3287, %v3279
    %v4696 = vpack.c.b16 %v3288, %v3280
    %v4697 = vpack.c.b16 %v3289, %v3281
    %v4698 = vpack.c.b16 %v3298, %v3290
    %v4699 = vpack.c.b16 %v3299, %v3291
    %v4700 = vpack.c.b16 %v3300, %v3292
    %v4701 = vpack.c.b16 %v3301, %v3293
    %v4702 = vpack.c.b16 %v3302, %v3294
    %v4703 = vpack.c.b16 %v3303, %v3295
    %v4704 = vpack.c.b16 %v3304, %v3296
    %v4705 = vpack.c.b16 %v3305, %v3297
    %v4706 = vpack.c.b16 %v3314, %v3306
    %v4707 = vpack.c.b16 %v3315, %v3307
    %v4708 = vpack.c.b16 %v3316, %v3308
    %v4709 = vpack.c.b16 %v3317, %v3309
    %v4710 = vpack.c.b16 %v3318, %v3310
    %v4711 = vpack.c.b16 %v3319, %v3311
    %v4712 = vpack.c.b16 %v3320, %v3312
    %v4713 = vpack.c.b16 %v3321, %v3313
    %v4714 = vpack.c.b16 %v3330, %v3322
    %v4715 = vpack.c.b16 %v3331, %v3323
    %v4716 = vpack.c.b16 %v3332, %v3324
    %v4717 = vpack.c.b16 %v3333, %v3325
    %v4718 = vpack.c.b16 %v3334, %v3326
    %v4719 = vpack.c.b16 %v3335, %v3327
    %v4720 = vpack.c.b16 %v3336, %v3328
    %v4721 = vpack.c.b16 %v3337, %v3329
    %v4722 = vpack.c.b16 %v3346, %v3338
    %v4723 = vpack.c.b16 %v3347, %v3339
    %v4724 = vpack.c.b16 %v3348, %v3340
    %v4725 = vpack.c.b16 %v3349, %v3341
    %v4726 = vpack.c.b16 %v3350, %v3342
    %v4727 = vpack.c.b16 %v3351, %v3343
    %v4728 = vpack.c.b16 %v3352, %v3344
    %v4729 = vpack.c.b16 %v3353, %v3345
    %v4730 = vpack.c.b16 %v3362, %v3354
    %v4731 = vpack.c.b16 %v3363, %v3355
    %v4732 = vpack.c.b16 %v3364, %v3356
    %v4733 = vpack.c.b16 %v3365, %v3357
    %v4734 = vpack.c.b16 %v3366, %v3358
    %v4735 = vpack.c.b16 %v3367, %v3359
    %v4736 = vpack.c.b16 %v3368, %v3360
    %v4737 = vpack.c.b16 %v3369, %v3361
    %v4738 = vpack.c.b16 %v3378, %v3370
    %v4739 = vpack.c.b16 %v3379, %v3371
    %v4740 = vpack.c.b16 %v3380, %v3372
    %v4741 = vpack.c.b16 %v3381, %v3373
    %v4742 = vpack.c.b16 %v3382, %v3374
    %v4743 = vpack.c.b16 %v3383, %v3375
    %v4744 = vpack.c.b16 %v3384, %v3376
    %v4745 = vpack.c.b16 %v3385, %v3377
    %v4746 = vpack.c.b16 %v3394, %v3386
    %v4747 = vpack.c.b16 %v3395, %v3387
    %v4748 = vpack.c.b16 %v3396, %v3388
    %v4749 = vpack.c.b16 %v3397, %v3389
    %v4750 = vpack.c.b16 %v3398, %v3390
    %v4751 = vpack.c.b16 %v3399, %v3391
    %v4752 = vpack.c.b16 %v3400, %v3392
    %v4753 = vpack.c.b16 %v3401, %v3393
    %v4754 = vpack.c.b16 %v3410, %v3402
    %v4755 = vpack.c.b16 %v3411, %v3403
    %v4756 = vpack.c.b16 %v3412, %v3404
    %v4757 = vpack.c.b16 %v3413, %v3405
    %v4758 = vpack.c.b16 %v3414, %v3406
    %v4759 = vpack.c.b16 %v3415, %v3407
    %v4760 = vpack.c.b16 %v3416, %v3408
    %v4761 = vpack.c.b16 %v3417, %v3409
    %v4762 = vpack.c.b16 %v3426, %v3418
    %v4763 = vpack.c.b16 %v3427, %v3419
    %v4764 = vpack.c.b16 %v3428, %v3420
    %v4765 = vpack.c.b16 %v3429, %v3421
    %v4766 = vpack.c.b16 %v3430, %v3422
    %v4767 = vpack.c.b16 %v3431, %v3423
    %v4768 = vpack.c.b16 %v3432, %v3424
    %v4769 = vpack.c.b16 %v3433, %v3425
    %v4770 = vpack.c.b16 %v3442, %v3434
    %v4771 = vpack.c.b16 %v3443, %v3435
    %v4772 = vpack.c.b16 %v3444, %v3436
    %v4773 = vpack.c.b16 %v3445, %v3437
    %v4774 = vpack.c.b16 %v3446, %v3438
    %v4775 = vpack.c.b16 %v3447, %v3439
    %v4776 = vpack.c.b16 %v3448, %v3440
    %v4777 = vpack.c.b16 %v3449, %v3441
    %v4778 = vpack.c.b16 %v3458, %v3450
    %v4779 = vpack.c.b16 %v3459, %v3451
    %v4780 = vpack.c.b16 %v3460, %v3452
    %v4781 = vpack.c.b16 %v3461, %v3453
    %v4782 = vpack.c.b16 %v3462, %v3454
    %v4783 = vpack.c.b16 %v3463, %v3455
    %v4784 = vpack.c.b16 %v3464, %v3456
    %v4785 = vpack.c.b16 %v3465, %v3457
    %v4786 = vpack.c.b16 %v3474, %v3466
    %v4787 = vpack.c.b16 %v3475, %v3467
    %v4788 = vpack.c.b16 %v3476, %v3468
    %v4789 = vpack.c.b16 %v3477, %v3469
    %v4790 = vpack.c.b16 %v3478, %v3470
    %v4791 = vpack.c.b16 %v3479, %v3471
    %v4792 = vpack.c.b16 %v3480, %v3472
    %v4793 = vpack.c.b16 %v3481, %v3473
    %v4794 = vpack.c.b16 %v3490, %v3482
    %v4795 = vpack.c.b16 %v3491, %v3483
    %v4796 = vpack.c.b16 %v3492, %v3484
    %v4797 = vpack.c.b16 %v3493, %v3485
    %v4798 = vpack.c.b16 %v3494, %v3486
    %v4799 = vpack.c.b16 %v3495, %v3487
    %v4800 = vpack.c.b16 %v3496, %v3488
    %v4801 = vpack.c.b16 %v3497, %v3489
    %v4802 = vpack.c.b16 %v3506, %v3498
    %v4803 = vpack.c.b16 %v3507, %v3499
    %v4804 = vpack.c.b16 %v3508, %v3500
    %v4805 = vpack.c.b16 %v3509, %v3501
    %v4806 = vpack.c.b16 %v3510, %v3502
    %v4807 = vpack.c.b16 %v3511, %v3503
    %v4808 = vpack.c.b16 %v3512, %v3504
    %v4809 = vpack.c.b16 %v3513, %v3505
    %v4810 = vpack.c.b16 %v3522, %v3514
    %v4811 = vpack.c.b16 %v3523, %v3515
    %v4812 = vpack.c.b16 %v3524, %v3516
    %v4813 = vpack.c.b16 %v3525, %v3517
    %v4814 = vpack.c.b16 %v3526, %v3518
    %v4815 = vpack.c.b16 %v3527, %v3519
    %v4816 = vpack.c.b16 %v3528, %v3520
    %v4817 = vpack.c.b16 %v3529, %v3521
    %v4818 = vpack.c.b16 %v3538, %v3530
    %v4819 = vpack.c.b16 %v3539, %v3531
    %v4820 = vpack.c.b16 %v3540, %v3532
    %v4821 = vpack.c.b16 %v3541, %v3533
    %v4822 = vpack.c.b16 %v3542, %v3534
    %v4823 = vpack.c.b16 %v3543, %v3535
    %v4824 = vpack.c.b16 %v3544, %v3536
    %v4825 = vpack.c.b16 %v3545, %v3537
    %v4826 = vpack.c.b16 %v3554, %v3546
    %v4827 = vpack.c.b16 %v3555, %v3547
    %v4828 = vpack.c.b16 %v3556, %v3548
    %v4829 = vpack.c.b16 %v3557, %v3549
    %v4830 = vpack.c.b16 %v3558, %v3550
    %v4831 = vpack.c.b16 %v3559, %v3551
    %v4832 = vpack.c.b16 %v3560, %v3552
    %v4833 = vpack.c.b16 %v3561, %v3553
    %v4834 = vpack.c.b16 %v3570, %v3562
    %v4835 = vpack.c.b16 %v3571, %v3563
    %v4836 = vpack.c.b16 %v3572, %v3564
    %v4837 = vpack.c.b16 %v3573, %v3565
    %v4838 = vpack.c.b16 %v3574, %v3566
    %v4839 = vpack.c.b16 %v3575, %v3567
    %v4840 = vpack.c.b16 %v3576, %v3568
    %v4841 = vpack.c.b16 %v3577, %v3569
    %v4842 = vpack.c.b16 %v3586, %v3578
    %v4843 = vpack.c.b16 %v3587, %v3579
    %v4844 = vpack.c.b16 %v3588, %v3580
    %v4845 = vpack.c.b16 %v3589, %v3581
    %v4846 = vpack.c.b16 %v3590, %v3582
    %v4847 = vpack.c.b16 %v3591, %v3583
    %v4848 = vpack.c.b16 %v3592, %v3584
    %v4849 = vpack.c.b16 %v3593, %v3585
    %v4850 = vpack.c.b16 %v3602, %v3594
    %v4851 = vpack.c.b16 %v3603, %v3595
    %v4852 = vpack.c.b16 %v3604, %v3596
    %v4853 = vpack.c.b16 %v3605, %v3597
    %v4854 = vpack.c.b16 %v3606, %v3598
    %v4855 = vpack.c.b16 %v3607, %v3599
    %v4856 = vpack.c.b16 %v3608, %v3600
    %v4857 = vpack.c.b16 %v3609, %v3601
    %v4858 = vpack.c.b16 %v3618, %v3610
    %v4859 = vpack.c.b16 %v3619, %v3611
    %v4860 = vpack.c.b16 %v3620, %v3612
    %v4861 = vpack.c.b16 %v3621, %v3613
    %v4862 = vpack.c.b16 %v3622, %v3614
    %v4863 = vpack.c.b16 %v3623, %v3615
    %v4864 = vpack.c.b16 %v3624, %v3616
    %v4865 = vpack.c.b16 %v3625, %v3617
    %v4866 = vpack.c.b16 %v3634, %v3626
    %v4867 = vpack.c.b16 %v3635, %v3627
    %v4868 = vpack.c.b16 %v3636, %v3628
    %v4869 = vpack.c.b16 %v3637, %v3629
    %v4870 = vpack.c.b16 %v3638, %v3630
    %v4871 = vpack.c.b16 %v3639, %v3631
    %v4872 = vpack.c.b16 %v3640, %v3632
    %v4873 = vpack.c.b16 %v3641, %v3633
    %v4874 = vpack.c.b16 %v3650, %v3642
    %v4875 = vpack.c.b16 %v3651, %v3643
    %v4876 = vpack.c.b16 %v3652, %v3644
    %v4877 = vpack.c.b16 %v3653, %v3645
    %v4878 = vpack.c.b16 %v3654, %v3646
    %v4879 = vpack.c.b16 %v3655, %v3647
    %v4880 = vpack.c.b16 %v3656, %v3648
    %v4881 = vpack.c.b16 %v3657, %v3649
    %v4882 = vpack.c.b16 %v3666, %v3658
    %v4883 = vpack.c.b16 %v3667, %v3659
    %v4884 = vpack.c.b16 %v3668, %v3660
    %v4885 = vpack.c.b16 %v3669, %v3661
    %v4886 = vpack.c.b16 %v3670, %v3662
    %v4887 = vpack.c.b16 %v3671, %v3663
    %v4888 = vpack.c.b16 %v3672, %v3664
    %v4889 = vpack.c.b16 %v3673, %v3665
    %v4890 = vpack.c.b16 %v3682, %v3674
    %v4891 = vpack.c.b16 %v3683, %v3675
    %v4892 = vpack.c.b16 %v3684, %v3676
    %v4893 = vpack.c.b16 %v3685, %v3677
    %v4894 = vpack.c.b16 %v3686, %v3678
    %v4895 = vpack.c.b16 %v3687, %v3679
    %v4896 = vpack.c.b16 %v3688, %v3680
    %v4897 = vpack.c.b16 %v3689, %v3681
    %v4898 = vpack.c.b16 %v3698, %v3690
    %v4899 = vpack.c.b16 %v3699, %v3691
    %v4900 = vpack.c.b16 %v3700, %v3692
    %v4901 = vpack.c.b16 %v3701, %v3693
    %v4902 = vpack.c.b16 %v3702, %v3694
    %v4903 = vpack.c.b16 %v3703, %v3695
    %v4904 = vpack.c.b16 %v3704, %v3696
    %v4905 = vpack.c.b16 %v3705, %v3697
    %v4906 = vpack.c.b16 %v3714, %v3706
    %v4907 = vpack.c.b16 %v3715, %v3707
    %v4908 = vpack.c.b16 %v3716, %v3708
    %v4909 = vpack.c.b16 %v3717, %v3709
    %v4910 = vpack.c.b16 %v3718, %v3710
    %v4911 = vpack.c.b16 %v3719, %v3711
    %v4912 = vpack.c.b16 %v3720, %v3712
    %v4913 = vpack.c.b16 %v3721, %v3713
    %v4914 = vpack.c.b16 %v3730, %v3722
    %v4915 = vpack.c.b16 %v3731, %v3723
    %v4916 = vpack.c.b16 %v3732, %v3724
    %v4917 = vpack.c.b16 %v3733, %v3725
    %v4918 = vpack.c.b16 %v3734, %v3726
    %v4919 = vpack.c.b16 %v3735, %v3727
    %v4920 = vpack.c.b16 %v3736, %v3728
    %v4921 = vpack.c.b16 %v3737, %v3729
    %v4922 = vpack.c.b16 %v3746, %v3738
    %v4923 = vpack.c.b16 %v3747, %v3739
    %v4924 = vpack.c.b16 %v3748, %v3740
    %v4925 = vpack.c.b16 %v3749, %v3741
    %v4926 = vpack.c.b16 %v3750, %v3742
    %v4927 = vpack.c.b16 %v3751, %v3743
    %v4928 = vpack.c.b16 %v3752, %v3744
    %v4929 = vpack.c.b16 %v3753, %v3745
    %v4930 = vpack.c.b16 %v3762, %v3754
    %v4931 = vpack.c.b16 %v3763, %v3755
    %v4932 = vpack.c.b16 %v3764, %v3756
    %v4933 = vpack.c.b16 %v3765, %v3757
    %v4934 = vpack.c.b16 %v3766, %v3758
    %v4935 = vpack.c.b16 %v3767, %v3759
    %v4936 = vpack.c.b16 %v3768, %v3760
    %v4937 = vpack.c.b16 %v3769, %v3761
    %v4938 = vpack.c.b16 %v3778, %v3770
    %v4939 = vpack.c.b16 %v3779, %v3771
    %v4940 = vpack.c.b16 %v3780, %v3772
    %v4941 = vpack.c.b16 %v3781, %v3773
    %v4942 = vpack.c.b16 %v3782, %v3774
    %v4943 = vpack.c.b16 %v3783, %v3775
    %v4944 = vpack.c.b16 %v3784, %v3776
    %v4945 = vpack.c.b16 %v3785, %v3777
    %v4946 = vpack.c.b16 %v3794, %v3786
    %v4947 = vpack.c.b16 %v3795, %v3787
    %v4948 = vpack.c.b16 %v3796, %v3788
    %v4949 = vpack.c.b16 %v3797, %v3789
    %v4950 = vpack.c.b16 %v3798, %v3790
    %v4951 = vpack.c.b16 %v3799, %v3791
    %v4952 = vpack.c.b16 %v3800, %v3792
    %v4953 = vpack.c.b16 %v3801, %v3793
    %v4954 = vpack.c.b16 %v3810, %v3802
    %v4955 = vpack.c.b16 %v3811, %v3803
    %v4956 = vpack.c.b16 %v3812, %v3804
    %v4957 = vpack.c.b16 %v3813, %v3805
    %v4958 = vpack.c.b16 %v3814, %v3806
    %v4959 = vpack.c.b16 %v3815, %v3807
    %v4960 = vpack.c.b16 %v3816, %v3808
    %v4961 = vpack.c.b16 %v3817, %v3809
    %v4962 = vpack.c.b16 %v3826, %v3818
    %v4963 = vpack.c.b16 %v3827, %v3819
    %v4964 = vpack.c.b16 %v3828, %v3820
    %v4965 = vpack.c.b16 %v3829, %v3821
    %v4966 = vpack.c.b16 %v3830, %v3822
    %v4967 = vpack.c.b16 %v3831, %v3823
    %v4968 = vpack.c.b16 %v3832, %v3824
    %v4969 = vpack.c.b16 %v3833, %v3825
    %v4970 = vpack.c.b16 %v3842, %v3834
    %v4971 = vpack.c.b16 %v3843, %v3835
    %v4972 = vpack.c.b16 %v3844, %v3836
    %v4973 = vpack.c.b16 %v3845, %v3837
    %v4974 = vpack.c.b16 %v3846, %v3838
    %v4975 = vpack.c.b16 %v3847, %v3839
    %v4976 = vpack.c.b16 %v3848, %v3840
    %v4977 = vpack.c.b16 %v3849, %v3841
    %v4978 = vpack.c.b16 %v3858, %v3850
    %v4979 = vpack.c.b16 %v3859, %v3851
    %v4980 = vpack.c.b16 %v3860, %v3852
    %v4981 = vpack.c.b16 %v3861, %v3853
    %v4982 = vpack.c.b16 %v3862, %v3854
    %v4983 = vpack.c.b16 %v3863, %v3855
    %v4984 = vpack.c.b16 %v3864, %v3856
    %v4985 = vpack.c.b16 %v3865, %v3857
    %v4986 = vpack.c.b16 %v3874, %v3866
    %v4987 = vpack.c.b16 %v3875, %v3867
    %v4988 = vpack.c.b16 %v3876, %v3868
    %v4989 = vpack.c.b16 %v3877, %v3869
    %v4990 = vpack.c.b16 %v3878, %v3870
    %v4991 = vpack.c.b16 %v3879, %v3871
    %v4992 = vpack.c.b16 %v3880, %v3872
    %v4993 = vpack.c.b16 %v3881, %v3873
    %v4994 = vpack.c.b16 %v3890, %v3882
    %v4995 = vpack.c.b16 %v3891, %v3883
    %v4996 = vpack.c.b16 %v3892, %v3884
    %v4997 = vpack.c.b16 %v3893, %v3885
    %v4998 = vpack.c.b16 %v3894, %v3886
    %v4999 = vpack.c.b16 %v3895, %v3887
    %v5000 = vpack.c.b16 %v3896, %v3888
    %v5001 = vpack.c.b16 %v3897, %v3889
    %v5002 = vpack.c.b16 %v3906, %v3898
    %v5003 = vpack.c.b16 %v3907, %v3899
    %v5004 = vpack.c.b16 %v3908, %v3900
    %v5005 = vpack.c.b16 %v3909, %v3901
    %v5006 = vpack.c.b16 %v3910, %v3902
    %v5007 = vpack.c.b16 %v3911, %v3903
    %v5008 = vpack.c.b16 %v3912, %v3904
    %v5009 = vpack.c.b16 %v3913, %v3905
    %v5010 = vpack.c.b16 %v3922, %v3914
    %v5011 = vpack.c.b16 %v3923, %v3915
    %v5012 = vpack.c.b16 %v3924, %v3916
    %v5013 = vpack.c.b16 %v3925, %v3917
    %v5014 = vpack.c.b16 %v3926, %v3918
    %v5015 = vpack.c.b16 %v3927, %v3919
    %v5016 = vpack.c.b16 %v3928, %v3920
    %v5017 = vpack.c.b16 %v3929, %v3921
    %v5018 = vpack.c.b16 %v3938, %v3930
    %v5019 = vpack.c.b16 %v3939, %v3931
    %v5020 = vpack.c.b16 %v3940, %v3932
    %v5021 = vpack.c.b16 %v3941, %v3933
    %v5022 = vpack.c.b16 %v3942, %v3934
    %v5023 = vpack.c.b16 %v3943, %v3935
    %v5024 = vpack.c.b16 %v3944, %v3936
    %v5025 = vpack.c.b16 %v3945, %v3937
    %v5026 = vpack.c.b16 %v3954, %v3946
    %v5027 = vpack.c.b16 %v3955, %v3947
    %v5028 = vpack.c.b16 %v3956, %v3948
    %v5029 = vpack.c.b16 %v3957, %v3949
    %v5030 = vpack.c.b16 %v3958, %v3950
    %v5031 = vpack.c.b16 %v3959, %v3951
    %v5032 = vpack.c.b16 %v3960, %v3952
    %v5033 = vpack.c.b16 %v3961, %v3953
    %v5034 = vpack.c.b16 %v3970, %v3962
    %v5035 = vpack.c.b16 %v3971, %v3963
    %v5036 = vpack.c.b16 %v3972, %v3964
    %v5037 = vpack.c.b16 %v3973, %v3965
    %v5038 = vpack.c.b16 %v3974, %v3966
    %v5039 = vpack.c.b16 %v3975, %v3967
    %v5040 = vpack.c.b16 %v3976, %v3968
    %v5041 = vpack.c.b16 %v3977, %v3969
    %v5042 = vpack.c.b16 %v3986, %v3978
    %v5043 = vpack.c.b16 %v3987, %v3979
    %v5044 = vpack.c.b16 %v3988, %v3980
    %v5045 = vpack.c.b16 %v3989, %v3981
    %v5046 = vpack.c.b16 %v3990, %v3982
    %v5047 = vpack.c.b16 %v3991, %v3983
    %v5048 = vpack.c.b16 %v3992, %v3984
    %v5049 = vpack.c.b16 %v3993, %v3985
    %v5050 = vpack.c.b16 %v4002, %v3994
    %v5051 = vpack.c.b16 %v4003, %v3995
    %v5052 = vpack.c.b16 %v4004, %v3996
    %v5053 = vpack.c.b16 %v4005, %v3997
    %v5054 = vpack.c.b16 %v4006, %v3998
    %v5055 = vpack.c.b16 %v4007, %v3999
    %v5056 = vpack.c.b16 %v4008, %v4000
    %v5057 = vpack.c.b16 %v4009, %v4001
    %v5058 = vpack.c.b16 %v4018, %v4010
    %v5059 = vpack.c.b16 %v4019, %v4011
    %v5060 = vpack.c.b16 %v4020, %v4012
    %v5061 = vpack.c.b16 %v4021, %v4013
    %v5062 = vpack.c.b16 %v4022, %v4014
    %v5063 = vpack.c.b16 %v4023, %v4015
    %v5064 = vpack.c.b16 %v4024, %v4016
    %v5065 = vpack.c.b16 %v4025, %v4017
    %v5066 = vpack.c.b16 %v4034, %v4026
    %v5067 = vpack.c.b16 %v4035, %v4027
    %v5068 = vpack.c.b16 %v4036, %v4028
    %v5069 = vpack.c.b16 %v4037, %v4029
    %v5070 = vpack.c.b16 %v4038, %v4030
    %v5071 = vpack.c.b16 %v4039, %v4031
    %v5072 = vpack.c.b16 %v4040, %v4032
    %v5073 = vpack.c.b16 %v4041, %v4033
    %v5074 = vpack.c.b16 %v4050, %v4042
    %v5075 = vpack.c.b16 %v4051, %v4043
    %v5076 = vpack.c.b16 %v4052, %v4044
    %v5077 = vpack.c.b16 %v4053, %v4045
    %v5078 = vpack.c.b16 %v4054, %v4046
    %v5079 = vpack.c.b16 %v4055, %v4047
    %v5080 = vpack.c.b16 %v4056, %v4048
    %v5081 = vpack.c.b16 %v4057, %v4049
    %v5082 = vpack.c.b16 %v4066, %v4058
    %v5083 = vpack.c.b16 %v4067, %v4059
    %v5084 = vpack.c.b16 %v4068, %v4060
    %v5085 = vpack.c.b16 %v4069, %v4061
    %v5086 = vpack.c.b16 %v4070, %v4062
    %v5087 = vpack.c.b16 %v4071, %v4063
    %v5088 = vpack.c.b16 %v4072, %v4064
    %v5089 = vpack.c.b16 %v4073, %v4065
    %v5090 = vpack.c.b16 %v4082, %v4074
    %v5091 = vpack.c.b16 %v4083, %v4075
    %v5092 = vpack.c.b16 %v4084, %v4076
    %v5093 = vpack.c.b16 %v4085, %v4077
    %v5094 = vpack.c.b16 %v4086, %v4078
    %v5095 = vpack.c.b16 %v4087, %v4079
    %v5096 = vpack.c.b16 %v4088, %v4080
    %v5097 = vpack.c.b16 %v4089, %v4081
    %v5098 = vpack.c.b16 %v4098, %v4090
    %v5099 = vpack.c.b16 %v4099, %v4091
    %v5100 = vpack.c.b16 %v4100, %v4092
    %v5101 = vpack.c.b16 %v4101, %v4093
    %v5102 = vpack.c.b16 %v4102, %v4094
    %v5103 = vpack.c.b16 %v4103, %v4095
    %v5104 = vpack.c.b16 %v4104, %v4096
    %v5105 = vpack.c.b16 %v4105, %v4097
    %v5106 = vpack.c.b16 %v4114, %v4106
    %v5107 = vpack.c.b16 %v4115, %v4107
    %v5108 = vpack.c.b16 %v4116, %v4108
    %v5109 = vpack.c.b16 %v4117, %v4109
    %v5110 = vpack.c.b16 %v4118, %v4110
    %v5111 = vpack.c.b16 %v4119, %v4111
    %v5112 = vpack.c.b16 %v4120, %v4112
    %v5113 = vpack.c.b16 %v4121, %v4113
    %v6107 = vlaneseq
    %v6108 = vshrl.u32 %v6107, 7
    %v6109 = vsub.s32 0, %v6108
    %v6110 = vrot.slane %v1145, %v6109
    %v6111 = vlaneseq
    %v6112 = vshrl.u32 %v6111, 7
    %v6113 = vsub.s32 1, %v6112
    %v6114 = vrot.slane %v1145, %v6113
    %v6115 = vlaneseq
    %v6116 = vshrl.u32 %v6115, 7
    %v6117 = vsub.s32 2, %v6116
    %v6118 = vrot.slane %v1145, %v6117
    %v6119 = vlaneseq
    %v6120 = vshrl.u32 %v6119, 7
    %v6121 = vsub.s32 3, %v6120
    %v6122 = vrot.slane %v1145, %v6121
    %v6123 = vlaneseq
    %v6124 = vshrl.u32 %v6123, 7
    %v6125 = vsub.s32 4, %v6124
    %v6126 = vrot.slane %v1145, %v6125
    %v6127 = vlaneseq
    %v6128 = vshrl.u32 %v6127, 7
    %v6129 = vsub.s32 5, %v6128
    %v6130 = vrot.slane %v1145, %v6129
    %v6131 = vlaneseq
    %v6132 = vshrl.u32 %v6131, 7
    %v6133 = vsub.s32 6, %v6132
    %v6134 = vrot.slane %v1145, %v6133
    %v6135 = vlaneseq
    %v6136 = vshrl.u32 %v6135, 7
    %v6137 = vsub.s32 7, %v6136
    %v6138 = vrot.slane %v1145, %v6137
    %vm6147 = vcmask 523264
    %v6149 = vsel %vm6147, %v152, 0
    %6151 = vmatprep.subr.bf16.mxu0 %v4123
    %6152 = vmatpush1.bf16.msra.mxu0 %v4122
    %6153 = vmatprep.subr.bf16.mxu0 %v4131
    %6154 = vmatpush1.bf16.msra.mxu0 %v4130
    %6155 = vmatprep.subr.bf16.mxu0 %v4139
    %6156 = vmatpush1.bf16.msra.mxu0 %v4138
    %6157 = vmatprep.subr.bf16.mxu0 %v4147
    %6158 = vmatpush1.bf16.msra.mxu0 %v4146
    %6159 = vmatprep.subr.bf16.mxu0 %v4155
    %6160 = vmatpush1.bf16.msra.mxu0 %v4154
    %6161 = vmatprep.subr.bf16.mxu0 %v4163
    %6162 = vmatpush1.bf16.msra.mxu0 %v4162
    %6163 = vmatprep.subr.bf16.mxu0 %v4171
    %6164 = vmatpush1.bf16.msra.mxu0 %v4170
    %6165 = vmatprep.subr.bf16.mxu0 %v4179
    %6166 = vmatpush1.bf16.msra.mxu0 %v4178
    %6167 = vmatprep.subr.bf16.mxu0 %v4187
    %6168 = vmatpush1.bf16.msra.mxu0 %v4186
    %6169 = vmatprep.subr.bf16.mxu0 %v4195
    %6170 = vmatpush1.bf16.msra.mxu0 %v4194
    %6171 = vmatprep.subr.bf16.mxu0 %v4203
    %6172 = vmatpush1.bf16.msra.mxu0 %v4202
    %6173 = vmatprep.subr.bf16.mxu0 %v4211
    %6174 = vmatpush1.bf16.msra.mxu0 %v4210
    %6175 = vmatprep.subr.bf16.mxu0 %v4219
    %6176 = vmatpush1.bf16.msra.mxu0 %v4218
    %6177 = vmatprep.subr.bf16.mxu0 %v4227
    %6178 = vmatpush1.bf16.msra.mxu0 %v4226
    %6179 = vmatprep.subr.bf16.mxu0 %v4235
    %6180 = vmatpush1.bf16.msra.mxu0 %v4234
    %6181 = vmatprep.subr.bf16.mxu0 %v4243
    %6182 = vmatpush1.bf16.msra.mxu0 %v4242
    %6183 = vmatprep.mubr.bf16.mxu0 %v138
    %6184 = vmatmul.mubr.bf16.gmra.mrb[0].mxu0 %v137
    %v6185 = vpop.f32.mrb[0].mxu0
    %v6186 = vadd.f32 %v6110, %v6185
    %v6187 = vpop.f32.mrb[0].mxu0
    %v6188 = vadd.f32 %v6114, %v6187
    %v6189 = vpop.f32.mrb[0].mxu0
    %v6190 = vpop.f32.mrb[0].mxu0
    %6191 = vdwg.mxu0
    %6192 = vmatprep.subr.bf16.mxu0 %v4251
    %6193 = vmatpush1.bf16.msra.mxu0 %v4250
    %6194 = vmatprep.subr.bf16.mxu0 %v4259
    %6195 = vmatpush1.bf16.msra.mxu0 %v4258
    %6196 = vmatprep.subr.bf16.mxu0 %v4267
    %6197 = vmatpush1.bf16.msra.mxu0 %v4266
    %6198 = vmatprep.subr.bf16.mxu0 %v4275
    %6199 = vmatpush1.bf16.msra.mxu0 %v4274
    %6200 = vmatprep.subr.bf16.mxu0 %v4283
    %6201 = vmatpush1.bf16.msra.mxu0 %v4282
    %6202 = vmatprep.subr.bf16.mxu0 %v4291
    %6203 = vmatpush1.bf16.msra.mxu0 %v4290
    %6204 = vmatprep.subr.bf16.mxu0 %v4299
    %6205 = vmatpush1.bf16.msra.mxu0 %v4298
    %6206 = vmatprep.subr.bf16.mxu0 %v4307
    %6207 = vmatpush1.bf16.msra.mxu0 %v4306
    %6208 = vmatprep.subr.bf16.mxu0 %v4315
    %6209 = vmatpush1.bf16.msra.mxu0 %v4314
    %6210 = vmatprep.subr.bf16.mxu0 %v4323
    %6211 = vmatpush1.bf16.msra.mxu0 %v4322
    %6212 = vmatprep.subr.bf16.mxu0 %v4331
    %6213 = vmatpush1.bf16.msra.mxu0 %v4330
    %6214 = vmatprep.subr.bf16.mxu0 %v4339
    %6215 = vmatpush1.bf16.msra.mxu0 %v4338
    %6216 = vmatprep.subr.bf16.mxu0 %v4347
    %6217 = vmatpush1.bf16.msra.mxu0 %v4346
    %6218 = vmatprep.subr.bf16.mxu0 %v4355
    %6219 = vmatpush1.bf16.msra.mxu0 %v4354
    %6220 = vmatprep.subr.bf16.mxu0 %v4363
    %6221 = vmatpush1.bf16.msra.mxu0 %v4362
    %6222 = vmatprep.subr.bf16.mxu0 %v4371
    %6223 = vmatpush1.bf16.msra.mxu0 %v4370
    %6224 = vmatprep.mubr.bf16.mxu0 %v140
    %6225 = vmatmul.mubr.bf16.gmra.mrb[0].mxu0 %v139
    %v6226 = vpop.f32.mrb[0].mxu0
    %v6227 = vadd.f32 %v6186, %v6226
    %v6228 = vpop.f32.mrb[0].mxu0
    %v6229 = vadd.f32 %v6188, %v6228
    %v6230 = vpop.f32.mrb[0].mxu0
    %v6231 = vpop.f32.mrb[0].mxu0
    %6232 = vdwg.mxu0
    %6233 = vmatprep.subr.bf16.mxu0 %v4379
    %6234 = vmatpush1.bf16.msra.mxu0 %v4378
    %6235 = vmatprep.subr.bf16.mxu0 %v4387
    %6236 = vmatpush1.bf16.msra.mxu0 %v4386
    %6237 = vmatprep.subr.bf16.mxu0 %v4395
    %6238 = vmatpush1.bf16.msra.mxu0 %v4394
    %6239 = vmatprep.subr.bf16.mxu0 %v4403
    %6240 = vmatpush1.bf16.msra.mxu0 %v4402
    %6241 = vmatprep.subr.bf16.mxu0 %v4411
    %6242 = vmatpush1.bf16.msra.mxu0 %v4410
    %6243 = vmatprep.subr.bf16.mxu0 %v4419
    %6244 = vmatpush1.bf16.msra.mxu0 %v4418
    %6245 = vmatprep.subr.bf16.mxu0 %v4427
    %6246 = vmatpush1.bf16.msra.mxu0 %v4426
    %6247 = vmatprep.subr.bf16.mxu0 %v4435
    %6248 = vmatpush1.bf16.msra.mxu0 %v4434
    %6249 = vmatprep.subr.bf16.mxu0 %v4443
    %6250 = vmatpush1.bf16.msra.mxu0 %v4442
    %6251 = vmatprep.subr.bf16.mxu0 %v4451
    %6252 = vmatpush1.bf16.msra.mxu0 %v4450
    %6253 = vmatprep.subr.bf16.mxu0 %v4459
    %6254 = vmatpush1.bf16.msra.mxu0 %v4458
    %6255 = vmatprep.subr.bf16.mxu0 %v4467
    %6256 = vmatpush1.bf16.msra.mxu0 %v4466
    %6257 = vmatprep.subr.bf16.mxu0 %v4475
    %6258 = vmatpush1.bf16.msra.mxu0 %v4474
    %6259 = vmatprep.subr.bf16.mxu0 %v4483
    %6260 = vmatpush1.bf16.msra.mxu0 %v4482
    %6261 = vmatprep.subr.bf16.mxu0 %v4491
    %6262 = vmatpush1.bf16.msra.mxu0 %v4490
    %6263 = vmatprep.subr.bf16.mxu0 %v4499
    %6264 = vmatpush1.bf16.msra.mxu0 %v4498
    %6265 = vmatprep.mubr.bf16.mxu0 %v142
    %6266 = vmatmul.mubr.bf16.gmra.mrb[0].mxu0 %v141
    %v6267 = vpop.f32.mrb[0].mxu0
    %v6268 = vadd.f32 %v6227, %v6267
    %v6269 = vpop.f32.mrb[0].mxu0
    %v6270 = vadd.f32 %v6229, %v6269
    %v6271 = vpop.f32.mrb[0].mxu0
    %v6272 = vpop.f32.mrb[0].mxu0
    %6273 = vdwg.mxu0
    %6274 = vmatprep.subr.bf16.mxu0 %v4507
    %6275 = vmatpush1.bf16.msra.mxu0 %v4506
    %6276 = vmatprep.subr.bf16.mxu0 %v4515
    %6277 = vmatpush1.bf16.msra.mxu0 %v4514
    %6278 = vmatprep.subr.bf16.mxu0 %v4523
    %6279 = vmatpush1.bf16.msra.mxu0 %v4522
    %6280 = vmatprep.subr.bf16.mxu0 %v4531
    %6281 = vmatpush1.bf16.msra.mxu0 %v4530
    %6282 = vmatprep.subr.bf16.mxu0 %v4539
    %6283 = vmatpush1.bf16.msra.mxu0 %v4538
    %6284 = vmatprep.subr.bf16.mxu0 %v4547
    %6285 = vmatpush1.bf16.msra.mxu0 %v4546
    %6286 = vmatprep.subr.bf16.mxu0 %v4555
    %6287 = vmatpush1.bf16.msra.mxu0 %v4554
    %6288 = vmatprep.subr.bf16.mxu0 %v4563
    %6289 = vmatpush1.bf16.msra.mxu0 %v4562
    %6290 = vmatprep.subr.bf16.mxu0 %v4571
    %6291 = vmatpush1.bf16.msra.mxu0 %v4570
    %6292 = vmatprep.subr.bf16.mxu0 %v4579
    %6293 = vmatpush1.bf16.msra.mxu0 %v4578
    %6294 = vmatprep.subr.bf16.mxu0 %v4587
    %6295 = vmatpush1.bf16.msra.mxu0 %v4586
    %6296 = vmatprep.subr.bf16.mxu0 %v4595
    %6297 = vmatpush1.bf16.msra.mxu0 %v4594
    %6298 = vmatprep.subr.bf16.mxu0 %v4603
    %6299 = vmatpush1.bf16.msra.mxu0 %v4602
    %6300 = vmatprep.subr.bf16.mxu0 %v4611
    %6301 = vmatpush1.bf16.msra.mxu0 %v4610
    %6302 = vmatprep.subr.bf16.mxu0 %v4619
    %6303 = vmatpush1.bf16.msra.mxu0 %v4618
    %6304 = vmatprep.subr.bf16.mxu0 %v4627
    %6305 = vmatpush1.bf16.msra.mxu0 %v4626
    %6306 = vmatprep.mubr.bf16.mxu0 %v144
    %6307 = vmatmul.mubr.bf16.gmra.mrb[0].mxu0 %v143
    %v6308 = vpop.f32.mrb[0].mxu0
    %v6309 = vadd.f32 %v6268, %v6308
    %v6310 = vpop.f32.mrb[0].mxu0
    %v6311 = vadd.f32 %v6270, %v6310
    %v6312 = vpop.f32.mrb[0].mxu0
    %v6313 = vpop.f32.mrb[0].mxu0
    %6314 = vdwg.mxu0
    %6315 = vmatprep.subr.bf16.mxu0 %v4635
    %6316 = vmatpush1.bf16.msra.mxu0 %v4634
    %6317 = vmatprep.subr.bf16.mxu0 %v4643
    %6318 = vmatpush1.bf16.msra.mxu0 %v4642
    %6319 = vmatprep.subr.bf16.mxu0 %v4651
    %6320 = vmatpush1.bf16.msra.mxu0 %v4650
    %6321 = vmatprep.subr.bf16.mxu0 %v4659
    %6322 = vmatpush1.bf16.msra.mxu0 %v4658
    %6323 = vmatprep.subr.bf16.mxu0 %v4667
    %6324 = vmatpush1.bf16.msra.mxu0 %v4666
    %6325 = vmatprep.subr.bf16.mxu0 %v4675
    %6326 = vmatpush1.bf16.msra.mxu0 %v4674
    %6327 = vmatprep.subr.bf16.mxu0 %v4683
    %6328 = vmatpush1.bf16.msra.mxu0 %v4682
    %6329 = vmatprep.subr.bf16.mxu0 %v4691
    %6330 = vmatpush1.bf16.msra.mxu0 %v4690
    %6331 = vmatprep.subr.bf16.mxu0 %v4699
    %6332 = vmatpush1.bf16.msra.mxu0 %v4698
    %6333 = vmatprep.subr.bf16.mxu0 %v4707
    %6334 = vmatpush1.bf16.msra.mxu0 %v4706
    %6335 = vmatprep.subr.bf16.mxu0 %v4715
    %6336 = vmatpush1.bf16.msra.mxu0 %v4714
    %6337 = vmatprep.subr.bf16.mxu0 %v4723
    %6338 = vmatpush1.bf16.msra.mxu0 %v4722
    %6339 = vmatprep.subr.bf16.mxu0 %v4731
    %6340 = vmatpush1.bf16.msra.mxu0 %v4730
    %6341 = vmatprep.subr.bf16.mxu0 %v4739
    %6342 = vmatpush1.bf16.msra.mxu0 %v4738
    %6343 = vmatprep.subr.bf16.mxu0 %v4747
    %6344 = vmatpush1.bf16.msra.mxu0 %v4746
    %6345 = vmatprep.subr.bf16.mxu0 %v4755
    %6346 = vmatpush1.bf16.msra.mxu0 %v4754
    %6347 = vmatprep.mubr.bf16.mxu0 %v146
    %6348 = vmatmul.mubr.bf16.gmra.mrb[0].mxu0 %v145
    %v6349 = vpop.f32.mrb[0].mxu0
    %v6350 = vadd.f32 %v6309, %v6349
    %v6351 = vpop.f32.mrb[0].mxu0
    %v6352 = vadd.f32 %v6311, %v6351
    %v6353 = vpop.f32.mrb[0].mxu0
    %v6354 = vpop.f32.mrb[0].mxu0
    %6355 = vdwg.mxu0
    %6356 = vmatprep.subr.bf16.mxu0 %v4763
    %6357 = vmatpush1.bf16.msra.mxu0 %v4762
    %6358 = vmatprep.subr.bf16.mxu0 %v4771
    %6359 = vmatpush1.bf16.msra.mxu0 %v4770
    %6360 = vmatprep.subr.bf16.mxu0 %v4779
    %6361 = vmatpush1.bf16.msra.mxu0 %v4778
    %6362 = vmatprep.subr.bf16.mxu0 %v4787
    %6363 = vmatpush1.bf16.msra.mxu0 %v4786
    %6364 = vmatprep.subr.bf16.mxu0 %v4795
    %6365 = vmatpush1.bf16.msra.mxu0 %v4794
    %6366 = vmatprep.subr.bf16.mxu0 %v4803
    %6367 = vmatpush1.bf16.msra.mxu0 %v4802
    %6368 = vmatprep.subr.bf16.mxu0 %v4811
    %6369 = vmatpush1.bf16.msra.mxu0 %v4810
    %6370 = vmatprep.subr.bf16.mxu0 %v4819
    %6371 = vmatpush1.bf16.msra.mxu0 %v4818
    %6372 = vmatprep.subr.bf16.mxu0 %v4827
    %6373 = vmatpush1.bf16.msra.mxu0 %v4826
    %6374 = vmatprep.subr.bf16.mxu0 %v4835
    %6375 = vmatpush1.bf16.msra.mxu0 %v4834
    %6376 = vmatprep.subr.bf16.mxu0 %v4843
    %6377 = vmatpush1.bf16.msra.mxu0 %v4842
    %6378 = vmatprep.subr.bf16.mxu0 %v4851
    %6379 = vmatpush1.bf16.msra.mxu0 %v4850
    %6380 = vmatprep.subr.bf16.mxu0 %v4859
    %6381 = vmatpush1.bf16.msra.mxu0 %v4858
    %6382 = vmatprep.subr.bf16.mxu0 %v4867
    %6383 = vmatpush1.bf16.msra.mxu0 %v4866
    %6384 = vmatprep.subr.bf16.mxu0 %v4875
    %6385 = vmatpush1.bf16.msra.mxu0 %v4874
    %6386 = vmatprep.subr.bf16.mxu0 %v4883
    %6387 = vmatpush1.bf16.msra.mxu0 %v4882
    %6388 = vmatprep.mubr.bf16.mxu0 %v148
    %6389 = vmatmul.mubr.bf16.gmra.mrb[0].mxu0 %v147
    %v6390 = vpop.f32.mrb[0].mxu0
    %v6391 = vadd.f32 %v6350, %v6390
    %v6392 = vpop.f32.mrb[0].mxu0
    %v6393 = vadd.f32 %v6352, %v6392
    %v6394 = vpop.f32.mrb[0].mxu0
    %v6395 = vpop.f32.mrb[0].mxu0
    %6396 = vdwg.mxu0
    %6397 = vmatprep.subr.bf16.mxu0 %v4891
    %6398 = vmatpush1.bf16.msra.mxu0 %v4890
    %6399 = vmatprep.subr.bf16.mxu0 %v4899
    %6400 = vmatpush1.bf16.msra.mxu0 %v4898
    %6401 = vmatprep.subr.bf16.mxu0 %v4907
    %6402 = vmatpush1.bf16.msra.mxu0 %v4906
    %6403 = vmatprep.subr.bf16.mxu0 %v4915
    %6404 = vmatpush1.bf16.msra.mxu0 %v4914
    %6405 = vmatprep.subr.bf16.mxu0 %v4923
    %6406 = vmatpush1.bf16.msra.mxu0 %v4922
    %6407 = vmatprep.subr.bf16.mxu0 %v4931
    %6408 = vmatpush1.bf16.msra.mxu0 %v4930
    %6409 = vmatprep.subr.bf16.mxu0 %v4939
    %6410 = vmatpush1.bf16.msra.mxu0 %v4938
    %6411 = vmatprep.subr.bf16.mxu0 %v4947
    %6412 = vmatpush1.bf16.msra.mxu0 %v4946
    %6413 = vmatprep.subr.bf16.mxu0 %v4955
    %6414 = vmatpush1.bf16.msra.mxu0 %v4954
    %6415 = vmatprep.subr.bf16.mxu0 %v4963
    %6416 = vmatpush1.bf16.msra.mxu0 %v4962
    %6417 = vmatprep.subr.bf16.mxu0 %v4971
    %6418 = vmatpush1.bf16.msra.mxu0 %v4970
    %6419 = vmatprep.subr.bf16.mxu0 %v4979
    %6420 = vmatpush1.bf16.msra.mxu0 %v4978
    %6421 = vmatprep.subr.bf16.mxu0 %v4987
    %6422 = vmatpush1.bf16.msra.mxu0 %v4986
    %6423 = vmatprep.subr.bf16.mxu0 %v4995
    %6424 = vmatpush1.bf16.msra.mxu0 %v4994
    %6425 = vmatprep.subr.bf16.mxu0 %v5003
    %6426 = vmatpush1.bf16.msra.mxu0 %v5002
    %6427 = vmatprep.subr.bf16.mxu0 %v5011
    %6428 = vmatpush1.bf16.msra.mxu0 %v5010
    %6429 = vmatprep.mubr.bf16.mxu0 %v150
    %6430 = vmatmul.mubr.bf16.gmra.mrb[0].mxu0 %v149
    %v6431 = vpop.f32.mrb[0].mxu0
    %v6432 = vadd.f32 %v6391, %v6431
    %v6433 = vpop.f32.mrb[0].mxu0
    %v6434 = vadd.f32 %v6393, %v6433
    %v6435 = vpop.f32.mrb[0].mxu0
    %v6436 = vpop.f32.mrb[0].mxu0
    %6437 = vdwg.mxu0
    %6438 = vmatprep.subr.bf16.mxu0 %v5019
    %6439 = vmatpush1.bf16.msra.mxu0 %v5018
    %6440 = vmatprep.subr.bf16.mxu0 %v5027
    %6441 = vmatpush1.bf16.msra.mxu0 %v5026
    %6442 = vmatprep.subr.bf16.mxu0 %v5035
    %6443 = vmatpush1.bf16.msra.mxu0 %v5034
    %6444 = vmatprep.subr.bf16.mxu0 %v5043
    %6445 = vmatpush1.bf16.msra.mxu0 %v5042
    %6446 = vmatprep.subr.bf16.mxu0 %v5051
    %6447 = vmatpush1.bf16.msra.mxu0 %v5050
    %6448 = vmatprep.subr.bf16.mxu0 %v5059
    %6449 = vmatpush1.bf16.msra.mxu0 %v5058
    %6450 = vmatprep.subr.bf16.mxu0 %v5067
    %6451 = vmatpush1.bf16.msra.mxu0 %v5066
    %6452 = vmatprep.subr.bf16.mxu0 %v5075
    %6453 = vmatpush1.bf16.msra.mxu0 %v5074
    %6454 = vmatprep.subr.bf16.mxu0 %v5083
    %6455 = vmatpush1.bf16.msra.mxu0 %v5082
    %6456 = vmatprep.subr.bf16.mxu0 %v5091
    %6457 = vmatpush1.bf16.msra.mxu0 %v5090
    %6458 = vmatprep.subr.bf16.mxu0 %v5099
    %6459 = vmatpush1.bf16.msra.mxu0 %v5098
    %6460 = vmatprep.subr.bf16.mxu0 %v5107
    %6461 = vmatpush1.bf16.msra.mxu0 %v5106
    %6462 = vmatprep.subr.bf16.mxu0 0
    %6463 = vmatpush1.bf16.msra.mxu0 0
    %6464 = vmatprep.subr.bf16.mxu0 0
    %6465 = vmatpush1.bf16.msra.mxu0 0
    %6466 = vmatprep.subr.bf16.mxu0 0
    %6467 = vmatpush1.bf16.msra.mxu0 0
    %6468 = vmatprep.subr.bf16.mxu0 0
    %6469 = vmatpush1.bf16.msra.mxu0 0
    %6470 = vmatprep.mubr.bf16.mxu0 %v6149
    %6471 = vmatmul.mubr.bf16.gmra.mrb[0].mxu0 %v151
    %v6472 = vpop.f32.mrb[0].mxu0
    %v6473 = vadd.f32 %v6432, %v6472
    %v6474 = vpop.f32.mrb[0].mxu0
    %v6475 = vadd.f32 %v6434, %v6474
    %v6476 = vpop.f32.mrb[0].mxu0
    %v6477 = vpop.f32.mrb[0].mxu0
    %6478 = vdwg.mxu0
    %6479 = vmatprep.subr.bf16.mxu0 %v4125
    %6480 = vmatpush1.bf16.msra.mxu0 %v4124
    %6481 = vmatprep.subr.bf16.mxu0 %v4133
    %6482 = vmatpush1.bf16.msra.mxu0 %v4132
    %6483 = vmatprep.subr.bf16.mxu0 %v4141
    %6484 = vmatpush1.bf16.msra.mxu0 %v4140
    %6485 = vmatprep.subr.bf16.mxu0 %v4149
    %6486 = vmatpush1.bf16.msra.mxu0 %v4148
    %6487 = vmatprep.subr.bf16.mxu0 %v4157
    %6488 = vmatpush1.bf16.msra.mxu0 %v4156
    %6489 = vmatprep.subr.bf16.mxu0 %v4165
    %6490 = vmatpush1.bf16.msra.mxu0 %v4164
    %6491 = vmatprep.subr.bf16.mxu0 %v4173
    %6492 = vmatpush1.bf16.msra.mxu0 %v4172
    %6493 = vmatprep.subr.bf16.mxu0 %v4181
    %6494 = vmatpush1.bf16.msra.mxu0 %v4180
    %6495 = vmatprep.subr.bf16.mxu0 %v4189
    %6496 = vmatpush1.bf16.msra.mxu0 %v4188
    %6497 = vmatprep.subr.bf16.mxu0 %v4197
    %6498 = vmatpush1.bf16.msra.mxu0 %v4196
    %6499 = vmatprep.subr.bf16.mxu0 %v4205
    %6500 = vmatpush1.bf16.msra.mxu0 %v4204
    %6501 = vmatprep.subr.bf16.mxu0 %v4213
    %6502 = vmatpush1.bf16.msra.mxu0 %v4212
    %6503 = vmatprep.subr.bf16.mxu0 %v4221
    %6504 = vmatpush1.bf16.msra.mxu0 %v4220
    %6505 = vmatprep.subr.bf16.mxu0 %v4229
    %6506 = vmatpush1.bf16.msra.mxu0 %v4228
    %6507 = vmatprep.subr.bf16.mxu0 %v4237
    %6508 = vmatpush1.bf16.msra.mxu0 %v4236
    %6509 = vmatprep.subr.bf16.mxu0 %v4245
    %6510 = vmatpush1.bf16.msra.mxu0 %v4244
    %6511 = vmatprep.mubr.bf16.mxu0 %v138
    %6512 = vmatmul.mubr.bf16.gmra.mrb[0].mxu0 %v137
    %v6513 = vpop.f32.mrb[0].mxu0
    %v6514 = vadd.f32 %v6118, %v6513
    %v6515 = vpop.f32.mrb[0].mxu0
    %v6516 = vadd.f32 %v6122, %v6515
    %v6517 = vpop.f32.mrb[0].mxu0
    %v6518 = vpop.f32.mrb[0].mxu0
    %6519 = vdwg.mxu0
    %6520 = vmatprep.subr.bf16.mxu0 %v4253
    %6521 = vmatpush1.bf16.msra.mxu0 %v4252
    %6522 = vmatprep.subr.bf16.mxu0 %v4261
    %6523 = vmatpush1.bf16.msra.mxu0 %v4260
    %6524 = vmatprep.subr.bf16.mxu0 %v4269
    %6525 = vmatpush1.bf16.msra.mxu0 %v4268
    %6526 = vmatprep.subr.bf16.mxu0 %v4277
    %6527 = vmatpush1.bf16.msra.mxu0 %v4276
    %6528 = vmatprep.subr.bf16.mxu0 %v4285
    %6529 = vmatpush1.bf16.msra.mxu0 %v4284
    %6530 = vmatprep.subr.bf16.mxu0 %v4293
    %6531 = vmatpush1.bf16.msra.mxu0 %v4292
    %6532 = vmatprep.subr.bf16.mxu0 %v4301
    %6533 = vmatpush1.bf16.msra.mxu0 %v4300
    %6534 = vmatprep.subr.bf16.mxu0 %v4309
    %6535 = vmatpush1.bf16.msra.mxu0 %v4308
    %6536 = vmatprep.subr.bf16.mxu0 %v4317
    %6537 = vmatpush1.bf16.msra.mxu0 %v4316
    %6538 = vmatprep.subr.bf16.mxu0 %v4325
    %6539 = vmatpush1.bf16.msra.mxu0 %v4324
    %6540 = vmatprep.subr.bf16.mxu0 %v4333
    %6541 = vmatpush1.bf16.msra.mxu0 %v4332
    %6542 = vmatprep.subr.bf16.mxu0 %v4341
    %6543 = vmatpush1.bf16.msra.mxu0 %v4340
    %6544 = vmatprep.subr.bf16.mxu0 %v4349
    %6545 = vmatpush1.bf16.msra.mxu0 %v4348
    %6546 = vmatprep.subr.bf16.mxu0 %v4357
    %6547 = vmatpush1.bf16.msra.mxu0 %v4356
    %6548 = vmatprep.subr.bf16.mxu0 %v4365
    %6549 = vmatpush1.bf16.msra.mxu0 %v4364
    %6550 = vmatprep.subr.bf16.mxu0 %v4373
    %6551 = vmatpush1.bf16.msra.mxu0 %v4372
    %6552 = vmatprep.mubr.bf16.mxu0 %v140
    %6553 = vmatmul.mubr.bf16.gmra.mrb[0].mxu0 %v139
    %v6554 = vpop.f32.mrb[0].mxu0
    %v6555 = vadd.f32 %v6514, %v6554
    %v6556 = vpop.f32.mrb[0].mxu0
    %v6557 = vadd.f32 %v6516, %v6556
    %v6558 = vpop.f32.mrb[0].mxu0
    %v6559 = vpop.f32.mrb[0].mxu0
    %6560 = vdwg.mxu0
    %6561 = vmatprep.subr.bf16.mxu0 %v4381
    %6562 = vmatpush1.bf16.msra.mxu0 %v4380
    %6563 = vmatprep.subr.bf16.mxu0 %v4389
    %6564 = vmatpush1.bf16.msra.mxu0 %v4388
    %6565 = vmatprep.subr.bf16.mxu0 %v4397
    %6566 = vmatpush1.bf16.msra.mxu0 %v4396
    %6567 = vmatprep.subr.bf16.mxu0 %v4405
    %6568 = vmatpush1.bf16.msra.mxu0 %v4404
    %6569 = vmatprep.subr.bf16.mxu0 %v4413
    %6570 = vmatpush1.bf16.msra.mxu0 %v4412
    %6571 = vmatprep.subr.bf16.mxu0 %v4421
    %6572 = vmatpush1.bf16.msra.mxu0 %v4420
    %6573 = vmatprep.subr.bf16.mxu0 %v4429
    %6574 = vmatpush1.bf16.msra.mxu0 %v4428
    %6575 = vmatprep.subr.bf16.mxu0 %v4437
    %6576 = vmatpush1.bf16.msra.mxu0 %v4436
    %6577 = vmatprep.subr.bf16.mxu0 %v4445
    %6578 = vmatpush1.bf16.msra.mxu0 %v4444
    %6579 = vmatprep.subr.bf16.mxu0 %v4453
    %6580 = vmatpush1.bf16.msra.mxu0 %v4452
    %6581 = vmatprep.subr.bf16.mxu0 %v4461
    %6582 = vmatpush1.bf16.msra.mxu0 %v4460
    %6583 = vmatprep.subr.bf16.mxu0 %v4469
    %6584 = vmatpush1.bf16.msra.mxu0 %v4468
    %6585 = vmatprep.subr.bf16.mxu0 %v4477
    %6586 = vmatpush1.bf16.msra.mxu0 %v4476
    %6587 = vmatprep.subr.bf16.mxu0 %v4485
    %6588 = vmatpush1.bf16.msra.mxu0 %v4484
    %6589 = vmatprep.subr.bf16.mxu0 %v4493
    %6590 = vmatpush1.bf16.msra.mxu0 %v4492
    %6591 = vmatprep.subr.bf16.mxu0 %v4501
    %6592 = vmatpush1.bf16.msra.mxu0 %v4500
    %6593 = vmatprep.mubr.bf16.mxu0 %v142
    %6594 = vmatmul.mubr.bf16.gmra.mrb[0].mxu0 %v141
    %v6595 = vpop.f32.mrb[0].mxu0
    %v6596 = vadd.f32 %v6555, %v6595
    %v6597 = vpop.f32.mrb[0].mxu0
    %v6598 = vadd.f32 %v6557, %v6597
    %v6599 = vpop.f32.mrb[0].mxu0
    %v6600 = vpop.f32.mrb[0].mxu0
    %6601 = vdwg.mxu0
    %6602 = vmatprep.subr.bf16.mxu0 %v4509
    %6603 = vmatpush1.bf16.msra.mxu0 %v4508
    %6604 = vmatprep.subr.bf16.mxu0 %v4517
    %6605 = vmatpush1.bf16.msra.mxu0 %v4516
    %6606 = vmatprep.subr.bf16.mxu0 %v4525
    %6607 = vmatpush1.bf16.msra.mxu0 %v4524
    %6608 = vmatprep.subr.bf16.mxu0 %v4533
    %6609 = vmatpush1.bf16.msra.mxu0 %v4532
    %6610 = vmatprep.subr.bf16.mxu0 %v4541
    %6611 = vmatpush1.bf16.msra.mxu0 %v4540
    %6612 = vmatprep.subr.bf16.mxu0 %v4549
    %6613 = vmatpush1.bf16.msra.mxu0 %v4548
    %6614 = vmatprep.subr.bf16.mxu0 %v4557
    %6615 = vmatpush1.bf16.msra.mxu0 %v4556
    %6616 = vmatprep.subr.bf16.mxu0 %v4565
    %6617 = vmatpush1.bf16.msra.mxu0 %v4564
    %6618 = vmatprep.subr.bf16.mxu0 %v4573
    %6619 = vmatpush1.bf16.msra.mxu0 %v4572
    %6620 = vmatprep.subr.bf16.mxu0 %v4581
    %6621 = vmatpush1.bf16.msra.mxu0 %v4580
    %6622 = vmatprep.subr.bf16.mxu0 %v4589
    %6623 = vmatpush1.bf16.msra.mxu0 %v4588
    %6624 = vmatprep.subr.bf16.mxu0 %v4597
    %6625 = vmatpush1.bf16.msra.mxu0 %v4596
    %6626 = vmatprep.subr.bf16.mxu0 %v4605
    %6627 = vmatpush1.bf16.msra.mxu0 %v4604
    %6628 = vmatprep.subr.bf16.mxu0 %v4613
    %6629 = vmatpush1.bf16.msra.mxu0 %v4612
    %6630 = vmatprep.subr.bf16.mxu0 %v4621
    %6631 = vmatpush1.bf16.msra.mxu0 %v4620
    %6632 = vmatprep.subr.bf16.mxu0 %v4629
    %6633 = vmatpush1.bf16.msra.mxu0 %v4628
    %6634 = vmatprep.mubr.bf16.mxu0 %v144
    %6635 = vmatmul.mubr.bf16.gmra.mrb[0].mxu0 %v143
    %v6636 = vpop.f32.mrb[0].mxu0
    %v6637 = vadd.f32 %v6596, %v6636
    %v6638 = vpop.f32.mrb[0].mxu0
    %v6639 = vadd.f32 %v6598, %v6638
    %v6640 = vpop.f32.mrb[0].mxu0
    %v6641 = vpop.f32.mrb[0].mxu0
    %6642 = vdwg.mxu0
    %6643 = vmatprep.subr.bf16.mxu0 %v4637
    %6644 = vmatpush1.bf16.msra.mxu0 %v4636
    %6645 = vmatprep.subr.bf16.mxu0 %v4645
    %6646 = vmatpush1.bf16.msra.mxu0 %v4644
    %6647 = vmatprep.subr.bf16.mxu0 %v4653
    %6648 = vmatpush1.bf16.msra.mxu0 %v4652
    %6649 = vmatprep.subr.bf16.mxu0 %v4661
    %6650 = vmatpush1.bf16.msra.mxu0 %v4660
    %6651 = vmatprep.subr.bf16.mxu0 %v4669
    %6652 = vmatpush1.bf16.msra.mxu0 %v4668
    %6653 = vmatprep.subr.bf16.mxu0 %v4677
    %6654 = vmatpush1.bf16.msra.mxu0 %v4676
    %6655 = vmatprep.subr.bf16.mxu0 %v4685
    %6656 = vmatpush1.bf16.msra.mxu0 %v4684
    %6657 = vmatprep.subr.bf16.mxu0 %v4693
    %6658 = vmatpush1.bf16.msra.mxu0 %v4692
    %6659 = vmatprep.subr.bf16.mxu0 %v4701
    %6660 = vmatpush1.bf16.msra.mxu0 %v4700
    %6661 = vmatprep.subr.bf16.mxu0 %v4709
    %6662 = vmatpush1.bf16.msra.mxu0 %v4708
    %6663 = vmatprep.subr.bf16.mxu0 %v4717
    %6664 = vmatpush1.bf16.msra.mxu0 %v4716
    %6665 = vmatprep.subr.bf16.mxu0 %v4725
    %6666 = vmatpush1.bf16.msra.mxu0 %v4724
    %6667 = vmatprep.subr.bf16.mxu0 %v4733
    %6668 = vmatpush1.bf16.msra.mxu0 %v4732
    %6669 = vmatprep.subr.bf16.mxu0 %v4741
    %6670 = vmatpush1.bf16.msra.mxu0 %v4740
    %6671 = vmatprep.subr.bf16.mxu0 %v4749
    %6672 = vmatpush1.bf16.msra.mxu0 %v4748
    %6673 = vmatprep.subr.bf16.mxu0 %v4757
    %6674 = vmatpush1.bf16.msra.mxu0 %v4756
    %6675 = vmatprep.mubr.bf16.mxu0 %v146
    %6676 = vmatmul.mubr.bf16.gmra.mrb[0].mxu0 %v145
    %v6677 = vpop.f32.mrb[0].mxu0
    %v6678 = vadd.f32 %v6637, %v6677
    %v6679 = vpop.f32.mrb[0].mxu0
    %v6680 = vadd.f32 %v6639, %v6679
    %v6681 = vpop.f32.mrb[0].mxu0
    %v6682 = vpop.f32.mrb[0].mxu0
    %6683 = vdwg.mxu0
    %6684 = vmatprep.subr.bf16.mxu0 %v4765
    %6685 = vmatpush1.bf16.msra.mxu0 %v4764
    %6686 = vmatprep.subr.bf16.mxu0 %v4773
    %6687 = vmatpush1.bf16.msra.mxu0 %v4772
    %6688 = vmatprep.subr.bf16.mxu0 %v4781
    %6689 = vmatpush1.bf16.msra.mxu0 %v4780
    %6690 = vmatprep.subr.bf16.mxu0 %v4789
    %6691 = vmatpush1.bf16.msra.mxu0 %v4788
    %6692 = vmatprep.subr.bf16.mxu0 %v4797
    %6693 = vmatpush1.bf16.msra.mxu0 %v4796
    %6694 = vmatprep.subr.bf16.mxu0 %v4805
    %6695 = vmatpush1.bf16.msra.mxu0 %v4804
    %6696 = vmatprep.subr.bf16.mxu0 %v4813
    %6697 = vmatpush1.bf16.msra.mxu0 %v4812
    %6698 = vmatprep.subr.bf16.mxu0 %v4821
    %6699 = vmatpush1.bf16.msra.mxu0 %v4820
    %6700 = vmatprep.subr.bf16.mxu0 %v4829
    %6701 = vmatpush1.bf16.msra.mxu0 %v4828
    %6702 = vmatprep.subr.bf16.mxu0 %v4837
    %6703 = vmatpush1.bf16.msra.mxu0 %v4836
    %6704 = vmatprep.subr.bf16.mxu0 %v4845
    %6705 = vmatpush1.bf16.msra.mxu0 %v4844
    %6706 = vmatprep.subr.bf16.mxu0 %v4853
    %6707 = vmatpush1.bf16.msra.mxu0 %v4852
    %6708 = vmatprep.subr.bf16.mxu0 %v4861
    %6709 = vmatpush1.bf16.msra.mxu0 %v4860
    %6710 = vmatprep.subr.bf16.mxu0 %v4869
    %6711 = vmatpush1.bf16.msra.mxu0 %v4868
    %6712 = vmatprep.subr.bf16.mxu0 %v4877
    %6713 = vmatpush1.bf16.msra.mxu0 %v4876
    %6714 = vmatprep.subr.bf16.mxu0 %v4885
    %6715 = vmatpush1.bf16.msra.mxu0 %v4884
    %6716 = vmatprep.mubr.bf16.mxu0 %v148
    %6717 = vmatmul.mubr.bf16.gmra.mrb[0].mxu0 %v147
    %v6718 = vpop.f32.mrb[0].mxu0
    %v6719 = vadd.f32 %v6678, %v6718
    %v6720 = vpop.f32.mrb[0].mxu0
    %v6721 = vadd.f32 %v6680, %v6720
    %v6722 = vpop.f32.mrb[0].mxu0
    %v6723 = vpop.f32.mrb[0].mxu0
    %6724 = vdwg.mxu0
    %6725 = vmatprep.subr.bf16.mxu0 %v4893
    %6726 = vmatpush1.bf16.msra.mxu0 %v4892
    %6727 = vmatprep.subr.bf16.mxu0 %v4901
    %6728 = vmatpush1.bf16.msra.mxu0 %v4900
    %6729 = vmatprep.subr.bf16.mxu0 %v4909
    %6730 = vmatpush1.bf16.msra.mxu0 %v4908
    %6731 = vmatprep.subr.bf16.mxu0 %v4917
    %6732 = vmatpush1.bf16.msra.mxu0 %v4916
    %6733 = vmatprep.subr.bf16.mxu0 %v4925
    %6734 = vmatpush1.bf16.msra.mxu0 %v4924
    %6735 = vmatprep.subr.bf16.mxu0 %v4933
    %6736 = vmatpush1.bf16.msra.mxu0 %v4932
    %6737 = vmatprep.subr.bf16.mxu0 %v4941
    %6738 = vmatpush1.bf16.msra.mxu0 %v4940
    %6739 = vmatprep.subr.bf16.mxu0 %v4949
    %6740 = vmatpush1.bf16.msra.mxu0 %v4948
    %6741 = vmatprep.subr.bf16.mxu0 %v4957
    %6742 = vmatpush1.bf16.msra.mxu0 %v4956
    %6743 = vmatprep.subr.bf16.mxu0 %v4965
    %6744 = vmatpush1.bf16.msra.mxu0 %v4964
    %6745 = vmatprep.subr.bf16.mxu0 %v4973
    %6746 = vmatpush1.bf16.msra.mxu0 %v4972
    %6747 = vmatprep.subr.bf16.mxu0 %v4981
    %6748 = vmatpush1.bf16.msra.mxu0 %v4980
    %6749 = vmatprep.subr.bf16.mxu0 %v4989
    %6750 = vmatpush1.bf16.msra.mxu0 %v4988
    %6751 = vmatprep.subr.bf16.mxu0 %v4997
    %6752 = vmatpush1.bf16.msra.mxu0 %v4996
    %6753 = vmatprep.subr.bf16.mxu0 %v5005
    %6754 = vmatpush1.bf16.msra.mxu0 %v5004
    %6755 = vmatprep.subr.bf16.mxu0 %v5013
    %6756 = vmatpush1.bf16.msra.mxu0 %v5012
    %6757 = vmatprep.mubr.bf16.mxu0 %v150
    %6758 = vmatmul.mubr.bf16.gmra.mrb[0].mxu0 %v149
    %v6759 = vpop.f32.mrb[0].mxu0
    %v6760 = vadd.f32 %v6719, %v6759
    %v6761 = vpop.f32.mrb[0].mxu0
    %v6762 = vadd.f32 %v6721, %v6761
    %v6763 = vpop.f32.mrb[0].mxu0
    %v6764 = vpop.f32.mrb[0].mxu0
    %6765 = vdwg.mxu0
    %6766 = vmatprep.subr.bf16.mxu0 %v5021
    %6767 = vmatpush1.bf16.msra.mxu0 %v5020
    %6768 = vmatprep.subr.bf16.mxu0 %v5029
    %6769 = vmatpush1.bf16.msra.mxu0 %v5028
    %6770 = vmatprep.subr.bf16.mxu0 %v5037
    %6771 = vmatpush1.bf16.msra.mxu0 %v5036
    %6772 = vmatprep.subr.bf16.mxu0 %v5045
    %6773 = vmatpush1.bf16.msra.mxu0 %v5044
    %6774 = vmatprep.subr.bf16.mxu0 %v5053
    %6775 = vmatpush1.bf16.msra.mxu0 %v5052
    %6776 = vmatprep.subr.bf16.mxu0 %v5061
    %6777 = vmatpush1.bf16.msra.mxu0 %v5060
    %6778 = vmatprep.subr.bf16.mxu0 %v5069
    %6779 = vmatpush1.bf16.msra.mxu0 %v5068
    %6780 = vmatprep.subr.bf16.mxu0 %v5077
    %6781 = vmatpush1.bf16.msra.mxu0 %v5076
    %6782 = vmatprep.subr.bf16.mxu0 %v5085
    %6783 = vmatpush1.bf16.msra.mxu0 %v5084
    %6784 = vmatprep.subr.bf16.mxu0 %v5093
    %6785 = vmatpush1.bf16.msra.mxu0 %v5092
    %6786 = vmatprep.subr.bf16.mxu0 %v5101
    %6787 = vmatpush1.bf16.msra.mxu0 %v5100
    %6788 = vmatprep.subr.bf16.mxu0 %v5109
    %6789 = vmatpush1.bf16.msra.mxu0 %v5108
    %6790 = vmatprep.subr.bf16.mxu0 0
    %6791 = vmatpush1.bf16.msra.mxu0 0
    %6792 = vmatprep.subr.bf16.mxu0 0
    %6793 = vmatpush1.bf16.msra.mxu0 0
    %6794 = vmatprep.subr.bf16.mxu0 0
    %6795 = vmatpush1.bf16.msra.mxu0 0
    %6796 = vmatprep.subr.bf16.mxu0 0
    %6797 = vmatpush1.bf16.msra.mxu0 0
    %6798 = vmatprep.mubr.bf16.mxu0 %v6149
    %6799 = vmatmul.mubr.bf16.gmra.mrb[0].mxu0 %v151
    %v6800 = vpop.f32.mrb[0].mxu0
    %v6801 = vadd.f32 %v6760, %v6800
    %v6802 = vpop.f32.mrb[0].mxu0
    %v6803 = vadd.f32 %v6762, %v6802
    %v6804 = vpop.f32.mrb[0].mxu0
    %v6805 = vpop.f32.mrb[0].mxu0
    %6806 = vdwg.mxu0
    %6807 = vmatprep.subr.bf16.mxu0 %v4127
    %6808 = vmatpush1.bf16.msra.mxu0 %v4126
    %6809 = vmatprep.subr.bf16.mxu0 %v4135
    %6810 = vmatpush1.bf16.msra.mxu0 %v4134
    %6811 = vmatprep.subr.bf16.mxu0 %v4143
    %6812 = vmatpush1.bf16.msra.mxu0 %v4142
    %6813 = vmatprep.subr.bf16.mxu0 %v4151
    %6814 = vmatpush1.bf16.msra.mxu0 %v4150
    %6815 = vmatprep.subr.bf16.mxu0 %v4159
    %6816 = vmatpush1.bf16.msra.mxu0 %v4158
    %6817 = vmatprep.subr.bf16.mxu0 %v4167
    %6818 = vmatpush1.bf16.msra.mxu0 %v4166
    %6819 = vmatprep.subr.bf16.mxu0 %v4175
    %6820 = vmatpush1.bf16.msra.mxu0 %v4174
    %6821 = vmatprep.subr.bf16.mxu0 %v4183
    %6822 = vmatpush1.bf16.msra.mxu0 %v4182
    %6823 = vmatprep.subr.bf16.mxu0 %v4191
    %6824 = vmatpush1.bf16.msra.mxu0 %v4190
    %6825 = vmatprep.subr.bf16.mxu0 %v4199
    %6826 = vmatpush1.bf16.msra.mxu0 %v4198
    %6827 = vmatprep.subr.bf16.mxu0 %v4207
    %6828 = vmatpush1.bf16.msra.mxu0 %v4206
    %6829 = vmatprep.subr.bf16.mxu0 %v4215
    %6830 = vmatpush1.bf16.msra.mxu0 %v4214
    %6831 = vmatprep.subr.bf16.mxu0 %v4223
    %6832 = vmatpush1.bf16.msra.mxu0 %v4222
    %6833 = vmatprep.subr.bf16.mxu0 %v4231
    %6834 = vmatpush1.bf16.msra.mxu0 %v4230
    %6835 = vmatprep.subr.bf16.mxu0 %v4239
    %6836 = vmatpush1.bf16.msra.mxu0 %v4238
    %6837 = vmatprep.subr.bf16.mxu0 %v4247
    %6838 = vmatpush1.bf16.msra.mxu0 %v4246
    %6839 = vmatprep.mubr.bf16.mxu0 %v138
    %6840 = vmatmul.mubr.bf16.gmra.mrb[0].mxu0 %v137
    %v6841 = vpop.f32.mrb[0].mxu0
    %v6842 = vadd.f32 %v6126, %v6841
    %v6843 = vpop.f32.mrb[0].mxu0
    %v6844 = vadd.f32 %v6130, %v6843
    %v6845 = vpop.f32.mrb[0].mxu0
    %v6846 = vpop.f32.mrb[0].mxu0
    %6847 = vdwg.mxu0
    %6848 = vmatprep.subr.bf16.mxu0 %v4255
    %6849 = vmatpush1.bf16.msra.mxu0 %v4254
    %6850 = vmatprep.subr.bf16.mxu0 %v4263
    %6851 = vmatpush1.bf16.msra.mxu0 %v4262
    %6852 = vmatprep.subr.bf16.mxu0 %v4271
    %6853 = vmatpush1.bf16.msra.mxu0 %v4270
    %6854 = vmatprep.subr.bf16.mxu0 %v4279
    %6855 = vmatpush1.bf16.msra.mxu0 %v4278
    %6856 = vmatprep.subr.bf16.mxu0 %v4287
    %6857 = vmatpush1.bf16.msra.mxu0 %v4286
    %6858 = vmatprep.subr.bf16.mxu0 %v4295
    %6859 = vmatpush1.bf16.msra.mxu0 %v4294
    %6860 = vmatprep.subr.bf16.mxu0 %v4303
    %6861 = vmatpush1.bf16.msra.mxu0 %v4302
    %6862 = vmatprep.subr.bf16.mxu0 %v4311
    %6863 = vmatpush1.bf16.msra.mxu0 %v4310
    %6864 = vmatprep.subr.bf16.mxu0 %v4319
    %6865 = vmatpush1.bf16.msra.mxu0 %v4318
    %6866 = vmatprep.subr.bf16.mxu0 %v4327
    %6867 = vmatpush1.bf16.msra.mxu0 %v4326
    %6868 = vmatprep.subr.bf16.mxu0 %v4335
    %6869 = vmatpush1.bf16.msra.mxu0 %v4334
    %6870 = vmatprep.subr.bf16.mxu0 %v4343
    %6871 = vmatpush1.bf16.msra.mxu0 %v4342
    %6872 = vmatprep.subr.bf16.mxu0 %v4351
    %6873 = vmatpush1.bf16.msra.mxu0 %v4350
    %6874 = vmatprep.subr.bf16.mxu0 %v4359
    %6875 = vmatpush1.bf16.msra.mxu0 %v4358
    %6876 = vmatprep.subr.bf16.mxu0 %v4367
    %6877 = vmatpush1.bf16.msra.mxu0 %v4366
    %6878 = vmatprep.subr.bf16.mxu0 %v4375
    %6879 = vmatpush1.bf16.msra.mxu0 %v4374
    %6880 = vmatprep.mubr.bf16.mxu0 %v140
    %6881 = vmatmul.mubr.bf16.gmra.mrb[0].mxu0 %v139
    %v6882 = vpop.f32.mrb[0].mxu0
    %v6883 = vadd.f32 %v6842, %v6882
    %v6884 = vpop.f32.mrb[0].mxu0
    %v6885 = vadd.f32 %v6844, %v6884
    %v6886 = vpop.f32.mrb[0].mxu0
    %v6887 = vpop.f32.mrb[0].mxu0
    %6888 = vdwg.mxu0
    %6889 = vmatprep.subr.bf16.mxu0 %v4383
    %6890 = vmatpush1.bf16.msra.mxu0 %v4382
    %6891 = vmatprep.subr.bf16.mxu0 %v4391
    %6892 = vmatpush1.bf16.msra.mxu0 %v4390
    %6893 = vmatprep.subr.bf16.mxu0 %v4399
    %6894 = vmatpush1.bf16.msra.mxu0 %v4398
    %6895 = vmatprep.subr.bf16.mxu0 %v4407
    %6896 = vmatpush1.bf16.msra.mxu0 %v4406
    %6897 = vmatprep.subr.bf16.mxu0 %v4415
    %6898 = vmatpush1.bf16.msra.mxu0 %v4414
    %6899 = vmatprep.subr.bf16.mxu0 %v4423
    %6900 = vmatpush1.bf16.msra.mxu0 %v4422
    %6901 = vmatprep.subr.bf16.mxu0 %v4431
    %6902 = vmatpush1.bf16.msra.mxu0 %v4430
    %6903 = vmatprep.subr.bf16.mxu0 %v4439
    %6904 = vmatpush1.bf16.msra.mxu0 %v4438
    %6905 = vmatprep.subr.bf16.mxu0 %v4447
    %6906 = vmatpush1.bf16.msra.mxu0 %v4446
    %6907 = vmatprep.subr.bf16.mxu0 %v4455
    %6908 = vmatpush1.bf16.msra.mxu0 %v4454
    %6909 = vmatprep.subr.bf16.mxu0 %v4463
    %6910 = vmatpush1.bf16.msra.mxu0 %v4462
    %6911 = vmatprep.subr.bf16.mxu0 %v4471
    %6912 = vmatpush1.bf16.msra.mxu0 %v4470
    %6913 = vmatprep.subr.bf16.mxu0 %v4479
    %6914 = vmatpush1.bf16.msra.mxu0 %v4478
    %6915 = vmatprep.subr.bf16.mxu0 %v4487
    %6916 = vmatpush1.bf16.msra.mxu0 %v4486
    %6917 = vmatprep.subr.bf16.mxu0 %v4495
    %6918 = vmatpush1.bf16.msra.mxu0 %v4494
    %6919 = vmatprep.subr.bf16.mxu0 %v4503
    %6920 = vmatpush1.bf16.msra.mxu0 %v4502
    %6921 = vmatprep.mubr.bf16.mxu0 %v142
    %6922 = vmatmul.mubr.bf16.gmra.mrb[0].mxu0 %v141
    %v6923 = vpop.f32.mrb[0].mxu0
    %v6924 = vadd.f32 %v6883, %v6923
    %v6925 = vpop.f32.mrb[0].mxu0
    %v6926 = vadd.f32 %v6885, %v6925
    %v6927 = vpop.f32.mrb[0].mxu0
    %v6928 = vpop.f32.mrb[0].mxu0
    %6929 = vdwg.mxu0
    %6930 = vmatprep.subr.bf16.mxu0 %v4511
    %6931 = vmatpush1.bf16.msra.mxu0 %v4510
    %6932 = vmatprep.subr.bf16.mxu0 %v4519
    %6933 = vmatpush1.bf16.msra.mxu0 %v4518
    %6934 = vmatprep.subr.bf16.mxu0 %v4527
    %6935 = vmatpush1.bf16.msra.mxu0 %v4526
    %6936 = vmatprep.subr.bf16.mxu0 %v4535
    %6937 = vmatpush1.bf16.msra.mxu0 %v4534
    %6938 = vmatprep.subr.bf16.mxu0 %v4543
    %6939 = vmatpush1.bf16.msra.mxu0 %v4542
    %6940 = vmatprep.subr.bf16.mxu0 %v4551
    %6941 = vmatpush1.bf16.msra.mxu0 %v4550
    %6942 = vmatprep.subr.bf16.mxu0 %v4559
    %6943 = vmatpush1.bf16.msra.mxu0 %v4558
    %6944 = vmatprep.subr.bf16.mxu0 %v4567
    %6945 = vmatpush1.bf16.msra.mxu0 %v4566
    %6946 = vmatprep.subr.bf16.mxu0 %v4575
    %6947 = vmatpush1.bf16.msra.mxu0 %v4574
    %6948 = vmatprep.subr.bf16.mxu0 %v4583
    %6949 = vmatpush1.bf16.msra.mxu0 %v4582
    %6950 = vmatprep.subr.bf16.mxu0 %v4591
    %6951 = vmatpush1.bf16.msra.mxu0 %v4590
    %6952 = vmatprep.subr.bf16.mxu0 %v4599
    %6953 = vmatpush1.bf16.msra.mxu0 %v4598
    %6954 = vmatprep.subr.bf16.mxu0 %v4607
    %6955 = vmatpush1.bf16.msra.mxu0 %v4606
    %6956 = vmatprep.subr.bf16.mxu0 %v4615
    %6957 = vmatpush1.bf16.msra.mxu0 %v4614
    %6958 = vmatprep.subr.bf16.mxu0 %v4623
    %6959 = vmatpush1.bf16.msra.mxu0 %v4622
    %6960 = vmatprep.subr.bf16.mxu0 %v4631
    %6961 = vmatpush1.bf16.msra.mxu0 %v4630
    %6962 = vmatprep.mubr.bf16.mxu0 %v144
    %6963 = vmatmul.mubr.bf16.gmra.mrb[0].mxu0 %v143
    %v6964 = vpop.f32.mrb[0].mxu0
    %v6965 = vadd.f32 %v6924, %v6964
    %v6966 = vpop.f32.mrb[0].mxu0
    %v6967 = vadd.f32 %v6926, %v6966
    %v6968 = vpop.f32.mrb[0].mxu0
    %v6969 = vpop.f32.mrb[0].mxu0
    %6970 = vdwg.mxu0
    %6971 = vmatprep.subr.bf16.mxu0 %v4639
    %6972 = vmatpush1.bf16.msra.mxu0 %v4638
    %6973 = vmatprep.subr.bf16.mxu0 %v4647
    %6974 = vmatpush1.bf16.msra.mxu0 %v4646
    %6975 = vmatprep.subr.bf16.mxu0 %v4655
    %6976 = vmatpush1.bf16.msra.mxu0 %v4654
    %6977 = vmatprep.subr.bf16.mxu0 %v4663
    %6978 = vmatpush1.bf16.msra.mxu0 %v4662
    %6979 = vmatprep.subr.bf16.mxu0 %v4671
    %6980 = vmatpush1.bf16.msra.mxu0 %v4670
    %6981 = vmatprep.subr.bf16.mxu0 %v4679
    %6982 = vmatpush1.bf16.msra.mxu0 %v4678
    %6983 = vmatprep.subr.bf16.mxu0 %v4687
    %6984 = vmatpush1.bf16.msra.mxu0 %v4686
    %6985 = vmatprep.subr.bf16.mxu0 %v4695
    %6986 = vmatpush1.bf16.msra.mxu0 %v4694
    %6987 = vmatprep.subr.bf16.mxu0 %v4703
    %6988 = vmatpush1.bf16.msra.mxu0 %v4702
    %6989 = vmatprep.subr.bf16.mxu0 %v4711
    %6990 = vmatpush1.bf16.msra.mxu0 %v4710
    %6991 = vmatprep.subr.bf16.mxu0 %v4719
    %6992 = vmatpush1.bf16.msra.mxu0 %v4718
    %6993 = vmatprep.subr.bf16.mxu0 %v4727
    %6994 = vmatpush1.bf16.msra.mxu0 %v4726
    %6995 = vmatprep.subr.bf16.mxu0 %v4735
    %6996 = vmatpush1.bf16.msra.mxu0 %v4734
    %6997 = vmatprep.subr.bf16.mxu0 %v4743
    %6998 = vmatpush1.bf16.msra.mxu0 %v4742
    %6999 = vmatprep.subr.bf16.mxu0 %v4751
    %7000 = vmatpush1.bf16.msra.mxu0 %v4750
    %7001 = vmatprep.subr.bf16.mxu0 %v4759
    %7002 = vmatpush1.bf16.msra.mxu0 %v4758
    %7003 = vmatprep.mubr.bf16.mxu0 %v146
    %7004 = vmatmul.mubr.bf16.gmra.mrb[0].mxu0 %v145
    %v7005 = vpop.f32.mrb[0].mxu0
    %v7006 = vadd.f32 %v6965, %v7005
    %v7007 = vpop.f32.mrb[0].mxu0
    %v7008 = vadd.f32 %v6967, %v7007
    %v7009 = vpop.f32.mrb[0].mxu0
    %v7010 = vpop.f32.mrb[0].mxu0
    %7011 = vdwg.mxu0
    %7012 = vmatprep.subr.bf16.mxu0 %v4767
    %7013 = vmatpush1.bf16.msra.mxu0 %v4766
    %7014 = vmatprep.subr.bf16.mxu0 %v4775
    %7015 = vmatpush1.bf16.msra.mxu0 %v4774
    %7016 = vmatprep.subr.bf16.mxu0 %v4783
    %7017 = vmatpush1.bf16.msra.mxu0 %v4782
    %7018 = vmatprep.subr.bf16.mxu0 %v4791
    %7019 = vmatpush1.bf16.msra.mxu0 %v4790
    %7020 = vmatprep.subr.bf16.mxu0 %v4799
    %7021 = vmatpush1.bf16.msra.mxu0 %v4798
    %7022 = vmatprep.subr.bf16.mxu0 %v4807
    %7023 = vmatpush1.bf16.msra.mxu0 %v4806
    %7024 = vmatprep.subr.bf16.mxu0 %v4815
    %7025 = vmatpush1.bf16.msra.mxu0 %v4814
    %7026 = vmatprep.subr.bf16.mxu0 %v4823
    %7027 = vmatpush1.bf16.msra.mxu0 %v4822
    %7028 = vmatprep.subr.bf16.mxu0 %v4831
    %7029 = vmatpush1.bf16.msra.mxu0 %v4830
    %7030 = vmatprep.subr.bf16.mxu0 %v4839
    %7031 = vmatpush1.bf16.msra.mxu0 %v4838
    %7032 = vmatprep.subr.bf16.mxu0 %v4847
    %7033 = vmatpush1.bf16.msra.mxu0 %v4846
    %7034 = vmatprep.subr.bf16.mxu0 %v4855
    %7035 = vmatpush1.bf16.msra.mxu0 %v4854
    %7036 = vmatprep.subr.bf16.mxu0 %v4863
    %7037 = vmatpush1.bf16.msra.mxu0 %v4862
    %7038 = vmatprep.subr.bf16.mxu0 %v4871
    %7039 = vmatpush1.bf16.msra.mxu0 %v4870
    %7040 = vmatprep.subr.bf16.mxu0 %v4879
    %7041 = vmatpush1.bf16.msra.mxu0 %v4878
    %7042 = vmatprep.subr.bf16.mxu0 %v4887
    %7043 = vmatpush1.bf16.msra.mxu0 %v4886
    %7044 = vmatprep.mubr.bf16.mxu0 %v148
    %7045 = vmatmul.mubr.bf16.gmra.mrb[0].mxu0 %v147
    %v7046 = vpop.f32.mrb[0].mxu0
    %v7047 = vadd.f32 %v7006, %v7046
    %v7048 = vpop.f32.mrb[0].mxu0
    %v7049 = vadd.f32 %v7008, %v7048
    %v7050 = vpop.f32.mrb[0].mxu0
    %v7051 = vpop.f32.mrb[0].mxu0
    %7052 = vdwg.mxu0
    %7053 = vmatprep.subr.bf16.mxu0 %v4895
    %7054 = vmatpush1.bf16.msra.mxu0 %v4894
    %7055 = vmatprep.subr.bf16.mxu0 %v4903
    %7056 = vmatpush1.bf16.msra.mxu0 %v4902
    %7057 = vmatprep.subr.bf16.mxu0 %v4911
    %7058 = vmatpush1.bf16.msra.mxu0 %v4910
    %7059 = vmatprep.subr.bf16.mxu0 %v4919
    %7060 = vmatpush1.bf16.msra.mxu0 %v4918
    %7061 = vmatprep.subr.bf16.mxu0 %v4927
    %7062 = vmatpush1.bf16.msra.mxu0 %v4926
    %7063 = vmatprep.subr.bf16.mxu0 %v4935
    %7064 = vmatpush1.bf16.msra.mxu0 %v4934
    %7065 = vmatprep.subr.bf16.mxu0 %v4943
    %7066 = vmatpush1.bf16.msra.mxu0 %v4942
    %7067 = vmatprep.subr.bf16.mxu0 %v4951
    %7068 = vmatpush1.bf16.msra.mxu0 %v4950
    %7069 = vmatprep.subr.bf16.mxu0 %v4959
    %7070 = vmatpush1.bf16.msra.mxu0 %v4958
    %7071 = vmatprep.subr.bf16.mxu0 %v4967
    %7072 = vmatpush1.bf16.msra.mxu0 %v4966
    %7073 = vmatprep.subr.bf16.mxu0 %v4975
    %7074 = vmatpush1.bf16.msra.mxu0 %v4974
    %7075 = vmatprep.subr.bf16.mxu0 %v4983
    %7076 = vmatpush1.bf16.msra.mxu0 %v4982
    %7077 = vmatprep.subr.bf16.mxu0 %v4991
    %7078 = vmatpush1.bf16.msra.mxu0 %v4990
    %7079 = vmatprep.subr.bf16.mxu0 %v4999
    %7080 = vmatpush1.bf16.msra.mxu0 %v4998
    %7081 = vmatprep.subr.bf16.mxu0 %v5007
    %7082 = vmatpush1.bf16.msra.mxu0 %v5006
    %7083 = vmatprep.subr.bf16.mxu0 %v5015
    %7084 = vmatpush1.bf16.msra.mxu0 %v5014
    %7085 = vmatprep.mubr.bf16.mxu0 %v150
    %7086 = vmatmul.mubr.bf16.gmra.mrb[0].mxu0 %v149
    %v7087 = vpop.f32.mrb[0].mxu0
    %v7088 = vadd.f32 %v7047, %v7087
    %v7089 = vpop.f32.mrb[0].mxu0
    %v7090 = vadd.f32 %v7049, %v7089
    %v7091 = vpop.f32.mrb[0].mxu0
    %v7092 = vpop.f32.mrb[0].mxu0
    %7093 = vdwg.mxu0
    %7094 = vmatprep.subr.bf16.mxu0 %v5023
    %7095 = vmatpush1.bf16.msra.mxu0 %v5022
    %7096 = vmatprep.subr.bf16.mxu0 %v5031
    %7097 = vmatpush1.bf16.msra.mxu0 %v5030
    %7098 = vmatprep.subr.bf16.mxu0 %v5039
    %7099 = vmatpush1.bf16.msra.mxu0 %v5038
    %7100 = vmatprep.subr.bf16.mxu0 %v5047
    %7101 = vmatpush1.bf16.msra.mxu0 %v5046
    %7102 = vmatprep.subr.bf16.mxu0 %v5055
    %7103 = vmatpush1.bf16.msra.mxu0 %v5054
    %7104 = vmatprep.subr.bf16.mxu0 %v5063
    %7105 = vmatpush1.bf16.msra.mxu0 %v5062
    %7106 = vmatprep.subr.bf16.mxu0 %v5071
    %7107 = vmatpush1.bf16.msra.mxu0 %v5070
    %7108 = vmatprep.subr.bf16.mxu0 %v5079
    %7109 = vmatpush1.bf16.msra.mxu0 %v5078
    %7110 = vmatprep.subr.bf16.mxu0 %v5087
    %7111 = vmatpush1.bf16.msra.mxu0 %v5086
    %7112 = vmatprep.subr.bf16.mxu0 %v5095
    %7113 = vmatpush1.bf16.msra.mxu0 %v5094
    %7114 = vmatprep.subr.bf16.mxu0 %v5103
    %7115 = vmatpush1.bf16.msra.mxu0 %v5102
    %7116 = vmatprep.subr.bf16.mxu0 %v5111
    %7117 = vmatpush1.bf16.msra.mxu0 %v5110
    %7118 = vmatprep.subr.bf16.mxu0 0
    %7119 = vmatpush1.bf16.msra.mxu0 0
    %7120 = vmatprep.subr.bf16.mxu0 0
    %7121 = vmatpush1.bf16.msra.mxu0 0
    %7122 = vmatprep.subr.bf16.mxu0 0
    %7123 = vmatpush1.bf16.msra.mxu0 0
    %7124 = vmatprep.subr.bf16.mxu0 0
    %7125 = vmatpush1.bf16.msra.mxu0 0
    %7126 = vmatprep.mubr.bf16.mxu0 %v6149
    %7127 = vmatmul.mubr.bf16.gmra.mrb[0].mxu0 %v151
    %v7128 = vpop.f32.mrb[0].mxu0
    %v7129 = vadd.f32 %v7088, %v7128
    %v7130 = vpop.f32.mrb[0].mxu0
    %v7131 = vadd.f32 %v7090, %v7130
    %v7132 = vpop.f32.mrb[0].mxu0
    %v7133 = vpop.f32.mrb[0].mxu0
    %7134 = vdwg.mxu0
    %7135 = vmatprep.subr.bf16.mxu0 %v4129
    %7136 = vmatpush1.bf16.msra.mxu0 %v4128
    %7137 = vmatprep.subr.bf16.mxu0 %v4137
    %7138 = vmatpush1.bf16.msra.mxu0 %v4136
    %7139 = vmatprep.subr.bf16.mxu0 %v4145
    %7140 = vmatpush1.bf16.msra.mxu0 %v4144
    %7141 = vmatprep.subr.bf16.mxu0 %v4153
    %7142 = vmatpush1.bf16.msra.mxu0 %v4152
    %7143 = vmatprep.subr.bf16.mxu0 %v4161
    %7144 = vmatpush1.bf16.msra.mxu0 %v4160
    %7145 = vmatprep.subr.bf16.mxu0 %v4169
    %7146 = vmatpush1.bf16.msra.mxu0 %v4168
    %7147 = vmatprep.subr.bf16.mxu0 %v4177
    %7148 = vmatpush1.bf16.msra.mxu0 %v4176
    %7149 = vmatprep.subr.bf16.mxu0 %v4185
    %7150 = vmatpush1.bf16.msra.mxu0 %v4184
    %7151 = vmatprep.subr.bf16.mxu0 %v4193
    %7152 = vmatpush1.bf16.msra.mxu0 %v4192
    %7153 = vmatprep.subr.bf16.mxu0 %v4201
    %7154 = vmatpush1.bf16.msra.mxu0 %v4200
    %7155 = vmatprep.subr.bf16.mxu0 %v4209
    %7156 = vmatpush1.bf16.msra.mxu0 %v4208
    %7157 = vmatprep.subr.bf16.mxu0 %v4217
    %7158 = vmatpush1.bf16.msra.mxu0 %v4216
    %7159 = vmatprep.subr.bf16.mxu0 %v4225
    %7160 = vmatpush1.bf16.msra.mxu0 %v4224
    %7161 = vmatprep.subr.bf16.mxu0 %v4233
    %7162 = vmatpush1.bf16.msra.mxu0 %v4232
    %7163 = vmatprep.subr.bf16.mxu0 %v4241
    %7164 = vmatpush1.bf16.msra.mxu0 %v4240
    %7165 = vmatprep.subr.bf16.mxu0 %v4249
    %7166 = vmatpush1.bf16.msra.mxu0 %v4248
    %7167 = vmatprep.mubr.bf16.mxu0 %v138
    %7168 = vmatmul.mubr.bf16.gmra.mrb[0].mxu0 %v137
    %v7169 = vpop.f32.mrb[0].mxu0
    %v7170 = vadd.f32 %v6134, %v7169
    %v7171 = vpop.f32.mrb[0].mxu0
    %v7172 = vadd.f32 %v6138, %v7171
    %v7173 = vpop.f32.mrb[0].mxu0
    %v7174 = vpop.f32.mrb[0].mxu0
    %7175 = vdwg.mxu0
    %7176 = vmatprep.subr.bf16.mxu0 %v4257
    %7177 = vmatpush1.bf16.msra.mxu0 %v4256
    %7178 = vmatprep.subr.bf16.mxu0 %v4265
    %7179 = vmatpush1.bf16.msra.mxu0 %v4264
    %7180 = vmatprep.subr.bf16.mxu0 %v4273
    %7181 = vmatpush1.bf16.msra.mxu0 %v4272
    %7182 = vmatprep.subr.bf16.mxu0 %v4281
    %7183 = vmatpush1.bf16.msra.mxu0 %v4280
    %7184 = vmatprep.subr.bf16.mxu0 %v4289
    %7185 = vmatpush1.bf16.msra.mxu0 %v4288
    %7186 = vmatprep.subr.bf16.mxu0 %v4297
    %7187 = vmatpush1.bf16.msra.mxu0 %v4296
    %7188 = vmatprep.subr.bf16.mxu0 %v4305
    %7189 = vmatpush1.bf16.msra.mxu0 %v4304
    %7190 = vmatprep.subr.bf16.mxu0 %v4313
    %7191 = vmatpush1.bf16.msra.mxu0 %v4312
    %7192 = vmatprep.subr.bf16.mxu0 %v4321
    %7193 = vmatpush1.bf16.msra.mxu0 %v4320
    %7194 = vmatprep.subr.bf16.mxu0 %v4329
    %7195 = vmatpush1.bf16.msra.mxu0 %v4328
    %7196 = vmatprep.subr.bf16.mxu0 %v4337
    %7197 = vmatpush1.bf16.msra.mxu0 %v4336
    %7198 = vmatprep.subr.bf16.mxu0 %v4345
    %7199 = vmatpush1.bf16.msra.mxu0 %v4344
    %7200 = vmatprep.subr.bf16.mxu0 %v4353
    %7201 = vmatpush1.bf16.msra.mxu0 %v4352
    %7202 = vmatprep.subr.bf16.mxu0 %v4361
    %7203 = vmatpush1.bf16.msra.mxu0 %v4360
    %7204 = vmatprep.subr.bf16.mxu0 %v4369
    %7205 = vmatpush1.bf16.msra.mxu0 %v4368
    %7206 = vmatprep.subr.bf16.mxu0 %v4377
    %7207 = vmatpush1.bf16.msra.mxu0 %v4376
    %7208 = vmatprep.mubr.bf16.mxu0 %v140
    %7209 = vmatmul.mubr.bf16.gmra.mrb[0].mxu0 %v139
    %v7210 = vpop.f32.mrb[0].mxu0
    %v7211 = vadd.f32 %v7170, %v7210
    %v7212 = vpop.f32.mrb[0].mxu0
    %v7213 = vadd.f32 %v7172, %v7212
    %v7214 = vpop.f32.mrb[0].mxu0
    %v7215 = vpop.f32.mrb[0].mxu0
    %7216 = vdwg.mxu0
    %7217 = vmatprep.subr.bf16.mxu0 %v4385
    %7218 = vmatpush1.bf16.msra.mxu0 %v4384
    %7219 = vmatprep.subr.bf16.mxu0 %v4393
    %7220 = vmatpush1.bf16.msra.mxu0 %v4392
    %7221 = vmatprep.subr.bf16.mxu0 %v4401
    %7222 = vmatpush1.bf16.msra.mxu0 %v4400
    %7223 = vmatprep.subr.bf16.mxu0 %v4409
    %7224 = vmatpush1.bf16.msra.mxu0 %v4408
    %7225 = vmatprep.subr.bf16.mxu0 %v4417
    %7226 = vmatpush1.bf16.msra.mxu0 %v4416
    %7227 = vmatprep.subr.bf16.mxu0 %v4425
    %7228 = vmatpush1.bf16.msra.mxu0 %v4424
    %7229 = vmatprep.subr.bf16.mxu0 %v4433
    %7230 = vmatpush1.bf16.msra.mxu0 %v4432
    %7231 = vmatprep.subr.bf16.mxu0 %v4441
    %7232 = vmatpush1.bf16.msra.mxu0 %v4440
    %7233 = vmatprep.subr.bf16.mxu0 %v4449
    %7234 = vmatpush1.bf16.msra.mxu0 %v4448
    %7235 = vmatprep.subr.bf16.mxu0 %v4457
    %7236 = vmatpush1.bf16.msra.mxu0 %v4456
    %7237 = vmatprep.subr.bf16.mxu0 %v4465
    %7238 = vmatpush1.bf16.msra.mxu0 %v4464
    %7239 = vmatprep.subr.bf16.mxu0 %v4473
    %7240 = vmatpush1.bf16.msra.mxu0 %v4472
    %7241 = vmatprep.subr.bf16.mxu0 %v4481
    %7242 = vmatpush1.bf16.msra.mxu0 %v4480
    %7243 = vmatprep.subr.bf16.mxu0 %v4489
    %7244 = vmatpush1.bf16.msra.mxu0 %v4488
    %7245 = vmatprep.subr.bf16.mxu0 %v4497
    %7246 = vmatpush1.bf16.msra.mxu0 %v4496
    %7247 = vmatprep.subr.bf16.mxu0 %v4505
    %7248 = vmatpush1.bf16.msra.mxu0 %v4504
    %7249 = vmatprep.mubr.bf16.mxu0 %v142
    %7250 = vmatmul.mubr.bf16.gmra.mrb[0].mxu0 %v141
    %v7251 = vpop.f32.mrb[0].mxu0
    %v7252 = vadd.f32 %v7211, %v7251
    %v7253 = vpop.f32.mrb[0].mxu0
    %v7254 = vadd.f32 %v7213, %v7253
    %v7255 = vpop.f32.mrb[0].mxu0
    %v7256 = vpop.f32.mrb[0].mxu0
    %7257 = vdwg.mxu0
    %7258 = vmatprep.subr.bf16.mxu0 %v4513
    %7259 = vmatpush1.bf16.msra.mxu0 %v4512
    %7260 = vmatprep.subr.bf16.mxu0 %v4521
    %7261 = vmatpush1.bf16.msra.mxu0 %v4520
    %7262 = vmatprep.subr.bf16.mxu0 %v4529
    %7263 = vmatpush1.bf16.msra.mxu0 %v4528
    %7264 = vmatprep.subr.bf16.mxu0 %v4537
    %7265 = vmatpush1.bf16.msra.mxu0 %v4536
    %7266 = vmatprep.subr.bf16.mxu0 %v4545
    %7267 = vmatpush1.bf16.msra.mxu0 %v4544
    %7268 = vmatprep.subr.bf16.mxu0 %v4553
    %7269 = vmatpush1.bf16.msra.mxu0 %v4552
    %7270 = vmatprep.subr.bf16.mxu0 %v4561
    %7271 = vmatpush1.bf16.msra.mxu0 %v4560
    %7272 = vmatprep.subr.bf16.mxu0 %v4569
    %7273 = vmatpush1.bf16.msra.mxu0 %v4568
    %7274 = vmatprep.subr.bf16.mxu0 %v4577
    %7275 = vmatpush1.bf16.msra.mxu0 %v4576
    %7276 = vmatprep.subr.bf16.mxu0 %v4585
    %7277 = vmatpush1.bf16.msra.mxu0 %v4584
    %7278 = vmatprep.subr.bf16.mxu0 %v4593
    %7279 = vmatpush1.bf16.msra.mxu0 %v4592
    %7280 = vmatprep.subr.bf16.mxu0 %v4601
    %7281 = vmatpush1.bf16.msra.mxu0 %v4600
    %7282 = vmatprep.subr.bf16.mxu0 %v4609
    %7283 = vmatpush1.bf16.msra.mxu0 %v4608
    %7284 = vmatprep.subr.bf16.mxu0 %v4617
    %7285 = vmatpush1.bf16.msra.mxu0 %v4616
    %7286 = vmatprep.subr.bf16.mxu0 %v4625
    %7287 = vmatpush1.bf16.msra.mxu0 %v4624
    %7288 = vmatprep.subr.bf16.mxu0 %v4633
    %7289 = vmatpush1.bf16.msra.mxu0 %v4632
    %7290 = vmatprep.mubr.bf16.mxu0 %v144
    %7291 = vmatmul.mubr.bf16.gmra.mrb[0].mxu0 %v143
    %v7292 = vpop.f32.mrb[0].mxu0
    %v7293 = vadd.f32 %v7252, %v7292
    %v7294 = vpop.f32.mrb[0].mxu0
    %v7295 = vadd.f32 %v7254, %v7294
    %v7296 = vpop.f32.mrb[0].mxu0
    %v7297 = vpop.f32.mrb[0].mxu0
    %7298 = vdwg.mxu0
    %7299 = vmatprep.subr.bf16.mxu0 %v4641
    %7300 = vmatpush1.bf16.msra.mxu0 %v4640
    %7301 = vmatprep.subr.bf16.mxu0 %v4649
    %7302 = vmatpush1.bf16.msra.mxu0 %v4648
    %7303 = vmatprep.subr.bf16.mxu0 %v4657
    %7304 = vmatpush1.bf16.msra.mxu0 %v4656
    %7305 = vmatprep.subr.bf16.mxu0 %v4665
    %7306 = vmatpush1.bf16.msra.mxu0 %v4664
    %7307 = vmatprep.subr.bf16.mxu0 %v4673
    %7308 = vmatpush1.bf16.msra.mxu0 %v4672
    %7309 = vmatprep.subr.bf16.mxu0 %v4681
    %7310 = vmatpush1.bf16.msra.mxu0 %v4680
    %7311 = vmatprep.subr.bf16.mxu0 %v4689
    %7312 = vmatpush1.bf16.msra.mxu0 %v4688
    %7313 = vmatprep.subr.bf16.mxu0 %v4697
    %7314 = vmatpush1.bf16.msra.mxu0 %v4696
    %7315 = vmatprep.subr.bf16.mxu0 %v4705
    %7316 = vmatpush1.bf16.msra.mxu0 %v4704
    %7317 = vmatprep.subr.bf16.mxu0 %v4713
    %7318 = vmatpush1.bf16.msra.mxu0 %v4712
    %7319 = vmatprep.subr.bf16.mxu0 %v4721
    %7320 = vmatpush1.bf16.msra.mxu0 %v4720
    %7321 = vmatprep.subr.bf16.mxu0 %v4729
    %7322 = vmatpush1.bf16.msra.mxu0 %v4728
    %7323 = vmatprep.subr.bf16.mxu0 %v4737
    %7324 = vmatpush1.bf16.msra.mxu0 %v4736
    %7325 = vmatprep.subr.bf16.mxu0 %v4745
    %7326 = vmatpush1.bf16.msra.mxu0 %v4744
    %7327 = vmatprep.subr.bf16.mxu0 %v4753
    %7328 = vmatpush1.bf16.msra.mxu0 %v4752
    %7329 = vmatprep.subr.bf16.mxu0 %v4761
    %7330 = vmatpush1.bf16.msra.mxu0 %v4760
    %7331 = vmatprep.mubr.bf16.mxu0 %v146
    %7332 = vmatmul.mubr.bf16.gmra.mrb[0].mxu0 %v145
    %v7333 = vpop.f32.mrb[0].mxu0
    %v7334 = vadd.f32 %v7293, %v7333
    %v7335 = vpop.f32.mrb[0].mxu0
    %v7336 = vadd.f32 %v7295, %v7335
    %v7337 = vpop.f32.mrb[0].mxu0
    %v7338 = vpop.f32.mrb[0].mxu0
    %7339 = vdwg.mxu0
    %7340 = vmatprep.subr.bf16.mxu0 %v4769
    %7341 = vmatpush1.bf16.msra.mxu0 %v4768
    %7342 = vmatprep.subr.bf16.mxu0 %v4777
    %7343 = vmatpush1.bf16.msra.mxu0 %v4776
    %7344 = vmatprep.subr.bf16.mxu0 %v4785
    %7345 = vmatpush1.bf16.msra.mxu0 %v4784
    %7346 = vmatprep.subr.bf16.mxu0 %v4793
    %7347 = vmatpush1.bf16.msra.mxu0 %v4792
    %7348 = vmatprep.subr.bf16.mxu0 %v4801
    %7349 = vmatpush1.bf16.msra.mxu0 %v4800
    %7350 = vmatprep.subr.bf16.mxu0 %v4809
    %7351 = vmatpush1.bf16.msra.mxu0 %v4808
    %7352 = vmatprep.subr.bf16.mxu0 %v4817
    %7353 = vmatpush1.bf16.msra.mxu0 %v4816
    %7354 = vmatprep.subr.bf16.mxu0 %v4825
    %7355 = vmatpush1.bf16.msra.mxu0 %v4824
    %7356 = vmatprep.subr.bf16.mxu0 %v4833
    %7357 = vmatpush1.bf16.msra.mxu0 %v4832
    %7358 = vmatprep.subr.bf16.mxu0 %v4841
    %7359 = vmatpush1.bf16.msra.mxu0 %v4840
    %7360 = vmatprep.subr.bf16.mxu0 %v4849
    %7361 = vmatpush1.bf16.msra.mxu0 %v4848
    %7362 = vmatprep.subr.bf16.mxu0 %v4857
    %7363 = vmatpush1.bf16.msra.mxu0 %v4856
    %7364 = vmatprep.subr.bf16.mxu0 %v4865
    %7365 = vmatpush1.bf16.msra.mxu0 %v4864
    %7366 = vmatprep.subr.bf16.mxu0 %v4873
    %7367 = vmatpush1.bf16.msra.mxu0 %v4872
    %7368 = vmatprep.subr.bf16.mxu0 %v4881
    %7369 = vmatpush1.bf16.msra.mxu0 %v4880
    %7370 = vmatprep.subr.bf16.mxu0 %v4889
    %7371 = vmatpush1.bf16.msra.mxu0 %v4888
    %7372 = vmatprep.mubr.bf16.mxu0 %v148
    %7373 = vmatmul.mubr.bf16.gmra.mrb[0].mxu0 %v147
    %v7374 = vpop.f32.mrb[0].mxu0
    %v7375 = vadd.f32 %v7334, %v7374
    %v7376 = vpop.f32.mrb[0].mxu0
    %v7377 = vadd.f32 %v7336, %v7376
    %v7378 = vpop.f32.mrb[0].mxu0
    %v7379 = vpop.f32.mrb[0].mxu0
    %7380 = vdwg.mxu0
    %7381 = vmatprep.subr.bf16.mxu0 %v4897
    %7382 = vmatpush1.bf16.msra.mxu0 %v4896
    %7383 = vmatprep.subr.bf16.mxu0 %v4905
    %7384 = vmatpush1.bf16.msra.mxu0 %v4904
    %7385 = vmatprep.subr.bf16.mxu0 %v4913
    %7386 = vmatpush1.bf16.msra.mxu0 %v4912
    %7387 = vmatprep.subr.bf16.mxu0 %v4921
    %7388 = vmatpush1.bf16.msra.mxu0 %v4920
    %7389 = vmatprep.subr.bf16.mxu0 %v4929
    %7390 = vmatpush1.bf16.msra.mxu0 %v4928
    %7391 = vmatprep.subr.bf16.mxu0 %v4937
    %7392 = vmatpush1.bf16.msra.mxu0 %v4936
    %7393 = vmatprep.subr.bf16.mxu0 %v4945
    %7394 = vmatpush1.bf16.msra.mxu0 %v4944
    %7395 = vmatprep.subr.bf16.mxu0 %v4953
    %7396 = vmatpush1.bf16.msra.mxu0 %v4952
    %7397 = vmatprep.subr.bf16.mxu0 %v4961
    %7398 = vmatpush1.bf16.msra.mxu0 %v4960
    %7399 = vmatprep.subr.bf16.mxu0 %v4969
    %7400 = vmatpush1.bf16.msra.mxu0 %v4968
    %7401 = vmatprep.subr.bf16.mxu0 %v4977
    %7402 = vmatpush1.bf16.msra.mxu0 %v4976
    %7403 = vmatprep.subr.bf16.mxu0 %v4985
    %7404 = vmatpush1.bf16.msra.mxu0 %v4984
    %7405 = vmatprep.subr.bf16.mxu0 %v4993
    %7406 = vmatpush1.bf16.msra.mxu0 %v4992
    %7407 = vmatprep.subr.bf16.mxu0 %v5001
    %7408 = vmatpush1.bf16.msra.mxu0 %v5000
    %7409 = vmatprep.subr.bf16.mxu0 %v5009
    %7410 = vmatpush1.bf16.msra.mxu0 %v5008
    %7411 = vmatprep.subr.bf16.mxu0 %v5017
    %7412 = vmatpush1.bf16.msra.mxu0 %v5016
    %7413 = vmatprep.mubr.bf16.mxu0 %v150
    %7414 = vmatmul.mubr.bf16.gmra.mrb[0].mxu0 %v149
    %v7415 = vpop.f32.mrb[0].mxu0
    %v7416 = vadd.f32 %v7375, %v7415
    %v7417 = vpop.f32.mrb[0].mxu0
    %v7418 = vadd.f32 %v7377, %v7417
    %v7419 = vpop.f32.mrb[0].mxu0
    %v7420 = vpop.f32.mrb[0].mxu0
    %7421 = vdwg.mxu0
    %7422 = vmatprep.subr.bf16.mxu0 %v5025
    %7423 = vmatpush1.bf16.msra.mxu0 %v5024
    %7424 = vmatprep.subr.bf16.mxu0 %v5033
    %7425 = vmatpush1.bf16.msra.mxu0 %v5032
    %7426 = vmatprep.subr.bf16.mxu0 %v5041
    %7427 = vmatpush1.bf16.msra.mxu0 %v5040
    %7428 = vmatprep.subr.bf16.mxu0 %v5049
    %7429 = vmatpush1.bf16.msra.mxu0 %v5048
    %7430 = vmatprep.subr.bf16.mxu0 %v5057
    %7431 = vmatpush1.bf16.msra.mxu0 %v5056
    %7432 = vmatprep.subr.bf16.mxu0 %v5065
    %7433 = vmatpush1.bf16.msra.mxu0 %v5064
    %7434 = vmatprep.subr.bf16.mxu0 %v5073
    %7435 = vmatpush1.bf16.msra.mxu0 %v5072
    %7436 = vmatprep.subr.bf16.mxu0 %v5081
    %7437 = vmatpush1.bf16.msra.mxu0 %v5080
    %7438 = vmatprep.subr.bf16.mxu0 %v5089
    %7439 = vmatpush1.bf16.msra.mxu0 %v5088
    %7440 = vmatprep.subr.bf16.mxu0 %v5097
    %7441 = vmatpush1.bf16.msra.mxu0 %v5096
    %7442 = vmatprep.subr.bf16.mxu0 %v5105
    %7443 = vmatpush1.bf16.msra.mxu0 %v5104
    %7444 = vmatprep.subr.bf16.mxu0 %v5113
    %7445 = vmatpush1.bf16.msra.mxu0 %v5112
    %7446 = vmatprep.subr.bf16.mxu0 0
    %7447 = vmatpush1.bf16.msra.mxu0 0
    %7448 = vmatprep.subr.bf16.mxu0 0
    %7449 = vmatpush1.bf16.msra.mxu0 0
    %7450 = vmatprep.subr.bf16.mxu0 0
    %7451 = vmatpush1.bf16.msra.mxu0 0
    %7452 = vmatprep.subr.bf16.mxu0 0
    %7453 = vmatpush1.bf16.msra.mxu0 0
    %7454 = vmatprep.mubr.bf16.mxu0 %v6149
    %7455 = vmatmul.mubr.bf16.gmra.mrb[0].mxu0 %v151
    %v7456 = vpop.f32.mrb[0].mxu0
    %v7457 = vadd.f32 %v7416, %v7456
    %v7458 = vpop.f32.mrb[0].mxu0
    %v7459 = vadd.f32 %v7418, %v7458
    %v7460 = vpop.f32.mrb[0].mxu0
    %v7461 = vpop.f32.mrb[0].mxu0
    %7462 = vdwg.mxu0
    %v7471 = vcombine.low %v6473, %v6475
    %v7472 = vcombine.low %v6801, %v6803
    %v7473 = vcombine.low %v7129, %v7131
    %v7474 = vcombine.low %v7457, %v7459
    %v7476 = vunpack.c.l.s4 1966171168
    %v7477 = vunpack.c.0.s8 %v7476
    %v7478 = vlaneseq
    %v7479 = vshrl.u32 %v7478, 7
    %v7480 = vsub.s32 %v7477, %v7479
    %v7481 = vrot.slane %v7471, %v7480
    %v7483 = vunpack.c.l.s4 1966171168
    %v7484 = vunpack.c.0.s8 %v7483
    %v7485 = vlaneseq
    %v7486 = vshrl.u32 %v7485, 7
    %v7487 = vsub.s32 %v7484, %v7486
    %v7488 = vrot.slane %v7472, %v7487
    %v7490 = vunpack.c.l.s4 1966171168
    %v7491 = vunpack.c.0.s8 %v7490
    %v7492 = vlaneseq
    %v7493 = vshrl.u32 %v7492, 7
    %v7494 = vsub.s32 %v7491, %v7493
    %v7495 = vrot.slane %v7473, %v7494
    %v7497 = vunpack.c.l.s4 1966171168
    %v7498 = vunpack.c.0.s8 %v7497
    %v7499 = vlaneseq
    %v7500 = vshrl.u32 %v7499, 7
    %v7501 = vsub.s32 %v7498, %v7500
    %v7502 = vrot.slane %v7474, %v7501
    %v7503 = vcombine.low %v7481, %v7488
    %v7504 = vcombine.low %v7495, %v7502
    %v7506 = vunpack.c.l.s4 1966171168
    %v7507 = vunpack.c.0.s8 %v7506
    %v7508 = vlaneseq
    %v7509 = vshrl.u32 %v7508, 7
    %v7510 = vsub.s32 %v7507, %v7509
    %v7511 = vrot.slane %v7503, %v7510
    %v7513 = vunpack.c.l.s4 1966171168
    %v7514 = vunpack.c.0.s8 %v7513
    %v7515 = vlaneseq
    %v7516 = vshrl.u32 %v7515, 7
    %v7517 = vsub.s32 %v7514, %v7516
    %v7518 = vrot.slane %v7504, %v7517
    %v7519 = vcombine.low %v7511, %v7518
    %7521 = vst [vmem:[#allocation8] sm:$0xff] %v7519
    // Predicated region
    $region26: #{tpu_custom_call.1} parent=1 // pred_check
      _
    $region27: #{tpu_custom_call.1} parent=1 // pred_check_branch
      %7523 = sbr.rel (0) target = $region29
    $region28: #{tpu_custom_call.1} parent=1 // pred_region
      %s7525 = ssub.s32 128, 128
      %7526 = vsyncadd [#allocation4], %s7525
      %s7528 = sshll.u32 [#allocation8], 4
      %s7529 = int_to_ptr.vmem [resolvable:$true] %s7528
      %7531 = dma.vmem_to_hbm [thread:$0]  %s7529, 128, %s3, [#allocation4]
    $region29: #{tpu_custom_call.1} parent=1 // pred_fallthru
      _
    // Predicated region
    $region30: #{tpu_custom_call.1} parent=1 // pred_check
      _
    $region31: #{tpu_custom_call.1} parent=1 // pred_check_branch
      %7533 = sbr.rel (0) target = $region33
    $region32: #{tpu_custom_call.1} parent=1 // pred_region
      %7534 = dma.done [#allocation4], 128
    $region33: #{tpu_custom_call.1} parent=1 // pred_fallthru
      _
    %7535 = vsyncpa [#allocation3], 1
    %7536 = vsyncpa [#allocation6], 1
    %7537 = vsyncpa [#allocation4], 1

</llo_original>
